<compile_context>
chip_gen: v7x
topology: tpu7x:2x2x1
jax: 0.10.0
libtpu: 0.0.40
codegen_flags: <defaults>
</compile_context>

<pallas_src>
import functools

import jax
import jax.numpy as jnp
from jax.experimental import pallas as pl
from jax.experimental.pallas import tpu as pltpu

# ----------------------------- configuration -----------------------------
NUM_INPUT_FEATURES = 8
HIDDEN_SIZE = 256            # must equal LIN_LAYERS[-1] for linear_mu shape consistency
NUM_LSTM_LAYERS = 2
LIN_LAYERS = (512, 256)
BATCH = 2
SEQ = 8
LANE = 128                   # lane-dense output width

assert HIDDEN_SIZE == LIN_LAYERS[-1]


# ----------------------------- fused Pallas kernel -----------------------------
def fused_forward_kernel(x_ref, wih1_ref, whh1_ref, b1_ref,
                         wl2_hbm, b2_ref,
                         w1_hbm, bh1_ref, w2_hbm, bh2_ref,
                         wmu_ref, bmu_ref,
                         out_ref,
                         gx_sc, wl2_sc, w1_sc, w2_sc, dma_sem,
                         *, seq_len, batch_pad, hidden, lane):
    """Entire forward pass in one kernel.

    x_ref    : (T*Bp, F)  f32   time-major rows (t*Bp + b), batch padded to Bp (multiple of 8)
    wih1     : (F, 4H)    f32   layer-1 input->gates (tiny, kept f32)
    whh1     : (H, 4H)    bf16  layer-1 recurrent weight, fed to the MXU as bf16
    b1/b2    : (1, 4H)    f32   bias_ih + bias_hh per layer
    wl2_hbm  : (2H, 4H)   bf16  fused [W_ih2; W_hh2], HBM-resident, manual DMA -> wl2_sc
    w1_hbm   : (H, 512)   bf16  head weight 1, HBM-resident, manual DMA -> w1_sc
    w2_hbm   : (512, 256) bf16  head weight 2, HBM-resident, manual DMA -> w2_sc
    bh1/bh2  : (1, 512)/(1, 256) f32
    wmu_ref  : (1, H)     f32   linear_mu weight as a lane-dense row
    bmu_ref  : (1,)       f32   SMEM scalar
    out_ref  : (Bp, 128)  f32   lane-dense; mu broadcast across lanes, wrapper slices [:B, :1]
    gx_sc    : (T*Bp, 4H) f32   hoisted layer-1 input projections
    """
    T, Bp, H = seq_len, batch_pad, hidden
    f32 = jnp.float32
    bf16 = jnp.bfloat16

    # ---- kick off overlapped weight DMAs (layer-2 fused weight + head weights) ----
    cp_wl2 = pltpu.make_async_copy(wl2_hbm, wl2_sc, dma_sem.at[0])
    cp_w1 = pltpu.make_async_copy(w1_hbm, w1_sc, dma_sem.at[1])
    cp_w2 = pltpu.make_async_copy(w2_hbm, w2_sc, dma_sem.at[2])
    cp_wl2.start()
    cp_w1.start()
    cp_w2.start()

    # ---- hoisted layer-1 input projection: one (T*Bp, F) @ (F, 4H) matmul ----
    gx_sc[...] = (jnp.dot(x_ref[...], wih1_ref[...], preferred_element_type=f32)
                  + b1_ref[...])

    def gate_split(gates):
        i = jax.nn.sigmoid(gates[:, 0 * H:1 * H])
        f = jax.nn.sigmoid(gates[:, 1 * H:2 * H])
        g = jnp.tanh(gates[:, 2 * H:3 * H])
        o = jax.nn.sigmoid(gates[:, 3 * H:4 * H])
        return i, f, g, o

    # ---- wavefront-interleaved 2-layer LSTM (statically unrolled, state lives in vregs) ----
    h1 = jnp.zeros((Bp, H), f32)
    c1 = jnp.zeros((Bp, H), f32)
    h2 = jnp.zeros((Bp, H), f32)
    c2 = jnp.zeros((Bp, H), f32)

    for t in range(T):
        # layer-1 step t (bf16 x bf16 MXU, f32 accumulate)
        g1 = gx_sc[t * Bp:(t + 1) * Bp, :] + jnp.dot(
            h1.astype(bf16), whh1_ref[...], preferred_element_type=f32)
        i1, f1, gg1, o1 = gate_split(g1)
        c1 = f1 * c1 + i1 * gg1
        h1 = o1 * jnp.tanh(c1)

        if t == 0:
            # layer-2 fused weight DMA overlapped with projection + layer-1 step 0
            cp_wl2.wait()

        # layer-2 step t: consumes h1_t and h2_{t-1}; single fused matmul against [W_ih2; W_hh2]
        zin = jnp.concatenate([h1, h2], axis=-1).astype(bf16)        # (Bp, 2H)
        g2 = jnp.dot(zin, wl2_sc[...], preferred_element_type=f32) + b2_ref[...]
        i2, f2, gg2, o2 = gate_split(g2)
        c2 = f2 * c2 + i2 * gg2
        h2 = o2 * jnp.tanh(c2)

    # ---- MLP head (Dropout layers are identity in eval mode) ----
    cp_w1.wait()   # head weight DMAs hidden behind the whole recurrence
    cp_w2.wait()
    z1 = jnp.maximum(jnp.dot(h2.astype(bf16), w1_sc[...],
                             preferred_element_type=f32) + bh1_ref[...], 0.0)
    z2 = jnp.maximum(jnp.dot(z1.astype(bf16), w2_sc[...],
                             preferred_element_type=f32) + bh2_ref[...], 0.0)

    # linear_mu as VPU multiply + lane-reduce, broadcast into the lane-dense output tile.
    mu = jnp.sum(z2 * wmu_ref[...], axis=-1, keepdims=True) + bmu_ref[0]   # (Bp, 1)
    out_ref[...] = jnp.broadcast_to(mu, (Bp, lane)).astype(out_ref.dtype)


# ----------------------------- wrapper -----------------------------
def forecast_lstm_forward(x, params):
    """x: (B, T, F) float32, batch_first like PyTorch. Returns mu of shape (B, 1)."""
    B, T, F = x.shape
    H = HIDDEN_SIZE
    G = 4 * H
    d1, d2 = LIN_LAYERS
    Bp = ((B + 7) // 8) * 8                                  # pad batch to whole sublane tiles

    # Tiny (<= 2 KB) layout prep kept in XLA: time-major, batch pad, flatten for the hoisted matmul.
    x_tm = jnp.transpose(x, (1, 0, 2)).astype(jnp.float32)   # (T, B, F)
    x_tm = jnp.pad(x_tm, ((0, 0), (0, Bp - B), (0, 0)))      # (T, Bp, F)
    x2d = x_tm.reshape(T * Bp, F)                            # time-major rows: t*Bp + b

    l1, l2, hd = params["l1"], params["l2"], params["head"]
    kernel = functools.partial(fused_forward_kernel, seq_len=T, batch_pad=Bp,
                               hidden=H, lane=LANE)

    vmem = pl.BlockSpec(memory_space=pltpu.MemorySpace.VMEM)
    smem = pl.BlockSpec(memory_space=pltpu.MemorySpace.SMEM)
    hbm = pl.BlockSpec(memory_space=pl.ANY)                  # manual async-copy inside the kernel

    out_pad = pl.pallas_call(
        kernel,
        out_shape=jax.ShapeDtypeStruct((Bp, LANE), jnp.float32),
        in_specs=[vmem, vmem, vmem, vmem,    # x2d, wih1, whh1, b1
                  hbm, vmem,                 # w_l2_cat (overlapped DMA), b2
                  hbm, vmem,                 # w1 (overlapped DMA), bh1
                  hbm, vmem,                 # w2 (overlapped DMA), bh2
                  vmem, smem],               # wmu row, bmu scalar
        out_specs=vmem,
        scratch_shapes=[
            pltpu.VMEM((T * Bp, G), jnp.float32),    # gx_sc: hoisted layer-1 input projections
            pltpu.VMEM((2 * H, G), jnp.bfloat16),    # wl2_sc: fused [W_ih2; W_hh2]
            pltpu.VMEM((H, d1), jnp.bfloat16),       # w1_sc
            pltpu.VMEM((d1, d2), jnp.bfloat16),      # w2_sc
            pltpu.SemaphoreType.DMA((3,)),           # one semaphore per overlapped weight DMA
        ],
    )(x2d,
      l1["wih"], l1["whh"], l1["b"],
      l2["w_cat"], l2["b"],
      hd["w1"], hd["b1"], hd["w2"], hd["b2"],
      hd["wmu"], hd["bmu"])

    return out_pad[:B, :1]


# ----------------------------- deterministic parameter init -----------------------------
def init_params(key):
    keys = iter(jax.random.split(key, 16))
    H, F = HIDDEN_SIZE, NUM_INPUT_FEATURES
    G = 4 * H
    k_lstm = 1.0 / jnp.sqrt(H)
    bf16 = jnp.bfloat16

    def u(shape, bound, dtype=jnp.float32):
        w = jax.random.uniform(next(keys), shape, jnp.float32, minval=-bound, maxval=bound)
        return w.astype(dtype)

    l1 = {
        "wih": u((F, G), k_lstm),                          # transposed weight_ih_l0 (tiny, f32)
        "whh": u((H, G), k_lstm, bf16),                    # transposed weight_hh_l0
        "b": u((1, G), k_lstm) + u((1, G), k_lstm),        # bias_ih + bias_hh
    }
    wih2 = u((H, G), k_lstm, bf16)
    whh2 = u((H, G), k_lstm, bf16)
    l2 = {
        "w_cat": jnp.concatenate([wih2, whh2], axis=0),    # pre-fused [W_ih2; W_hh2] (2H, 4H) bf16
        "b": u((1, G), k_lstm) + u((1, G), k_lstm),
    }

    d1, d2 = LIN_LAYERS
    head = {
        "w1": u((H, d1), 1.0 / jnp.sqrt(H), bf16),
        "b1": u((1, d1), 1.0 / jnp.sqrt(H)),
        "w2": u((d1, d2), 1.0 / jnp.sqrt(d1), bf16),
        "b2": u((1, d2), 1.0 / jnp.sqrt(d1)),
        "wmu": u((1, H), 1.0 / jnp.sqrt(d2)),              # linear_mu weight as a lane-dense row
        "bmu": u((1,), 1.0 / jnp.sqrt(d2)),                # scalar bias (SMEM)
    }
    return {"l1": l1, "l2": l2, "head": head}


# ----------------------------- pure-JAX reference (sanity check) -----------------------------
def reference_forward(x, params):
    B, T, _ = x.shape
    H = HIDDEN_SIZE
    xs = jnp.transpose(x, (1, 0, 2)).astype(jnp.float32)    # (T, B, F)
    l1, l2, hd = params["l1"], params["l2"], params["head"]

    wih1 = l1["wih"].astype(jnp.float32)
    whh1 = l1["whh"].astype(jnp.float32)
    b1 = l1["b"]
    w_cat = l2["w_cat"].astype(jnp.float32)
    wih2, whh2 = w_cat[:H], w_cat[H:]
    b2 = l2["b"]

    def cell(x_t, h, c, wih, whh, b):
        gates = x_t @ wih + h @ whh + b
        i = jax.nn.sigmoid(gates[:, 0 * H:1 * H])
        f = jax.nn.sigmoid(gates[:, 1 * H:2 * H])
        g = jnp.tanh(gates[:, 2 * H:3 * H])
        o = jax.nn.sigmoid(gates[:, 3 * H:4 * H])
        c = f * c + i * g
        return o * jnp.tanh(c), c

    h1 = jnp.zeros((B, H), jnp.float32)
    c1 = jnp.zeros((B, H), jnp.float32)
    h2 = jnp.zeros((B, H), jnp.float32)
    c2 = jnp.zeros((B, H), jnp.float32)
    for t in range(T):
        h1, c1 = cell(xs[t], h1, c1, wih1, whh1, b1)
        h2, c2 = cell(h1, h2, c2, wih2, whh2, b2)

    z1 = jnp.maximum(h2 @ hd["w1"].astype(jnp.float32) + hd["b1"], 0.0)
    z2 = jnp.maximum(z1 @ hd["w2"].astype(jnp.float32) + hd["b2"], 0.0)
    return z2 @ hd["wmu"].astype(jnp.float32).T + hd["bmu"][0]


# ----------------------------- main -----------------------------
if __name__ == "__main__":
    key = jax.random.PRNGKey(0)
    k_x, k_p = jax.random.split(key)
    x = jax.random.normal(k_x, (BATCH, SEQ, NUM_INPUT_FEATURES), jnp.float32)
    params = init_params(k_p)

    fwd = jax.jit(forecast_lstm_forward)
    out = jax.block_until_ready(fwd(x, params))
    assert out.shape == (BATCH, 1), out.shape

    ref = reference_forward(x, params)
    # bf16 weights + bf16 MXU activations vs the (internally bf16-pass) f32 reference.
    assert jnp.allclose(out, ref, rtol=5e-2, atol=5e-2), (out, ref)

    print("KERNEL_OK")
</pallas_src>

<mosaic_0001>
module attributes {stable_mosaic.version = 11 : i64} {
  func.func @fused_forward_kernel(%arg0: memref<64x8xf32, #tpu.memory_space<vmem>>, %arg1: memref<8x1024xf32, #tpu.memory_space<vmem>>, %arg2: memref<256x1024xbf16, #tpu.memory_space<vmem>>, %arg3: memref<1x1024xf32, #tpu.memory_space<vmem>>, %arg4: memref<512x1024xbf16, #tpu.memory_space<any>>, %arg5: memref<1x1024xf32, #tpu.memory_space<vmem>>, %arg6: memref<256x512xbf16, #tpu.memory_space<any>>, %arg7: memref<1x512xf32, #tpu.memory_space<vmem>>, %arg8: memref<512x256xbf16, #tpu.memory_space<any>>, %arg9: memref<1x256xf32, #tpu.memory_space<vmem>>, %arg10: memref<1x256xf32, #tpu.memory_space<vmem>>, %arg11: memref<1xf32, #tpu.memory_space<smem>>, %arg12: memref<8x128xf32, #tpu.memory_space<vmem>>, %arg13: memref<64x1024xf32, #tpu.memory_space<vmem>>, %arg14: memref<512x1024xbf16, #tpu.memory_space<vmem>>, %arg15: memref<256x512xbf16, #tpu.memory_space<vmem>>, %arg16: memref<512x256xbf16, #tpu.memory_space<vmem>>, %arg17: memref<3x!tpu.dma_semaphore, #tpu.memory_space<semaphore_mem>>) attributes {dimension_semantics = [], scalar_prefetch = 0 : i64, scratch_operands = 5 : i64, tpu.core_type = #tpu.core_type<tc>} {
    %c0_i32 = arith.constant 0 : i32
    %0 = tpu.memref_slice %arg17[%c0_i32] : memref<3x!tpu.dma_semaphore, #tpu.memory_space<semaphore_mem>> -> memref<1x!tpu.dma_semaphore, #tpu.memory_space<semaphore_mem>>
    %1 = tpu.memref_squeeze %0 : memref<1x!tpu.dma_semaphore, #tpu.memory_space<semaphore_mem>> -> memref<!tpu.dma_semaphore, #tpu.memory_space<semaphore_mem>>
    tpu.enqueue_dma source(%arg4 : memref<512x1024xbf16, #tpu.memory_space<any>>) target(%arg14 : memref<512x1024xbf16, #tpu.memory_space<vmem>>) target_semaphore(%1 : memref<!tpu.dma_semaphore, #tpu.memory_space<semaphore_mem>>)
    %c1_i32 = arith.constant 1 : i32
    %2 = tpu.memref_slice %arg17[%c1_i32] : memref<3x!tpu.dma_semaphore, #tpu.memory_space<semaphore_mem>> -> memref<1x!tpu.dma_semaphore, #tpu.memory_space<semaphore_mem>>
    %3 = tpu.memref_squeeze %2 : memref<1x!tpu.dma_semaphore, #tpu.memory_space<semaphore_mem>> -> memref<!tpu.dma_semaphore, #tpu.memory_space<semaphore_mem>>
    tpu.enqueue_dma source(%arg6 : memref<256x512xbf16, #tpu.memory_space<any>>) target(%arg15 : memref<256x512xbf16, #tpu.memory_space<vmem>>) target_semaphore(%3 : memref<!tpu.dma_semaphore, #tpu.memory_space<semaphore_mem>>)
    %c2_i32 = arith.constant 2 : i32
    %4 = tpu.memref_slice %arg17[%c2_i32] : memref<3x!tpu.dma_semaphore, #tpu.memory_space<semaphore_mem>> -> memref<1x!tpu.dma_semaphore, #tpu.memory_space<semaphore_mem>>
    %5 = tpu.memref_squeeze %4 : memref<1x!tpu.dma_semaphore, #tpu.memory_space<semaphore_mem>> -> memref<!tpu.dma_semaphore, #tpu.memory_space<semaphore_mem>>
    tpu.enqueue_dma source(%arg8 : memref<512x256xbf16, #tpu.memory_space<any>>) target(%arg16 : memref<512x256xbf16, #tpu.memory_space<vmem>>) target_semaphore(%5 : memref<!tpu.dma_semaphore, #tpu.memory_space<semaphore_mem>>)
    %c0 = arith.constant 0 : index
    %c0_0 = arith.constant 0 : index
    %6 = vector.load %arg0[%c0, %c0_0] : memref<64x8xf32, #tpu.memory_space<vmem>>, vector<64x8xf32>
    %c0_1 = arith.constant 0 : index
    %c0_2 = arith.constant 0 : index
    %7 = vector.load %arg1[%c0_1, %c0_2] : memref<8x1024xf32, #tpu.memory_space<vmem>>, vector<8x1024xf32>
    %cst = arith.constant dense<0.000000e+00> : vector<64x1024xf32>
    %8 = tpu.matmul %6, %7, %cst {dimension_numbers = #tpu.dot_dimension_numbers<[1], [0], [0], [1], [0, 0, 1, 1], [], []>} : vector<64x8xf32>, vector<8x1024xf32>, vector<64x1024xf32> -> vector<64x1024xf32>
    %c0_3 = arith.constant 0 : index
    %c0_4 = arith.constant 0 : index
    %9 = vector.load %arg3[%c0_3, %c0_4] : memref<1x1024xf32, #tpu.memory_space<vmem>>, vector<1x1024xf32>
    %10 = vector.broadcast %9 : vector<1x1024xf32> to vector<64x1024xf32>
    %11 = arith.addf %8, %10 : vector<64x1024xf32>
    %c0_5 = arith.constant 0 : index
    %c0_6 = arith.constant 0 : index
    %12 = vector.load %arg13[%c0_5, %c0_6] : memref<64x1024xf32, #tpu.memory_space<vmem>>, vector<64x1024xf32>
    tpu.vector_store %arg13[%c0_5, %c0_6], %11 {strides = array<i32>} : memref<64x1024xf32, #tpu.memory_space<vmem>>, vector<64x1024xf32>,
    %cst_7 = arith.constant 0.000000e+00 : f32
    %13 = vector.broadcast %cst_7 : f32 to vector<8x256xf32>
    %cst_8 = arith.constant 0.000000e+00 : f32
    %14 = vector.broadcast %cst_8 : f32 to vector<8x256xf32>
    %cst_9 = arith.constant 0.000000e+00 : f32
    %15 = vector.broadcast %cst_9 : f32 to vector<8x256xf32>
    %cst_10 = arith.constant 0.000000e+00 : f32
    %16 = vector.broadcast %cst_10 : f32 to vector<8x256xf32>
    %c0_11 = arith.constant 0 : index
    %c0_12 = arith.constant 0 : index
    %17 = vector.load %arg13[%c0_11, %c0_12] : memref<64x1024xf32, #tpu.memory_space<vmem>>, vector<8x1024xf32>
    %18 = arith.truncf %13 : vector<8x256xf32> to vector<8x256xbf16>
    %c0_13 = arith.constant 0 : index
    %c0_14 = arith.constant 0 : index
    %19 = vector.load %arg2[%c0_13, %c0_14] : memref<256x1024xbf16, #tpu.memory_space<vmem>>, vector<256x1024xbf16>
    %cst_15 = arith.constant dense<0.000000e+00> : vector<8x1024xf32>
    %20 = tpu.matmul %18, %19, %cst_15 {dimension_numbers = #tpu.dot_dimension_numbers<[1], [0], [0], [1], [0, 0, 1, 1], [], []>} : vector<8x256xbf16>, vector<256x1024xbf16>, vector<8x1024xf32> -> vector<8x1024xf32>
    %21 = arith.addf %17, %20 : vector<8x1024xf32>
    %22 = vector.extract_strided_slice %21 {offsets = [0, 0], sizes = [8, 256], strides = [1, 1]} : vector<8x1024xf32> to vector<8x256xf32>
    %23 = arith.negf %22 : vector<8x256xf32>
    %24 = math.exp %23 : vector<8x256xf32>
    %cst_16 = arith.constant 1.000000e+00 : f32
    %25 = vector.broadcast %cst_16 : f32 to vector<8x256xf32>
    %26 = arith.addf %25, %24 : vector<8x256xf32>
    %27 = arith.divf %25, %26 : vector<8x256xf32>
    %28 = vector.extract_strided_slice %21 {offsets = [0, 256], sizes = [8, 256], strides = [1, 1]} : vector<8x1024xf32> to vector<8x256xf32>
    %29 = arith.negf %28 : vector<8x256xf32>
    %30 = math.exp %29 : vector<8x256xf32>
    %cst_17 = arith.constant 1.000000e+00 : f32
    %31 = vector.broadcast %cst_17 : f32 to vector<8x256xf32>
    %32 = arith.addf %31, %30 : vector<8x256xf32>
    %33 = arith.divf %31, %32 : vector<8x256xf32>
    %34 = vector.extract_strided_slice %21 {offsets = [0, 512], sizes = [8, 256], strides = [1, 1]} : vector<8x1024xf32> to vector<8x256xf32>
    %35 = math.tanh %34 : vector<8x256xf32>
    %36 = vector.extract_strided_slice %21 {offsets = [0, 768], sizes = [8, 256], strides = [1, 1]} : vector<8x1024xf32> to vector<8x256xf32>
    %37 = arith.negf %36 : vector<8x256xf32>
    %38 = math.exp %37 : vector<8x256xf32>
    %cst_18 = arith.constant 1.000000e+00 : f32
    %39 = vector.broadcast %cst_18 : f32 to vector<8x256xf32>
    %40 = arith.addf %39, %38 : vector<8x256xf32>
    %41 = arith.divf %39, %40 : vector<8x256xf32>
    %42 = arith.mulf %33, %14 : vector<8x256xf32>
    %43 = arith.mulf %27, %35 : vector<8x256xf32>
    %44 = arith.addf %42, %43 : vector<8x256xf32>
    %45 = math.tanh %44 : vector<8x256xf32>
    %46 = arith.mulf %41, %45 : vector<8x256xf32>
    %c0_i32_19 = arith.constant 0 : i32
    %47 = tpu.memref_slice %arg17[%c0_i32_19] : memref<3x!tpu.dma_semaphore, #tpu.memory_space<semaphore_mem>> -> memref<1x!tpu.dma_semaphore, #tpu.memory_space<semaphore_mem>>
    %48 = tpu.memref_squeeze %47 : memref<1x!tpu.dma_semaphore, #tpu.memory_space<semaphore_mem>> -> memref<!tpu.dma_semaphore, #tpu.memory_space<semaphore_mem>>
    tpu.wait_dma2 semaphore(%48 : memref<!tpu.dma_semaphore, #tpu.memory_space<semaphore_mem>>) src(%arg4 : memref<512x1024xbf16, #tpu.memory_space<any>>) dst(%arg14 : memref<512x1024xbf16, #tpu.memory_space<vmem>>)
    %49 = tpu.concatenate %46, %15 in 1 : vector<8x256xf32>, vector<8x256xf32> -> vector<8x512xf32>
    %50 = arith.truncf %49 : vector<8x512xf32> to vector<8x512xbf16>
    %c0_20 = arith.constant 0 : index
    %c0_21 = arith.constant 0 : index
    %51 = vector.load %arg14[%c0_20, %c0_21] : memref<512x1024xbf16, #tpu.memory_space<vmem>>, vector<512x1024xbf16>
    %cst_22 = arith.constant dense<0.000000e+00> : vector<8x1024xf32>
    %52 = tpu.matmul %50, %51, %cst_22 {dimension_numbers = #tpu.dot_dimension_numbers<[1], [0], [0], [1], [0, 0, 1, 1], [], []>} : vector<8x512xbf16>, vector<512x1024xbf16>, vector<8x1024xf32> -> vector<8x1024xf32>
    %c0_23 = arith.constant 0 : index
    %c0_24 = arith.constant 0 : index
    %53 = vector.load %arg5[%c0_23, %c0_24] : memref<1x1024xf32, #tpu.memory_space<vmem>>, vector<1x1024xf32>
    %54 = vector.broadcast %53 : vector<1x1024xf32> to vector<8x1024xf32>
    %55 = arith.addf %52, %54 : vector<8x1024xf32>
    %56 = vector.extract_strided_slice %55 {offsets = [0, 0], sizes = [8, 256], strides = [1, 1]} : vector<8x1024xf32> to vector<8x256xf32>
    %57 = arith.negf %56 : vector<8x256xf32>
    %58 = math.exp %57 : vector<8x256xf32>
    %cst_25 = arith.constant 1.000000e+00 : f32
    %59 = vector.broadcast %cst_25 : f32 to vector<8x256xf32>
    %60 = arith.addf %59, %58 : vector<8x256xf32>
    %61 = arith.divf %59, %60 : vector<8x256xf32>
    %62 = vector.extract_strided_slice %55 {offsets = [0, 256], sizes = [8, 256], strides = [1, 1]} : vector<8x1024xf32> to vector<8x256xf32>
    %63 = arith.negf %62 : vector<8x256xf32>
    %64 = math.exp %63 : vector<8x256xf32>
    %cst_26 = arith.constant 1.000000e+00 : f32
    %65 = vector.broadcast %cst_26 : f32 to vector<8x256xf32>
    %66 = arith.addf %65, %64 : vector<8x256xf32>
    %67 = arith.divf %65, %66 : vector<8x256xf32>
    %68 = vector.extract_strided_slice %55 {offsets = [0, 512], sizes = [8, 256], strides = [1, 1]} : vector<8x1024xf32> to vector<8x256xf32>
    %69 = math.tanh %68 : vector<8x256xf32>
    %70 = vector.extract_strided_slice %55 {offsets = [0, 768], sizes = [8, 256], strides = [1, 1]} : vector<8x1024xf32> to vector<8x256xf32>
    %71 = arith.negf %70 : vector<8x256xf32>
    %72 = math.exp %71 : vector<8x256xf32>
    %cst_27 = arith.constant 1.000000e+00 : f32
    %73 = vector.broadcast %cst_27 : f32 to vector<8x256xf32>
    %74 = arith.addf %73, %72 : vector<8x256xf32>
    %75 = arith.divf %73, %74 : vector<8x256xf32>
    %76 = arith.mulf %67, %16 : vector<8x256xf32>
    %77 = arith.mulf %61, %69 : vector<8x256xf32>
    %78 = arith.addf %76, %77 : vector<8x256xf32>
    %79 = math.tanh %78 : vector<8x256xf32>
    %80 = arith.mulf %75, %79 : vector<8x256xf32>
    %c8 = arith.constant 8 : index
    %c0_28 = arith.constant 0 : index
    %81 = vector.load %arg13[%c8, %c0_28] : memref<64x1024xf32, #tpu.memory_space<vmem>>, vector<8x1024xf32>
    %82 = arith.truncf %46 : vector<8x256xf32> to vector<8x256xbf16>
    %c0_29 = arith.constant 0 : index
    %c0_30 = arith.constant 0 : index
    %83 = vector.load %arg2[%c0_29, %c0_30] : memref<256x1024xbf16, #tpu.memory_space<vmem>>, vector<256x1024xbf16>
    %cst_31 = arith.constant dense<0.000000e+00> : vector<8x1024xf32>
    %84 = tpu.matmul %82, %83, %cst_31 {dimension_numbers = #tpu.dot_dimension_numbers<[1], [0], [0], [1], [0, 0, 1, 1], [], []>} : vector<8x256xbf16>, vector<256x1024xbf16>, vector<8x1024xf32> -> vector<8x1024xf32>
    %85 = arith.addf %81, %84 : vector<8x1024xf32>
    %86 = vector.extract_strided_slice %85 {offsets = [0, 0], sizes = [8, 256], strides = [1, 1]} : vector<8x1024xf32> to vector<8x256xf32>
    %87 = arith.negf %86 : vector<8x256xf32>
    %88 = math.exp %87 : vector<8x256xf32>
    %cst_32 = arith.constant 1.000000e+00 : f32
    %89 = vector.broadcast %cst_32 : f32 to vector<8x256xf32>
    %90 = arith.addf %89, %88 : vector<8x256xf32>
    %91 = arith.divf %89, %90 : vector<8x256xf32>
    %92 = vector.extract_strided_slice %85 {offsets = [0, 256], sizes = [8, 256], strides = [1, 1]} : vector<8x1024xf32> to vector<8x256xf32>
    %93 = arith.negf %92 : vector<8x256xf32>
    %94 = math.exp %93 : vector<8x256xf32>
    %cst_33 = arith.constant 1.000000e+00 : f32
    %95 = vector.broadcast %cst_33 : f32 to vector<8x256xf32>
    %96 = arith.addf %95, %94 : vector<8x256xf32>
    %97 = arith.divf %95, %96 : vector<8x256xf32>
    %98 = vector.extract_strided_slice %85 {offsets = [0, 512], sizes = [8, 256], strides = [1, 1]} : vector<8x1024xf32> to vector<8x256xf32>
    %99 = math.tanh %98 : vector<8x256xf32>
    %100 = vector.extract_strided_slice %85 {offsets = [0, 768], sizes = [8, 256], strides = [1, 1]} : vector<8x1024xf32> to vector<8x256xf32>
    %101 = arith.negf %100 : vector<8x256xf32>
    %102 = math.exp %101 : vector<8x256xf32>
    %cst_34 = arith.constant 1.000000e+00 : f32
    %103 = vector.broadcast %cst_34 : f32 to vector<8x256xf32>
    %104 = arith.addf %103, %102 : vector<8x256xf32>
    %105 = arith.divf %103, %104 : vector<8x256xf32>
    %106 = arith.mulf %97, %44 : vector<8x256xf32>
    %107 = arith.mulf %91, %99 : vector<8x256xf32>
    %108 = arith.addf %106, %107 : vector<8x256xf32>
    %109 = math.tanh %108 : vector<8x256xf32>
    %110 = arith.mulf %105, %109 : vector<8x256xf32>
    %111 = tpu.concatenate %110, %80 in 1 : vector<8x256xf32>, vector<8x256xf32> -> vector<8x512xf32>
    %112 = arith.truncf %111 : vector<8x512xf32> to vector<8x512xbf16>
    %c0_35 = arith.constant 0 : index
    %c0_36 = arith.constant 0 : index
    %113 = vector.load %arg14[%c0_35, %c0_36] : memref<512x1024xbf16, #tpu.memory_space<vmem>>, vector<512x1024xbf16>
    %cst_37 = arith.constant dense<0.000000e+00> : vector<8x1024xf32>
    %114 = tpu.matmul %112, %113, %cst_37 {dimension_numbers = #tpu.dot_dimension_numbers<[1], [0], [0], [1], [0, 0, 1, 1], [], []>} : vector<8x512xbf16>, vector<512x1024xbf16>, vector<8x1024xf32> -> vector<8x1024xf32>
    %c0_38 = arith.constant 0 : index
    %c0_39 = arith.constant 0 : index
    %115 = vector.load %arg5[%c0_38, %c0_39] : memref<1x1024xf32, #tpu.memory_space<vmem>>, vector<1x1024xf32>
    %116 = vector.broadcast %115 : vector<1x1024xf32> to vector<8x1024xf32>
    %117 = arith.addf %114, %116 : vector<8x1024xf32>
    %118 = vector.extract_strided_slice %117 {offsets = [0, 0], sizes = [8, 256], strides = [1, 1]} : vector<8x1024xf32> to vector<8x256xf32>
    %119 = arith.negf %118 : vector<8x256xf32>
    %120 = math.exp %119 : vector<8x256xf32>
    %cst_40 = arith.constant 1.000000e+00 : f32
    %121 = vector.broadcast %cst_40 : f32 to vector<8x256xf32>
    %122 = arith.addf %121, %120 : vector<8x256xf32>
    %123 = arith.divf %121, %122 : vector<8x256xf32>
    %124 = vector.extract_strided_slice %117 {offsets = [0, 256], sizes = [8, 256], strides = [1, 1]} : vector<8x1024xf32> to vector<8x256xf32>
    %125 = arith.negf %124 : vector<8x256xf32>
    %126 = math.exp %125 : vector<8x256xf32>
    %cst_41 = arith.constant 1.000000e+00 : f32
    %127 = vector.broadcast %cst_41 : f32 to vector<8x256xf32>
    %128 = arith.addf %127, %126 : vector<8x256xf32>
    %129 = arith.divf %127, %128 : vector<8x256xf32>
    %130 = vector.extract_strided_slice %117 {offsets = [0, 512], sizes = [8, 256], strides = [1, 1]} : vector<8x1024xf32> to vector<8x256xf32>
    %131 = math.tanh %130 : vector<8x256xf32>
    %132 = vector.extract_strided_slice %117 {offsets = [0, 768], sizes = [8, 256], strides = [1, 1]} : vector<8x1024xf32> to vector<8x256xf32>
    %133 = arith.negf %132 : vector<8x256xf32>
    %134 = math.exp %133 : vector<8x256xf32>
    %cst_42 = arith.constant 1.000000e+00 : f32
    %135 = vector.broadcast %cst_42 : f32 to vector<8x256xf32>
    %136 = arith.addf %135, %134 : vector<8x256xf32>
    %137 = arith.divf %135, %136 : vector<8x256xf32>
    %138 = arith.mulf %129, %78 : vector<8x256xf32>
    %139 = arith.mulf %123, %131 : vector<8x256xf32>
    %140 = arith.addf %138, %139 : vector<8x256xf32>
    %141 = math.tanh %140 : vector<8x256xf32>
    %142 = arith.mulf %137, %141 : vector<8x256xf32>
    %c16 = arith.constant 16 : index
    %c0_43 = arith.constant 0 : index
    %143 = vector.load %arg13[%c16, %c0_43] : memref<64x1024xf32, #tpu.memory_space<vmem>>, vector<8x1024xf32>
    %144 = arith.truncf %110 : vector<8x256xf32> to vector<8x256xbf16>
    %c0_44 = arith.constant 0 : index
    %c0_45 = arith.constant 0 : index
    %145 = vector.load %arg2[%c0_44, %c0_45] : memref<256x1024xbf16, #tpu.memory_space<vmem>>, vector<256x1024xbf16>
    %cst_46 = arith.constant dense<0.000000e+00> : vector<8x1024xf32>
    %146 = tpu.matmul %144, %145, %cst_46 {dimension_numbers = #tpu.dot_dimension_numbers<[1], [0], [0], [1], [0, 0, 1, 1], [], []>} : vector<8x256xbf16>, vector<256x1024xbf16>, vector<8x1024xf32> -> vector<8x1024xf32>
    %147 = arith.addf %143, %146 : vector<8x1024xf32>
    %148 = vector.extract_strided_slice %147 {offsets = [0, 0], sizes = [8, 256], strides = [1, 1]} : vector<8x1024xf32> to vector<8x256xf32>
    %149 = arith.negf %148 : vector<8x256xf32>
    %150 = math.exp %149 : vector<8x256xf32>
    %cst_47 = arith.constant 1.000000e+00 : f32
    %151 = vector.broadcast %cst_47 : f32 to vector<8x256xf32>
    %152 = arith.addf %151, %150 : vector<8x256xf32>
    %153 = arith.divf %151, %152 : vector<8x256xf32>
    %154 = vector.extract_strided_slice %147 {offsets = [0, 256], sizes = [8, 256], strides = [1, 1]} : vector<8x1024xf32> to vector<8x256xf32>
    %155 = arith.negf %154 : vector<8x256xf32>
    %156 = math.exp %155 : vector<8x256xf32>
    %cst_48 = arith.constant 1.000000e+00 : f32
    %157 = vector.broadcast %cst_48 : f32 to vector<8x256xf32>
    %158 = arith.addf %157, %156 : vector<8x256xf32>
    %159 = arith.divf %157, %158 : vector<8x256xf32>
    %160 = vector.extract_strided_slice %147 {offsets = [0, 512], sizes = [8, 256], strides = [1, 1]} : vector<8x1024xf32> to vector<8x256xf32>
    %161 = math.tanh %160 : vector<8x256xf32>
    %162 = vector.extract_strided_slice %147 {offsets = [0, 768], sizes = [8, 256], strides = [1, 1]} : vector<8x1024xf32> to vector<8x256xf32>
    %163 = arith.negf %162 : vector<8x256xf32>
    %164 = math.exp %163 : vector<8x256xf32>
    %cst_49 = arith.constant 1.000000e+00 : f32
    %165 = vector.broadcast %cst_49 : f32 to vector<8x256xf32>
    %166 = arith.addf %165, %164 : vector<8x256xf32>
    %167 = arith.divf %165, %166 : vector<8x256xf32>
    %168 = arith.mulf %159, %108 : vector<8x256xf32>
    %169 = arith.mulf %153, %161 : vector<8x256xf32>
    %170 = arith.addf %168, %169 : vector<8x256xf32>
    %171 = math.tanh %170 : vector<8x256xf32>
    %172 = arith.mulf %167, %171 : vector<8x256xf32>
    %173 = tpu.concatenate %172, %142 in 1 : vector<8x256xf32>, vector<8x256xf32> -> vector<8x512xf32>
    %174 = arith.truncf %173 : vector<8x512xf32> to vector<8x512xbf16>
    %c0_50 = arith.constant 0 : index
    %c0_51 = arith.constant 0 : index
    %175 = vector.load %arg14[%c0_50, %c0_51] : memref<512x1024xbf16, #tpu.memory_space<vmem>>, vector<512x1024xbf16>
    %cst_52 = arith.constant dense<0.000000e+00> : vector<8x1024xf32>
    %176 = tpu.matmul %174, %175, %cst_52 {dimension_numbers = #tpu.dot_dimension_numbers<[1], [0], [0], [1], [0, 0, 1, 1], [], []>} : vector<8x512xbf16>, vector<512x1024xbf16>, vector<8x1024xf32> -> vector<8x1024xf32>
    %c0_53 = arith.constant 0 : index
    %c0_54 = arith.constant 0 : index
    %177 = vector.load %arg5[%c0_53, %c0_54] : memref<1x1024xf32, #tpu.memory_space<vmem>>, vector<1x1024xf32>
    %178 = vector.broadcast %177 : vector<1x1024xf32> to vector<8x1024xf32>
    %179 = arith.addf %176, %178 : vector<8x1024xf32>
    %180 = vector.extract_strided_slice %179 {offsets = [0, 0], sizes = [8, 256], strides = [1, 1]} : vector<8x1024xf32> to vector<8x256xf32>
    %181 = arith.negf %180 : vector<8x256xf32>
    %182 = math.exp %181 : vector<8x256xf32>
    %cst_55 = arith.constant 1.000000e+00 : f32
    %183 = vector.broadcast %cst_55 : f32 to vector<8x256xf32>
    %184 = arith.addf %183, %182 : vector<8x256xf32>
    %185 = arith.divf %183, %184 : vector<8x256xf32>
    %186 = vector.extract_strided_slice %179 {offsets = [0, 256], sizes = [8, 256], strides = [1, 1]} : vector<8x1024xf32> to vector<8x256xf32>
    %187 = arith.negf %186 : vector<8x256xf32>
    %188 = math.exp %187 : vector<8x256xf32>
    %cst_56 = arith.constant 1.000000e+00 : f32
    %189 = vector.broadcast %cst_56 : f32 to vector<8x256xf32>
    %190 = arith.addf %189, %188 : vector<8x256xf32>
    %191 = arith.divf %189, %190 : vector<8x256xf32>
    %192 = vector.extract_strided_slice %179 {offsets = [0, 512], sizes = [8, 256], strides = [1, 1]} : vector<8x1024xf32> to vector<8x256xf32>
    %193 = math.tanh %192 : vector<8x256xf32>
    %194 = vector.extract_strided_slice %179 {offsets = [0, 768], sizes = [8, 256], strides = [1, 1]} : vector<8x1024xf32> to vector<8x256xf32>
    %195 = arith.negf %194 : vector<8x256xf32>
    %196 = math.exp %195 : vector<8x256xf32>
    %cst_57 = arith.constant 1.000000e+00 : f32
    %197 = vector.broadcast %cst_57 : f32 to vector<8x256xf32>
    %198 = arith.addf %197, %196 : vector<8x256xf32>
    %199 = arith.divf %197, %198 : vector<8x256xf32>
    %200 = arith.mulf %191, %140 : vector<8x256xf32>
    %201 = arith.mulf %185, %193 : vector<8x256xf32>
    %202 = arith.addf %200, %201 : vector<8x256xf32>
    %203 = math.tanh %202 : vector<8x256xf32>
    %204 = arith.mulf %199, %203 : vector<8x256xf32>
    %c24 = arith.constant 24 : index
    %c0_58 = arith.constant 0 : index
    %205 = vector.load %arg13[%c24, %c0_58] : memref<64x1024xf32, #tpu.memory_space<vmem>>, vector<8x1024xf32>
    %206 = arith.truncf %172 : vector<8x256xf32> to vector<8x256xbf16>
    %c0_59 = arith.constant 0 : index
    %c0_60 = arith.constant 0 : index
    %207 = vector.load %arg2[%c0_59, %c0_60] : memref<256x1024xbf16, #tpu.memory_space<vmem>>, vector<256x1024xbf16>
    %cst_61 = arith.constant dense<0.000000e+00> : vector<8x1024xf32>
    %208 = tpu.matmul %206, %207, %cst_61 {dimension_numbers = #tpu.dot_dimension_numbers<[1], [0], [0], [1], [0, 0, 1, 1], [], []>} : vector<8x256xbf16>, vector<256x1024xbf16>, vector<8x1024xf32> -> vector<8x1024xf32>
    %209 = arith.addf %205, %208 : vector<8x1024xf32>
    %210 = vector.extract_strided_slice %209 {offsets = [0, 0], sizes = [8, 256], strides = [1, 1]} : vector<8x1024xf32> to vector<8x256xf32>
    %211 = arith.negf %210 : vector<8x256xf32>
    %212 = math.exp %211 : vector<8x256xf32>
    %cst_62 = arith.constant 1.000000e+00 : f32
    %213 = vector.broadcast %cst_62 : f32 to vector<8x256xf32>
    %214 = arith.addf %213, %212 : vector<8x256xf32>
    %215 = arith.divf %213, %214 : vector<8x256xf32>
    %216 = vector.extract_strided_slice %209 {offsets = [0, 256], sizes = [8, 256], strides = [1, 1]} : vector<8x1024xf32> to vector<8x256xf32>
    %217 = arith.negf %216 : vector<8x256xf32>
    %218 = math.exp %217 : vector<8x256xf32>
    %cst_63 = arith.constant 1.000000e+00 : f32
    %219 = vector.broadcast %cst_63 : f32 to vector<8x256xf32>
    %220 = arith.addf %219, %218 : vector<8x256xf32>
    %221 = arith.divf %219, %220 : vector<8x256xf32>
    %222 = vector.extract_strided_slice %209 {offsets = [0, 512], sizes = [8, 256], strides = [1, 1]} : vector<8x1024xf32> to vector<8x256xf32>
    %223 = math.tanh %222 : vector<8x256xf32>
    %224 = vector.extract_strided_slice %209 {offsets = [0, 768], sizes = [8, 256], strides = [1, 1]} : vector<8x1024xf32> to vector<8x256xf32>
    %225 = arith.negf %224 : vector<8x256xf32>
    %226 = math.exp %225 : vector<8x256xf32>
    %cst_64 = arith.constant 1.000000e+00 : f32
    %227 = vector.broadcast %cst_64 : f32 to vector<8x256xf32>
    %228 = arith.addf %227, %226 : vector<8x256xf32>
    %229 = arith.divf %227, %228 : vector<8x256xf32>
    %230 = arith.mulf %221, %170 : vector<8x256xf32>
    %231 = arith.mulf %215, %223 : vector<8x256xf32>
    %232 = arith.addf %230, %231 : vector<8x256xf32>
    %233 = math.tanh %232 : vector<8x256xf32>
    %234 = arith.mulf %229, %233 : vector<8x256xf32>
    %235 = tpu.concatenate %234, %204 in 1 : vector<8x256xf32>, vector<8x256xf32> -> vector<8x512xf32>
    %236 = arith.truncf %235 : vector<8x512xf32> to vector<8x512xbf16>
    %c0_65 = arith.constant 0 : index
    %c0_66 = arith.constant 0 : index
    %237 = vector.load %arg14[%c0_65, %c0_66] : memref<512x1024xbf16, #tpu.memory_space<vmem>>, vector<512x1024xbf16>
    %cst_67 = arith.constant dense<0.000000e+00> : vector<8x1024xf32>
    %238 = tpu.matmul %236, %237, %cst_67 {dimension_numbers = #tpu.dot_dimension_numbers<[1], [0], [0], [1], [0, 0, 1, 1], [], []>} : vector<8x512xbf16>, vector<512x1024xbf16>, vector<8x1024xf32> -> vector<8x1024xf32>
    %c0_68 = arith.constant 0 : index
    %c0_69 = arith.constant 0 : index
    %239 = vector.load %arg5[%c0_68, %c0_69] : memref<1x1024xf32, #tpu.memory_space<vmem>>, vector<1x1024xf32>
    %240 = vector.broadcast %239 : vector<1x1024xf32> to vector<8x1024xf32>
    %241 = arith.addf %238, %240 : vector<8x1024xf32>
    %242 = vector.extract_strided_slice %241 {offsets = [0, 0], sizes = [8, 256], strides = [1, 1]} : vector<8x1024xf32> to vector<8x256xf32>
    %243 = arith.negf %242 : vector<8x256xf32>
    %244 = math.exp %243 : vector<8x256xf32>
    %cst_70 = arith.constant 1.000000e+00 : f32
    %245 = vector.broadcast %cst_70 : f32 to vector<8x256xf32>
    %246 = arith.addf %245, %244 : vector<8x256xf32>
    %247 = arith.divf %245, %246 : vector<8x256xf32>
    %248 = vector.extract_strided_slice %241 {offsets = [0, 256], sizes = [8, 256], strides = [1, 1]} : vector<8x1024xf32> to vector<8x256xf32>
    %249 = arith.negf %248 : vector<8x256xf32>
    %250 = math.exp %249 : vector<8x256xf32>
    %cst_71 = arith.constant 1.000000e+00 : f32
    %251 = vector.broadcast %cst_71 : f32 to vector<8x256xf32>
    %252 = arith.addf %251, %250 : vector<8x256xf32>
    %253 = arith.divf %251, %252 : vector<8x256xf32>
    %254 = vector.extract_strided_slice %241 {offsets = [0, 512], sizes = [8, 256], strides = [1, 1]} : vector<8x1024xf32> to vector<8x256xf32>
    %255 = math.tanh %254 : vector<8x256xf32>
    %256 = vector.extract_strided_slice %241 {offsets = [0, 768], sizes = [8, 256], strides = [1, 1]} : vector<8x1024xf32> to vector<8x256xf32>
    %257 = arith.negf %256 : vector<8x256xf32>
    %258 = math.exp %257 : vector<8x256xf32>
    %cst_72 = arith.constant 1.000000e+00 : f32
    %259 = vector.broadcast %cst_72 : f32 to vector<8x256xf32>
    %260 = arith.addf %259, %258 : vector<8x256xf32>
    %261 = arith.divf %259, %260 : vector<8x256xf32>
    %262 = arith.mulf %253, %202 : vector<8x256xf32>
    %263 = arith.mulf %247, %255 : vector<8x256xf32>
    %264 = arith.addf %262, %263 : vector<8x256xf32>
    %265 = math.tanh %264 : vector<8x256xf32>
    %266 = arith.mulf %261, %265 : vector<8x256xf32>
    %c32 = arith.constant 32 : index
    %c0_73 = arith.constant 0 : index
    %267 = vector.load %arg13[%c32, %c0_73] : memref<64x1024xf32, #tpu.memory_space<vmem>>, vector<8x1024xf32>
    %268 = arith.truncf %234 : vector<8x256xf32> to vector<8x256xbf16>
    %c0_74 = arith.constant 0 : index
    %c0_75 = arith.constant 0 : index
    %269 = vector.load %arg2[%c0_74, %c0_75] : memref<256x1024xbf16, #tpu.memory_space<vmem>>, vector<256x1024xbf16>
    %cst_76 = arith.constant dense<0.000000e+00> : vector<8x1024xf32>
    %270 = tpu.matmul %268, %269, %cst_76 {dimension_numbers = #tpu.dot_dimension_numbers<[1], [0], [0], [1], [0, 0, 1, 1], [], []>} : vector<8x256xbf16>, vector<256x1024xbf16>, vector<8x1024xf32> -> vector<8x1024xf32>
    %271 = arith.addf %267, %270 : vector<8x1024xf32>
    %272 = vector.extract_strided_slice %271 {offsets = [0, 0], sizes = [8, 256], strides = [1, 1]} : vector<8x1024xf32> to vector<8x256xf32>
    %273 = arith.negf %272 : vector<8x256xf32>
    %274 = math.exp %273 : vector<8x256xf32>
    %cst_77 = arith.constant 1.000000e+00 : f32
    %275 = vector.broadcast %cst_77 : f32 to vector<8x256xf32>
    %276 = arith.addf %275, %274 : vector<8x256xf32>
    %277 = arith.divf %275, %276 : vector<8x256xf32>
    %278 = vector.extract_strided_slice %271 {offsets = [0, 256], sizes = [8, 256], strides = [1, 1]} : vector<8x1024xf32> to vector<8x256xf32>
    %279 = arith.negf %278 : vector<8x256xf32>
    %280 = math.exp %279 : vector<8x256xf32>
    %cst_78 = arith.constant 1.000000e+00 : f32
    %281 = vector.broadcast %cst_78 : f32 to vector<8x256xf32>
    %282 = arith.addf %281, %280 : vector<8x256xf32>
    %283 = arith.divf %281, %282 : vector<8x256xf32>
    %284 = vector.extract_strided_slice %271 {offsets = [0, 512], sizes = [8, 256], strides = [1, 1]} : vector<8x1024xf32> to vector<8x256xf32>
    %285 = math.tanh %284 : vector<8x256xf32>
    %286 = vector.extract_strided_slice %271 {offsets = [0, 768], sizes = [8, 256], strides = [1, 1]} : vector<8x1024xf32> to vector<8x256xf32>
    %287 = arith.negf %286 : vector<8x256xf32>
    %288 = math.exp %287 : vector<8x256xf32>
    %cst_79 = arith.constant 1.000000e+00 : f32
    %289 = vector.broadcast %cst_79 : f32 to vector<8x256xf32>
    %290 = arith.addf %289, %288 : vector<8x256xf32>
    %291 = arith.divf %289, %290 : vector<8x256xf32>
    %292 = arith.mulf %283, %232 : vector<8x256xf32>
    %293 = arith.mulf %277, %285 : vector<8x256xf32>
    %294 = arith.addf %292, %293 : vector<8x256xf32>
    %295 = math.tanh %294 : vector<8x256xf32>
    %296 = arith.mulf %291, %295 : vector<8x256xf32>
    %297 = tpu.concatenate %296, %266 in 1 : vector<8x256xf32>, vector<8x256xf32> -> vector<8x512xf32>
    %298 = arith.truncf %297 : vector<8x512xf32> to vector<8x512xbf16>
    %c0_80 = arith.constant 0 : index
    %c0_81 = arith.constant 0 : index
    %299 = vector.load %arg14[%c0_80, %c0_81] : memref<512x1024xbf16, #tpu.memory_space<vmem>>, vector<512x1024xbf16>
    %cst_82 = arith.constant dense<0.000000e+00> : vector<8x1024xf32>
    %300 = tpu.matmul %298, %299, %cst_82 {dimension_numbers = #tpu.dot_dimension_numbers<[1], [0], [0], [1], [0, 0, 1, 1], [], []>} : vector<8x512xbf16>, vector<512x1024xbf16>, vector<8x1024xf32> -> vector<8x1024xf32>
    %c0_83 = arith.constant 0 : index
    %c0_84 = arith.constant 0 : index
    %301 = vector.load %arg5[%c0_83, %c0_84] : memref<1x1024xf32, #tpu.memory_space<vmem>>, vector<1x1024xf32>
    %302 = vector.broadcast %301 : vector<1x1024xf32> to vector<8x1024xf32>
    %303 = arith.addf %300, %302 : vector<8x1024xf32>
    %304 = vector.extract_strided_slice %303 {offsets = [0, 0], sizes = [8, 256], strides = [1, 1]} : vector<8x1024xf32> to vector<8x256xf32>
    %305 = arith.negf %304 : vector<8x256xf32>
    %306 = math.exp %305 : vector<8x256xf32>
    %cst_85 = arith.constant 1.000000e+00 : f32
    %307 = vector.broadcast %cst_85 : f32 to vector<8x256xf32>
    %308 = arith.addf %307, %306 : vector<8x256xf32>
    %309 = arith.divf %307, %308 : vector<8x256xf32>
    %310 = vector.extract_strided_slice %303 {offsets = [0, 256], sizes = [8, 256], strides = [1, 1]} : vector<8x1024xf32> to vector<8x256xf32>
    %311 = arith.negf %310 : vector<8x256xf32>
    %312 = math.exp %311 : vector<8x256xf32>
    %cst_86 = arith.constant 1.000000e+00 : f32
    %313 = vector.broadcast %cst_86 : f32 to vector<8x256xf32>
    %314 = arith.addf %313, %312 : vector<8x256xf32>
    %315 = arith.divf %313, %314 : vector<8x256xf32>
    %316 = vector.extract_strided_slice %303 {offsets = [0, 512], sizes = [8, 256], strides = [1, 1]} : vector<8x1024xf32> to vector<8x256xf32>
    %317 = math.tanh %316 : vector<8x256xf32>
    %318 = vector.extract_strided_slice %303 {offsets = [0, 768], sizes = [8, 256], strides = [1, 1]} : vector<8x1024xf32> to vector<8x256xf32>
    %319 = arith.negf %318 : vector<8x256xf32>
    %320 = math.exp %319 : vector<8x256xf32>
    %cst_87 = arith.constant 1.000000e+00 : f32
    %321 = vector.broadcast %cst_87 : f32 to vector<8x256xf32>
    %322 = arith.addf %321, %320 : vector<8x256xf32>
    %323 = arith.divf %321, %322 : vector<8x256xf32>
    %324 = arith.mulf %315, %264 : vector<8x256xf32>
    %325 = arith.mulf %309, %317 : vector<8x256xf32>
    %326 = arith.addf %324, %325 : vector<8x256xf32>
    %327 = math.tanh %326 : vector<8x256xf32>
    %328 = arith.mulf %323, %327 : vector<8x256xf32>
    %c40 = arith.constant 40 : index
    %c0_88 = arith.constant 0 : index
    %329 = vector.load %arg13[%c40, %c0_88] : memref<64x1024xf32, #tpu.memory_space<vmem>>, vector<8x1024xf32>
    %330 = arith.truncf %296 : vector<8x256xf32> to vector<8x256xbf16>
    %c0_89 = arith.constant 0 : index
    %c0_90 = arith.constant 0 : index
    %331 = vector.load %arg2[%c0_89, %c0_90] : memref<256x1024xbf16, #tpu.memory_space<vmem>>, vector<256x1024xbf16>
    %cst_91 = arith.constant dense<0.000000e+00> : vector<8x1024xf32>
    %332 = tpu.matmul %330, %331, %cst_91 {dimension_numbers = #tpu.dot_dimension_numbers<[1], [0], [0], [1], [0, 0, 1, 1], [], []>} : vector<8x256xbf16>, vector<256x1024xbf16>, vector<8x1024xf32> -> vector<8x1024xf32>
    %333 = arith.addf %329, %332 : vector<8x1024xf32>
    %334 = vector.extract_strided_slice %333 {offsets = [0, 0], sizes = [8, 256], strides = [1, 1]} : vector<8x1024xf32> to vector<8x256xf32>
    %335 = arith.negf %334 : vector<8x256xf32>
    %336 = math.exp %335 : vector<8x256xf32>
    %cst_92 = arith.constant 1.000000e+00 : f32
    %337 = vector.broadcast %cst_92 : f32 to vector<8x256xf32>
    %338 = arith.addf %337, %336 : vector<8x256xf32>
    %339 = arith.divf %337, %338 : vector<8x256xf32>
    %340 = vector.extract_strided_slice %333 {offsets = [0, 256], sizes = [8, 256], strides = [1, 1]} : vector<8x1024xf32> to vector<8x256xf32>
    %341 = arith.negf %340 : vector<8x256xf32>
    %342 = math.exp %341 : vector<8x256xf32>
    %cst_93 = arith.constant 1.000000e+00 : f32
    %343 = vector.broadcast %cst_93 : f32 to vector<8x256xf32>
    %344 = arith.addf %343, %342 : vector<8x256xf32>
    %345 = arith.divf %343, %344 : vector<8x256xf32>
    %346 = vector.extract_strided_slice %333 {offsets = [0, 512], sizes = [8, 256], strides = [1, 1]} : vector<8x1024xf32> to vector<8x256xf32>
    %347 = math.tanh %346 : vector<8x256xf32>
    %348 = vector.extract_strided_slice %333 {offsets = [0, 768], sizes = [8, 256], strides = [1, 1]} : vector<8x1024xf32> to vector<8x256xf32>
    %349 = arith.negf %348 : vector<8x256xf32>
    %350 = math.exp %349 : vector<8x256xf32>
    %cst_94 = arith.constant 1.000000e+00 : f32
    %351 = vector.broadcast %cst_94 : f32 to vector<8x256xf32>
    %352 = arith.addf %351, %350 : vector<8x256xf32>
    %353 = arith.divf %351, %352 : vector<8x256xf32>
    %354 = arith.mulf %345, %294 : vector<8x256xf32>
    %355 = arith.mulf %339, %347 : vector<8x256xf32>
    %356 = arith.addf %354, %355 : vector<8x256xf32>
    %357 = math.tanh %356 : vector<8x256xf32>
    %358 = arith.mulf %353, %357 : vector<8x256xf32>
    %359 = tpu.concatenate %358, %328 in 1 : vector<8x256xf32>, vector<8x256xf32> -> vector<8x512xf32>
    %360 = arith.truncf %359 : vector<8x512xf32> to vector<8x512xbf16>
    %c0_95 = arith.constant 0 : index
    %c0_96 = arith.constant 0 : index
    %361 = vector.load %arg14[%c0_95, %c0_96] : memref<512x1024xbf16, #tpu.memory_space<vmem>>, vector<512x1024xbf16>
    %cst_97 = arith.constant dense<0.000000e+00> : vector<8x1024xf32>
    %362 = tpu.matmul %360, %361, %cst_97 {dimension_numbers = #tpu.dot_dimension_numbers<[1], [0], [0], [1], [0, 0, 1, 1], [], []>} : vector<8x512xbf16>, vector<512x1024xbf16>, vector<8x1024xf32> -> vector<8x1024xf32>
    %c0_98 = arith.constant 0 : index
    %c0_99 = arith.constant 0 : index
    %363 = vector.load %arg5[%c0_98, %c0_99] : memref<1x1024xf32, #tpu.memory_space<vmem>>, vector<1x1024xf32>
    %364 = vector.broadcast %363 : vector<1x1024xf32> to vector<8x1024xf32>
    %365 = arith.addf %362, %364 : vector<8x1024xf32>
    %366 = vector.extract_strided_slice %365 {offsets = [0, 0], sizes = [8, 256], strides = [1, 1]} : vector<8x1024xf32> to vector<8x256xf32>
    %367 = arith.negf %366 : vector<8x256xf32>
    %368 = math.exp %367 : vector<8x256xf32>
    %cst_100 = arith.constant 1.000000e+00 : f32
    %369 = vector.broadcast %cst_100 : f32 to vector<8x256xf32>
    %370 = arith.addf %369, %368 : vector<8x256xf32>
    %371 = arith.divf %369, %370 : vector<8x256xf32>
    %372 = vector.extract_strided_slice %365 {offsets = [0, 256], sizes = [8, 256], strides = [1, 1]} : vector<8x1024xf32> to vector<8x256xf32>
    %373 = arith.negf %372 : vector<8x256xf32>
    %374 = math.exp %373 : vector<8x256xf32>
    %cst_101 = arith.constant 1.000000e+00 : f32
    %375 = vector.broadcast %cst_101 : f32 to vector<8x256xf32>
    %376 = arith.addf %375, %374 : vector<8x256xf32>
    %377 = arith.divf %375, %376 : vector<8x256xf32>
    %378 = vector.extract_strided_slice %365 {offsets = [0, 512], sizes = [8, 256], strides = [1, 1]} : vector<8x1024xf32> to vector<8x256xf32>
    %379 = math.tanh %378 : vector<8x256xf32>
    %380 = vector.extract_strided_slice %365 {offsets = [0, 768], sizes = [8, 256], strides = [1, 1]} : vector<8x1024xf32> to vector<8x256xf32>
    %381 = arith.negf %380 : vector<8x256xf32>
    %382 = math.exp %381 : vector<8x256xf32>
    %cst_102 = arith.constant 1.000000e+00 : f32
    %383 = vector.broadcast %cst_102 : f32 to vector<8x256xf32>
    %384 = arith.addf %383, %382 : vector<8x256xf32>
    %385 = arith.divf %383, %384 : vector<8x256xf32>
    %386 = arith.mulf %377, %326 : vector<8x256xf32>
    %387 = arith.mulf %371, %379 : vector<8x256xf32>
    %388 = arith.addf %386, %387 : vector<8x256xf32>
    %389 = math.tanh %388 : vector<8x256xf32>
    %390 = arith.mulf %385, %389 : vector<8x256xf32>
    %c48 = arith.constant 48 : index
    %c0_103 = arith.constant 0 : index
    %391 = vector.load %arg13[%c48, %c0_103] : memref<64x1024xf32, #tpu.memory_space<vmem>>, vector<8x1024xf32>
    %392 = arith.truncf %358 : vector<8x256xf32> to vector<8x256xbf16>
    %c0_104 = arith.constant 0 : index
    %c0_105 = arith.constant 0 : index
    %393 = vector.load %arg2[%c0_104, %c0_105] : memref<256x1024xbf16, #tpu.memory_space<vmem>>, vector<256x1024xbf16>
    %cst_106 = arith.constant dense<0.000000e+00> : vector<8x1024xf32>
    %394 = tpu.matmul %392, %393, %cst_106 {dimension_numbers = #tpu.dot_dimension_numbers<[1], [0], [0], [1], [0, 0, 1, 1], [], []>} : vector<8x256xbf16>, vector<256x1024xbf16>, vector<8x1024xf32> -> vector<8x1024xf32>
    %395 = arith.addf %391, %394 : vector<8x1024xf32>
    %396 = vector.extract_strided_slice %395 {offsets = [0, 0], sizes = [8, 256], strides = [1, 1]} : vector<8x1024xf32> to vector<8x256xf32>
    %397 = arith.negf %396 : vector<8x256xf32>
    %398 = math.exp %397 : vector<8x256xf32>
    %cst_107 = arith.constant 1.000000e+00 : f32
    %399 = vector.broadcast %cst_107 : f32 to vector<8x256xf32>
    %400 = arith.addf %399, %398 : vector<8x256xf32>
    %401 = arith.divf %399, %400 : vector<8x256xf32>
    %402 = vector.extract_strided_slice %395 {offsets = [0, 256], sizes = [8, 256], strides = [1, 1]} : vector<8x1024xf32> to vector<8x256xf32>
    %403 = arith.negf %402 : vector<8x256xf32>
    %404 = math.exp %403 : vector<8x256xf32>
    %cst_108 = arith.constant 1.000000e+00 : f32
    %405 = vector.broadcast %cst_108 : f32 to vector<8x256xf32>
    %406 = arith.addf %405, %404 : vector<8x256xf32>
    %407 = arith.divf %405, %406 : vector<8x256xf32>
    %408 = vector.extract_strided_slice %395 {offsets = [0, 512], sizes = [8, 256], strides = [1, 1]} : vector<8x1024xf32> to vector<8x256xf32>
    %409 = math.tanh %408 : vector<8x256xf32>
    %410 = vector.extract_strided_slice %395 {offsets = [0, 768], sizes = [8, 256], strides = [1, 1]} : vector<8x1024xf32> to vector<8x256xf32>
    %411 = arith.negf %410 : vector<8x256xf32>
    %412 = math.exp %411 : vector<8x256xf32>
    %cst_109 = arith.constant 1.000000e+00 : f32
    %413 = vector.broadcast %cst_109 : f32 to vector<8x256xf32>
    %414 = arith.addf %413, %412 : vector<8x256xf32>
    %415 = arith.divf %413, %414 : vector<8x256xf32>
    %416 = arith.mulf %407, %356 : vector<8x256xf32>
    %417 = arith.mulf %401, %409 : vector<8x256xf32>
    %418 = arith.addf %416, %417 : vector<8x256xf32>
    %419 = math.tanh %418 : vector<8x256xf32>
    %420 = arith.mulf %415, %419 : vector<8x256xf32>
    %421 = tpu.concatenate %420, %390 in 1 : vector<8x256xf32>, vector<8x256xf32> -> vector<8x512xf32>
    %422 = arith.truncf %421 : vector<8x512xf32> to vector<8x512xbf16>
    %c0_110 = arith.constant 0 : index
    %c0_111 = arith.constant 0 : index
    %423 = vector.load %arg14[%c0_110, %c0_111] : memref<512x1024xbf16, #tpu.memory_space<vmem>>, vector<512x1024xbf16>
    %cst_112 = arith.constant dense<0.000000e+00> : vector<8x1024xf32>
    %424 = tpu.matmul %422, %423, %cst_112 {dimension_numbers = #tpu.dot_dimension_numbers<[1], [0], [0], [1], [0, 0, 1, 1], [], []>} : vector<8x512xbf16>, vector<512x1024xbf16>, vector<8x1024xf32> -> vector<8x1024xf32>
    %c0_113 = arith.constant 0 : index
    %c0_114 = arith.constant 0 : index
    %425 = vector.load %arg5[%c0_113, %c0_114] : memref<1x1024xf32, #tpu.memory_space<vmem>>, vector<1x1024xf32>
    %426 = vector.broadcast %425 : vector<1x1024xf32> to vector<8x1024xf32>
    %427 = arith.addf %424, %426 : vector<8x1024xf32>
    %428 = vector.extract_strided_slice %427 {offsets = [0, 0], sizes = [8, 256], strides = [1, 1]} : vector<8x1024xf32> to vector<8x256xf32>
    %429 = arith.negf %428 : vector<8x256xf32>
    %430 = math.exp %429 : vector<8x256xf32>
    %cst_115 = arith.constant 1.000000e+00 : f32
    %431 = vector.broadcast %cst_115 : f32 to vector<8x256xf32>
    %432 = arith.addf %431, %430 : vector<8x256xf32>
    %433 = arith.divf %431, %432 : vector<8x256xf32>
    %434 = vector.extract_strided_slice %427 {offsets = [0, 256], sizes = [8, 256], strides = [1, 1]} : vector<8x1024xf32> to vector<8x256xf32>
    %435 = arith.negf %434 : vector<8x256xf32>
    %436 = math.exp %435 : vector<8x256xf32>
    %cst_116 = arith.constant 1.000000e+00 : f32
    %437 = vector.broadcast %cst_116 : f32 to vector<8x256xf32>
    %438 = arith.addf %437, %436 : vector<8x256xf32>
    %439 = arith.divf %437, %438 : vector<8x256xf32>
    %440 = vector.extract_strided_slice %427 {offsets = [0, 512], sizes = [8, 256], strides = [1, 1]} : vector<8x1024xf32> to vector<8x256xf32>
    %441 = math.tanh %440 : vector<8x256xf32>
    %442 = vector.extract_strided_slice %427 {offsets = [0, 768], sizes = [8, 256], strides = [1, 1]} : vector<8x1024xf32> to vector<8x256xf32>
    %443 = arith.negf %442 : vector<8x256xf32>
    %444 = math.exp %443 : vector<8x256xf32>
    %cst_117 = arith.constant 1.000000e+00 : f32
    %445 = vector.broadcast %cst_117 : f32 to vector<8x256xf32>
    %446 = arith.addf %445, %444 : vector<8x256xf32>
    %447 = arith.divf %445, %446 : vector<8x256xf32>
    %448 = arith.mulf %439, %388 : vector<8x256xf32>
    %449 = arith.mulf %433, %441 : vector<8x256xf32>
    %450 = arith.addf %448, %449 : vector<8x256xf32>
    %451 = math.tanh %450 : vector<8x256xf32>
    %452 = arith.mulf %447, %451 : vector<8x256xf32>
    %c56 = arith.constant 56 : index
    %c0_118 = arith.constant 0 : index
    %453 = vector.load %arg13[%c56, %c0_118] : memref<64x1024xf32, #tpu.memory_space<vmem>>, vector<8x1024xf32>
    %454 = arith.truncf %420 : vector<8x256xf32> to vector<8x256xbf16>
    %c0_119 = arith.constant 0 : index
    %c0_120 = arith.constant 0 : index
    %455 = vector.load %arg2[%c0_119, %c0_120] : memref<256x1024xbf16, #tpu.memory_space<vmem>>, vector<256x1024xbf16>
    %cst_121 = arith.constant dense<0.000000e+00> : vector<8x1024xf32>
    %456 = tpu.matmul %454, %455, %cst_121 {dimension_numbers = #tpu.dot_dimension_numbers<[1], [0], [0], [1], [0, 0, 1, 1], [], []>} : vector<8x256xbf16>, vector<256x1024xbf16>, vector<8x1024xf32> -> vector<8x1024xf32>
    %457 = arith.addf %453, %456 : vector<8x1024xf32>
    %458 = vector.extract_strided_slice %457 {offsets = [0, 0], sizes = [8, 256], strides = [1, 1]} : vector<8x1024xf32> to vector<8x256xf32>
    %459 = arith.negf %458 : vector<8x256xf32>
    %460 = math.exp %459 : vector<8x256xf32>
    %cst_122 = arith.constant 1.000000e+00 : f32
    %461 = vector.broadcast %cst_122 : f32 to vector<8x256xf32>
    %462 = arith.addf %461, %460 : vector<8x256xf32>
    %463 = arith.divf %461, %462 : vector<8x256xf32>
    %464 = vector.extract_strided_slice %457 {offsets = [0, 256], sizes = [8, 256], strides = [1, 1]} : vector<8x1024xf32> to vector<8x256xf32>
    %465 = arith.negf %464 : vector<8x256xf32>
    %466 = math.exp %465 : vector<8x256xf32>
    %cst_123 = arith.constant 1.000000e+00 : f32
    %467 = vector.broadcast %cst_123 : f32 to vector<8x256xf32>
    %468 = arith.addf %467, %466 : vector<8x256xf32>
    %469 = arith.divf %467, %468 : vector<8x256xf32>
    %470 = vector.extract_strided_slice %457 {offsets = [0, 512], sizes = [8, 256], strides = [1, 1]} : vector<8x1024xf32> to vector<8x256xf32>
    %471 = math.tanh %470 : vector<8x256xf32>
    %472 = vector.extract_strided_slice %457 {offsets = [0, 768], sizes = [8, 256], strides = [1, 1]} : vector<8x1024xf32> to vector<8x256xf32>
    %473 = arith.negf %472 : vector<8x256xf32>
    %474 = math.exp %473 : vector<8x256xf32>
    %cst_124 = arith.constant 1.000000e+00 : f32
    %475 = vector.broadcast %cst_124 : f32 to vector<8x256xf32>
    %476 = arith.addf %475, %474 : vector<8x256xf32>
    %477 = arith.divf %475, %476 : vector<8x256xf32>
    %478 = arith.mulf %469, %418 : vector<8x256xf32>
    %479 = arith.mulf %463, %471 : vector<8x256xf32>
    %480 = arith.addf %478, %479 : vector<8x256xf32>
    %481 = math.tanh %480 : vector<8x256xf32>
    %482 = arith.mulf %477, %481 : vector<8x256xf32>
    %483 = tpu.concatenate %482, %452 in 1 : vector<8x256xf32>, vector<8x256xf32> -> vector<8x512xf32>
    %484 = arith.truncf %483 : vector<8x512xf32> to vector<8x512xbf16>
    %c0_125 = arith.constant 0 : index
    %c0_126 = arith.constant 0 : index
    %485 = vector.load %arg14[%c0_125, %c0_126] : memref<512x1024xbf16, #tpu.memory_space<vmem>>, vector<512x1024xbf16>
    %cst_127 = arith.constant dense<0.000000e+00> : vector<8x1024xf32>
    %486 = tpu.matmul %484, %485, %cst_127 {dimension_numbers = #tpu.dot_dimension_numbers<[1], [0], [0], [1], [0, 0, 1, 1], [], []>} : vector<8x512xbf16>, vector<512x1024xbf16>, vector<8x1024xf32> -> vector<8x1024xf32>
    %c0_128 = arith.constant 0 : index
    %c0_129 = arith.constant 0 : index
    %487 = vector.load %arg5[%c0_128, %c0_129] : memref<1x1024xf32, #tpu.memory_space<vmem>>, vector<1x1024xf32>
    %488 = vector.broadcast %487 : vector<1x1024xf32> to vector<8x1024xf32>
    %489 = arith.addf %486, %488 : vector<8x1024xf32>
    %490 = vector.extract_strided_slice %489 {offsets = [0, 0], sizes = [8, 256], strides = [1, 1]} : vector<8x1024xf32> to vector<8x256xf32>
    %491 = arith.negf %490 : vector<8x256xf32>
    %492 = math.exp %491 : vector<8x256xf32>
    %cst_130 = arith.constant 1.000000e+00 : f32
    %493 = vector.broadcast %cst_130 : f32 to vector<8x256xf32>
    %494 = arith.addf %493, %492 : vector<8x256xf32>
    %495 = arith.divf %493, %494 : vector<8x256xf32>
    %496 = vector.extract_strided_slice %489 {offsets = [0, 256], sizes = [8, 256], strides = [1, 1]} : vector<8x1024xf32> to vector<8x256xf32>
    %497 = arith.negf %496 : vector<8x256xf32>
    %498 = math.exp %497 : vector<8x256xf32>
    %cst_131 = arith.constant 1.000000e+00 : f32
    %499 = vector.broadcast %cst_131 : f32 to vector<8x256xf32>
    %500 = arith.addf %499, %498 : vector<8x256xf32>
    %501 = arith.divf %499, %500 : vector<8x256xf32>
    %502 = vector.extract_strided_slice %489 {offsets = [0, 512], sizes = [8, 256], strides = [1, 1]} : vector<8x1024xf32> to vector<8x256xf32>
    %503 = math.tanh %502 : vector<8x256xf32>
    %504 = vector.extract_strided_slice %489 {offsets = [0, 768], sizes = [8, 256], strides = [1, 1]} : vector<8x1024xf32> to vector<8x256xf32>
    %505 = arith.negf %504 : vector<8x256xf32>
    %506 = math.exp %505 : vector<8x256xf32>
    %cst_132 = arith.constant 1.000000e+00 : f32
    %507 = vector.broadcast %cst_132 : f32 to vector<8x256xf32>
    %508 = arith.addf %507, %506 : vector<8x256xf32>
    %509 = arith.divf %507, %508 : vector<8x256xf32>
    %510 = arith.mulf %501, %450 : vector<8x256xf32>
    %511 = arith.mulf %495, %503 : vector<8x256xf32>
    %512 = arith.addf %510, %511 : vector<8x256xf32>
    %513 = math.tanh %512 : vector<8x256xf32>
    %514 = arith.mulf %509, %513 : vector<8x256xf32>
    %c1_i32_133 = arith.constant 1 : i32
    %515 = tpu.memref_slice %arg17[%c1_i32_133] : memref<3x!tpu.dma_semaphore, #tpu.memory_space<semaphore_mem>> -> memref<1x!tpu.dma_semaphore, #tpu.memory_space<semaphore_mem>>
    %516 = tpu.memref_squeeze %515 : memref<1x!tpu.dma_semaphore, #tpu.memory_space<semaphore_mem>> -> memref<!tpu.dma_semaphore, #tpu.memory_space<semaphore_mem>>
    tpu.wait_dma2 semaphore(%516 : memref<!tpu.dma_semaphore, #tpu.memory_space<semaphore_mem>>) src(%arg6 : memref<256x512xbf16, #tpu.memory_space<any>>) dst(%arg15 : memref<256x512xbf16, #tpu.memory_space<vmem>>)
    %c2_i32_134 = arith.constant 2 : i32
    %517 = tpu.memref_slice %arg17[%c2_i32_134] : memref<3x!tpu.dma_semaphore, #tpu.memory_space<semaphore_mem>> -> memref<1x!tpu.dma_semaphore, #tpu.memory_space<semaphore_mem>>
    %518 = tpu.memref_squeeze %517 : memref<1x!tpu.dma_semaphore, #tpu.memory_space<semaphore_mem>> -> memref<!tpu.dma_semaphore, #tpu.memory_space<semaphore_mem>>
    tpu.wait_dma2 semaphore(%518 : memref<!tpu.dma_semaphore, #tpu.memory_space<semaphore_mem>>) src(%arg8 : memref<512x256xbf16, #tpu.memory_space<any>>) dst(%arg16 : memref<512x256xbf16, #tpu.memory_space<vmem>>)
    %519 = arith.truncf %514 : vector<8x256xf32> to vector<8x256xbf16>
    %c0_135 = arith.constant 0 : index
    %c0_136 = arith.constant 0 : index
    %520 = vector.load %arg15[%c0_135, %c0_136] : memref<256x512xbf16, #tpu.memory_space<vmem>>, vector<256x512xbf16>
    %cst_137 = arith.constant dense<0.000000e+00> : vector<8x512xf32>
    %521 = tpu.matmul %519, %520, %cst_137 {dimension_numbers = #tpu.dot_dimension_numbers<[1], [0], [0], [1], [0, 0, 1, 1], [], []>} : vector<8x256xbf16>, vector<256x512xbf16>, vector<8x512xf32> -> vector<8x512xf32>
    %c0_138 = arith.constant 0 : index
    %c0_139 = arith.constant 0 : index
    %522 = vector.load %arg7[%c0_138, %c0_139] : memref<1x512xf32, #tpu.memory_space<vmem>>, vector<1x512xf32>
    %523 = vector.broadcast %522 : vector<1x512xf32> to vector<8x512xf32>
    %524 = arith.addf %521, %523 : vector<8x512xf32>
    %cst_140 = arith.constant 0.000000e+00 : f32
    %525 = vector.broadcast %cst_140 : f32 to vector<8x512xf32>
    %526 = arith.maximumf %524, %525 : vector<8x512xf32>
    %527 = arith.truncf %526 : vector<8x512xf32> to vector<8x512xbf16>
    %c0_141 = arith.constant 0 : index
    %c0_142 = arith.constant 0 : index
    %528 = vector.load %arg16[%c0_141, %c0_142] : memref<512x256xbf16, #tpu.memory_space<vmem>>, vector<512x256xbf16>
    %cst_143 = arith.constant dense<0.000000e+00> : vector<8x256xf32>
    %529 = tpu.matmul %527, %528, %cst_143 {dimension_numbers = #tpu.dot_dimension_numbers<[1], [0], [0], [1], [0, 0, 1, 1], [], []>} : vector<8x512xbf16>, vector<512x256xbf16>, vector<8x256xf32> -> vector<8x256xf32>
    %c0_144 = arith.constant 0 : index
    %c0_145 = arith.constant 0 : index
    %530 = vector.load %arg9[%c0_144, %c0_145] : memref<1x256xf32, #tpu.memory_space<vmem>>, vector<1x256xf32>
    %531 = vector.broadcast %530 : vector<1x256xf32> to vector<8x256xf32>
    %532 = arith.addf %529, %531 : vector<8x256xf32>
    %cst_146 = arith.constant 0.000000e+00 : f32
    %533 = vector.broadcast %cst_146 : f32 to vector<8x256xf32>
    %534 = arith.maximumf %532, %533 : vector<8x256xf32>
    %c0_147 = arith.constant 0 : index
    %c0_148 = arith.constant 0 : index
    %535 = vector.load %arg10[%c0_147, %c0_148] : memref<1x256xf32, #tpu.memory_space<vmem>>, vector<1x256xf32>
    %536 = vector.broadcast %535 : vector<1x256xf32> to vector<8x256xf32>
    %537 = arith.mulf %534, %536 : vector<8x256xf32>
    %cst_149 = arith.constant dense<0.000000e+00> : vector<8xf32>
    %538 = vector.multi_reduction <add>, %537, %cst_149 [1] : vector<8x256xf32> to vector<8xf32>
    %539 = vector.shape_cast %538 : vector<8xf32> to vector<8x1xf32>
    %c0_150 = arith.constant 0 : index
    %540 = memref.load %arg11[%c0_150] : memref<1xf32, #tpu.memory_space<smem>>
    %541 = vector.broadcast %540 : f32 to vector<8x1xf32>
    %542 = arith.addf %539, %541 : vector<8x1xf32>
    %543 = vector.shape_cast %542 : vector<8x1xf32> to vector<8x1xf32>
    %544 = vector.broadcast %543 : vector<8x1xf32> to vector<8x128xf32>
    %c0_151 = arith.constant 0 : index
    %c0_152 = arith.constant 0 : index
    %545 = vector.load %arg12[%c0_151, %c0_152] : memref<8x128xf32, #tpu.memory_space<vmem>>, vector<8x128xf32>
    tpu.vector_store %arg12[%c0_151, %c0_152], %544 {strides = array<i32>} : memref<8x128xf32, #tpu.memory_space<vmem>>, vector<8x128xf32>,
    return
  }
}

</mosaic_0001>

<llo_original>
// kernel: forecast_lstm_forward.1
$region0: #{forecast_lstm_forward.1}
  #allocation0 [shape = 'u32[]', space=smem, size = 0x4, offset = 0x4, fixed_abs, tag = 'smem constant byte address 0x4 - core index']
  #allocation1 [shape = 'u32[144,128]{1,0:T(1,128)}', space=vmem, size = 0x12000, scoped, tag = 'internal scratch']
  #allocation2 [shape = 'f32[64,1024]{1,0:T(8,128)}', space=vmem, size = 0x40000, scoped, tag = 'scratch operand']
  #allocation3 [shape = 'bf16[512,1024]{1,0:T(16,128)(2,1)}', space=vmem, size = 0x100000, scoped, tag = 'scratch operand']
  #allocation4 [shape = 'bf16[256,512]{1,0:T(16,128)(2,1)}', space=vmem, size = 0x40000, scoped, tag = 'scratch operand']
  #allocation5 [shape = 'bf16[512,256]{1,0:T(16,128)(2,1)}', space=vmem, size = 0x40000, scoped, tag = 'scratch operand']
  #allocation6 [shape = 's32[3]{0}', space=sflag, size = 0xc, scoped, tag = 'scratch operand']
  #allocation7 [shape = 'f32[1]{0:T(128)S(6)}', space=smem, size = 0x200, scoped, tag = 'scoped memory for forecast_lstm_forward.1']
  #allocation10 [shape = 's32[]', space=sflag, size = 0x4, offset = 0, fixed_abs, tag = 'sflag constant byte address 0x0 - dummy sync flag']
  #allocation12 [shape = 's32[]', space=sflag, size = 0x4, offset = 0, fixed_abs, tag = 'sflag constant byte address 0x0 - dummy sync flag']
  #allocation14 [shape = 's32[]', space=sflag, size = 0x4, offset = 0, fixed_abs, tag = 'sflag constant byte address 0x0 - dummy sync flag']
  %s0 = inlined_call_operand.vmem [shape: f32[64,8], index: 0, kind: input, shape index: {}]
  %s1 = inlined_call_operand.vmem [shape: f32[8,1024], index: 1, kind: input, shape index: {}]
  %s2 = inlined_call_operand.hbm [shape: bf16[256,1024], index: 2, kind: input, shape index: {}]
  %s3 = inlined_call_operand.vmem [shape: f32[1,1024], index: 3, kind: input, shape index: {}]
  %s4 = inlined_call_operand.hbm [shape: bf16[512,1024], index: 4, kind: input, shape index: {}]
  %s5 = inlined_call_operand.vmem [shape: f32[1,1024], index: 5, kind: input, shape index: {}]
  %s6 = inlined_call_operand.hbm [shape: bf16[256,512], index: 6, kind: input, shape index: {}]
  %s7 = inlined_call_operand.vmem [shape: f32[1,512], index: 7, kind: input, shape index: {}]
  %s8 = inlined_call_operand.hbm [shape: bf16[512,256], index: 8, kind: input, shape index: {}]
  %s9 = inlined_call_operand.vmem [shape: f32[1,256], index: 9, kind: input, shape index: {}]
  %s10 = inlined_call_operand.vmem [shape: f32[1,256], index: 10, kind: input, shape index: {}]
  %s11 = inlined_call_operand.<no memory space> [shape: f32[1], index: 11, kind: input, shape index: {}]
  %s12 = inlined_call_operand.vmem [shape: f32[8,128], index: 12, kind: output, shape index: {}]
  %s13 = sld [smem:[#allocation0]]
  $region50: #{forecast_lstm_forward.1} parent=0
    _
  %s15 = ssub.s32 1, %s13
  %s16 = scalar_select 0, %s15, %s13
  %17 = sst [smem:[#allocation7]] %s11
  $region1: #{forecast_lstm_forward.1} parent=0
    #allocation8 [shape = 'u8[524288]{0}', space=vmem, size = 0x80000, scoped, tag = 'input window, operand 2, single buffered']
    #allocation9 [shape = 's32[1]{0}', space=sflag, size = 0x4, scoped, tag = 'scoped memory for forecast_lstm_forward.1']
    #allocation11 [shape = 'u32[9]{0}', space=smem, size = 0x24, scoped, tag = 'DMA stride descriptor']
    #allocation13 [shape = 'u32[9]{0}', space=smem, size = 0x24, scoped, tag = 'DMA stride descriptor']
    #allocation15 [shape = 'u32[9]{0}', space=smem, size = 0x24, scoped, tag = 'DMA stride descriptor']
    %18 = vsyncpa [#allocation9], 0
    // Predicated region
    $region2: #{forecast_lstm_forward.1} parent=1 // pred_check
      _
    $region3: #{forecast_lstm_forward.1} parent=1 // pred_check_branch
      %20 = sbr.rel (0) target = $region5
    $region4: #{forecast_lstm_forward.1} parent=1 // pred_region
      _
    $region5: #{forecast_lstm_forward.1} parent=1 // pred_fallthru
      _
    // Predicated region
    $region6: #{forecast_lstm_forward.1} parent=1 // pred_check
      _
    $region7: #{forecast_lstm_forward.1} parent=1 // pred_check_branch
      %22 = sbr.rel (0) target = $region9
    $region8: #{forecast_lstm_forward.1} parent=1 // pred_region
      _
    $region9: #{forecast_lstm_forward.1} parent=1 // pred_fallthru
      _
    // Predicated region
    $region10: #{forecast_lstm_forward.1} parent=1 // pred_check
      _
    $region11: #{forecast_lstm_forward.1} parent=1 // pred_check_branch
      %24 = sbr.rel (0) target = $region13
    $region12: #{forecast_lstm_forward.1} parent=1 // pred_region
      %s26 = ssub.s32 16384, 16384
      %27 = vsyncadd [#allocation9], %s26
      %s28 = sshll.u32 [#allocation8], 4
      %s29 = int_to_ptr.vmem [resolvable:$true] %s28
      %34 = dma.hbm_to_vmem [thread:$0]  %s2, 16384, %s29, [#allocation9], 512, 512, 32
    $region13: #{forecast_lstm_forward.1} parent=1 // pred_fallthru
      _
    // Predicated region
    $region14: #{forecast_lstm_forward.1} parent=1 // pred_check
      _
    $region15: #{forecast_lstm_forward.1} parent=1 // pred_check_branch
      %36 = sbr.rel (0) target = $region17
    $region16: #{forecast_lstm_forward.1} parent=1 // pred_region
      _
    $region17: #{forecast_lstm_forward.1} parent=1 // pred_fallthru
      _
    // Predicated region
    $region18: #{forecast_lstm_forward.1} parent=1 // pred_check
      _
    $region19: #{forecast_lstm_forward.1} parent=1 // pred_check_branch
      %38 = sbr.rel (0) target = $region21
    $region20: #{forecast_lstm_forward.1} parent=1 // pred_region
      _
    $region21: #{forecast_lstm_forward.1} parent=1 // pred_fallthru
      _
    // Predicated region
    $region22: #{forecast_lstm_forward.1} parent=1 // pred_check
      _
    $region23: #{forecast_lstm_forward.1} parent=1 // pred_check_branch
      %40 = sbr.rel (0) target = $region25
    $region24: #{forecast_lstm_forward.1} parent=1 // pred_region
      _
    $region25: #{forecast_lstm_forward.1} parent=1 // pred_fallthru
      _
    // Predicated region
    $region26: #{forecast_lstm_forward.1} parent=1 // pred_check
      _
    $region27: #{forecast_lstm_forward.1} parent=1 // pred_check_branch
      %42 = sbr.rel (0) target = $region29
    $region28: #{forecast_lstm_forward.1} parent=1 // pred_region
      _
    $region29: #{forecast_lstm_forward.1} parent=1 // pred_fallthru
      _
    // Predicated region
    $region30: #{forecast_lstm_forward.1} parent=1 // pred_check
      _
    $region31: #{forecast_lstm_forward.1} parent=1 // pred_check_branch
      %44 = sbr.rel (0) target = $region33
    $region32: #{forecast_lstm_forward.1} parent=1 // pred_region
      _
    $region33: #{forecast_lstm_forward.1} parent=1 // pred_fallthru
      _
    // Predicated region
    $region34: #{forecast_lstm_forward.1} parent=1 // pred_check
      _
    $region35: #{forecast_lstm_forward.1} parent=1 // pred_check_branch
      %46 = sbr.rel (0) target = $region37
    $region36: #{forecast_lstm_forward.1} parent=1 // pred_region
      _
    $region37: #{forecast_lstm_forward.1} parent=1 // pred_fallthru
      _
    // Predicated region
    $region38: #{forecast_lstm_forward.1} parent=1 // pred_check
      _
    $region39: #{forecast_lstm_forward.1} parent=1 // pred_check_branch
      %48 = sbr.rel (0) target = $region41
    $region40: #{forecast_lstm_forward.1} parent=1 // pred_region
      %49 = dma.done [#allocation9], 16384
    $region41: #{forecast_lstm_forward.1} parent=1 // pred_fallthru
      _
    %s52 = sshll.u32 1, 14
    %s53 = sxor.u32 4294967295, %s52
    %s55 = sld [smem:[#allocation0]]
    %s56 = sadd.s32 2, %s55
    %s58 = sshll.u32 7, 26
    %s59 = sxor.u32 4294967295, %s58
    %s60 = sand.u32 0, %s59
    %s61 = sshll.u32 %s56, 26
    %s62 = sor.u32 %s60, %s61
    %s63 = sshll.u32 [#allocation3], 4
    %s64 = int_to_ptr.vmem [resolvable:$true] %s63
    %67 = sst [smem:[#allocation11]] 1024
    %s68 = scalar_lea.smem [#allocation11], 1
    %69 = sst [smem:[%s68]] 1024
    %s70 = scalar_lea.smem [#allocation11], 2
    %71 = sst [smem:[%s70]] 8
    %s72 = scalar_lea.smem [#allocation11], 3
    %73 = sst [smem:[%s72]] 64
    %s74 = scalar_lea.smem [#allocation11], 4
    %75 = sst [smem:[%s74]] 128
    %s76 = scalar_lea.smem [#allocation11], 5
    %77 = sst [smem:[%s76]] 2
    %s78 = scalar_lea.smem [#allocation11], 6
    %79 = sst [smem:[%s78]] 512
    %s80 = scalar_lea.smem [#allocation11], 7
    %81 = sst [smem:[%s80]] 64
    %s82 = scalar_lea.smem [#allocation11], 8
    %83 = sst [smem:[%s82]] 4
    %85 = dma.general %s4, 32768, %s64, [#allocation6], [#allocation10], [#allocation11], %s62, 0
    %s86 = scalar_lea.sflag [#allocation6], 1
    %s88 = sshll.u32 1, 14
    %s89 = sxor.u32 4294967295, %s88
    %s91 = sadd.s32 2, %s55
    %s93 = sshll.u32 7, 26
    %s94 = sxor.u32 4294967295, %s93
    %s95 = sand.u32 0, %s94
    %s96 = sshll.u32 %s91, 26
    %s97 = sor.u32 %s95, %s96
    %s98 = sshll.u32 [#allocation4], 4
    %s99 = int_to_ptr.vmem [resolvable:$true] %s98
    %102 = sst [smem:[#allocation13]] 512
    %s103 = scalar_lea.smem [#allocation13], 1
    %104 = sst [smem:[%s103]] 512
    %s105 = scalar_lea.smem [#allocation13], 2
    %106 = sst [smem:[%s105]] 4
    %s107 = scalar_lea.smem [#allocation13], 3
    %108 = sst [smem:[%s107]] 64
    %s109 = scalar_lea.smem [#allocation13], 4
    %110 = sst [smem:[%s109]] 128
    %s111 = scalar_lea.smem [#allocation13], 5
    %112 = sst [smem:[%s111]] 2
    %s113 = scalar_lea.smem [#allocation13], 6
    %114 = sst [smem:[%s113]] 256
    %s115 = scalar_lea.smem [#allocation13], 7
    %116 = sst [smem:[%s115]] 64
    %s117 = scalar_lea.smem [#allocation13], 8
    %118 = sst [smem:[%s117]] 4
    %120 = dma.general %s6, 8192, %s99, %s86, [#allocation12], [#allocation13], %s97, 0
    %s121 = scalar_lea.sflag [#allocation6], 2
    %s123 = sshll.u32 1, 14
    %s124 = sxor.u32 4294967295, %s123
    %s126 = sadd.s32 2, %s55
    %s128 = sshll.u32 7, 26
    %s129 = sxor.u32 4294967295, %s128
    %s130 = sand.u32 0, %s129
    %s131 = sshll.u32 %s126, 26
    %s132 = sor.u32 %s130, %s131
    %s133 = sshll.u32 [#allocation5], 4
    %s134 = int_to_ptr.vmem [resolvable:$true] %s133
    %137 = sst [smem:[#allocation15]] 256
    %s138 = scalar_lea.smem [#allocation15], 1
    %139 = sst [smem:[%s138]] 256
    %s140 = scalar_lea.smem [#allocation15], 2
    %141 = sst [smem:[%s140]] 2
    %s142 = scalar_lea.smem [#allocation15], 3
    %143 = sst [smem:[%s142]] 64
    %s144 = scalar_lea.smem [#allocation15], 4
    %145 = sst [smem:[%s144]] 128
    %s146 = scalar_lea.smem [#allocation15], 5
    %147 = sst [smem:[%s146]] 2
    %s148 = scalar_lea.smem [#allocation15], 6
    %149 = sst [smem:[%s148]] 128
    %s150 = scalar_lea.smem [#allocation15], 7
    %151 = sst [smem:[%s150]] 64
    %s152 = scalar_lea.smem [#allocation15], 8
    %153 = sst [smem:[%s152]] 4
    %155 = dma.general %s8, 8192, %s134, %s121, [#allocation14], [#allocation15], %s132, 0
    %v156 = vld [vmem:[%s0] sm:$0xff]
    %v157 = vld [vmem:[%s0 + $0x8] sm:$0xff]
    %v158 = vld [vmem:[%s0 + $0x10] sm:$0xff]
    %v159 = vld [vmem:[%s0 + $0x18] sm:$0xff]
    %v160 = vld [vmem:[%s0 + $0x20] sm:$0xff]
    %v161 = vld [vmem:[%s0 + $0x28] sm:$0xff]
    %v162 = vld [vmem:[%s0 + $0x30] sm:$0xff]
    %v163 = vld [vmem:[%s0 + $0x38] sm:$0xff]
    %v164 = vld [vmem:[%s1] sm:$0xff]
    %v165 = vld [vmem:[%s1 + $0x8] sm:$0xff]
    %v166 = vld [vmem:[%s1 + $0x10] sm:$0xff]
    %v167 = vld [vmem:[%s1 + $0x18] sm:$0xff]
    %v168 = vld [vmem:[%s1 + $0x20] sm:$0xff]
    %v169 = vld [vmem:[%s1 + $0x28] sm:$0xff]
    %v170 = vld [vmem:[%s1 + $0x30] sm:$0xff]
    %v171 = vld [vmem:[%s1 + $0x38] sm:$0xff]
    %v172 = vld [vmem:[%s3] sm:$0xff]
    %v174 = vlaneseq
    %v175 = vshrl.u32 %v174, 7
    %v176 = vsub.s32 0, %v175
    %v177 = vrot.slane %v172, %v176
    %v178 = vlaneseq
    %v179 = vshrl.u32 %v178, 7
    %v180 = vsub.s32 1, %v179
    %v181 = vrot.slane %v172, %v180
    %v182 = vlaneseq
    %v183 = vshrl.u32 %v182, 7
    %v184 = vsub.s32 2, %v183
    %v185 = vrot.slane %v172, %v184
    %v186 = vlaneseq
    %v187 = vshrl.u32 %v186, 7
    %v188 = vsub.s32 3, %v187
    %v189 = vrot.slane %v172, %v188
    %v190 = vlaneseq
    %v191 = vshrl.u32 %v190, 7
    %v192 = vsub.s32 4, %v191
    %v193 = vrot.slane %v172, %v192
    %v194 = vlaneseq
    %v195 = vshrl.u32 %v194, 7
    %v196 = vsub.s32 5, %v195
    %v197 = vrot.slane %v172, %v196
    %v198 = vlaneseq
    %v199 = vshrl.u32 %v198, 7
    %v200 = vsub.s32 6, %v199
    %v201 = vrot.slane %v172, %v200
    %v202 = vlaneseq
    %v203 = vshrl.u32 %v202, 7
    %v204 = vsub.s32 7, %v203
    %v205 = vrot.slane %v172, %v204
    %vm214 = vcmask 64512
    %v216 = vsel %vm214, %v156, 0
    %v219 = vsel %vm214, %v157, 0
    %v222 = vsel %vm214, %v158, 0
    %v225 = vsel %vm214, %v159, 0
    %v228 = vsel %vm214, %v160, 0
    %v231 = vsel %vm214, %v161, 0
    %v234 = vsel %vm214, %v162, 0
    %v237 = vsel %vm214, %v163, 0
    %239 = vmatprep.subr.mxu0 %v165
    %240 = vmatpush1.msra.mxu0 %v164
    %241 = vmatprep.subr.mxu0 0.0
    %242 = vmatpush1.msra.mxu0 0.0
    %243 = vmatprep.subr.mxu0 0.0
    %244 = vmatpush1.msra.mxu0 0.0
    %245 = vmatprep.subr.mxu0 0.0
    %246 = vmatpush1.msra.mxu0 0.0
    %247 = vmatprep.subr.mxu0 0.0
    %248 = vmatpush1.msra.mxu0 0.0
    %249 = vmatprep.subr.mxu0 0.0
    %250 = vmatpush1.msra.mxu0 0.0
    %251 = vmatprep.subr.mxu0 0.0
    %252 = vmatpush1.msra.mxu0 0.0
    %253 = vmatprep.subr.mxu0 0.0
    %254 = vmatpush1.msra.mxu0 0.0
    %255 = vmatprep.subr.mxu0 0.0
    %256 = vmatpush1.msra.mxu0 0.0
    %257 = vmatprep.subr.mxu0 0.0
    %258 = vmatpush1.msra.mxu0 0.0
    %259 = vmatprep.subr.mxu0 0.0
    %260 = vmatpush1.msra.mxu0 0.0
    %261 = vmatprep.subr.mxu0 0.0
    %262 = vmatpush1.msra.mxu0 0.0
    %263 = vmatprep.subr.mxu0 0.0
    %264 = vmatpush1.msra.mxu0 0.0
    %265 = vmatprep.subr.mxu0 0.0
    %266 = vmatpush1.msra.mxu0 0.0
    %267 = vmatprep.subr.mxu0 0.0
    %268 = vmatpush1.msra.mxu0 0.0
    %269 = vmatprep.subr.mxu0 0.0
    %270 = vmatpush1.msra.mxu0 0.0
    %271 = vmatprep.subr.mxu0 0.0
    %272 = vmatpush1.msra.mxu0 0.0
    %273 = vmatprep.subr.mxu0 0.0
    %274 = vmatpush1.msra.mxu0 0.0
    %275 = vmatprep.subr.mxu0 0.0
    %276 = vmatpush1.msra.mxu0 0.0
    %277 = vmatprep.subr.mxu0 0.0
    %278 = vmatpush1.msra.mxu0 0.0
    %279 = vmatprep.subr.mxu0 0.0
    %280 = vmatpush1.msra.mxu0 0.0
    %281 = vmatprep.subr.mxu0 0.0
    %282 = vmatpush1.msra.mxu0 0.0
    %283 = vmatprep.subr.mxu0 0.0
    %284 = vmatpush1.msra.mxu0 0.0
    %285 = vmatprep.subr.mxu0 0.0
    %286 = vmatpush1.msra.mxu0 0.0
    %287 = vmatprep.subr.mxu0 0.0
    %288 = vmatpush1.msra.mxu0 0.0
    %289 = vmatprep.subr.mxu0 0.0
    %290 = vmatpush1.msra.mxu0 0.0
    %291 = vmatprep.subr.mxu0 0.0
    %292 = vmatpush1.msra.mxu0 0.0
    %293 = vmatprep.subr.mxu0 0.0
    %294 = vmatpush1.msra.mxu0 0.0
    %295 = vmatprep.subr.mxu0 0.0
    %296 = vmatpush1.msra.mxu0 0.0
    %297 = vmatprep.subr.mxu0 0.0
    %298 = vmatpush1.msra.mxu0 0.0
    %299 = vmatprep.subr.mxu0 0.0
    %300 = vmatpush1.msra.mxu0 0.0
    %301 = vmatprep.subr.mxu0 0.0
    %302 = vmatpush1.msra.mxu0 0.0
    %303 = vmatprep.mubr.f32.mxu0 0.0
    %304 = vmatmul.mubr.f32.gmra.mrb[0].mxu0 %v216
    %v305 = vpop.f32.mrb[0].mxu0
    %v306 = vadd.f32 %v177, %v305
    %v307 = vpop.f32.mrb[0].mxu0
    %v308 = vadd.f32 %v181, %v307
    %309 = vmatprep.mubr.f32.mxu0 0.0
    %310 = vmatmul.mubr.f32.gmra.mrb[0].mxu0 %v219
    %v311 = vpop.f32.mrb[0].mxu0
    %v312 = vadd.f32 %v177, %v311
    %v313 = vpop.f32.mrb[0].mxu0
    %v314 = vadd.f32 %v181, %v313
    %315 = vmatprep.mubr.f32.mxu0 0.0
    %316 = vmatmul.mubr.f32.gmra.mrb[0].mxu0 %v222
    %v317 = vpop.f32.mrb[0].mxu0
    %v318 = vadd.f32 %v177, %v317
    %v319 = vpop.f32.mrb[0].mxu0
    %v320 = vadd.f32 %v181, %v319
    %321 = vmatprep.mubr.f32.mxu0 0.0
    %322 = vmatmul.mubr.f32.gmra.mrb[0].mxu0 %v225
    %v323 = vpop.f32.mrb[0].mxu0
    %v324 = vadd.f32 %v177, %v323
    %v325 = vpop.f32.mrb[0].mxu0
    %v326 = vadd.f32 %v181, %v325
    %327 = vmatprep.mubr.f32.mxu0 0.0
    %328 = vmatmul.mubr.f32.gmra.mrb[0].mxu0 %v228
    %v329 = vpop.f32.mrb[0].mxu0
    %v330 = vadd.f32 %v177, %v329
    %v331 = vpop.f32.mrb[0].mxu0
    %v332 = vadd.f32 %v181, %v331
    %333 = vmatprep.mubr.f32.mxu0 0.0
    %334 = vmatmul.mubr.f32.gmra.mrb[0].mxu0 %v231
    %v335 = vpop.f32.mrb[0].mxu0
    %v336 = vadd.f32 %v177, %v335
    %v337 = vpop.f32.mrb[0].mxu0
    %v338 = vadd.f32 %v181, %v337
    %339 = vmatprep.mubr.f32.mxu0 0.0
    %340 = vmatmul.mubr.f32.gmra.mrb[0].mxu0 %v234
    %v341 = vpop.f32.mrb[0].mxu0
    %v342 = vadd.f32 %v177, %v341
    %v343 = vpop.f32.mrb[0].mxu0
    %v344 = vadd.f32 %v181, %v343
    %345 = vmatprep.mubr.f32.mxu0 0.0
    %346 = vmatmul.mubr.f32.gmra.mrb[0].mxu0 %v237
    %v347 = vpop.f32.mrb[0].mxu0
    %v348 = vadd.f32 %v177, %v347
    %v349 = vpop.f32.mrb[0].mxu0
    %v350 = vadd.f32 %v181, %v349
    %351 = vdwg.mxu0
    %352 = vmatprep.subr.mxu0 %v167
    %353 = vmatpush1.msra.mxu0 %v166
    %354 = vmatprep.subr.mxu0 0.0
    %355 = vmatpush1.msra.mxu0 0.0
    %356 = vmatprep.subr.mxu0 0.0
    %357 = vmatpush1.msra.mxu0 0.0
    %358 = vmatprep.subr.mxu0 0.0
    %359 = vmatpush1.msra.mxu0 0.0
    %360 = vmatprep.subr.mxu0 0.0
    %361 = vmatpush1.msra.mxu0 0.0
    %362 = vmatprep.subr.mxu0 0.0
    %363 = vmatpush1.msra.mxu0 0.0
    %364 = vmatprep.subr.mxu0 0.0
    %365 = vmatpush1.msra.mxu0 0.0
    %366 = vmatprep.subr.mxu0 0.0
    %367 = vmatpush1.msra.mxu0 0.0
    %368 = vmatprep.subr.mxu0 0.0
    %369 = vmatpush1.msra.mxu0 0.0
    %370 = vmatprep.subr.mxu0 0.0
    %371 = vmatpush1.msra.mxu0 0.0
    %372 = vmatprep.subr.mxu0 0.0
    %373 = vmatpush1.msra.mxu0 0.0
    %374 = vmatprep.subr.mxu0 0.0
    %375 = vmatpush1.msra.mxu0 0.0
    %376 = vmatprep.subr.mxu0 0.0
    %377 = vmatpush1.msra.mxu0 0.0
    %378 = vmatprep.subr.mxu0 0.0
    %379 = vmatpush1.msra.mxu0 0.0
    %380 = vmatprep.subr.mxu0 0.0
    %381 = vmatpush1.msra.mxu0 0.0
    %382 = vmatprep.subr.mxu0 0.0
    %383 = vmatpush1.msra.mxu0 0.0
    %384 = vmatprep.subr.mxu0 0.0
    %385 = vmatpush1.msra.mxu0 0.0
    %386 = vmatprep.subr.mxu0 0.0
    %387 = vmatpush1.msra.mxu0 0.0
    %388 = vmatprep.subr.mxu0 0.0
    %389 = vmatpush1.msra.mxu0 0.0
    %390 = vmatprep.subr.mxu0 0.0
    %391 = vmatpush1.msra.mxu0 0.0
    %392 = vmatprep.subr.mxu0 0.0
    %393 = vmatpush1.msra.mxu0 0.0
    %394 = vmatprep.subr.mxu0 0.0
    %395 = vmatpush1.msra.mxu0 0.0
    %396 = vmatprep.subr.mxu0 0.0
    %397 = vmatpush1.msra.mxu0 0.0
    %398 = vmatprep.subr.mxu0 0.0
    %399 = vmatpush1.msra.mxu0 0.0
    %400 = vmatprep.subr.mxu0 0.0
    %401 = vmatpush1.msra.mxu0 0.0
    %402 = vmatprep.subr.mxu0 0.0
    %403 = vmatpush1.msra.mxu0 0.0
    %404 = vmatprep.subr.mxu0 0.0
    %405 = vmatpush1.msra.mxu0 0.0
    %406 = vmatprep.subr.mxu0 0.0
    %407 = vmatpush1.msra.mxu0 0.0
    %408 = vmatprep.subr.mxu0 0.0
    %409 = vmatpush1.msra.mxu0 0.0
    %410 = vmatprep.subr.mxu0 0.0
    %411 = vmatpush1.msra.mxu0 0.0
    %412 = vmatprep.subr.mxu0 0.0
    %413 = vmatpush1.msra.mxu0 0.0
    %414 = vmatprep.subr.mxu0 0.0
    %415 = vmatpush1.msra.mxu0 0.0
    %416 = vmatprep.mubr.f32.mxu0 0.0
    %417 = vmatmul.mubr.f32.gmra.mrb[0].mxu0 %v216
    %v418 = vpop.f32.mrb[0].mxu0
    %v419 = vadd.f32 %v185, %v418
    %v420 = vpop.f32.mrb[0].mxu0
    %v421 = vadd.f32 %v189, %v420
    %422 = vmatprep.mubr.f32.mxu0 0.0
    %423 = vmatmul.mubr.f32.gmra.mrb[0].mxu0 %v219
    %v424 = vpop.f32.mrb[0].mxu0
    %v425 = vadd.f32 %v185, %v424
    %v426 = vpop.f32.mrb[0].mxu0
    %v427 = vadd.f32 %v189, %v426
    %428 = vmatprep.mubr.f32.mxu0 0.0
    %429 = vmatmul.mubr.f32.gmra.mrb[0].mxu0 %v222
    %v430 = vpop.f32.mrb[0].mxu0
    %v431 = vadd.f32 %v185, %v430
    %v432 = vpop.f32.mrb[0].mxu0
    %v433 = vadd.f32 %v189, %v432
    %434 = vmatprep.mubr.f32.mxu0 0.0
    %435 = vmatmul.mubr.f32.gmra.mrb[0].mxu0 %v225
    %v436 = vpop.f32.mrb[0].mxu0
    %v437 = vadd.f32 %v185, %v436
    %v438 = vpop.f32.mrb[0].mxu0
    %v439 = vadd.f32 %v189, %v438
    %440 = vmatprep.mubr.f32.mxu0 0.0
    %441 = vmatmul.mubr.f32.gmra.mrb[0].mxu0 %v228
    %v442 = vpop.f32.mrb[0].mxu0
    %v443 = vadd.f32 %v185, %v442
    %v444 = vpop.f32.mrb[0].mxu0
    %v445 = vadd.f32 %v189, %v444
    %446 = vmatprep.mubr.f32.mxu0 0.0
    %447 = vmatmul.mubr.f32.gmra.mrb[0].mxu0 %v231
    %v448 = vpop.f32.mrb[0].mxu0
    %v449 = vadd.f32 %v185, %v448
    %v450 = vpop.f32.mrb[0].mxu0
    %v451 = vadd.f32 %v189, %v450
    %452 = vmatprep.mubr.f32.mxu0 0.0
    %453 = vmatmul.mubr.f32.gmra.mrb[0].mxu0 %v234
    %v454 = vpop.f32.mrb[0].mxu0
    %v455 = vadd.f32 %v185, %v454
    %v456 = vpop.f32.mrb[0].mxu0
    %v457 = vadd.f32 %v189, %v456
    %458 = vmatprep.mubr.f32.mxu0 0.0
    %459 = vmatmul.mubr.f32.gmra.mrb[0].mxu0 %v237
    %v460 = vpop.f32.mrb[0].mxu0
    %v461 = vadd.f32 %v185, %v460
    %v462 = vpop.f32.mrb[0].mxu0
    %v463 = vadd.f32 %v189, %v462
    %464 = vdwg.mxu0
    %465 = vmatprep.subr.mxu0 %v169
    %466 = vmatpush1.msra.mxu0 %v168
    %467 = vmatprep.subr.mxu0 0.0
    %468 = vmatpush1.msra.mxu0 0.0
    %469 = vmatprep.subr.mxu0 0.0
    %470 = vmatpush1.msra.mxu0 0.0
    %471 = vmatprep.subr.mxu0 0.0
    %472 = vmatpush1.msra.mxu0 0.0
    %473 = vmatprep.subr.mxu0 0.0
    %474 = vmatpush1.msra.mxu0 0.0
    %475 = vmatprep.subr.mxu0 0.0
    %476 = vmatpush1.msra.mxu0 0.0
    %477 = vmatprep.subr.mxu0 0.0
    %478 = vmatpush1.msra.mxu0 0.0
    %479 = vmatprep.subr.mxu0 0.0
    %480 = vmatpush1.msra.mxu0 0.0
    %481 = vmatprep.subr.mxu0 0.0
    %482 = vmatpush1.msra.mxu0 0.0
    %483 = vmatprep.subr.mxu0 0.0
    %484 = vmatpush1.msra.mxu0 0.0
    %485 = vmatprep.subr.mxu0 0.0
    %486 = vmatpush1.msra.mxu0 0.0
    %487 = vmatprep.subr.mxu0 0.0
    %488 = vmatpush1.msra.mxu0 0.0
    %489 = vmatprep.subr.mxu0 0.0
    %490 = vmatpush1.msra.mxu0 0.0
    %491 = vmatprep.subr.mxu0 0.0
    %492 = vmatpush1.msra.mxu0 0.0
    %493 = vmatprep.subr.mxu0 0.0
    %494 = vmatpush1.msra.mxu0 0.0
    %495 = vmatprep.subr.mxu0 0.0
    %496 = vmatpush1.msra.mxu0 0.0
    %497 = vmatprep.subr.mxu0 0.0
    %498 = vmatpush1.msra.mxu0 0.0
    %499 = vmatprep.subr.mxu0 0.0
    %500 = vmatpush1.msra.mxu0 0.0
    %501 = vmatprep.subr.mxu0 0.0
    %502 = vmatpush1.msra.mxu0 0.0
    %503 = vmatprep.subr.mxu0 0.0
    %504 = vmatpush1.msra.mxu0 0.0
    %505 = vmatprep.subr.mxu0 0.0
    %506 = vmatpush1.msra.mxu0 0.0
    %507 = vmatprep.subr.mxu0 0.0
    %508 = vmatpush1.msra.mxu0 0.0
    %509 = vmatprep.subr.mxu0 0.0
    %510 = vmatpush1.msra.mxu0 0.0
    %511 = vmatprep.subr.mxu0 0.0
    %512 = vmatpush1.msra.mxu0 0.0
    %513 = vmatprep.subr.mxu0 0.0
    %514 = vmatpush1.msra.mxu0 0.0
    %515 = vmatprep.subr.mxu0 0.0
    %516 = vmatpush1.msra.mxu0 0.0
    %517 = vmatprep.subr.mxu0 0.0
    %518 = vmatpush1.msra.mxu0 0.0
    %519 = vmatprep.subr.mxu0 0.0
    %520 = vmatpush1.msra.mxu0 0.0
    %521 = vmatprep.subr.mxu0 0.0
    %522 = vmatpush1.msra.mxu0 0.0
    %523 = vmatprep.subr.mxu0 0.0
    %524 = vmatpush1.msra.mxu0 0.0
    %525 = vmatprep.subr.mxu0 0.0
    %526 = vmatpush1.msra.mxu0 0.0
    %527 = vmatprep.subr.mxu0 0.0
    %528 = vmatpush1.msra.mxu0 0.0
    %529 = vmatprep.mubr.f32.mxu0 0.0
    %530 = vmatmul.mubr.f32.gmra.mrb[0].mxu0 %v216
    %v531 = vpop.f32.mrb[0].mxu0
    %v532 = vadd.f32 %v193, %v531
    %v533 = vpop.f32.mrb[0].mxu0
    %v534 = vadd.f32 %v197, %v533
    %535 = vmatprep.mubr.f32.mxu0 0.0
    %536 = vmatmul.mubr.f32.gmra.mrb[0].mxu0 %v219
    %v537 = vpop.f32.mrb[0].mxu0
    %v538 = vadd.f32 %v193, %v537
    %v539 = vpop.f32.mrb[0].mxu0
    %v540 = vadd.f32 %v197, %v539
    %541 = vmatprep.mubr.f32.mxu0 0.0
    %542 = vmatmul.mubr.f32.gmra.mrb[0].mxu0 %v222
    %v543 = vpop.f32.mrb[0].mxu0
    %v544 = vadd.f32 %v193, %v543
    %v545 = vpop.f32.mrb[0].mxu0
    %v546 = vadd.f32 %v197, %v545
    %547 = vmatprep.mubr.f32.mxu0 0.0
    %548 = vmatmul.mubr.f32.gmra.mrb[0].mxu0 %v225
    %v549 = vpop.f32.mrb[0].mxu0
    %v550 = vadd.f32 %v193, %v549
    %v551 = vpop.f32.mrb[0].mxu0
    %v552 = vadd.f32 %v197, %v551
    %553 = vmatprep.mubr.f32.mxu0 0.0
    %554 = vmatmul.mubr.f32.gmra.mrb[0].mxu0 %v228
    %v555 = vpop.f32.mrb[0].mxu0
    %v556 = vadd.f32 %v193, %v555
    %v557 = vpop.f32.mrb[0].mxu0
    %v558 = vadd.f32 %v197, %v557
    %559 = vmatprep.mubr.f32.mxu0 0.0
    %560 = vmatmul.mubr.f32.gmra.mrb[0].mxu0 %v231
    %v561 = vpop.f32.mrb[0].mxu0
    %v562 = vadd.f32 %v193, %v561
    %v563 = vpop.f32.mrb[0].mxu0
    %v564 = vadd.f32 %v197, %v563
    %565 = vmatprep.mubr.f32.mxu0 0.0
    %566 = vmatmul.mubr.f32.gmra.mrb[0].mxu0 %v234
    %v567 = vpop.f32.mrb[0].mxu0
    %v568 = vadd.f32 %v193, %v567
    %v569 = vpop.f32.mrb[0].mxu0
    %v570 = vadd.f32 %v197, %v569
    %571 = vmatprep.mubr.f32.mxu0 0.0
    %572 = vmatmul.mubr.f32.gmra.mrb[0].mxu0 %v237
    %v573 = vpop.f32.mrb[0].mxu0
    %v574 = vadd.f32 %v193, %v573
    %v575 = vpop.f32.mrb[0].mxu0
    %v576 = vadd.f32 %v197, %v575
    %577 = vdwg.mxu0
    %578 = vmatprep.subr.mxu0 %v171
    %579 = vmatpush1.msra.mxu0 %v170
    %580 = vmatprep.subr.mxu0 0.0
    %581 = vmatpush1.msra.mxu0 0.0
    %582 = vmatprep.subr.mxu0 0.0
    %583 = vmatpush1.msra.mxu0 0.0
    %584 = vmatprep.subr.mxu0 0.0
    %585 = vmatpush1.msra.mxu0 0.0
    %586 = vmatprep.subr.mxu0 0.0
    %587 = vmatpush1.msra.mxu0 0.0
    %588 = vmatprep.subr.mxu0 0.0
    %589 = vmatpush1.msra.mxu0 0.0
    %590 = vmatprep.subr.mxu0 0.0
    %591 = vmatpush1.msra.mxu0 0.0
    %592 = vmatprep.subr.mxu0 0.0
    %593 = vmatpush1.msra.mxu0 0.0
    %594 = vmatprep.subr.mxu0 0.0
    %595 = vmatpush1.msra.mxu0 0.0
    %596 = vmatprep.subr.mxu0 0.0
    %597 = vmatpush1.msra.mxu0 0.0
    %598 = vmatprep.subr.mxu0 0.0
    %599 = vmatpush1.msra.mxu0 0.0
    %600 = vmatprep.subr.mxu0 0.0
    %601 = vmatpush1.msra.mxu0 0.0
    %602 = vmatprep.subr.mxu0 0.0
    %603 = vmatpush1.msra.mxu0 0.0
    %604 = vmatprep.subr.mxu0 0.0
    %605 = vmatpush1.msra.mxu0 0.0
    %606 = vmatprep.subr.mxu0 0.0
    %607 = vmatpush1.msra.mxu0 0.0
    %608 = vmatprep.subr.mxu0 0.0
    %609 = vmatpush1.msra.mxu0 0.0
    %610 = vmatprep.subr.mxu0 0.0
    %611 = vmatpush1.msra.mxu0 0.0
    %612 = vmatprep.subr.mxu0 0.0
    %613 = vmatpush1.msra.mxu0 0.0
    %614 = vmatprep.subr.mxu0 0.0
    %615 = vmatpush1.msra.mxu0 0.0
    %616 = vmatprep.subr.mxu0 0.0
    %617 = vmatpush1.msra.mxu0 0.0
    %618 = vmatprep.subr.mxu0 0.0
    %619 = vmatpush1.msra.mxu0 0.0
    %620 = vmatprep.subr.mxu0 0.0
    %621 = vmatpush1.msra.mxu0 0.0
    %622 = vmatprep.subr.mxu0 0.0
    %623 = vmatpush1.msra.mxu0 0.0
    %624 = vmatprep.subr.mxu0 0.0
    %625 = vmatpush1.msra.mxu0 0.0
    %626 = vmatprep.subr.mxu0 0.0
    %627 = vmatpush1.msra.mxu0 0.0
    %628 = vmatprep.subr.mxu0 0.0
    %629 = vmatpush1.msra.mxu0 0.0
    %630 = vmatprep.subr.mxu0 0.0
    %631 = vmatpush1.msra.mxu0 0.0
    %632 = vmatprep.subr.mxu0 0.0
    %633 = vmatpush1.msra.mxu0 0.0
    %634 = vmatprep.subr.mxu0 0.0
    %635 = vmatpush1.msra.mxu0 0.0
    %636 = vmatprep.subr.mxu0 0.0
    %637 = vmatpush1.msra.mxu0 0.0
    %638 = vmatprep.subr.mxu0 0.0
    %639 = vmatpush1.msra.mxu0 0.0
    %640 = vmatprep.subr.mxu0 0.0
    %641 = vmatpush1.msra.mxu0 0.0
    %642 = vmatprep.mubr.f32.mxu0 0.0
    %643 = vmatmul.mubr.f32.gmra.mrb[0].mxu0 %v216
    %v644 = vpop.f32.mrb[0].mxu0
    %v645 = vadd.f32 %v201, %v644
    %v646 = vpop.f32.mrb[0].mxu0
    %v647 = vadd.f32 %v205, %v646
    %648 = vmatprep.mubr.f32.mxu0 0.0
    %649 = vmatmul.mubr.f32.gmra.mrb[0].mxu0 %v219
    %v650 = vpop.f32.mrb[0].mxu0
    %v651 = vadd.f32 %v201, %v650
    %v652 = vpop.f32.mrb[0].mxu0
    %v653 = vadd.f32 %v205, %v652
    %654 = vmatprep.mubr.f32.mxu0 0.0
    %655 = vmatmul.mubr.f32.gmra.mrb[0].mxu0 %v222
    %v656 = vpop.f32.mrb[0].mxu0
    %v657 = vadd.f32 %v201, %v656
    %v658 = vpop.f32.mrb[0].mxu0
    %v659 = vadd.f32 %v205, %v658
    %660 = vmatprep.mubr.f32.mxu0 0.0
    %661 = vmatmul.mubr.f32.gmra.mrb[0].mxu0 %v225
    %v662 = vpop.f32.mrb[0].mxu0
    %v663 = vadd.f32 %v201, %v662
    %v664 = vpop.f32.mrb[0].mxu0
    %v665 = vadd.f32 %v205, %v664
    %666 = vmatprep.mubr.f32.mxu0 0.0
    %667 = vmatmul.mubr.f32.gmra.mrb[0].mxu0 %v228
    %v668 = vpop.f32.mrb[0].mxu0
    %v669 = vadd.f32 %v201, %v668
    %v670 = vpop.f32.mrb[0].mxu0
    %v671 = vadd.f32 %v205, %v670
    %672 = vmatprep.mubr.f32.mxu0 0.0
    %673 = vmatmul.mubr.f32.gmra.mrb[0].mxu0 %v231
    %v674 = vpop.f32.mrb[0].mxu0
    %v675 = vadd.f32 %v201, %v674
    %v676 = vpop.f32.mrb[0].mxu0
    %v677 = vadd.f32 %v205, %v676
    %678 = vmatprep.mubr.f32.mxu0 0.0
    %679 = vmatmul.mubr.f32.gmra.mrb[0].mxu0 %v234
    %v680 = vpop.f32.mrb[0].mxu0
    %v681 = vadd.f32 %v201, %v680
    %v682 = vpop.f32.mrb[0].mxu0
    %v683 = vadd.f32 %v205, %v682
    %684 = vmatprep.mubr.f32.mxu0 0.0
    %685 = vmatmul.mubr.f32.gmra.mrb[0].mxu0 %v237
    %v686 = vpop.f32.mrb[0].mxu0
    %v687 = vadd.f32 %v201, %v686
    %v688 = vpop.f32.mrb[0].mxu0
    %v689 = vadd.f32 %v205, %v688
    %690 = vdwg.mxu0
    %691 = vst [vmem:[#allocation2] sm:$0xff] %v306
    %692 = vst [vmem:[#allocation2 + $0x8] sm:$0xff] %v308
    %693 = vst [vmem:[#allocation2 + $0x10] sm:$0xff] %v419
    %694 = vst [vmem:[#allocation2 + $0x18] sm:$0xff] %v421
    %695 = vst [vmem:[#allocation2 + $0x20] sm:$0xff] %v532
    %696 = vst [vmem:[#allocation2 + $0x28] sm:$0xff] %v534
    %697 = vst [vmem:[#allocation2 + $0x30] sm:$0xff] %v645
    %698 = vst [vmem:[#allocation2 + $0x38] sm:$0xff] %v647
    %699 = vst [vmem:[#allocation2 + $0x40] sm:$0xff] %v312
    %700 = vst [vmem:[#allocation2 + $0x48] sm:$0xff] %v314
    %701 = vst [vmem:[#allocation2 + $0x50] sm:$0xff] %v425
    %702 = vst [vmem:[#allocation2 + $0x58] sm:$0xff] %v427
    %703 = vst [vmem:[#allocation2 + $0x60] sm:$0xff] %v538
    %704 = vst [vmem:[#allocation2 + $0x68] sm:$0xff] %v540
    %705 = vst [vmem:[#allocation2 + $0x70] sm:$0xff] %v651
    %706 = vst [vmem:[#allocation2 + $0x78] sm:$0xff] %v653
    %707 = vst [vmem:[#allocation2 + $0x80] sm:$0xff] %v318
    %708 = vst [vmem:[#allocation2 + $0x88] sm:$0xff] %v320
    %709 = vst [vmem:[#allocation2 + $0x90] sm:$0xff] %v431
    %710 = vst [vmem:[#allocation2 + $0x98] sm:$0xff] %v433
    %711 = vst [vmem:[#allocation2 + $0xa0] sm:$0xff] %v544
    %712 = vst [vmem:[#allocation2 + $0xa8] sm:$0xff] %v546
    %713 = vst [vmem:[#allocation2 + $0xb0] sm:$0xff] %v657
    %714 = vst [vmem:[#allocation2 + $0xb8] sm:$0xff] %v659
    %715 = vst [vmem:[#allocation2 + $0xc0] sm:$0xff] %v324
    %716 = vst [vmem:[#allocation2 + $0xc8] sm:$0xff] %v326
    %717 = vst [vmem:[#allocation2 + $0xd0] sm:$0xff] %v437
    %718 = vst [vmem:[#allocation2 + $0xd8] sm:$0xff] %v439
    %719 = vst [vmem:[#allocation2 + $0xe0] sm:$0xff] %v550
    %720 = vst [vmem:[#allocation2 + $0xe8] sm:$0xff] %v552
    %721 = vst [vmem:[#allocation2 + $0xf0] sm:$0xff] %v663
    %722 = vst [vmem:[#allocation2 + $0xf8] sm:$0xff] %v665
    %723 = vst [vmem:[#allocation2 + $0x100] sm:$0xff] %v330
    %724 = vst [vmem:[#allocation2 + $0x108] sm:$0xff] %v332
    %725 = vst [vmem:[#allocation2 + $0x110] sm:$0xff] %v443
    %726 = vst [vmem:[#allocation2 + $0x118] sm:$0xff] %v445
    %727 = vst [vmem:[#allocation2 + $0x120] sm:$0xff] %v556
    %728 = vst [vmem:[#allocation2 + $0x128] sm:$0xff] %v558
    %729 = vst [vmem:[#allocation2 + $0x130] sm:$0xff] %v669
    %730 = vst [vmem:[#allocation2 + $0x138] sm:$0xff] %v671
    %731 = vst [vmem:[#allocation2 + $0x140] sm:$0xff] %v336
    %732 = vst [vmem:[#allocation2 + $0x148] sm:$0xff] %v338
    %733 = vst [vmem:[#allocation2 + $0x150] sm:$0xff] %v449
    %734 = vst [vmem:[#allocation2 + $0x158] sm:$0xff] %v451
    %735 = vst [vmem:[#allocation2 + $0x160] sm:$0xff] %v562
    %736 = vst [vmem:[#allocation2 + $0x168] sm:$0xff] %v564
    %737 = vst [vmem:[#allocation2 + $0x170] sm:$0xff] %v675
    %738 = vst [vmem:[#allocation2 + $0x178] sm:$0xff] %v677
    %739 = vst [vmem:[#allocation2 + $0x180] sm:$0xff] %v342
    %740 = vst [vmem:[#allocation2 + $0x188] sm:$0xff] %v344
    %741 = vst [vmem:[#allocation2 + $0x190] sm:$0xff] %v455
    %742 = vst [vmem:[#allocation2 + $0x198] sm:$0xff] %v457
    %743 = vst [vmem:[#allocation2 + $0x1a0] sm:$0xff] %v568
    %744 = vst [vmem:[#allocation2 + $0x1a8] sm:$0xff] %v570
    %745 = vst [vmem:[#allocation2 + $0x1b0] sm:$0xff] %v681
    %746 = vst [vmem:[#allocation2 + $0x1b8] sm:$0xff] %v683
    %747 = vst [vmem:[#allocation2 + $0x1c0] sm:$0xff] %v348
    %748 = vst [vmem:[#allocation2 + $0x1c8] sm:$0xff] %v350
    %749 = vst [vmem:[#allocation2 + $0x1d0] sm:$0xff] %v461
    %750 = vst [vmem:[#allocation2 + $0x1d8] sm:$0xff] %v463
    %751 = vst [vmem:[#allocation2 + $0x1e0] sm:$0xff] %v574
    %752 = vst [vmem:[#allocation2 + $0x1e8] sm:$0xff] %v576
    %753 = vst [vmem:[#allocation2 + $0x1f0] sm:$0xff] %v687
    %754 = vst [vmem:[#allocation2 + $0x1f8] sm:$0xff] %v689
    %v755 = vld [vmem:[#allocation2] sm:$0xff]
    %v756 = vld [vmem:[#allocation2 + $0x8] sm:$0xff]
    %v757 = vld [vmem:[#allocation2 + $0x10] sm:$0xff]
    %v758 = vld [vmem:[#allocation2 + $0x18] sm:$0xff]
    %v759 = vld [vmem:[#allocation2 + $0x20] sm:$0xff]
    %v760 = vld [vmem:[#allocation2 + $0x28] sm:$0xff]
    %v761 = vld [vmem:[#allocation2 + $0x30] sm:$0xff]
    %v762 = vld [vmem:[#allocation2 + $0x38] sm:$0xff]
    %v763 = vld [vmem:[#allocation8] sm:$0xff]
    %v764 = vld [vmem:[#allocation8 + $0x8] sm:$0xff]
    %v765 = vld [vmem:[#allocation8 + $0x10] sm:$0xff]
    %v766 = vld [vmem:[#allocation8 + $0x18] sm:$0xff]
    %v767 = vld [vmem:[#allocation8 + $0x20] sm:$0xff]
    %v768 = vld [vmem:[#allocation8 + $0x28] sm:$0xff]
    %v769 = vld [vmem:[#allocation8 + $0x30] sm:$0xff]
    %v770 = vld [vmem:[#allocation8 + $0x38] sm:$0xff]
    %v771 = vld [vmem:[#allocation8 + $0x40] sm:$0xff]
    %v772 = vld [vmem:[#allocation8 + $0x48] sm:$0xff]
    %v773 = vld [vmem:[#allocation8 + $0x50] sm:$0xff]
    %v774 = vld [vmem:[#allocation8 + $0x58] sm:$0xff]
    %v775 = vld [vmem:[#allocation8 + $0x60] sm:$0xff]
    %v776 = vld [vmem:[#allocation8 + $0x68] sm:$0xff]
    %v777 = vld [vmem:[#allocation8 + $0x70] sm:$0xff]
    %v778 = vld [vmem:[#allocation8 + $0x78] sm:$0xff]
    %v779 = vld [vmem:[#allocation8 + $0x80] sm:$0xff]
    %v780 = vld [vmem:[#allocation8 + $0x88] sm:$0xff]
    %v781 = vld [vmem:[#allocation8 + $0x90] sm:$0xff]
    %v782 = vld [vmem:[#allocation8 + $0x98] sm:$0xff]
    %v783 = vld [vmem:[#allocation8 + $0xa0] sm:$0xff]
    %v784 = vld [vmem:[#allocation8 + $0xa8] sm:$0xff]
    %v785 = vld [vmem:[#allocation8 + $0xb0] sm:$0xff]
    %v786 = vld [vmem:[#allocation8 + $0xb8] sm:$0xff]
    %v787 = vld [vmem:[#allocation8 + $0xc0] sm:$0xff]
    %v788 = vld [vmem:[#allocation8 + $0xc8] sm:$0xff]
    %v789 = vld [vmem:[#allocation8 + $0xd0] sm:$0xff]
    %v790 = vld [vmem:[#allocation8 + $0xd8] sm:$0xff]
    %v791 = vld [vmem:[#allocation8 + $0xe0] sm:$0xff]
    %v792 = vld [vmem:[#allocation8 + $0xe8] sm:$0xff]
    %v793 = vld [vmem:[#allocation8 + $0xf0] sm:$0xff]
    %v794 = vld [vmem:[#allocation8 + $0xf8] sm:$0xff]
    %v795 = vld [vmem:[#allocation8 + $0x100] sm:$0xff]
    %v796 = vld [vmem:[#allocation8 + $0x108] sm:$0xff]
    %v797 = vld [vmem:[#allocation8 + $0x110] sm:$0xff]
    %v798 = vld [vmem:[#allocation8 + $0x118] sm:$0xff]
    %v799 = vld [vmem:[#allocation8 + $0x120] sm:$0xff]
    %v800 = vld [vmem:[#allocation8 + $0x128] sm:$0xff]
    %v801 = vld [vmem:[#allocation8 + $0x130] sm:$0xff]
    %v802 = vld [vmem:[#allocation8 + $0x138] sm:$0xff]
    %v803 = vld [vmem:[#allocation8 + $0x140] sm:$0xff]
    %v804 = vld [vmem:[#allocation8 + $0x148] sm:$0xff]
    %v805 = vld [vmem:[#allocation8 + $0x150] sm:$0xff]
    %v806 = vld [vmem:[#allocation8 + $0x158] sm:$0xff]
    %v807 = vld [vmem:[#allocation8 + $0x160] sm:$0xff]
    %v808 = vld [vmem:[#allocation8 + $0x168] sm:$0xff]
    %v809 = vld [vmem:[#allocation8 + $0x170] sm:$0xff]
    %v810 = vld [vmem:[#allocation8 + $0x178] sm:$0xff]
    %v811 = vld [vmem:[#allocation8 + $0x180] sm:$0xff]
    %v812 = vld [vmem:[#allocation8 + $0x188] sm:$0xff]
    %v813 = vld [vmem:[#allocation8 + $0x190] sm:$0xff]
    %v814 = vld [vmem:[#allocation8 + $0x198] sm:$0xff]
    %v815 = vld [vmem:[#allocation8 + $0x1a0] sm:$0xff]
    %v816 = vld [vmem:[#allocation8 + $0x1a8] sm:$0xff]
    %v817 = vld [vmem:[#allocation8 + $0x1b0] sm:$0xff]
    %v818 = vld [vmem:[#allocation8 + $0x1b8] sm:$0xff]
    %v819 = vld [vmem:[#allocation8 + $0x1c0] sm:$0xff]
    %v820 = vld [vmem:[#allocation8 + $0x1c8] sm:$0xff]
    %v821 = vld [vmem:[#allocation8 + $0x1d0] sm:$0xff]
    %v822 = vld [vmem:[#allocation8 + $0x1d8] sm:$0xff]
    %v823 = vld [vmem:[#allocation8 + $0x1e0] sm:$0xff]
    %v824 = vld [vmem:[#allocation8 + $0x1e8] sm:$0xff]
    %v825 = vld [vmem:[#allocation8 + $0x1f0] sm:$0xff]
    %v826 = vld [vmem:[#allocation8 + $0x1f8] sm:$0xff]
    %v827 = vld [vmem:[#allocation8 + $0x200] sm:$0xff]
    %v828 = vld [vmem:[#allocation8 + $0x208] sm:$0xff]
    %v829 = vld [vmem:[#allocation8 + $0x210] sm:$0xff]
    %v830 = vld [vmem:[#allocation8 + $0x218] sm:$0xff]
    %v831 = vld [vmem:[#allocation8 + $0x220] sm:$0xff]
    %v832 = vld [vmem:[#allocation8 + $0x228] sm:$0xff]
    %v833 = vld [vmem:[#allocation8 + $0x230] sm:$0xff]
    %v834 = vld [vmem:[#allocation8 + $0x238] sm:$0xff]
    %v835 = vld [vmem:[#allocation8 + $0x240] sm:$0xff]
    %v836 = vld [vmem:[#allocation8 + $0x248] sm:$0xff]
    %v837 = vld [vmem:[#allocation8 + $0x250] sm:$0xff]
    %v838 = vld [vmem:[#allocation8 + $0x258] sm:$0xff]
    %v839 = vld [vmem:[#allocation8 + $0x260] sm:$0xff]
    %v840 = vld [vmem:[#allocation8 + $0x268] sm:$0xff]
    %v841 = vld [vmem:[#allocation8 + $0x270] sm:$0xff]
    %v842 = vld [vmem:[#allocation8 + $0x278] sm:$0xff]
    %v843 = vld [vmem:[#allocation8 + $0x280] sm:$0xff]
    %v844 = vld [vmem:[#allocation8 + $0x288] sm:$0xff]
    %v845 = vld [vmem:[#allocation8 + $0x290] sm:$0xff]
    %v846 = vld [vmem:[#allocation8 + $0x298] sm:$0xff]
    %v847 = vld [vmem:[#allocation8 + $0x2a0] sm:$0xff]
    %v848 = vld [vmem:[#allocation8 + $0x2a8] sm:$0xff]
    %v849 = vld [vmem:[#allocation8 + $0x2b0] sm:$0xff]
    %v850 = vld [vmem:[#allocation8 + $0x2b8] sm:$0xff]
    %v851 = vld [vmem:[#allocation8 + $0x2c0] sm:$0xff]
    %v852 = vld [vmem:[#allocation8 + $0x2c8] sm:$0xff]
    %v853 = vld [vmem:[#allocation8 + $0x2d0] sm:$0xff]
    %v854 = vld [vmem:[#allocation8 + $0x2d8] sm:$0xff]
    %v855 = vld [vmem:[#allocation8 + $0x2e0] sm:$0xff]
    %v856 = vld [vmem:[#allocation8 + $0x2e8] sm:$0xff]
    %v857 = vld [vmem:[#allocation8 + $0x2f0] sm:$0xff]
    %v858 = vld [vmem:[#allocation8 + $0x2f8] sm:$0xff]
    %v859 = vld [vmem:[#allocation8 + $0x300] sm:$0xff]
    %v860 = vld [vmem:[#allocation8 + $0x308] sm:$0xff]
    %v861 = vld [vmem:[#allocation8 + $0x310] sm:$0xff]
    %v862 = vld [vmem:[#allocation8 + $0x318] sm:$0xff]
    %v863 = vld [vmem:[#allocation8 + $0x320] sm:$0xff]
    %v864 = vld [vmem:[#allocation8 + $0x328] sm:$0xff]
    %v865 = vld [vmem:[#allocation8 + $0x330] sm:$0xff]
    %v866 = vld [vmem:[#allocation8 + $0x338] sm:$0xff]
    %v867 = vld [vmem:[#allocation8 + $0x340] sm:$0xff]
    %v868 = vld [vmem:[#allocation8 + $0x348] sm:$0xff]
    %v869 = vld [vmem:[#allocation8 + $0x350] sm:$0xff]
    %v870 = vld [vmem:[#allocation8 + $0x358] sm:$0xff]
    %v871 = vld [vmem:[#allocation8 + $0x360] sm:$0xff]
    %v872 = vld [vmem:[#allocation8 + $0x368] sm:$0xff]
    %v873 = vld [vmem:[#allocation8 + $0x370] sm:$0xff]
    %v874 = vld [vmem:[#allocation8 + $0x378] sm:$0xff]
    %v875 = vld [vmem:[#allocation8 + $0x380] sm:$0xff]
    %v876 = vld [vmem:[#allocation8 + $0x388] sm:$0xff]
    %v877 = vld [vmem:[#allocation8 + $0x390] sm:$0xff]
    %v878 = vld [vmem:[#allocation8 + $0x398] sm:$0xff]
    %v879 = vld [vmem:[#allocation8 + $0x3a0] sm:$0xff]
    %v880 = vld [vmem:[#allocation8 + $0x3a8] sm:$0xff]
    %v881 = vld [vmem:[#allocation8 + $0x3b0] sm:$0xff]
    %v882 = vld [vmem:[#allocation8 + $0x3b8] sm:$0xff]
    %v883 = vld [vmem:[#allocation8 + $0x3c0] sm:$0xff]
    %v884 = vld [vmem:[#allocation8 + $0x3c8] sm:$0xff]
    %v885 = vld [vmem:[#allocation8 + $0x3d0] sm:$0xff]
    %v886 = vld [vmem:[#allocation8 + $0x3d8] sm:$0xff]
    %v887 = vld [vmem:[#allocation8 + $0x3e0] sm:$0xff]
    %v888 = vld [vmem:[#allocation8 + $0x3e8] sm:$0xff]
    %v889 = vld [vmem:[#allocation8 + $0x3f0] sm:$0xff]
    %v890 = vld [vmem:[#allocation8 + $0x3f8] sm:$0xff]
    %v1019 = vunpack.c.l.b16 %v763
    %v1020 = vunpack.c.h.b16 %v763
    %v1021 = vunpack.c.l.b16 %v764
    %v1022 = vunpack.c.h.b16 %v764
    %v1023 = vunpack.c.l.b16 %v765
    %v1024 = vunpack.c.h.b16 %v765
    %v1025 = vunpack.c.l.b16 %v766
    %v1026 = vunpack.c.h.b16 %v766
    %v1027 = vunpack.c.l.b16 %v767
    %v1028 = vunpack.c.h.b16 %v767
    %v1029 = vunpack.c.l.b16 %v768
    %v1030 = vunpack.c.h.b16 %v768
    %v1031 = vunpack.c.l.b16 %v769
    %v1032 = vunpack.c.h.b16 %v769
    %v1033 = vunpack.c.l.b16 %v770
    %v1034 = vunpack.c.h.b16 %v770
    %v1035 = vunpack.c.l.b16 %v771
    %v1036 = vunpack.c.h.b16 %v771
    %v1037 = vunpack.c.l.b16 %v772
    %v1038 = vunpack.c.h.b16 %v772
    %v1039 = vunpack.c.l.b16 %v773
    %v1040 = vunpack.c.h.b16 %v773
    %v1041 = vunpack.c.l.b16 %v774
    %v1042 = vunpack.c.h.b16 %v774
    %v1043 = vunpack.c.l.b16 %v775
    %v1044 = vunpack.c.h.b16 %v775
    %v1045 = vunpack.c.l.b16 %v776
    %v1046 = vunpack.c.h.b16 %v776
    %v1047 = vunpack.c.l.b16 %v777
    %v1048 = vunpack.c.h.b16 %v777
    %v1049 = vunpack.c.l.b16 %v778
    %v1050 = vunpack.c.h.b16 %v778
    %v1051 = vunpack.c.l.b16 %v779
    %v1052 = vunpack.c.h.b16 %v779
    %v1053 = vunpack.c.l.b16 %v780
    %v1054 = vunpack.c.h.b16 %v780
    %v1055 = vunpack.c.l.b16 %v781
    %v1056 = vunpack.c.h.b16 %v781
    %v1057 = vunpack.c.l.b16 %v782
    %v1058 = vunpack.c.h.b16 %v782
    %v1059 = vunpack.c.l.b16 %v783
    %v1060 = vunpack.c.h.b16 %v783
    %v1061 = vunpack.c.l.b16 %v784
    %v1062 = vunpack.c.h.b16 %v784
    %v1063 = vunpack.c.l.b16 %v785
    %v1064 = vunpack.c.h.b16 %v785
    %v1065 = vunpack.c.l.b16 %v786
    %v1066 = vunpack.c.h.b16 %v786
    %v1067 = vunpack.c.l.b16 %v787
    %v1068 = vunpack.c.h.b16 %v787
    %v1069 = vunpack.c.l.b16 %v788
    %v1070 = vunpack.c.h.b16 %v788
    %v1071 = vunpack.c.l.b16 %v789
    %v1072 = vunpack.c.h.b16 %v789
    %v1073 = vunpack.c.l.b16 %v790
    %v1074 = vunpack.c.h.b16 %v790
    %v1075 = vunpack.c.l.b16 %v791
    %v1076 = vunpack.c.h.b16 %v791
    %v1077 = vunpack.c.l.b16 %v792
    %v1078 = vunpack.c.h.b16 %v792
    %v1079 = vunpack.c.l.b16 %v793
    %v1080 = vunpack.c.h.b16 %v793
    %v1081 = vunpack.c.l.b16 %v794
    %v1082 = vunpack.c.h.b16 %v794
    %v1083 = vunpack.c.l.b16 %v795
    %v1084 = vunpack.c.h.b16 %v795
    %v1085 = vunpack.c.l.b16 %v796
    %v1086 = vunpack.c.h.b16 %v796
    %v1087 = vunpack.c.l.b16 %v797
    %v1088 = vunpack.c.h.b16 %v797
    %v1089 = vunpack.c.l.b16 %v798
    %v1090 = vunpack.c.h.b16 %v798
    %v1091 = vunpack.c.l.b16 %v799
    %v1092 = vunpack.c.h.b16 %v799
    %v1093 = vunpack.c.l.b16 %v800
    %v1094 = vunpack.c.h.b16 %v800
    %v1095 = vunpack.c.l.b16 %v801
    %v1096 = vunpack.c.h.b16 %v801
    %v1097 = vunpack.c.l.b16 %v802
    %v1098 = vunpack.c.h.b16 %v802
    %v1099 = vunpack.c.l.b16 %v803
    %v1100 = vunpack.c.h.b16 %v803
    %v1101 = vunpack.c.l.b16 %v804
    %v1102 = vunpack.c.h.b16 %v804
    %v1103 = vunpack.c.l.b16 %v805
    %v1104 = vunpack.c.h.b16 %v805
    %v1105 = vunpack.c.l.b16 %v806
    %v1106 = vunpack.c.h.b16 %v806
    %v1107 = vunpack.c.l.b16 %v807
    %v1108 = vunpack.c.h.b16 %v807
    %v1109 = vunpack.c.l.b16 %v808
    %v1110 = vunpack.c.h.b16 %v808
    %v1111 = vunpack.c.l.b16 %v809
    %v1112 = vunpack.c.h.b16 %v809
    %v1113 = vunpack.c.l.b16 %v810
    %v1114 = vunpack.c.h.b16 %v810
    %v1115 = vunpack.c.l.b16 %v811
    %v1116 = vunpack.c.h.b16 %v811
    %v1117 = vunpack.c.l.b16 %v812
    %v1118 = vunpack.c.h.b16 %v812
    %v1119 = vunpack.c.l.b16 %v813
    %v1120 = vunpack.c.h.b16 %v813
    %v1121 = vunpack.c.l.b16 %v814
    %v1122 = vunpack.c.h.b16 %v814
    %v1123 = vunpack.c.l.b16 %v815
    %v1124 = vunpack.c.h.b16 %v815
    %v1125 = vunpack.c.l.b16 %v816
    %v1126 = vunpack.c.h.b16 %v816
    %v1127 = vunpack.c.l.b16 %v817
    %v1128 = vunpack.c.h.b16 %v817
    %v1129 = vunpack.c.l.b16 %v818
    %v1130 = vunpack.c.h.b16 %v818
    %v1131 = vunpack.c.l.b16 %v819
    %v1132 = vunpack.c.h.b16 %v819
    %v1133 = vunpack.c.l.b16 %v820
    %v1134 = vunpack.c.h.b16 %v820
    %v1135 = vunpack.c.l.b16 %v821
    %v1136 = vunpack.c.h.b16 %v821
    %v1137 = vunpack.c.l.b16 %v822
    %v1138 = vunpack.c.h.b16 %v822
    %v1139 = vunpack.c.l.b16 %v823
    %v1140 = vunpack.c.h.b16 %v823
    %v1141 = vunpack.c.l.b16 %v824
    %v1142 = vunpack.c.h.b16 %v824
    %v1143 = vunpack.c.l.b16 %v825
    %v1144 = vunpack.c.h.b16 %v825
    %v1145 = vunpack.c.l.b16 %v826
    %v1146 = vunpack.c.h.b16 %v826
    %v1147 = vunpack.c.l.b16 %v827
    %v1148 = vunpack.c.h.b16 %v827
    %v1149 = vunpack.c.l.b16 %v828
    %v1150 = vunpack.c.h.b16 %v828
    %v1151 = vunpack.c.l.b16 %v829
    %v1152 = vunpack.c.h.b16 %v829
    %v1153 = vunpack.c.l.b16 %v830
    %v1154 = vunpack.c.h.b16 %v830
    %v1155 = vunpack.c.l.b16 %v831
    %v1156 = vunpack.c.h.b16 %v831
    %v1157 = vunpack.c.l.b16 %v832
    %v1158 = vunpack.c.h.b16 %v832
    %v1159 = vunpack.c.l.b16 %v833
    %v1160 = vunpack.c.h.b16 %v833
    %v1161 = vunpack.c.l.b16 %v834
    %v1162 = vunpack.c.h.b16 %v834
    %v1163 = vunpack.c.l.b16 %v835
    %v1164 = vunpack.c.h.b16 %v835
    %v1165 = vunpack.c.l.b16 %v836
    %v1166 = vunpack.c.h.b16 %v836
    %v1167 = vunpack.c.l.b16 %v837
    %v1168 = vunpack.c.h.b16 %v837
    %v1169 = vunpack.c.l.b16 %v838
    %v1170 = vunpack.c.h.b16 %v838
    %v1171 = vunpack.c.l.b16 %v839
    %v1172 = vunpack.c.h.b16 %v839
    %v1173 = vunpack.c.l.b16 %v840
    %v1174 = vunpack.c.h.b16 %v840
    %v1175 = vunpack.c.l.b16 %v841
    %v1176 = vunpack.c.h.b16 %v841
    %v1177 = vunpack.c.l.b16 %v842
    %v1178 = vunpack.c.h.b16 %v842
    %v1179 = vunpack.c.l.b16 %v843
    %v1180 = vunpack.c.h.b16 %v843
    %v1181 = vunpack.c.l.b16 %v844
    %v1182 = vunpack.c.h.b16 %v844
    %v1183 = vunpack.c.l.b16 %v845
    %v1184 = vunpack.c.h.b16 %v845
    %v1185 = vunpack.c.l.b16 %v846
    %v1186 = vunpack.c.h.b16 %v846
    %v1187 = vunpack.c.l.b16 %v847
    %v1188 = vunpack.c.h.b16 %v847
    %v1189 = vunpack.c.l.b16 %v848
    %v1190 = vunpack.c.h.b16 %v848
    %v1191 = vunpack.c.l.b16 %v849
    %v1192 = vunpack.c.h.b16 %v849
    %v1193 = vunpack.c.l.b16 %v850
    %v1194 = vunpack.c.h.b16 %v850
    %v1195 = vunpack.c.l.b16 %v851
    %v1196 = vunpack.c.h.b16 %v851
    %v1197 = vunpack.c.l.b16 %v852
    %v1198 = vunpack.c.h.b16 %v852
    %v1199 = vunpack.c.l.b16 %v853
    %v1200 = vunpack.c.h.b16 %v853
    %v1201 = vunpack.c.l.b16 %v854
    %v1202 = vunpack.c.h.b16 %v854
    %v1203 = vunpack.c.l.b16 %v855
    %v1204 = vunpack.c.h.b16 %v855
    %v1205 = vunpack.c.l.b16 %v856
    %v1206 = vunpack.c.h.b16 %v856
    %v1207 = vunpack.c.l.b16 %v857
    %v1208 = vunpack.c.h.b16 %v857
    %v1209 = vunpack.c.l.b16 %v858
    %v1210 = vunpack.c.h.b16 %v858
    %v1211 = vunpack.c.l.b16 %v859
    %v1212 = vunpack.c.h.b16 %v859
    %v1213 = vunpack.c.l.b16 %v860
    %v1214 = vunpack.c.h.b16 %v860
    %v1215 = vunpack.c.l.b16 %v861
    %v1216 = vunpack.c.h.b16 %v861
    %v1217 = vunpack.c.l.b16 %v862
    %v1218 = vunpack.c.h.b16 %v862
    %v1219 = vunpack.c.l.b16 %v863
    %v1220 = vunpack.c.h.b16 %v863
    %v1221 = vunpack.c.l.b16 %v864
    %v1222 = vunpack.c.h.b16 %v864
    %v1223 = vunpack.c.l.b16 %v865
    %v1224 = vunpack.c.h.b16 %v865
    %v1225 = vunpack.c.l.b16 %v866
    %v1226 = vunpack.c.h.b16 %v866
    %v1227 = vunpack.c.l.b16 %v867
    %v1228 = vunpack.c.h.b16 %v867
    %v1229 = vunpack.c.l.b16 %v868
    %v1230 = vunpack.c.h.b16 %v868
    %v1231 = vunpack.c.l.b16 %v869
    %v1232 = vunpack.c.h.b16 %v869
    %v1233 = vunpack.c.l.b16 %v870
    %v1234 = vunpack.c.h.b16 %v870
    %v1235 = vunpack.c.l.b16 %v871
    %v1236 = vunpack.c.h.b16 %v871
    %v1237 = vunpack.c.l.b16 %v872
    %v1238 = vunpack.c.h.b16 %v872
    %v1239 = vunpack.c.l.b16 %v873
    %v1240 = vunpack.c.h.b16 %v873
    %v1241 = vunpack.c.l.b16 %v874
    %v1242 = vunpack.c.h.b16 %v874
    %v1243 = vunpack.c.l.b16 %v875
    %v1244 = vunpack.c.h.b16 %v875
    %v1245 = vunpack.c.l.b16 %v876
    %v1246 = vunpack.c.h.b16 %v876
    %v1247 = vunpack.c.l.b16 %v877
    %v1248 = vunpack.c.h.b16 %v877
    %v1249 = vunpack.c.l.b16 %v878
    %v1250 = vunpack.c.h.b16 %v878
    %v1251 = vunpack.c.l.b16 %v879
    %v1252 = vunpack.c.h.b16 %v879
    %v1253 = vunpack.c.l.b16 %v880
    %v1254 = vunpack.c.h.b16 %v880
    %v1255 = vunpack.c.l.b16 %v881
    %v1256 = vunpack.c.h.b16 %v881
    %v1257 = vunpack.c.l.b16 %v882
    %v1258 = vunpack.c.h.b16 %v882
    %v1259 = vunpack.c.l.b16 %v883
    %v1260 = vunpack.c.h.b16 %v883
    %v1261 = vunpack.c.l.b16 %v884
    %v1262 = vunpack.c.h.b16 %v884
    %v1263 = vunpack.c.l.b16 %v885
    %v1264 = vunpack.c.h.b16 %v885
    %v1265 = vunpack.c.l.b16 %v886
    %v1266 = vunpack.c.h.b16 %v886
    %v1267 = vunpack.c.l.b16 %v887
    %v1268 = vunpack.c.h.b16 %v887
    %v1269 = vunpack.c.l.b16 %v888
    %v1270 = vunpack.c.h.b16 %v888
    %v1271 = vunpack.c.l.b16 %v889
    %v1272 = vunpack.c.h.b16 %v889
    %v1273 = vunpack.c.l.b16 %v890
    %v1274 = vunpack.c.h.b16 %v890
    %v1275 = vpack.c.b16 %v1027, %v1019
    %v1276 = vpack.c.b16 %v1028, %v1020
    %v1277 = vpack.c.b16 %v1029, %v1021
    %v1278 = vpack.c.b16 %v1030, %v1022
    %v1279 = vpack.c.b16 %v1031, %v1023
    %v1280 = vpack.c.b16 %v1032, %v1024
    %v1281 = vpack.c.b16 %v1033, %v1025
    %v1282 = vpack.c.b16 %v1034, %v1026
    %v1283 = vpack.c.b16 %v1043, %v1035
    %v1284 = vpack.c.b16 %v1044, %v1036
    %v1285 = vpack.c.b16 %v1045, %v1037
    %v1286 = vpack.c.b16 %v1046, %v1038
    %v1287 = vpack.c.b16 %v1047, %v1039
    %v1288 = vpack.c.b16 %v1048, %v1040
    %v1289 = vpack.c.b16 %v1049, %v1041
    %v1290 = vpack.c.b16 %v1050, %v1042
    %v1291 = vpack.c.b16 %v1059, %v1051
    %v1292 = vpack.c.b16 %v1060, %v1052
    %v1293 = vpack.c.b16 %v1061, %v1053
    %v1294 = vpack.c.b16 %v1062, %v1054
    %v1295 = vpack.c.b16 %v1063, %v1055
    %v1296 = vpack.c.b16 %v1064, %v1056
    %v1297 = vpack.c.b16 %v1065, %v1057
    %v1298 = vpack.c.b16 %v1066, %v1058
    %v1299 = vpack.c.b16 %v1075, %v1067
    %v1300 = vpack.c.b16 %v1076, %v1068
    %v1301 = vpack.c.b16 %v1077, %v1069
    %v1302 = vpack.c.b16 %v1078, %v1070
    %v1303 = vpack.c.b16 %v1079, %v1071
    %v1304 = vpack.c.b16 %v1080, %v1072
    %v1305 = vpack.c.b16 %v1081, %v1073
    %v1306 = vpack.c.b16 %v1082, %v1074
    %v1307 = vpack.c.b16 %v1091, %v1083
    %v1308 = vpack.c.b16 %v1092, %v1084
    %v1309 = vpack.c.b16 %v1093, %v1085
    %v1310 = vpack.c.b16 %v1094, %v1086
    %v1311 = vpack.c.b16 %v1095, %v1087
    %v1312 = vpack.c.b16 %v1096, %v1088
    %v1313 = vpack.c.b16 %v1097, %v1089
    %v1314 = vpack.c.b16 %v1098, %v1090
    %v1315 = vpack.c.b16 %v1107, %v1099
    %v1316 = vpack.c.b16 %v1108, %v1100
    %v1317 = vpack.c.b16 %v1109, %v1101
    %v1318 = vpack.c.b16 %v1110, %v1102
    %v1319 = vpack.c.b16 %v1111, %v1103
    %v1320 = vpack.c.b16 %v1112, %v1104
    %v1321 = vpack.c.b16 %v1113, %v1105
    %v1322 = vpack.c.b16 %v1114, %v1106
    %v1323 = vpack.c.b16 %v1123, %v1115
    %v1324 = vpack.c.b16 %v1124, %v1116
    %v1325 = vpack.c.b16 %v1125, %v1117
    %v1326 = vpack.c.b16 %v1126, %v1118
    %v1327 = vpack.c.b16 %v1127, %v1119
    %v1328 = vpack.c.b16 %v1128, %v1120
    %v1329 = vpack.c.b16 %v1129, %v1121
    %v1330 = vpack.c.b16 %v1130, %v1122
    %v1331 = vpack.c.b16 %v1139, %v1131
    %v1332 = vpack.c.b16 %v1140, %v1132
    %v1333 = vpack.c.b16 %v1141, %v1133
    %v1334 = vpack.c.b16 %v1142, %v1134
    %v1335 = vpack.c.b16 %v1143, %v1135
    %v1336 = vpack.c.b16 %v1144, %v1136
    %v1337 = vpack.c.b16 %v1145, %v1137
    %v1338 = vpack.c.b16 %v1146, %v1138
    %v1339 = vpack.c.b16 %v1155, %v1147
    %v1340 = vpack.c.b16 %v1156, %v1148
    %v1341 = vpack.c.b16 %v1157, %v1149
    %v1342 = vpack.c.b16 %v1158, %v1150
    %v1343 = vpack.c.b16 %v1159, %v1151
    %v1344 = vpack.c.b16 %v1160, %v1152
    %v1345 = vpack.c.b16 %v1161, %v1153
    %v1346 = vpack.c.b16 %v1162, %v1154
    %v1347 = vpack.c.b16 %v1171, %v1163
    %v1348 = vpack.c.b16 %v1172, %v1164
    %v1349 = vpack.c.b16 %v1173, %v1165
    %v1350 = vpack.c.b16 %v1174, %v1166
    %v1351 = vpack.c.b16 %v1175, %v1167
    %v1352 = vpack.c.b16 %v1176, %v1168
    %v1353 = vpack.c.b16 %v1177, %v1169
    %v1354 = vpack.c.b16 %v1178, %v1170
    %v1355 = vpack.c.b16 %v1187, %v1179
    %v1356 = vpack.c.b16 %v1188, %v1180
    %v1357 = vpack.c.b16 %v1189, %v1181
    %v1358 = vpack.c.b16 %v1190, %v1182
    %v1359 = vpack.c.b16 %v1191, %v1183
    %v1360 = vpack.c.b16 %v1192, %v1184
    %v1361 = vpack.c.b16 %v1193, %v1185
    %v1362 = vpack.c.b16 %v1194, %v1186
    %v1363 = vpack.c.b16 %v1203, %v1195
    %v1364 = vpack.c.b16 %v1204, %v1196
    %v1365 = vpack.c.b16 %v1205, %v1197
    %v1366 = vpack.c.b16 %v1206, %v1198
    %v1367 = vpack.c.b16 %v1207, %v1199
    %v1368 = vpack.c.b16 %v1208, %v1200
    %v1369 = vpack.c.b16 %v1209, %v1201
    %v1370 = vpack.c.b16 %v1210, %v1202
    %v1371 = vpack.c.b16 %v1219, %v1211
    %v1372 = vpack.c.b16 %v1220, %v1212
    %v1373 = vpack.c.b16 %v1221, %v1213
    %v1374 = vpack.c.b16 %v1222, %v1214
    %v1375 = vpack.c.b16 %v1223, %v1215
    %v1376 = vpack.c.b16 %v1224, %v1216
    %v1377 = vpack.c.b16 %v1225, %v1217
    %v1378 = vpack.c.b16 %v1226, %v1218
    %v1379 = vpack.c.b16 %v1235, %v1227
    %v1380 = vpack.c.b16 %v1236, %v1228
    %v1381 = vpack.c.b16 %v1237, %v1229
    %v1382 = vpack.c.b16 %v1238, %v1230
    %v1383 = vpack.c.b16 %v1239, %v1231
    %v1384 = vpack.c.b16 %v1240, %v1232
    %v1385 = vpack.c.b16 %v1241, %v1233
    %v1386 = vpack.c.b16 %v1242, %v1234
    %v1387 = vpack.c.b16 %v1251, %v1243
    %v1388 = vpack.c.b16 %v1252, %v1244
    %v1389 = vpack.c.b16 %v1253, %v1245
    %v1390 = vpack.c.b16 %v1254, %v1246
    %v1391 = vpack.c.b16 %v1255, %v1247
    %v1392 = vpack.c.b16 %v1256, %v1248
    %v1393 = vpack.c.b16 %v1257, %v1249
    %v1394 = vpack.c.b16 %v1258, %v1250
    %v1395 = vpack.c.b16 %v1267, %v1259
    %v1396 = vpack.c.b16 %v1268, %v1260
    %v1397 = vpack.c.b16 %v1269, %v1261
    %v1398 = vpack.c.b16 %v1270, %v1262
    %v1399 = vpack.c.b16 %v1271, %v1263
    %v1400 = vpack.c.b16 %v1272, %v1264
    %v1401 = vpack.c.b16 %v1273, %v1265
    %v1402 = vpack.c.b16 %v1274, %v1266
    %1531 = vmatprep.subr.bf16.mxu0 %v1276
    %1532 = vmatpush1.bf16.msra.mxu0 %v1275
    %1533 = vmatprep.subr.bf16.mxu0 %v1284
    %1534 = vmatpush1.bf16.msra.mxu0 %v1283
    %1535 = vmatprep.subr.bf16.mxu0 %v1292
    %1536 = vmatpush1.bf16.msra.mxu0 %v1291
    %1537 = vmatprep.subr.bf16.mxu0 %v1300
    %1538 = vmatpush1.bf16.msra.mxu0 %v1299
    %1539 = vmatprep.subr.bf16.mxu0 %v1308
    %1540 = vmatpush1.bf16.msra.mxu0 %v1307
    %1541 = vmatprep.subr.bf16.mxu0 %v1316
    %1542 = vmatpush1.bf16.msra.mxu0 %v1315
    %1543 = vmatprep.subr.bf16.mxu0 %v1324
    %1544 = vmatpush1.bf16.msra.mxu0 %v1323
    %1545 = vmatprep.subr.bf16.mxu0 %v1332
    %1546 = vmatpush1.bf16.msra.mxu0 %v1331
    %1547 = vmatprep.subr.bf16.mxu0 %v1340
    %1548 = vmatpush1.bf16.msra.mxu0 %v1339
    %1549 = vmatprep.subr.bf16.mxu0 %v1348
    %1550 = vmatpush1.bf16.msra.mxu0 %v1347
    %1551 = vmatprep.subr.bf16.mxu0 %v1356
    %1552 = vmatpush1.bf16.msra.mxu0 %v1355
    %1553 = vmatprep.subr.bf16.mxu0 %v1364
    %1554 = vmatpush1.bf16.msra.mxu0 %v1363
    %1555 = vmatprep.subr.bf16.mxu0 %v1372
    %1556 = vmatpush1.bf16.msra.mxu0 %v1371
    %1557 = vmatprep.subr.bf16.mxu0 %v1380
    %1558 = vmatpush1.bf16.msra.mxu0 %v1379
    %1559 = vmatprep.subr.bf16.mxu0 %v1388
    %1560 = vmatpush1.bf16.msra.mxu0 %v1387
    %1561 = vmatprep.subr.bf16.mxu0 %v1396
    %1562 = vmatpush1.bf16.msra.mxu0 %v1395
    %1563 = vmatprep.mubr.bf16.mxu0 0
    %1564 = vmatmul.mubr.bf16.gmra.mrb[0].mxu0 0
    %v1565 = vpop.f32.mrb[0].mxu0
    %v1566 = vadd.f32 0.0, %v1565
    %v1567 = vpop.f32.mrb[0].mxu0
    %v1568 = vadd.f32 0.0, %v1567
    %v1569 = vpop.f32.mrb[0].mxu0
    %v1570 = vpop.f32.mrb[0].mxu0
    %1571 = vdwg.mxu0
    %1572 = vmatprep.subr.bf16.mxu0 %v1278
    %1573 = vmatpush1.bf16.msra.mxu0 %v1277
    %1574 = vmatprep.subr.bf16.mxu0 %v1286
    %1575 = vmatpush1.bf16.msra.mxu0 %v1285
    %1576 = vmatprep.subr.bf16.mxu0 %v1294
    %1577 = vmatpush1.bf16.msra.mxu0 %v1293
    %1578 = vmatprep.subr.bf16.mxu0 %v1302
    %1579 = vmatpush1.bf16.msra.mxu0 %v1301
    %1580 = vmatprep.subr.bf16.mxu0 %v1310
    %1581 = vmatpush1.bf16.msra.mxu0 %v1309
    %1582 = vmatprep.subr.bf16.mxu0 %v1318
    %1583 = vmatpush1.bf16.msra.mxu0 %v1317
    %1584 = vmatprep.subr.bf16.mxu0 %v1326
    %1585 = vmatpush1.bf16.msra.mxu0 %v1325
    %1586 = vmatprep.subr.bf16.mxu0 %v1334
    %1587 = vmatpush1.bf16.msra.mxu0 %v1333
    %1588 = vmatprep.subr.bf16.mxu0 %v1342
    %1589 = vmatpush1.bf16.msra.mxu0 %v1341
    %1590 = vmatprep.subr.bf16.mxu0 %v1350
    %1591 = vmatpush1.bf16.msra.mxu0 %v1349
    %1592 = vmatprep.subr.bf16.mxu0 %v1358
    %1593 = vmatpush1.bf16.msra.mxu0 %v1357
    %1594 = vmatprep.subr.bf16.mxu0 %v1366
    %1595 = vmatpush1.bf16.msra.mxu0 %v1365
    %1596 = vmatprep.subr.bf16.mxu0 %v1374
    %1597 = vmatpush1.bf16.msra.mxu0 %v1373
    %1598 = vmatprep.subr.bf16.mxu0 %v1382
    %1599 = vmatpush1.bf16.msra.mxu0 %v1381
    %1600 = vmatprep.subr.bf16.mxu0 %v1390
    %1601 = vmatpush1.bf16.msra.mxu0 %v1389
    %1602 = vmatprep.subr.bf16.mxu0 %v1398
    %1603 = vmatpush1.bf16.msra.mxu0 %v1397
    %1604 = vmatprep.mubr.bf16.mxu0 0
    %1605 = vmatmul.mubr.bf16.gmra.mrb[0].mxu0 0
    %v1606 = vpop.f32.mrb[0].mxu0
    %v1607 = vadd.f32 0.0, %v1606
    %v1608 = vpop.f32.mrb[0].mxu0
    %v1609 = vadd.f32 0.0, %v1608
    %v1610 = vpop.f32.mrb[0].mxu0
    %v1611 = vpop.f32.mrb[0].mxu0
    %1612 = vdwg.mxu0
    %1613 = vmatprep.subr.bf16.mxu0 %v1280
    %1614 = vmatpush1.bf16.msra.mxu0 %v1279
    %1615 = vmatprep.subr.bf16.mxu0 %v1288
    %1616 = vmatpush1.bf16.msra.mxu0 %v1287
    %1617 = vmatprep.subr.bf16.mxu0 %v1296
    %1618 = vmatpush1.bf16.msra.mxu0 %v1295
    %1619 = vmatprep.subr.bf16.mxu0 %v1304
    %1620 = vmatpush1.bf16.msra.mxu0 %v1303
    %1621 = vmatprep.subr.bf16.mxu0 %v1312
    %1622 = vmatpush1.bf16.msra.mxu0 %v1311
    %1623 = vmatprep.subr.bf16.mxu0 %v1320
    %1624 = vmatpush1.bf16.msra.mxu0 %v1319
    %1625 = vmatprep.subr.bf16.mxu0 %v1328
    %1626 = vmatpush1.bf16.msra.mxu0 %v1327
    %1627 = vmatprep.subr.bf16.mxu0 %v1336
    %1628 = vmatpush1.bf16.msra.mxu0 %v1335
    %1629 = vmatprep.subr.bf16.mxu0 %v1344
    %1630 = vmatpush1.bf16.msra.mxu0 %v1343
    %1631 = vmatprep.subr.bf16.mxu0 %v1352
    %1632 = vmatpush1.bf16.msra.mxu0 %v1351
    %1633 = vmatprep.subr.bf16.mxu0 %v1360
    %1634 = vmatpush1.bf16.msra.mxu0 %v1359
    %1635 = vmatprep.subr.bf16.mxu0 %v1368
    %1636 = vmatpush1.bf16.msra.mxu0 %v1367
    %1637 = vmatprep.subr.bf16.mxu0 %v1376
    %1638 = vmatpush1.bf16.msra.mxu0 %v1375
    %1639 = vmatprep.subr.bf16.mxu0 %v1384
    %1640 = vmatpush1.bf16.msra.mxu0 %v1383
    %1641 = vmatprep.subr.bf16.mxu0 %v1392
    %1642 = vmatpush1.bf16.msra.mxu0 %v1391
    %1643 = vmatprep.subr.bf16.mxu0 %v1400
    %1644 = vmatpush1.bf16.msra.mxu0 %v1399
    %1645 = vmatprep.mubr.bf16.mxu0 0
    %1646 = vmatmul.mubr.bf16.gmra.mrb[0].mxu0 0
    %v1647 = vpop.f32.mrb[0].mxu0
    %v1648 = vadd.f32 0.0, %v1647
    %v1649 = vpop.f32.mrb[0].mxu0
    %v1650 = vadd.f32 0.0, %v1649
    %v1651 = vpop.f32.mrb[0].mxu0
    %v1652 = vpop.f32.mrb[0].mxu0
    %1653 = vdwg.mxu0
    %1654 = vmatprep.subr.bf16.mxu0 %v1282
    %1655 = vmatpush1.bf16.msra.mxu0 %v1281
    %1656 = vmatprep.subr.bf16.mxu0 %v1290
    %1657 = vmatpush1.bf16.msra.mxu0 %v1289
    %1658 = vmatprep.subr.bf16.mxu0 %v1298
    %1659 = vmatpush1.bf16.msra.mxu0 %v1297
    %1660 = vmatprep.subr.bf16.mxu0 %v1306
    %1661 = vmatpush1.bf16.msra.mxu0 %v1305
    %1662 = vmatprep.subr.bf16.mxu0 %v1314
    %1663 = vmatpush1.bf16.msra.mxu0 %v1313
    %1664 = vmatprep.subr.bf16.mxu0 %v1322
    %1665 = vmatpush1.bf16.msra.mxu0 %v1321
    %1666 = vmatprep.subr.bf16.mxu0 %v1330
    %1667 = vmatpush1.bf16.msra.mxu0 %v1329
    %1668 = vmatprep.subr.bf16.mxu0 %v1338
    %1669 = vmatpush1.bf16.msra.mxu0 %v1337
    %1670 = vmatprep.subr.bf16.mxu0 %v1346
    %1671 = vmatpush1.bf16.msra.mxu0 %v1345
    %1672 = vmatprep.subr.bf16.mxu0 %v1354
    %1673 = vmatpush1.bf16.msra.mxu0 %v1353
    %1674 = vmatprep.subr.bf16.mxu0 %v1362
    %1675 = vmatpush1.bf16.msra.mxu0 %v1361
    %1676 = vmatprep.subr.bf16.mxu0 %v1370
    %1677 = vmatpush1.bf16.msra.mxu0 %v1369
    %1678 = vmatprep.subr.bf16.mxu0 %v1378
    %1679 = vmatpush1.bf16.msra.mxu0 %v1377
    %1680 = vmatprep.subr.bf16.mxu0 %v1386
    %1681 = vmatpush1.bf16.msra.mxu0 %v1385
    %1682 = vmatprep.subr.bf16.mxu0 %v1394
    %1683 = vmatpush1.bf16.msra.mxu0 %v1393
    %1684 = vmatprep.subr.bf16.mxu0 %v1402
    %1685 = vmatpush1.bf16.msra.mxu0 %v1401
    %1686 = vmatprep.mubr.bf16.mxu0 0
    %1687 = vmatmul.mubr.bf16.gmra.mrb[0].mxu0 0
    %v1688 = vpop.f32.mrb[0].mxu0
    %v1689 = vadd.f32 0.0, %v1688
    %v1690 = vpop.f32.mrb[0].mxu0
    %v1691 = vadd.f32 0.0, %v1690
    %v1692 = vpop.f32.mrb[0].mxu0
    %v1693 = vpop.f32.mrb[0].mxu0
    %1694 = vdwg.mxu0
    %v1695 = vadd.f32 %v755, %v1566
    %v1696 = vadd.f32 %v756, %v1568
    %v1697 = vadd.f32 %v757, %v1607
    %v1698 = vadd.f32 %v758, %v1609
    %v1699 = vadd.f32 %v759, %v1648
    %v1700 = vadd.f32 %v760, %v1650
    %v1701 = vadd.f32 %v761, %v1689
    %v1702 = vadd.f32 %v762, %v1691
    %v1703 = vxor.u32 %v1695, 2147483648
    %v1704 = vxor.u32 %v1696, 2147483648
    %v1705 = vmul.f32 %v1703, 1.442695
    %v1706 = vpow.pop %v1705
    %v1707 = vmul.f32 %v1704, 1.442695
    %v1708 = vpow.pop %v1707
    %v1709 = vadd.f32 %v1706, 1.0
    %v1710 = vadd.f32 %v1708, 1.0
    %v1711 = vrcp.pop %v1709
    %v1712 = vmul.f32 1.0, %v1711
    %v1713 = vrcp.pop %v1710
    %v1714 = vmul.f32 1.0, %v1713
    %v1715 = vxor.u32 %v1697, 2147483648
    %v1716 = vxor.u32 %v1698, 2147483648
    %v1717 = vmul.f32 %v1715, 1.442695
    %v1718 = vpow.pop %v1717
    %v1719 = vmul.f32 %v1716, 1.442695
    %v1720 = vpow.pop %v1719
    %v1721 = vadd.f32 %v1718, 1.0
    %v1722 = vadd.f32 %v1720, 1.0
    %v1723 = vrcp.pop %v1721
    %v1724 = vmul.f32 1.0, %v1723
    %v1725 = vrcp.pop %v1722
    %v1726 = vmul.f32 1.0, %v1725
    %v1727 = vtanh.pop %v1699
    %v1728 = vtanh.pop %v1700
    %v1729 = vxor.u32 %v1701, 2147483648
    %v1730 = vxor.u32 %v1702, 2147483648
    %v1731 = vmul.f32 %v1729, 1.442695
    %v1732 = vpow.pop %v1731
    %v1733 = vmul.f32 %v1730, 1.442695
    %v1734 = vpow.pop %v1733
    %v1735 = vadd.f32 %v1732, 1.0
    %v1736 = vadd.f32 %v1734, 1.0
    %v1737 = vrcp.pop %v1735
    %v1738 = vmul.f32 1.0, %v1737
    %v1739 = vrcp.pop %v1736
    %v1740 = vmul.f32 1.0, %v1739
    %v1741 = vmul.f32 %v1724, 0.0
    %v1742 = vmul.f32 %v1726, 0.0
    %v1743 = vmul.f32 %v1712, %v1727
    %v1744 = vmul.f32 %v1714, %v1728
    %v1745 = vadd.f32 %v1741, %v1743
    %v1746 = vadd.f32 %v1742, %v1744
    %v1747 = vtanh.pop %v1745
    %v1748 = vtanh.pop %v1746
    %v1749 = vmul.f32 %v1738, %v1747
    %v1750 = vmul.f32 %v1740, %v1748
    %s1751 = smul.u32 4, 64
    %s1752 = smul.u32 %s1751, 8
    %s1753 = sshll.u32 %s1752, 4
    %1754 = dma.done [#allocation6], %s1753
    %v1755 = vpack.c.bf16 %v1749, %v1749
    %v1756 = vpack.c.bf16 %v1750, %v1750
    %v1757 = vpack.c.bf16 0.0, 0.0
    %v1758 = vld [vmem:[#allocation3] sm:$0xff]
    %v1759 = vld [vmem:[#allocation3 + $0x8] sm:$0xff]
    %v1760 = vld [vmem:[#allocation3 + $0x10] sm:$0xff]
    %v1761 = vld [vmem:[#allocation3 + $0x18] sm:$0xff]
    %v1762 = vld [vmem:[#allocation3 + $0x20] sm:$0xff]
    %v1763 = vld [vmem:[#allocation3 + $0x28] sm:$0xff]
    %v1764 = vld [vmem:[#allocation3 + $0x30] sm:$0xff]
    %v1765 = vld [vmem:[#allocation3 + $0x38] sm:$0xff]
    %v1766 = vld [vmem:[#allocation3 + $0x40] sm:$0xff]
    %v1767 = vld [vmem:[#allocation3 + $0x48] sm:$0xff]
    %v1768 = vld [vmem:[#allocation3 + $0x50] sm:$0xff]
    %v1769 = vld [vmem:[#allocation3 + $0x58] sm:$0xff]
    %v1770 = vld [vmem:[#allocation3 + $0x60] sm:$0xff]
    %v1771 = vld [vmem:[#allocation3 + $0x68] sm:$0xff]
    %v1772 = vld [vmem:[#allocation3 + $0x70] sm:$0xff]
    %v1773 = vld [vmem:[#allocation3 + $0x78] sm:$0xff]
    %v1774 = vld [vmem:[#allocation3 + $0x80] sm:$0xff]
    %v1775 = vld [vmem:[#allocation3 + $0x88] sm:$0xff]
    %v1776 = vld [vmem:[#allocation3 + $0x90] sm:$0xff]
    %v1777 = vld [vmem:[#allocation3 + $0x98] sm:$0xff]
    %v1778 = vld [vmem:[#allocation3 + $0xa0] sm:$0xff]
    %v1779 = vld [vmem:[#allocation3 + $0xa8] sm:$0xff]
    %v1780 = vld [vmem:[#allocation3 + $0xb0] sm:$0xff]
    %v1781 = vld [vmem:[#allocation3 + $0xb8] sm:$0xff]
    %v1782 = vld [vmem:[#allocation3 + $0xc0] sm:$0xff]
    %v1783 = vld [vmem:[#allocation3 + $0xc8] sm:$0xff]
    %v1784 = vld [vmem:[#allocation3 + $0xd0] sm:$0xff]
    %v1785 = vld [vmem:[#allocation3 + $0xd8] sm:$0xff]
    %v1786 = vld [vmem:[#allocation3 + $0xe0] sm:$0xff]
    %v1787 = vld [vmem:[#allocation3 + $0xe8] sm:$0xff]
    %v1788 = vld [vmem:[#allocation3 + $0xf0] sm:$0xff]
    %v1789 = vld [vmem:[#allocation3 + $0xf8] sm:$0xff]
    %v1790 = vld [vmem:[#allocation3 + $0x100] sm:$0xff]
    %v1791 = vld [vmem:[#allocation3 + $0x108] sm:$0xff]
    %v1792 = vld [vmem:[#allocation3 + $0x110] sm:$0xff]
    %v1793 = vld [vmem:[#allocation3 + $0x118] sm:$0xff]
    %v1794 = vld [vmem:[#allocation3 + $0x120] sm:$0xff]
    %v1795 = vld [vmem:[#allocation3 + $0x128] sm:$0xff]
    %v1796 = vld [vmem:[#allocation3 + $0x130] sm:$0xff]
    %v1797 = vld [vmem:[#allocation3 + $0x138] sm:$0xff]
    %v1798 = vld [vmem:[#allocation3 + $0x140] sm:$0xff]
    %v1799 = vld [vmem:[#allocation3 + $0x148] sm:$0xff]
    %v1800 = vld [vmem:[#allocation3 + $0x150] sm:$0xff]
    %v1801 = vld [vmem:[#allocation3 + $0x158] sm:$0xff]
    %v1802 = vld [vmem:[#allocation3 + $0x160] sm:$0xff]
    %v1803 = vld [vmem:[#allocation3 + $0x168] sm:$0xff]
    %v1804 = vld [vmem:[#allocation3 + $0x170] sm:$0xff]
    %v1805 = vld [vmem:[#allocation3 + $0x178] sm:$0xff]
    %v1806 = vld [vmem:[#allocation3 + $0x180] sm:$0xff]
    %v1807 = vld [vmem:[#allocation3 + $0x188] sm:$0xff]
    %v1808 = vld [vmem:[#allocation3 + $0x190] sm:$0xff]
    %v1809 = vld [vmem:[#allocation3 + $0x198] sm:$0xff]
    %v1810 = vld [vmem:[#allocation3 + $0x1a0] sm:$0xff]
    %v1811 = vld [vmem:[#allocation3 + $0x1a8] sm:$0xff]
    %v1812 = vld [vmem:[#allocation3 + $0x1b0] sm:$0xff]
    %v1813 = vld [vmem:[#allocation3 + $0x1b8] sm:$0xff]
    %v1814 = vld [vmem:[#allocation3 + $0x1c0] sm:$0xff]
    %v1815 = vld [vmem:[#allocation3 + $0x1c8] sm:$0xff]
    %v1816 = vld [vmem:[#allocation3 + $0x1d0] sm:$0xff]
    %v1817 = vld [vmem:[#allocation3 + $0x1d8] sm:$0xff]
    %v1818 = vld [vmem:[#allocation3 + $0x1e0] sm:$0xff]
    %v1819 = vld [vmem:[#allocation3 + $0x1e8] sm:$0xff]
    %v1820 = vld [vmem:[#allocation3 + $0x1f0] sm:$0xff]
    %v1821 = vld [vmem:[#allocation3 + $0x1f8] sm:$0xff]
    %v1822 = vld [vmem:[#allocation3 + $0x200] sm:$0xff]
    %v1823 = vld [vmem:[#allocation3 + $0x208] sm:$0xff]
    %v1824 = vld [vmem:[#allocation3 + $0x210] sm:$0xff]
    %v1825 = vld [vmem:[#allocation3 + $0x218] sm:$0xff]
    %v1826 = vld [vmem:[#allocation3 + $0x220] sm:$0xff]
    %v1827 = vld [vmem:[#allocation3 + $0x228] sm:$0xff]
    %v1828 = vld [vmem:[#allocation3 + $0x230] sm:$0xff]
    %v1829 = vld [vmem:[#allocation3 + $0x238] sm:$0xff]
    %v1830 = vld [vmem:[#allocation3 + $0x240] sm:$0xff]
    %v1831 = vld [vmem:[#allocation3 + $0x248] sm:$0xff]
    %v1832 = vld [vmem:[#allocation3 + $0x250] sm:$0xff]
    %v1833 = vld [vmem:[#allocation3 + $0x258] sm:$0xff]
    %v1834 = vld [vmem:[#allocation3 + $0x260] sm:$0xff]
    %v1835 = vld [vmem:[#allocation3 + $0x268] sm:$0xff]
    %v1836 = vld [vmem:[#allocation3 + $0x270] sm:$0xff]
    %v1837 = vld [vmem:[#allocation3 + $0x278] sm:$0xff]
    %v1838 = vld [vmem:[#allocation3 + $0x280] sm:$0xff]
    %v1839 = vld [vmem:[#allocation3 + $0x288] sm:$0xff]
    %v1840 = vld [vmem:[#allocation3 + $0x290] sm:$0xff]
    %v1841 = vld [vmem:[#allocation3 + $0x298] sm:$0xff]
    %v1842 = vld [vmem:[#allocation3 + $0x2a0] sm:$0xff]
    %v1843 = vld [vmem:[#allocation3 + $0x2a8] sm:$0xff]
    %v1844 = vld [vmem:[#allocation3 + $0x2b0] sm:$0xff]
    %v1845 = vld [vmem:[#allocation3 + $0x2b8] sm:$0xff]
    %v1846 = vld [vmem:[#allocation3 + $0x2c0] sm:$0xff]
    %v1847 = vld [vmem:[#allocation3 + $0x2c8] sm:$0xff]
    %v1848 = vld [vmem:[#allocation3 + $0x2d0] sm:$0xff]
    %v1849 = vld [vmem:[#allocation3 + $0x2d8] sm:$0xff]
    %v1850 = vld [vmem:[#allocation3 + $0x2e0] sm:$0xff]
    %v1851 = vld [vmem:[#allocation3 + $0x2e8] sm:$0xff]
    %v1852 = vld [vmem:[#allocation3 + $0x2f0] sm:$0xff]
    %v1853 = vld [vmem:[#allocation3 + $0x2f8] sm:$0xff]
    %v1854 = vld [vmem:[#allocation3 + $0x300] sm:$0xff]
    %v1855 = vld [vmem:[#allocation3 + $0x308] sm:$0xff]
    %v1856 = vld [vmem:[#allocation3 + $0x310] sm:$0xff]
    %v1857 = vld [vmem:[#allocation3 + $0x318] sm:$0xff]
    %v1858 = vld [vmem:[#allocation3 + $0x320] sm:$0xff]
    %v1859 = vld [vmem:[#allocation3 + $0x328] sm:$0xff]
    %v1860 = vld [vmem:[#allocation3 + $0x330] sm:$0xff]
    %v1861 = vld [vmem:[#allocation3 + $0x338] sm:$0xff]
    %v1862 = vld [vmem:[#allocation3 + $0x340] sm:$0xff]
    %v1863 = vld [vmem:[#allocation3 + $0x348] sm:$0xff]
    %v1864 = vld [vmem:[#allocation3 + $0x350] sm:$0xff]
    %v1865 = vld [vmem:[#allocation3 + $0x358] sm:$0xff]
    %v1866 = vld [vmem:[#allocation3 + $0x360] sm:$0xff]
    %v1867 = vld [vmem:[#allocation3 + $0x368] sm:$0xff]
    %v1868 = vld [vmem:[#allocation3 + $0x370] sm:$0xff]
    %v1869 = vld [vmem:[#allocation3 + $0x378] sm:$0xff]
    %v1870 = vld [vmem:[#allocation3 + $0x380] sm:$0xff]
    %v1871 = vld [vmem:[#allocation3 + $0x388] sm:$0xff]
    %v1872 = vld [vmem:[#allocation3 + $0x390] sm:$0xff]
    %v1873 = vld [vmem:[#allocation3 + $0x398] sm:$0xff]
    %v1874 = vld [vmem:[#allocation3 + $0x3a0] sm:$0xff]
    %v1875 = vld [vmem:[#allocation3 + $0x3a8] sm:$0xff]
    %v1876 = vld [vmem:[#allocation3 + $0x3b0] sm:$0xff]
    %v1877 = vld [vmem:[#allocation3 + $0x3b8] sm:$0xff]
    %v1878 = vld [vmem:[#allocation3 + $0x3c0] sm:$0xff]
    %v1879 = vld [vmem:[#allocation3 + $0x3c8] sm:$0xff]
    %v1880 = vld [vmem:[#allocation3 + $0x3d0] sm:$0xff]
    %v1881 = vld [vmem:[#allocation3 + $0x3d8] sm:$0xff]
    %v1882 = vld [vmem:[#allocation3 + $0x3e0] sm:$0xff]
    %v1883 = vld [vmem:[#allocation3 + $0x3e8] sm:$0xff]
    %v1884 = vld [vmem:[#allocation3 + $0x3f0] sm:$0xff]
    %v1885 = vld [vmem:[#allocation3 + $0x3f8] sm:$0xff]
    %v1886 = vld [vmem:[#allocation3 + $0x400] sm:$0xff]
    %v1887 = vld [vmem:[#allocation3 + $0x408] sm:$0xff]
    %v1888 = vld [vmem:[#allocation3 + $0x410] sm:$0xff]
    %v1889 = vld [vmem:[#allocation3 + $0x418] sm:$0xff]
    %v1890 = vld [vmem:[#allocation3 + $0x420] sm:$0xff]
    %v1891 = vld [vmem:[#allocation3 + $0x428] sm:$0xff]
    %v1892 = vld [vmem:[#allocation3 + $0x430] sm:$0xff]
    %v1893 = vld [vmem:[#allocation3 + $0x438] sm:$0xff]
    %v1894 = vld [vmem:[#allocation3 + $0x440] sm:$0xff]
    %v1895 = vld [vmem:[#allocation3 + $0x448] sm:$0xff]
    %v1896 = vld [vmem:[#allocation3 + $0x450] sm:$0xff]
    %v1897 = vld [vmem:[#allocation3 + $0x458] sm:$0xff]
    %v1898 = vld [vmem:[#allocation3 + $0x460] sm:$0xff]
    %v1899 = vld [vmem:[#allocation3 + $0x468] sm:$0xff]
    %v1900 = vld [vmem:[#allocation3 + $0x470] sm:$0xff]
    %v1901 = vld [vmem:[#allocation3 + $0x478] sm:$0xff]
    %v1902 = vld [vmem:[#allocation3 + $0x480] sm:$0xff]
    %v1903 = vld [vmem:[#allocation3 + $0x488] sm:$0xff]
    %v1904 = vld [vmem:[#allocation3 + $0x490] sm:$0xff]
    %v1905 = vld [vmem:[#allocation3 + $0x498] sm:$0xff]
    %v1906 = vld [vmem:[#allocation3 + $0x4a0] sm:$0xff]
    %v1907 = vld [vmem:[#allocation3 + $0x4a8] sm:$0xff]
    %v1908 = vld [vmem:[#allocation3 + $0x4b0] sm:$0xff]
    %v1909 = vld [vmem:[#allocation3 + $0x4b8] sm:$0xff]
    %v1910 = vld [vmem:[#allocation3 + $0x4c0] sm:$0xff]
    %v1911 = vld [vmem:[#allocation3 + $0x4c8] sm:$0xff]
    %v1912 = vld [vmem:[#allocation3 + $0x4d0] sm:$0xff]
    %v1913 = vld [vmem:[#allocation3 + $0x4d8] sm:$0xff]
    %v1914 = vld [vmem:[#allocation3 + $0x4e0] sm:$0xff]
    %v1915 = vld [vmem:[#allocation3 + $0x4e8] sm:$0xff]
    %v1916 = vld [vmem:[#allocation3 + $0x4f0] sm:$0xff]
    %v1917 = vld [vmem:[#allocation3 + $0x4f8] sm:$0xff]
    %v1918 = vld [vmem:[#allocation3 + $0x500] sm:$0xff]
    %v1919 = vld [vmem:[#allocation3 + $0x508] sm:$0xff]
    %v1920 = vld [vmem:[#allocation3 + $0x510] sm:$0xff]
    %v1921 = vld [vmem:[#allocation3 + $0x518] sm:$0xff]
    %v1922 = vld [vmem:[#allocation3 + $0x520] sm:$0xff]
    %v1923 = vld [vmem:[#allocation3 + $0x528] sm:$0xff]
    %v1924 = vld [vmem:[#allocation3 + $0x530] sm:$0xff]
    %v1925 = vld [vmem:[#allocation3 + $0x538] sm:$0xff]
    %v1926 = vld [vmem:[#allocation3 + $0x540] sm:$0xff]
    %v1927 = vld [vmem:[#allocation3 + $0x548] sm:$0xff]
    %v1928 = vld [vmem:[#allocation3 + $0x550] sm:$0xff]
    %v1929 = vld [vmem:[#allocation3 + $0x558] sm:$0xff]
    %v1930 = vld [vmem:[#allocation3 + $0x560] sm:$0xff]
    %v1931 = vld [vmem:[#allocation3 + $0x568] sm:$0xff]
    %v1932 = vld [vmem:[#allocation3 + $0x570] sm:$0xff]
    %v1933 = vld [vmem:[#allocation3 + $0x578] sm:$0xff]
    %v1934 = vld [vmem:[#allocation3 + $0x580] sm:$0xff]
    %v1935 = vld [vmem:[#allocation3 + $0x588] sm:$0xff]
    %v1936 = vld [vmem:[#allocation3 + $0x590] sm:$0xff]
    %v1937 = vld [vmem:[#allocation3 + $0x598] sm:$0xff]
    %v1938 = vld [vmem:[#allocation3 + $0x5a0] sm:$0xff]
    %v1939 = vld [vmem:[#allocation3 + $0x5a8] sm:$0xff]
    %v1940 = vld [vmem:[#allocation3 + $0x5b0] sm:$0xff]
    %v1941 = vld [vmem:[#allocation3 + $0x5b8] sm:$0xff]
    %v1942 = vld [vmem:[#allocation3 + $0x5c0] sm:$0xff]
    %v1943 = vld [vmem:[#allocation3 + $0x5c8] sm:$0xff]
    %v1944 = vld [vmem:[#allocation3 + $0x5d0] sm:$0xff]
    %v1945 = vld [vmem:[#allocation3 + $0x5d8] sm:$0xff]
    %v1946 = vld [vmem:[#allocation3 + $0x5e0] sm:$0xff]
    %v1947 = vld [vmem:[#allocation3 + $0x5e8] sm:$0xff]
    %v1948 = vld [vmem:[#allocation3 + $0x5f0] sm:$0xff]
    %v1949 = vld [vmem:[#allocation3 + $0x5f8] sm:$0xff]
    %v1950 = vld [vmem:[#allocation3 + $0x600] sm:$0xff]
    %v1951 = vld [vmem:[#allocation3 + $0x608] sm:$0xff]
    %v1952 = vld [vmem:[#allocation3 + $0x610] sm:$0xff]
    %v1953 = vld [vmem:[#allocation3 + $0x618] sm:$0xff]
    %v1954 = vld [vmem:[#allocation3 + $0x620] sm:$0xff]
    %v1955 = vld [vmem:[#allocation3 + $0x628] sm:$0xff]
    %v1956 = vld [vmem:[#allocation3 + $0x630] sm:$0xff]
    %v1957 = vld [vmem:[#allocation3 + $0x638] sm:$0xff]
    %v1958 = vld [vmem:[#allocation3 + $0x640] sm:$0xff]
    %v1959 = vld [vmem:[#allocation3 + $0x648] sm:$0xff]
    %v1960 = vld [vmem:[#allocation3 + $0x650] sm:$0xff]
    %v1961 = vld [vmem:[#allocation3 + $0x658] sm:$0xff]
    %v1962 = vld [vmem:[#allocation3 + $0x660] sm:$0xff]
    %v1963 = vld [vmem:[#allocation3 + $0x668] sm:$0xff]
    %v1964 = vld [vmem:[#allocation3 + $0x670] sm:$0xff]
    %v1965 = vld [vmem:[#allocation3 + $0x678] sm:$0xff]
    %v1966 = vld [vmem:[#allocation3 + $0x680] sm:$0xff]
    %v1967 = vld [vmem:[#allocation3 + $0x688] sm:$0xff]
    %v1968 = vld [vmem:[#allocation3 + $0x690] sm:$0xff]
    %v1969 = vld [vmem:[#allocation3 + $0x698] sm:$0xff]
    %v1970 = vld [vmem:[#allocation3 + $0x6a0] sm:$0xff]
    %v1971 = vld [vmem:[#allocation3 + $0x6a8] sm:$0xff]
    %v1972 = vld [vmem:[#allocation3 + $0x6b0] sm:$0xff]
    %v1973 = vld [vmem:[#allocation3 + $0x6b8] sm:$0xff]
    %v1974 = vld [vmem:[#allocation3 + $0x6c0] sm:$0xff]
    %v1975 = vld [vmem:[#allocation3 + $0x6c8] sm:$0xff]
    %v1976 = vld [vmem:[#allocation3 + $0x6d0] sm:$0xff]
    %v1977 = vld [vmem:[#allocation3 + $0x6d8] sm:$0xff]
    %v1978 = vld [vmem:[#allocation3 + $0x6e0] sm:$0xff]
    %v1979 = vld [vmem:[#allocation3 + $0x6e8] sm:$0xff]
    %v1980 = vld [vmem:[#allocation3 + $0x6f0] sm:$0xff]
    %v1981 = vld [vmem:[#allocation3 + $0x6f8] sm:$0xff]
    %v1982 = vld [vmem:[#allocation3 + $0x700] sm:$0xff]
    %v1983 = vld [vmem:[#allocation3 + $0x708] sm:$0xff]
    %v1984 = vld [vmem:[#allocation3 + $0x710] sm:$0xff]
    %v1985 = vld [vmem:[#allocation3 + $0x718] sm:$0xff]
    %v1986 = vld [vmem:[#allocation3 + $0x720] sm:$0xff]
    %v1987 = vld [vmem:[#allocation3 + $0x728] sm:$0xff]
    %v1988 = vld [vmem:[#allocation3 + $0x730] sm:$0xff]
    %v1989 = vld [vmem:[#allocation3 + $0x738] sm:$0xff]
    %v1990 = vld [vmem:[#allocation3 + $0x740] sm:$0xff]
    %v1991 = vld [vmem:[#allocation3 + $0x748] sm:$0xff]
    %v1992 = vld [vmem:[#allocation3 + $0x750] sm:$0xff]
    %v1993 = vld [vmem:[#allocation3 + $0x758] sm:$0xff]
    %v1994 = vld [vmem:[#allocation3 + $0x760] sm:$0xff]
    %v1995 = vld [vmem:[#allocation3 + $0x768] sm:$0xff]
    %v1996 = vld [vmem:[#allocation3 + $0x770] sm:$0xff]
    %v1997 = vld [vmem:[#allocation3 + $0x778] sm:$0xff]
    %v1998 = vld [vmem:[#allocation3 + $0x780] sm:$0xff]
    %v1999 = vld [vmem:[#allocation3 + $0x788] sm:$0xff]
    %v2000 = vld [vmem:[#allocation3 + $0x790] sm:$0xff]
    %v2001 = vld [vmem:[#allocation3 + $0x798] sm:$0xff]
    %v2002 = vld [vmem:[#allocation3 + $0x7a0] sm:$0xff]
    %v2003 = vld [vmem:[#allocation3 + $0x7a8] sm:$0xff]
    %v2004 = vld [vmem:[#allocation3 + $0x7b0] sm:$0xff]
    %v2005 = vld [vmem:[#allocation3 + $0x7b8] sm:$0xff]
    %v2006 = vld [vmem:[#allocation3 + $0x7c0] sm:$0xff]
    %v2007 = vld [vmem:[#allocation3 + $0x7c8] sm:$0xff]
    %v2008 = vld [vmem:[#allocation3 + $0x7d0] sm:$0xff]
    %v2009 = vld [vmem:[#allocation3 + $0x7d8] sm:$0xff]
    %v2010 = vld [vmem:[#allocation3 + $0x7e0] sm:$0xff]
    %v2011 = vld [vmem:[#allocation3 + $0x7e8] sm:$0xff]
    %v2012 = vld [vmem:[#allocation3 + $0x7f0] sm:$0xff]
    %v2013 = vld [vmem:[#allocation3 + $0x7f8] sm:$0xff]
    %v2014 = vld [vmem:[%s5] sm:$0xff]
    %v2016 = vlaneseq
    %v2017 = vshrl.u32 %v2016, 7
    %v2018 = vsub.s32 0, %v2017
    %v2019 = vrot.slane %v2014, %v2018
    %v2020 = vlaneseq
    %v2021 = vshrl.u32 %v2020, 7
    %v2022 = vsub.s32 1, %v2021
    %v2023 = vrot.slane %v2014, %v2022
    %v2024 = vlaneseq
    %v2025 = vshrl.u32 %v2024, 7
    %v2026 = vsub.s32 2, %v2025
    %v2027 = vrot.slane %v2014, %v2026
    %v2028 = vlaneseq
    %v2029 = vshrl.u32 %v2028, 7
    %v2030 = vsub.s32 3, %v2029
    %v2031 = vrot.slane %v2014, %v2030
    %v2032 = vlaneseq
    %v2033 = vshrl.u32 %v2032, 7
    %v2034 = vsub.s32 4, %v2033
    %v2035 = vrot.slane %v2014, %v2034
    %v2036 = vlaneseq
    %v2037 = vshrl.u32 %v2036, 7
    %v2038 = vsub.s32 5, %v2037
    %v2039 = vrot.slane %v2014, %v2038
    %v2040 = vlaneseq
    %v2041 = vshrl.u32 %v2040, 7
    %v2042 = vsub.s32 6, %v2041
    %v2043 = vrot.slane %v2014, %v2042
    %v2044 = vlaneseq
    %v2045 = vshrl.u32 %v2044, 7
    %v2046 = vsub.s32 7, %v2045
    %v2047 = vrot.slane %v2014, %v2046
    %2056 = vmatprep.subr.bf16.mxu0 %v1759
    %2057 = vmatpush1.bf16.msra.mxu0 %v1758
    %2058 = vmatprep.subr.bf16.mxu0 %v1767
    %2059 = vmatpush1.bf16.msra.mxu0 %v1766
    %2060 = vmatprep.subr.bf16.mxu0 %v1775
    %2061 = vmatpush1.bf16.msra.mxu0 %v1774
    %2062 = vmatprep.subr.bf16.mxu0 %v1783
    %2063 = vmatpush1.bf16.msra.mxu0 %v1782
    %2064 = vmatprep.subr.bf16.mxu0 %v1791
    %2065 = vmatpush1.bf16.msra.mxu0 %v1790
    %2066 = vmatprep.subr.bf16.mxu0 %v1799
    %2067 = vmatpush1.bf16.msra.mxu0 %v1798
    %2068 = vmatprep.subr.bf16.mxu0 %v1807
    %2069 = vmatpush1.bf16.msra.mxu0 %v1806
    %2070 = vmatprep.subr.bf16.mxu0 %v1815
    %2071 = vmatpush1.bf16.msra.mxu0 %v1814
    %2072 = vmatprep.subr.bf16.mxu0 %v1823
    %2073 = vmatpush1.bf16.msra.mxu0 %v1822
    %2074 = vmatprep.subr.bf16.mxu0 %v1831
    %2075 = vmatpush1.bf16.msra.mxu0 %v1830
    %2076 = vmatprep.subr.bf16.mxu0 %v1839
    %2077 = vmatpush1.bf16.msra.mxu0 %v1838
    %2078 = vmatprep.subr.bf16.mxu0 %v1847
    %2079 = vmatpush1.bf16.msra.mxu0 %v1846
    %2080 = vmatprep.subr.bf16.mxu0 %v1855
    %2081 = vmatpush1.bf16.msra.mxu0 %v1854
    %2082 = vmatprep.subr.bf16.mxu0 %v1863
    %2083 = vmatpush1.bf16.msra.mxu0 %v1862
    %2084 = vmatprep.subr.bf16.mxu0 %v1871
    %2085 = vmatpush1.bf16.msra.mxu0 %v1870
    %2086 = vmatprep.subr.bf16.mxu0 %v1879
    %2087 = vmatpush1.bf16.msra.mxu0 %v1878
    %2088 = vmatprep.mubr.bf16.mxu0 %v1756
    %2089 = vmatmul.mubr.bf16.gmra.mrb[0].mxu0 %v1755
    %v2090 = vpop.f32.mrb[0].mxu0
    %v2091 = vadd.f32 %v2019, %v2090
    %v2092 = vpop.f32.mrb[0].mxu0
    %v2093 = vadd.f32 %v2023, %v2092
    %v2094 = vpop.f32.mrb[0].mxu0
    %v2095 = vpop.f32.mrb[0].mxu0
    %2096 = vdwg.mxu0
    %2097 = vmatprep.subr.bf16.mxu0 %v1887
    %2098 = vmatpush1.bf16.msra.mxu0 %v1886
    %2099 = vmatprep.subr.bf16.mxu0 %v1895
    %2100 = vmatpush1.bf16.msra.mxu0 %v1894
    %2101 = vmatprep.subr.bf16.mxu0 %v1903
    %2102 = vmatpush1.bf16.msra.mxu0 %v1902
    %2103 = vmatprep.subr.bf16.mxu0 %v1911
    %2104 = vmatpush1.bf16.msra.mxu0 %v1910
    %2105 = vmatprep.subr.bf16.mxu0 %v1919
    %2106 = vmatpush1.bf16.msra.mxu0 %v1918
    %2107 = vmatprep.subr.bf16.mxu0 %v1927
    %2108 = vmatpush1.bf16.msra.mxu0 %v1926
    %2109 = vmatprep.subr.bf16.mxu0 %v1935
    %2110 = vmatpush1.bf16.msra.mxu0 %v1934
    %2111 = vmatprep.subr.bf16.mxu0 %v1943
    %2112 = vmatpush1.bf16.msra.mxu0 %v1942
    %2113 = vmatprep.subr.bf16.mxu0 %v1951
    %2114 = vmatpush1.bf16.msra.mxu0 %v1950
    %2115 = vmatprep.subr.bf16.mxu0 %v1959
    %2116 = vmatpush1.bf16.msra.mxu0 %v1958
    %2117 = vmatprep.subr.bf16.mxu0 %v1967
    %2118 = vmatpush1.bf16.msra.mxu0 %v1966
    %2119 = vmatprep.subr.bf16.mxu0 %v1975
    %2120 = vmatpush1.bf16.msra.mxu0 %v1974
    %2121 = vmatprep.subr.bf16.mxu0 %v1983
    %2122 = vmatpush1.bf16.msra.mxu0 %v1982
    %2123 = vmatprep.subr.bf16.mxu0 %v1991
    %2124 = vmatpush1.bf16.msra.mxu0 %v1990
    %2125 = vmatprep.subr.bf16.mxu0 %v1999
    %2126 = vmatpush1.bf16.msra.mxu0 %v1998
    %2127 = vmatprep.subr.bf16.mxu0 %v2007
    %2128 = vmatpush1.bf16.msra.mxu0 %v2006
    %2129 = vmatprep.mubr.bf16.mxu0 %v1757
    %2130 = vmatmul.mubr.bf16.gmra.mrb[0].mxu0 %v1757
    %v2131 = vpop.f32.mrb[0].mxu0
    %v2132 = vadd.f32 %v2091, %v2131
    %v2133 = vpop.f32.mrb[0].mxu0
    %v2134 = vadd.f32 %v2093, %v2133
    %v2135 = vpop.f32.mrb[0].mxu0
    %v2136 = vpop.f32.mrb[0].mxu0
    %2137 = vdwg.mxu0
    %2138 = vmatprep.subr.bf16.mxu0 %v1761
    %2139 = vmatpush1.bf16.msra.mxu0 %v1760
    %2140 = vmatprep.subr.bf16.mxu0 %v1769
    %2141 = vmatpush1.bf16.msra.mxu0 %v1768
    %2142 = vmatprep.subr.bf16.mxu0 %v1777
    %2143 = vmatpush1.bf16.msra.mxu0 %v1776
    %2144 = vmatprep.subr.bf16.mxu0 %v1785
    %2145 = vmatpush1.bf16.msra.mxu0 %v1784
    %2146 = vmatprep.subr.bf16.mxu0 %v1793
    %2147 = vmatpush1.bf16.msra.mxu0 %v1792
    %2148 = vmatprep.subr.bf16.mxu0 %v1801
    %2149 = vmatpush1.bf16.msra.mxu0 %v1800
    %2150 = vmatprep.subr.bf16.mxu0 %v1809
    %2151 = vmatpush1.bf16.msra.mxu0 %v1808
    %2152 = vmatprep.subr.bf16.mxu0 %v1817
    %2153 = vmatpush1.bf16.msra.mxu0 %v1816
    %2154 = vmatprep.subr.bf16.mxu0 %v1825
    %2155 = vmatpush1.bf16.msra.mxu0 %v1824
    %2156 = vmatprep.subr.bf16.mxu0 %v1833
    %2157 = vmatpush1.bf16.msra.mxu0 %v1832
    %2158 = vmatprep.subr.bf16.mxu0 %v1841
    %2159 = vmatpush1.bf16.msra.mxu0 %v1840
    %2160 = vmatprep.subr.bf16.mxu0 %v1849
    %2161 = vmatpush1.bf16.msra.mxu0 %v1848
    %2162 = vmatprep.subr.bf16.mxu0 %v1857
    %2163 = vmatpush1.bf16.msra.mxu0 %v1856
    %2164 = vmatprep.subr.bf16.mxu0 %v1865
    %2165 = vmatpush1.bf16.msra.mxu0 %v1864
    %2166 = vmatprep.subr.bf16.mxu0 %v1873
    %2167 = vmatpush1.bf16.msra.mxu0 %v1872
    %2168 = vmatprep.subr.bf16.mxu0 %v1881
    %2169 = vmatpush1.bf16.msra.mxu0 %v1880
    %2170 = vmatprep.mubr.bf16.mxu0 %v1756
    %2171 = vmatmul.mubr.bf16.gmra.mrb[0].mxu0 %v1755
    %v2172 = vpop.f32.mrb[0].mxu0
    %v2173 = vadd.f32 %v2027, %v2172
    %v2174 = vpop.f32.mrb[0].mxu0
    %v2175 = vadd.f32 %v2031, %v2174
    %v2176 = vpop.f32.mrb[0].mxu0
    %v2177 = vpop.f32.mrb[0].mxu0
    %2178 = vdwg.mxu0
    %2179 = vmatprep.subr.bf16.mxu0 %v1889
    %2180 = vmatpush1.bf16.msra.mxu0 %v1888
    %2181 = vmatprep.subr.bf16.mxu0 %v1897
    %2182 = vmatpush1.bf16.msra.mxu0 %v1896
    %2183 = vmatprep.subr.bf16.mxu0 %v1905
    %2184 = vmatpush1.bf16.msra.mxu0 %v1904
    %2185 = vmatprep.subr.bf16.mxu0 %v1913
    %2186 = vmatpush1.bf16.msra.mxu0 %v1912
    %2187 = vmatprep.subr.bf16.mxu0 %v1921
    %2188 = vmatpush1.bf16.msra.mxu0 %v1920
    %2189 = vmatprep.subr.bf16.mxu0 %v1929
    %2190 = vmatpush1.bf16.msra.mxu0 %v1928
    %2191 = vmatprep.subr.bf16.mxu0 %v1937
    %2192 = vmatpush1.bf16.msra.mxu0 %v1936
    %2193 = vmatprep.subr.bf16.mxu0 %v1945
    %2194 = vmatpush1.bf16.msra.mxu0 %v1944
    %2195 = vmatprep.subr.bf16.mxu0 %v1953
    %2196 = vmatpush1.bf16.msra.mxu0 %v1952
    %2197 = vmatprep.subr.bf16.mxu0 %v1961
    %2198 = vmatpush1.bf16.msra.mxu0 %v1960
    %2199 = vmatprep.subr.bf16.mxu0 %v1969
    %2200 = vmatpush1.bf16.msra.mxu0 %v1968
    %2201 = vmatprep.subr.bf16.mxu0 %v1977
    %2202 = vmatpush1.bf16.msra.mxu0 %v1976
    %2203 = vmatprep.subr.bf16.mxu0 %v1985
    %2204 = vmatpush1.bf16.msra.mxu0 %v1984
    %2205 = vmatprep.subr.bf16.mxu0 %v1993
    %2206 = vmatpush1.bf16.msra.mxu0 %v1992
    %2207 = vmatprep.subr.bf16.mxu0 %v2001
    %2208 = vmatpush1.bf16.msra.mxu0 %v2000
    %2209 = vmatprep.subr.bf16.mxu0 %v2009
    %2210 = vmatpush1.bf16.msra.mxu0 %v2008
    %2211 = vmatprep.mubr.bf16.mxu0 %v1757
    %2212 = vmatmul.mubr.bf16.gmra.mrb[0].mxu0 %v1757
    %v2213 = vpop.f32.mrb[0].mxu0
    %v2214 = vadd.f32 %v2173, %v2213
    %v2215 = vpop.f32.mrb[0].mxu0
    %v2216 = vadd.f32 %v2175, %v2215
    %v2217 = vpop.f32.mrb[0].mxu0
    %v2218 = vpop.f32.mrb[0].mxu0
    %2219 = vdwg.mxu0
    %2220 = vmatprep.subr.bf16.mxu0 %v1763
    %2221 = vmatpush1.bf16.msra.mxu0 %v1762
    %2222 = vmatprep.subr.bf16.mxu0 %v1771
    %2223 = vmatpush1.bf16.msra.mxu0 %v1770
    %2224 = vmatprep.subr.bf16.mxu0 %v1779
    %2225 = vmatpush1.bf16.msra.mxu0 %v1778
    %2226 = vmatprep.subr.bf16.mxu0 %v1787
    %2227 = vmatpush1.bf16.msra.mxu0 %v1786
    %2228 = vmatprep.subr.bf16.mxu0 %v1795
    %2229 = vmatpush1.bf16.msra.mxu0 %v1794
    %2230 = vmatprep.subr.bf16.mxu0 %v1803
    %2231 = vmatpush1.bf16.msra.mxu0 %v1802
    %2232 = vmatprep.subr.bf16.mxu0 %v1811
    %2233 = vmatpush1.bf16.msra.mxu0 %v1810
    %2234 = vmatprep.subr.bf16.mxu0 %v1819
    %2235 = vmatpush1.bf16.msra.mxu0 %v1818
    %2236 = vmatprep.subr.bf16.mxu0 %v1827
    %2237 = vmatpush1.bf16.msra.mxu0 %v1826
    %2238 = vmatprep.subr.bf16.mxu0 %v1835
    %2239 = vmatpush1.bf16.msra.mxu0 %v1834
    %2240 = vmatprep.subr.bf16.mxu0 %v1843
    %2241 = vmatpush1.bf16.msra.mxu0 %v1842
    %2242 = vmatprep.subr.bf16.mxu0 %v1851
    %2243 = vmatpush1.bf16.msra.mxu0 %v1850
    %2244 = vmatprep.subr.bf16.mxu0 %v1859
    %2245 = vmatpush1.bf16.msra.mxu0 %v1858
    %2246 = vmatprep.subr.bf16.mxu0 %v1867
    %2247 = vmatpush1.bf16.msra.mxu0 %v1866
    %2248 = vmatprep.subr.bf16.mxu0 %v1875
    %2249 = vmatpush1.bf16.msra.mxu0 %v1874
    %2250 = vmatprep.subr.bf16.mxu0 %v1883
    %2251 = vmatpush1.bf16.msra.mxu0 %v1882
    %2252 = vmatprep.mubr.bf16.mxu0 %v1756
    %2253 = vmatmul.mubr.bf16.gmra.mrb[0].mxu0 %v1755
    %v2254 = vpop.f32.mrb[0].mxu0
    %v2255 = vadd.f32 %v2035, %v2254
    %v2256 = vpop.f32.mrb[0].mxu0
    %v2257 = vadd.f32 %v2039, %v2256
    %v2258 = vpop.f32.mrb[0].mxu0
    %v2259 = vpop.f32.mrb[0].mxu0
    %2260 = vdwg.mxu0
    %2261 = vmatprep.subr.bf16.mxu0 %v1891
    %2262 = vmatpush1.bf16.msra.mxu0 %v1890
    %2263 = vmatprep.subr.bf16.mxu0 %v1899
    %2264 = vmatpush1.bf16.msra.mxu0 %v1898
    %2265 = vmatprep.subr.bf16.mxu0 %v1907
    %2266 = vmatpush1.bf16.msra.mxu0 %v1906
    %2267 = vmatprep.subr.bf16.mxu0 %v1915
    %2268 = vmatpush1.bf16.msra.mxu0 %v1914
    %2269 = vmatprep.subr.bf16.mxu0 %v1923
    %2270 = vmatpush1.bf16.msra.mxu0 %v1922
    %2271 = vmatprep.subr.bf16.mxu0 %v1931
    %2272 = vmatpush1.bf16.msra.mxu0 %v1930
    %2273 = vmatprep.subr.bf16.mxu0 %v1939
    %2274 = vmatpush1.bf16.msra.mxu0 %v1938
    %2275 = vmatprep.subr.bf16.mxu0 %v1947
    %2276 = vmatpush1.bf16.msra.mxu0 %v1946
    %2277 = vmatprep.subr.bf16.mxu0 %v1955
    %2278 = vmatpush1.bf16.msra.mxu0 %v1954
    %2279 = vmatprep.subr.bf16.mxu0 %v1963
    %2280 = vmatpush1.bf16.msra.mxu0 %v1962
    %2281 = vmatprep.subr.bf16.mxu0 %v1971
    %2282 = vmatpush1.bf16.msra.mxu0 %v1970
    %2283 = vmatprep.subr.bf16.mxu0 %v1979
    %2284 = vmatpush1.bf16.msra.mxu0 %v1978
    %2285 = vmatprep.subr.bf16.mxu0 %v1987
    %2286 = vmatpush1.bf16.msra.mxu0 %v1986
    %2287 = vmatprep.subr.bf16.mxu0 %v1995
    %2288 = vmatpush1.bf16.msra.mxu0 %v1994
    %2289 = vmatprep.subr.bf16.mxu0 %v2003
    %2290 = vmatpush1.bf16.msra.mxu0 %v2002
    %2291 = vmatprep.subr.bf16.mxu0 %v2011
    %2292 = vmatpush1.bf16.msra.mxu0 %v2010
    %2293 = vmatprep.mubr.bf16.mxu0 %v1757
    %2294 = vmatmul.mubr.bf16.gmra.mrb[0].mxu0 %v1757
    %v2295 = vpop.f32.mrb[0].mxu0
    %v2296 = vadd.f32 %v2255, %v2295
    %v2297 = vpop.f32.mrb[0].mxu0
    %v2298 = vadd.f32 %v2257, %v2297
    %v2299 = vpop.f32.mrb[0].mxu0
    %v2300 = vpop.f32.mrb[0].mxu0
    %2301 = vdwg.mxu0
    %2302 = vmatprep.subr.bf16.mxu0 %v1765
    %2303 = vmatpush1.bf16.msra.mxu0 %v1764
    %2304 = vmatprep.subr.bf16.mxu0 %v1773
    %2305 = vmatpush1.bf16.msra.mxu0 %v1772
    %2306 = vmatprep.subr.bf16.mxu0 %v1781
    %2307 = vmatpush1.bf16.msra.mxu0 %v1780
    %2308 = vmatprep.subr.bf16.mxu0 %v1789
    %2309 = vmatpush1.bf16.msra.mxu0 %v1788
    %2310 = vmatprep.subr.bf16.mxu0 %v1797
    %2311 = vmatpush1.bf16.msra.mxu0 %v1796
    %2312 = vmatprep.subr.bf16.mxu0 %v1805
    %2313 = vmatpush1.bf16.msra.mxu0 %v1804
    %2314 = vmatprep.subr.bf16.mxu0 %v1813
    %2315 = vmatpush1.bf16.msra.mxu0 %v1812
    %2316 = vmatprep.subr.bf16.mxu0 %v1821
    %2317 = vmatpush1.bf16.msra.mxu0 %v1820
    %2318 = vmatprep.subr.bf16.mxu0 %v1829
    %2319 = vmatpush1.bf16.msra.mxu0 %v1828
    %2320 = vmatprep.subr.bf16.mxu0 %v1837
    %2321 = vmatpush1.bf16.msra.mxu0 %v1836
    %2322 = vmatprep.subr.bf16.mxu0 %v1845
    %2323 = vmatpush1.bf16.msra.mxu0 %v1844
    %2324 = vmatprep.subr.bf16.mxu0 %v1853
    %2325 = vmatpush1.bf16.msra.mxu0 %v1852
    %2326 = vmatprep.subr.bf16.mxu0 %v1861
    %2327 = vmatpush1.bf16.msra.mxu0 %v1860
    %2328 = vmatprep.subr.bf16.mxu0 %v1869
    %2329 = vmatpush1.bf16.msra.mxu0 %v1868
    %2330 = vmatprep.subr.bf16.mxu0 %v1877
    %2331 = vmatpush1.bf16.msra.mxu0 %v1876
    %2332 = vmatprep.subr.bf16.mxu0 %v1885
    %2333 = vmatpush1.bf16.msra.mxu0 %v1884
    %2334 = vmatprep.mubr.bf16.mxu0 %v1756
    %2335 = vmatmul.mubr.bf16.gmra.mrb[0].mxu0 %v1755
    %v2336 = vpop.f32.mrb[0].mxu0
    %v2337 = vadd.f32 %v2043, %v2336
    %v2338 = vpop.f32.mrb[0].mxu0
    %v2339 = vadd.f32 %v2047, %v2338
    %v2340 = vpop.f32.mrb[0].mxu0
    %v2341 = vpop.f32.mrb[0].mxu0
    %2342 = vdwg.mxu0
    %2343 = vmatprep.subr.bf16.mxu0 %v1893
    %2344 = vmatpush1.bf16.msra.mxu0 %v1892
    %2345 = vmatprep.subr.bf16.mxu0 %v1901
    %2346 = vmatpush1.bf16.msra.mxu0 %v1900
    %2347 = vmatprep.subr.bf16.mxu0 %v1909
    %2348 = vmatpush1.bf16.msra.mxu0 %v1908
    %2349 = vmatprep.subr.bf16.mxu0 %v1917
    %2350 = vmatpush1.bf16.msra.mxu0 %v1916
    %2351 = vmatprep.subr.bf16.mxu0 %v1925
    %2352 = vmatpush1.bf16.msra.mxu0 %v1924
    %2353 = vmatprep.subr.bf16.mxu0 %v1933
    %2354 = vmatpush1.bf16.msra.mxu0 %v1932
    %2355 = vmatprep.subr.bf16.mxu0 %v1941
    %2356 = vmatpush1.bf16.msra.mxu0 %v1940
    %2357 = vmatprep.subr.bf16.mxu0 %v1949
    %2358 = vmatpush1.bf16.msra.mxu0 %v1948
    %2359 = vmatprep.subr.bf16.mxu0 %v1957
    %2360 = vmatpush1.bf16.msra.mxu0 %v1956
    %2361 = vmatprep.subr.bf16.mxu0 %v1965
    %2362 = vmatpush1.bf16.msra.mxu0 %v1964
    %2363 = vmatprep.subr.bf16.mxu0 %v1973
    %2364 = vmatpush1.bf16.msra.mxu0 %v1972
    %2365 = vmatprep.subr.bf16.mxu0 %v1981
    %2366 = vmatpush1.bf16.msra.mxu0 %v1980
    %2367 = vmatprep.subr.bf16.mxu0 %v1989
    %2368 = vmatpush1.bf16.msra.mxu0 %v1988
    %2369 = vmatprep.subr.bf16.mxu0 %v1997
    %2370 = vmatpush1.bf16.msra.mxu0 %v1996
    %2371 = vmatprep.subr.bf16.mxu0 %v2005
    %2372 = vmatpush1.bf16.msra.mxu0 %v2004
    %2373 = vmatprep.subr.bf16.mxu0 %v2013
    %2374 = vmatpush1.bf16.msra.mxu0 %v2012
    %2375 = vmatprep.mubr.bf16.mxu0 %v1757
    %2376 = vmatmul.mubr.bf16.gmra.mrb[0].mxu0 %v1757
    %v2377 = vpop.f32.mrb[0].mxu0
    %v2378 = vadd.f32 %v2337, %v2377
    %v2379 = vpop.f32.mrb[0].mxu0
    %v2380 = vadd.f32 %v2339, %v2379
    %v2381 = vpop.f32.mrb[0].mxu0
    %v2382 = vpop.f32.mrb[0].mxu0
    %2383 = vdwg.mxu0
    %v2384 = vxor.u32 %v2132, 2147483648
    %v2385 = vxor.u32 %v2134, 2147483648
    %v2386 = vmul.f32 %v2384, 1.442695
    %v2387 = vpow.pop %v2386
    %v2388 = vmul.f32 %v2385, 1.442695
    %v2389 = vpow.pop %v2388
    %v2390 = vadd.f32 %v2387, 1.0
    %v2391 = vadd.f32 %v2389, 1.0
    %v2392 = vrcp.pop %v2390
    %v2393 = vmul.f32 1.0, %v2392
    %v2394 = vrcp.pop %v2391
    %v2395 = vmul.f32 1.0, %v2394
    %v2396 = vxor.u32 %v2214, 2147483648
    %v2397 = vxor.u32 %v2216, 2147483648
    %v2398 = vmul.f32 %v2396, 1.442695
    %v2399 = vpow.pop %v2398
    %v2400 = vmul.f32 %v2397, 1.442695
    %v2401 = vpow.pop %v2400
    %v2402 = vadd.f32 %v2399, 1.0
    %v2403 = vadd.f32 %v2401, 1.0
    %v2404 = vrcp.pop %v2402
    %v2405 = vmul.f32 1.0, %v2404
    %v2406 = vrcp.pop %v2403
    %v2407 = vmul.f32 1.0, %v2406
    %v2408 = vtanh.pop %v2296
    %v2409 = vtanh.pop %v2298
    %v2410 = vxor.u32 %v2378, 2147483648
    %v2411 = vxor.u32 %v2380, 2147483648
    %v2412 = vmul.f32 %v2410, 1.442695
    %v2413 = vpow.pop %v2412
    %v2414 = vmul.f32 %v2411, 1.442695
    %v2415 = vpow.pop %v2414
    %v2416 = vadd.f32 %v2413, 1.0
    %v2417 = vadd.f32 %v2415, 1.0
    %v2418 = vrcp.pop %v2416
    %v2419 = vmul.f32 1.0, %v2418
    %v2420 = vrcp.pop %v2417
    %v2421 = vmul.f32 1.0, %v2420
    %v2422 = vmul.f32 %v2405, 0.0
    %v2423 = vmul.f32 %v2407, 0.0
    %v2424 = vmul.f32 %v2393, %v2408
    %v2425 = vmul.f32 %v2395, %v2409
    %v2426 = vadd.f32 %v2422, %v2424
    %v2427 = vadd.f32 %v2423, %v2425
    %v2428 = vtanh.pop %v2426
    %v2429 = vtanh.pop %v2427
    %v2430 = vmul.f32 %v2419, %v2428
    %v2431 = vmul.f32 %v2421, %v2429
    %v2432 = vld [vmem:[#allocation2 + $0x40] sm:$0xff]
    %v2433 = vld [vmem:[#allocation2 + $0x48] sm:$0xff]
    %v2434 = vld [vmem:[#allocation2 + $0x50] sm:$0xff]
    %v2435 = vld [vmem:[#allocation2 + $0x58] sm:$0xff]
    %v2436 = vld [vmem:[#allocation2 + $0x60] sm:$0xff]
    %v2437 = vld [vmem:[#allocation2 + $0x68] sm:$0xff]
    %v2438 = vld [vmem:[#allocation2 + $0x70] sm:$0xff]
    %v2439 = vld [vmem:[#allocation2 + $0x78] sm:$0xff]
    %v2440 = vld [vmem:[#allocation8] sm:$0xff]
    %v2441 = vld [vmem:[#allocation8 + $0x8] sm:$0xff]
    %v2442 = vld [vmem:[#allocation8 + $0x10] sm:$0xff]
    %v2443 = vld [vmem:[#allocation8 + $0x18] sm:$0xff]
    %v2444 = vld [vmem:[#allocation8 + $0x20] sm:$0xff]
    %v2445 = vld [vmem:[#allocation8 + $0x28] sm:$0xff]
    %v2446 = vld [vmem:[#allocation8 + $0x30] sm:$0xff]
    %v2447 = vld [vmem:[#allocation8 + $0x38] sm:$0xff]
    %v2448 = vld [vmem:[#allocation8 + $0x40] sm:$0xff]
    %v2449 = vld [vmem:[#allocation8 + $0x48] sm:$0xff]
    %v2450 = vld [vmem:[#allocation8 + $0x50] sm:$0xff]
    %v2451 = vld [vmem:[#allocation8 + $0x58] sm:$0xff]
    %v2452 = vld [vmem:[#allocation8 + $0x60] sm:$0xff]
    %v2453 = vld [vmem:[#allocation8 + $0x68] sm:$0xff]
    %v2454 = vld [vmem:[#allocation8 + $0x70] sm:$0xff]
    %v2455 = vld [vmem:[#allocation8 + $0x78] sm:$0xff]
    %v2456 = vld [vmem:[#allocation8 + $0x80] sm:$0xff]
    %v2457 = vld [vmem:[#allocation8 + $0x88] sm:$0xff]
    %v2458 = vld [vmem:[#allocation8 + $0x90] sm:$0xff]
    %v2459 = vld [vmem:[#allocation8 + $0x98] sm:$0xff]
    %v2460 = vld [vmem:[#allocation8 + $0xa0] sm:$0xff]
    %v2461 = vld [vmem:[#allocation8 + $0xa8] sm:$0xff]
    %v2462 = vld [vmem:[#allocation8 + $0xb0] sm:$0xff]
    %v2463 = vld [vmem:[#allocation8 + $0xb8] sm:$0xff]
    %v2464 = vld [vmem:[#allocation8 + $0xc0] sm:$0xff]
    %v2465 = vld [vmem:[#allocation8 + $0xc8] sm:$0xff]
    %v2466 = vld [vmem:[#allocation8 + $0xd0] sm:$0xff]
    %v2467 = vld [vmem:[#allocation8 + $0xd8] sm:$0xff]
    %v2468 = vld [vmem:[#allocation8 + $0xe0] sm:$0xff]
    %v2469 = vld [vmem:[#allocation8 + $0xe8] sm:$0xff]
    %v2470 = vld [vmem:[#allocation8 + $0xf0] sm:$0xff]
    %v2471 = vld [vmem:[#allocation8 + $0xf8] sm:$0xff]
    %v2472 = vld [vmem:[#allocation8 + $0x100] sm:$0xff]
    %v2473 = vld [vmem:[#allocation8 + $0x108] sm:$0xff]
    %v2474 = vld [vmem:[#allocation8 + $0x110] sm:$0xff]
    %v2475 = vld [vmem:[#allocation8 + $0x118] sm:$0xff]
    %v2476 = vld [vmem:[#allocation8 + $0x120] sm:$0xff]
    %v2477 = vld [vmem:[#allocation8 + $0x128] sm:$0xff]
    %v2478 = vld [vmem:[#allocation8 + $0x130] sm:$0xff]
    %v2479 = vld [vmem:[#allocation8 + $0x138] sm:$0xff]
    %v2480 = vld [vmem:[#allocation8 + $0x140] sm:$0xff]
    %v2481 = vld [vmem:[#allocation8 + $0x148] sm:$0xff]
    %v2482 = vld [vmem:[#allocation8 + $0x150] sm:$0xff]
    %v2483 = vld [vmem:[#allocation8 + $0x158] sm:$0xff]
    %v2484 = vld [vmem:[#allocation8 + $0x160] sm:$0xff]
    %v2485 = vld [vmem:[#allocation8 + $0x168] sm:$0xff]
    %v2486 = vld [vmem:[#allocation8 + $0x170] sm:$0xff]
    %v2487 = vld [vmem:[#allocation8 + $0x178] sm:$0xff]
    %v2488 = vld [vmem:[#allocation8 + $0x180] sm:$0xff]
    %v2489 = vld [vmem:[#allocation8 + $0x188] sm:$0xff]
    %v2490 = vld [vmem:[#allocation8 + $0x190] sm:$0xff]
    %v2491 = vld [vmem:[#allocation8 + $0x198] sm:$0xff]
    %v2492 = vld [vmem:[#allocation8 + $0x1a0] sm:$0xff]
    %v2493 = vld [vmem:[#allocation8 + $0x1a8] sm:$0xff]
    %v2494 = vld [vmem:[#allocation8 + $0x1b0] sm:$0xff]
    %v2495 = vld [vmem:[#allocation8 + $0x1b8] sm:$0xff]
    %v2496 = vld [vmem:[#allocation8 + $0x1c0] sm:$0xff]
    %v2497 = vld [vmem:[#allocation8 + $0x1c8] sm:$0xff]
    %v2498 = vld [vmem:[#allocation8 + $0x1d0] sm:$0xff]
    %v2499 = vld [vmem:[#allocation8 + $0x1d8] sm:$0xff]
    %v2500 = vld [vmem:[#allocation8 + $0x1e0] sm:$0xff]
    %v2501 = vld [vmem:[#allocation8 + $0x1e8] sm:$0xff]
    %v2502 = vld [vmem:[#allocation8 + $0x1f0] sm:$0xff]
    %v2503 = vld [vmem:[#allocation8 + $0x1f8] sm:$0xff]
    %v2504 = vld [vmem:[#allocation8 + $0x200] sm:$0xff]
    %v2505 = vld [vmem:[#allocation8 + $0x208] sm:$0xff]
    %v2506 = vld [vmem:[#allocation8 + $0x210] sm:$0xff]
    %v2507 = vld [vmem:[#allocation8 + $0x218] sm:$0xff]
    %v2508 = vld [vmem:[#allocation8 + $0x220] sm:$0xff]
    %v2509 = vld [vmem:[#allocation8 + $0x228] sm:$0xff]
    %v2510 = vld [vmem:[#allocation8 + $0x230] sm:$0xff]
    %v2511 = vld [vmem:[#allocation8 + $0x238] sm:$0xff]
    %v2512 = vld [vmem:[#allocation8 + $0x240] sm:$0xff]
    %v2513 = vld [vmem:[#allocation8 + $0x248] sm:$0xff]
    %v2514 = vld [vmem:[#allocation8 + $0x250] sm:$0xff]
    %v2515 = vld [vmem:[#allocation8 + $0x258] sm:$0xff]
    %v2516 = vld [vmem:[#allocation8 + $0x260] sm:$0xff]
    %v2517 = vld [vmem:[#allocation8 + $0x268] sm:$0xff]
    %v2518 = vld [vmem:[#allocation8 + $0x270] sm:$0xff]
    %v2519 = vld [vmem:[#allocation8 + $0x278] sm:$0xff]
    %v2520 = vld [vmem:[#allocation8 + $0x280] sm:$0xff]
    %v2521 = vld [vmem:[#allocation8 + $0x288] sm:$0xff]
    %v2522 = vld [vmem:[#allocation8 + $0x290] sm:$0xff]
    %v2523 = vld [vmem:[#allocation8 + $0x298] sm:$0xff]
    %v2524 = vld [vmem:[#allocation8 + $0x2a0] sm:$0xff]
    %v2525 = vld [vmem:[#allocation8 + $0x2a8] sm:$0xff]
    %v2526 = vld [vmem:[#allocation8 + $0x2b0] sm:$0xff]
    %v2527 = vld [vmem:[#allocation8 + $0x2b8] sm:$0xff]
    %v2528 = vld [vmem:[#allocation8 + $0x2c0] sm:$0xff]
    %v2529 = vld [vmem:[#allocation8 + $0x2c8] sm:$0xff]
    %v2530 = vld [vmem:[#allocation8 + $0x2d0] sm:$0xff]
    %v2531 = vld [vmem:[#allocation8 + $0x2d8] sm:$0xff]
    %v2532 = vld [vmem:[#allocation8 + $0x2e0] sm:$0xff]
    %v2533 = vld [vmem:[#allocation8 + $0x2e8] sm:$0xff]
    %v2534 = vld [vmem:[#allocation8 + $0x2f0] sm:$0xff]
    %v2535 = vld [vmem:[#allocation8 + $0x2f8] sm:$0xff]
    %v2536 = vld [vmem:[#allocation8 + $0x300] sm:$0xff]
    %v2537 = vld [vmem:[#allocation8 + $0x308] sm:$0xff]
    %v2538 = vld [vmem:[#allocation8 + $0x310] sm:$0xff]
    %v2539 = vld [vmem:[#allocation8 + $0x318] sm:$0xff]
    %v2540 = vld [vmem:[#allocation8 + $0x320] sm:$0xff]
    %v2541 = vld [vmem:[#allocation8 + $0x328] sm:$0xff]
    %v2542 = vld [vmem:[#allocation8 + $0x330] sm:$0xff]
    %v2543 = vld [vmem:[#allocation8 + $0x338] sm:$0xff]
    %v2544 = vld [vmem:[#allocation8 + $0x340] sm:$0xff]
    %v2545 = vld [vmem:[#allocation8 + $0x348] sm:$0xff]
    %v2546 = vld [vmem:[#allocation8 + $0x350] sm:$0xff]
    %v2547 = vld [vmem:[#allocation8 + $0x358] sm:$0xff]
    %v2548 = vld [vmem:[#allocation8 + $0x360] sm:$0xff]
    %v2549 = vld [vmem:[#allocation8 + $0x368] sm:$0xff]
    %v2550 = vld [vmem:[#allocation8 + $0x370] sm:$0xff]
    %v2551 = vld [vmem:[#allocation8 + $0x378] sm:$0xff]
    %v2552 = vld [vmem:[#allocation8 + $0x380] sm:$0xff]
    %v2553 = vld [vmem:[#allocation8 + $0x388] sm:$0xff]
    %v2554 = vld [vmem:[#allocation8 + $0x390] sm:$0xff]
    %v2555 = vld [vmem:[#allocation8 + $0x398] sm:$0xff]
    %v2556 = vld [vmem:[#allocation8 + $0x3a0] sm:$0xff]
    %v2557 = vld [vmem:[#allocation8 + $0x3a8] sm:$0xff]
    %v2558 = vld [vmem:[#allocation8 + $0x3b0] sm:$0xff]
    %v2559 = vld [vmem:[#allocation8 + $0x3b8] sm:$0xff]
    %v2560 = vld [vmem:[#allocation8 + $0x3c0] sm:$0xff]
    %v2561 = vld [vmem:[#allocation8 + $0x3c8] sm:$0xff]
    %v2562 = vld [vmem:[#allocation8 + $0x3d0] sm:$0xff]
    %v2563 = vld [vmem:[#allocation8 + $0x3d8] sm:$0xff]
    %v2564 = vld [vmem:[#allocation8 + $0x3e0] sm:$0xff]
    %v2565 = vld [vmem:[#allocation8 + $0x3e8] sm:$0xff]
    %v2566 = vld [vmem:[#allocation8 + $0x3f0] sm:$0xff]
    %v2567 = vld [vmem:[#allocation8 + $0x3f8] sm:$0xff]
    %v2696 = vunpack.c.l.b16 %v2440
    %v2697 = vunpack.c.h.b16 %v2440
    %v2698 = vunpack.c.l.b16 %v2441
    %v2699 = vunpack.c.h.b16 %v2441
    %v2700 = vunpack.c.l.b16 %v2442
    %v2701 = vunpack.c.h.b16 %v2442
    %v2702 = vunpack.c.l.b16 %v2443
    %v2703 = vunpack.c.h.b16 %v2443
    %v2704 = vunpack.c.l.b16 %v2444
    %v2705 = vunpack.c.h.b16 %v2444
    %v2706 = vunpack.c.l.b16 %v2445
    %v2707 = vunpack.c.h.b16 %v2445
    %v2708 = vunpack.c.l.b16 %v2446
    %v2709 = vunpack.c.h.b16 %v2446
    %v2710 = vunpack.c.l.b16 %v2447
    %v2711 = vunpack.c.h.b16 %v2447
    %v2712 = vunpack.c.l.b16 %v2448
    %v2713 = vunpack.c.h.b16 %v2448
    %v2714 = vunpack.c.l.b16 %v2449
    %v2715 = vunpack.c.h.b16 %v2449
    %v2716 = vunpack.c.l.b16 %v2450
    %v2717 = vunpack.c.h.b16 %v2450
    %v2718 = vunpack.c.l.b16 %v2451
    %v2719 = vunpack.c.h.b16 %v2451
    %v2720 = vunpack.c.l.b16 %v2452
    %v2721 = vunpack.c.h.b16 %v2452
    %v2722 = vunpack.c.l.b16 %v2453
    %v2723 = vunpack.c.h.b16 %v2453
    %v2724 = vunpack.c.l.b16 %v2454
    %v2725 = vunpack.c.h.b16 %v2454
    %v2726 = vunpack.c.l.b16 %v2455
    %v2727 = vunpack.c.h.b16 %v2455
    %v2728 = vunpack.c.l.b16 %v2456
    %v2729 = vunpack.c.h.b16 %v2456
    %v2730 = vunpack.c.l.b16 %v2457
    %v2731 = vunpack.c.h.b16 %v2457
    %v2732 = vunpack.c.l.b16 %v2458
    %v2733 = vunpack.c.h.b16 %v2458
    %v2734 = vunpack.c.l.b16 %v2459
    %v2735 = vunpack.c.h.b16 %v2459
    %v2736 = vunpack.c.l.b16 %v2460
    %v2737 = vunpack.c.h.b16 %v2460
    %v2738 = vunpack.c.l.b16 %v2461
    %v2739 = vunpack.c.h.b16 %v2461
    %v2740 = vunpack.c.l.b16 %v2462
    %v2741 = vunpack.c.h.b16 %v2462
    %v2742 = vunpack.c.l.b16 %v2463
    %v2743 = vunpack.c.h.b16 %v2463
    %v2744 = vunpack.c.l.b16 %v2464
    %v2745 = vunpack.c.h.b16 %v2464
    %v2746 = vunpack.c.l.b16 %v2465
    %v2747 = vunpack.c.h.b16 %v2465
    %v2748 = vunpack.c.l.b16 %v2466
    %v2749 = vunpack.c.h.b16 %v2466
    %v2750 = vunpack.c.l.b16 %v2467
    %v2751 = vunpack.c.h.b16 %v2467
    %v2752 = vunpack.c.l.b16 %v2468
    %v2753 = vunpack.c.h.b16 %v2468
    %v2754 = vunpack.c.l.b16 %v2469
    %v2755 = vunpack.c.h.b16 %v2469
    %v2756 = vunpack.c.l.b16 %v2470
    %v2757 = vunpack.c.h.b16 %v2470
    %v2758 = vunpack.c.l.b16 %v2471
    %v2759 = vunpack.c.h.b16 %v2471
    %v2760 = vunpack.c.l.b16 %v2472
    %v2761 = vunpack.c.h.b16 %v2472
    %v2762 = vunpack.c.l.b16 %v2473
    %v2763 = vunpack.c.h.b16 %v2473
    %v2764 = vunpack.c.l.b16 %v2474
    %v2765 = vunpack.c.h.b16 %v2474
    %v2766 = vunpack.c.l.b16 %v2475
    %v2767 = vunpack.c.h.b16 %v2475
    %v2768 = vunpack.c.l.b16 %v2476
    %v2769 = vunpack.c.h.b16 %v2476
    %v2770 = vunpack.c.l.b16 %v2477
    %v2771 = vunpack.c.h.b16 %v2477
    %v2772 = vunpack.c.l.b16 %v2478
    %v2773 = vunpack.c.h.b16 %v2478
    %v2774 = vunpack.c.l.b16 %v2479
    %v2775 = vunpack.c.h.b16 %v2479
    %v2776 = vunpack.c.l.b16 %v2480
    %v2777 = vunpack.c.h.b16 %v2480
    %v2778 = vunpack.c.l.b16 %v2481
    %v2779 = vunpack.c.h.b16 %v2481
    %v2780 = vunpack.c.l.b16 %v2482
    %v2781 = vunpack.c.h.b16 %v2482
    %v2782 = vunpack.c.l.b16 %v2483
    %v2783 = vunpack.c.h.b16 %v2483
    %v2784 = vunpack.c.l.b16 %v2484
    %v2785 = vunpack.c.h.b16 %v2484
    %v2786 = vunpack.c.l.b16 %v2485
    %v2787 = vunpack.c.h.b16 %v2485
    %v2788 = vunpack.c.l.b16 %v2486
    %v2789 = vunpack.c.h.b16 %v2486
    %v2790 = vunpack.c.l.b16 %v2487
    %v2791 = vunpack.c.h.b16 %v2487
    %v2792 = vunpack.c.l.b16 %v2488
    %v2793 = vunpack.c.h.b16 %v2488
    %v2794 = vunpack.c.l.b16 %v2489
    %v2795 = vunpack.c.h.b16 %v2489
    %v2796 = vunpack.c.l.b16 %v2490
    %v2797 = vunpack.c.h.b16 %v2490
    %v2798 = vunpack.c.l.b16 %v2491
    %v2799 = vunpack.c.h.b16 %v2491
    %v2800 = vunpack.c.l.b16 %v2492
    %v2801 = vunpack.c.h.b16 %v2492
    %v2802 = vunpack.c.l.b16 %v2493
    %v2803 = vunpack.c.h.b16 %v2493
    %v2804 = vunpack.c.l.b16 %v2494
    %v2805 = vunpack.c.h.b16 %v2494
    %v2806 = vunpack.c.l.b16 %v2495
    %v2807 = vunpack.c.h.b16 %v2495
    %v2808 = vunpack.c.l.b16 %v2496
    %v2809 = vunpack.c.h.b16 %v2496
    %v2810 = vunpack.c.l.b16 %v2497
    %v2811 = vunpack.c.h.b16 %v2497
    %v2812 = vunpack.c.l.b16 %v2498
    %v2813 = vunpack.c.h.b16 %v2498
    %v2814 = vunpack.c.l.b16 %v2499
    %v2815 = vunpack.c.h.b16 %v2499
    %v2816 = vunpack.c.l.b16 %v2500
    %v2817 = vunpack.c.h.b16 %v2500
    %v2818 = vunpack.c.l.b16 %v2501
    %v2819 = vunpack.c.h.b16 %v2501
    %v2820 = vunpack.c.l.b16 %v2502
    %v2821 = vunpack.c.h.b16 %v2502
    %v2822 = vunpack.c.l.b16 %v2503
    %v2823 = vunpack.c.h.b16 %v2503
    %v2824 = vunpack.c.l.b16 %v2504
    %v2825 = vunpack.c.h.b16 %v2504
    %v2826 = vunpack.c.l.b16 %v2505
    %v2827 = vunpack.c.h.b16 %v2505
    %v2828 = vunpack.c.l.b16 %v2506
    %v2829 = vunpack.c.h.b16 %v2506
    %v2830 = vunpack.c.l.b16 %v2507
    %v2831 = vunpack.c.h.b16 %v2507
    %v2832 = vunpack.c.l.b16 %v2508
    %v2833 = vunpack.c.h.b16 %v2508
    %v2834 = vunpack.c.l.b16 %v2509
    %v2835 = vunpack.c.h.b16 %v2509
    %v2836 = vunpack.c.l.b16 %v2510
    %v2837 = vunpack.c.h.b16 %v2510
    %v2838 = vunpack.c.l.b16 %v2511
    %v2839 = vunpack.c.h.b16 %v2511
    %v2840 = vunpack.c.l.b16 %v2512
    %v2841 = vunpack.c.h.b16 %v2512
    %v2842 = vunpack.c.l.b16 %v2513
    %v2843 = vunpack.c.h.b16 %v2513
    %v2844 = vunpack.c.l.b16 %v2514
    %v2845 = vunpack.c.h.b16 %v2514
    %v2846 = vunpack.c.l.b16 %v2515
    %v2847 = vunpack.c.h.b16 %v2515
    %v2848 = vunpack.c.l.b16 %v2516
    %v2849 = vunpack.c.h.b16 %v2516
    %v2850 = vunpack.c.l.b16 %v2517
    %v2851 = vunpack.c.h.b16 %v2517
    %v2852 = vunpack.c.l.b16 %v2518
    %v2853 = vunpack.c.h.b16 %v2518
    %v2854 = vunpack.c.l.b16 %v2519
    %v2855 = vunpack.c.h.b16 %v2519
    %v2856 = vunpack.c.l.b16 %v2520
    %v2857 = vunpack.c.h.b16 %v2520
    %v2858 = vunpack.c.l.b16 %v2521
    %v2859 = vunpack.c.h.b16 %v2521
    %v2860 = vunpack.c.l.b16 %v2522
    %v2861 = vunpack.c.h.b16 %v2522
    %v2862 = vunpack.c.l.b16 %v2523
    %v2863 = vunpack.c.h.b16 %v2523
    %v2864 = vunpack.c.l.b16 %v2524
    %v2865 = vunpack.c.h.b16 %v2524
    %v2866 = vunpack.c.l.b16 %v2525
    %v2867 = vunpack.c.h.b16 %v2525
    %v2868 = vunpack.c.l.b16 %v2526
    %v2869 = vunpack.c.h.b16 %v2526
    %v2870 = vunpack.c.l.b16 %v2527
    %v2871 = vunpack.c.h.b16 %v2527
    %v2872 = vunpack.c.l.b16 %v2528
    %v2873 = vunpack.c.h.b16 %v2528
    %v2874 = vunpack.c.l.b16 %v2529
    %v2875 = vunpack.c.h.b16 %v2529
    %v2876 = vunpack.c.l.b16 %v2530
    %v2877 = vunpack.c.h.b16 %v2530
    %v2878 = vunpack.c.l.b16 %v2531
    %v2879 = vunpack.c.h.b16 %v2531
    %v2880 = vunpack.c.l.b16 %v2532
    %v2881 = vunpack.c.h.b16 %v2532
    %v2882 = vunpack.c.l.b16 %v2533
    %v2883 = vunpack.c.h.b16 %v2533
    %v2884 = vunpack.c.l.b16 %v2534
    %v2885 = vunpack.c.h.b16 %v2534
    %v2886 = vunpack.c.l.b16 %v2535
    %v2887 = vunpack.c.h.b16 %v2535
    %v2888 = vunpack.c.l.b16 %v2536
    %v2889 = vunpack.c.h.b16 %v2536
    %v2890 = vunpack.c.l.b16 %v2537
    %v2891 = vunpack.c.h.b16 %v2537
    %v2892 = vunpack.c.l.b16 %v2538
    %v2893 = vunpack.c.h.b16 %v2538
    %v2894 = vunpack.c.l.b16 %v2539
    %v2895 = vunpack.c.h.b16 %v2539
    %v2896 = vunpack.c.l.b16 %v2540
    %v2897 = vunpack.c.h.b16 %v2540
    %v2898 = vunpack.c.l.b16 %v2541
    %v2899 = vunpack.c.h.b16 %v2541
    %v2900 = vunpack.c.l.b16 %v2542
    %v2901 = vunpack.c.h.b16 %v2542
    %v2902 = vunpack.c.l.b16 %v2543
    %v2903 = vunpack.c.h.b16 %v2543
    %v2904 = vunpack.c.l.b16 %v2544
    %v2905 = vunpack.c.h.b16 %v2544
    %v2906 = vunpack.c.l.b16 %v2545
    %v2907 = vunpack.c.h.b16 %v2545
    %v2908 = vunpack.c.l.b16 %v2546
    %v2909 = vunpack.c.h.b16 %v2546
    %v2910 = vunpack.c.l.b16 %v2547
    %v2911 = vunpack.c.h.b16 %v2547
    %v2912 = vunpack.c.l.b16 %v2548
    %v2913 = vunpack.c.h.b16 %v2548
    %v2914 = vunpack.c.l.b16 %v2549
    %v2915 = vunpack.c.h.b16 %v2549
    %v2916 = vunpack.c.l.b16 %v2550
    %v2917 = vunpack.c.h.b16 %v2550
    %v2918 = vunpack.c.l.b16 %v2551
    %v2919 = vunpack.c.h.b16 %v2551
    %v2920 = vunpack.c.l.b16 %v2552
    %v2921 = vunpack.c.h.b16 %v2552
    %v2922 = vunpack.c.l.b16 %v2553
    %v2923 = vunpack.c.h.b16 %v2553
    %v2924 = vunpack.c.l.b16 %v2554
    %v2925 = vunpack.c.h.b16 %v2554
    %v2926 = vunpack.c.l.b16 %v2555
    %v2927 = vunpack.c.h.b16 %v2555
    %v2928 = vunpack.c.l.b16 %v2556
    %v2929 = vunpack.c.h.b16 %v2556
    %v2930 = vunpack.c.l.b16 %v2557
    %v2931 = vunpack.c.h.b16 %v2557
    %v2932 = vunpack.c.l.b16 %v2558
    %v2933 = vunpack.c.h.b16 %v2558
    %v2934 = vunpack.c.l.b16 %v2559
    %v2935 = vunpack.c.h.b16 %v2559
    %v2936 = vunpack.c.l.b16 %v2560
    %v2937 = vunpack.c.h.b16 %v2560
    %v2938 = vunpack.c.l.b16 %v2561
    %v2939 = vunpack.c.h.b16 %v2561
    %v2940 = vunpack.c.l.b16 %v2562
    %v2941 = vunpack.c.h.b16 %v2562
    %v2942 = vunpack.c.l.b16 %v2563
    %v2943 = vunpack.c.h.b16 %v2563
    %v2944 = vunpack.c.l.b16 %v2564
    %v2945 = vunpack.c.h.b16 %v2564
    %v2946 = vunpack.c.l.b16 %v2565
    %v2947 = vunpack.c.h.b16 %v2565
    %v2948 = vunpack.c.l.b16 %v2566
    %v2949 = vunpack.c.h.b16 %v2566
    %v2950 = vunpack.c.l.b16 %v2567
    %v2951 = vunpack.c.h.b16 %v2567
    %v2952 = vpack.c.b16 %v2704, %v2696
    %v2953 = vpack.c.b16 %v2705, %v2697
    %v2954 = vpack.c.b16 %v2706, %v2698
    %v2955 = vpack.c.b16 %v2707, %v2699
    %v2956 = vpack.c.b16 %v2708, %v2700
    %v2957 = vpack.c.b16 %v2709, %v2701
    %v2958 = vpack.c.b16 %v2710, %v2702
    %v2959 = vpack.c.b16 %v2711, %v2703
    %v2960 = vpack.c.b16 %v2720, %v2712
    %v2961 = vpack.c.b16 %v2721, %v2713
    %v2962 = vpack.c.b16 %v2722, %v2714
    %v2963 = vpack.c.b16 %v2723, %v2715
    %v2964 = vpack.c.b16 %v2724, %v2716
    %v2965 = vpack.c.b16 %v2725, %v2717
    %v2966 = vpack.c.b16 %v2726, %v2718
    %v2967 = vpack.c.b16 %v2727, %v2719
    %v2968 = vpack.c.b16 %v2736, %v2728
    %v2969 = vpack.c.b16 %v2737, %v2729
    %v2970 = vpack.c.b16 %v2738, %v2730
    %v2971 = vpack.c.b16 %v2739, %v2731
    %v2972 = vpack.c.b16 %v2740, %v2732
    %v2973 = vpack.c.b16 %v2741, %v2733
    %v2974 = vpack.c.b16 %v2742, %v2734
    %v2975 = vpack.c.b16 %v2743, %v2735
    %v2976 = vpack.c.b16 %v2752, %v2744
    %v2977 = vpack.c.b16 %v2753, %v2745
    %v2978 = vpack.c.b16 %v2754, %v2746
    %v2979 = vpack.c.b16 %v2755, %v2747
    %v2980 = vpack.c.b16 %v2756, %v2748
    %v2981 = vpack.c.b16 %v2757, %v2749
    %v2982 = vpack.c.b16 %v2758, %v2750
    %v2983 = vpack.c.b16 %v2759, %v2751
    %v2984 = vpack.c.b16 %v2768, %v2760
    %v2985 = vpack.c.b16 %v2769, %v2761
    %v2986 = vpack.c.b16 %v2770, %v2762
    %v2987 = vpack.c.b16 %v2771, %v2763
    %v2988 = vpack.c.b16 %v2772, %v2764
    %v2989 = vpack.c.b16 %v2773, %v2765
    %v2990 = vpack.c.b16 %v2774, %v2766
    %v2991 = vpack.c.b16 %v2775, %v2767
    %v2992 = vpack.c.b16 %v2784, %v2776
    %v2993 = vpack.c.b16 %v2785, %v2777
    %v2994 = vpack.c.b16 %v2786, %v2778
    %v2995 = vpack.c.b16 %v2787, %v2779
    %v2996 = vpack.c.b16 %v2788, %v2780
    %v2997 = vpack.c.b16 %v2789, %v2781
    %v2998 = vpack.c.b16 %v2790, %v2782
    %v2999 = vpack.c.b16 %v2791, %v2783
    %v3000 = vpack.c.b16 %v2800, %v2792
    %v3001 = vpack.c.b16 %v2801, %v2793
    %v3002 = vpack.c.b16 %v2802, %v2794
    %v3003 = vpack.c.b16 %v2803, %v2795
    %v3004 = vpack.c.b16 %v2804, %v2796
    %v3005 = vpack.c.b16 %v2805, %v2797
    %v3006 = vpack.c.b16 %v2806, %v2798
    %v3007 = vpack.c.b16 %v2807, %v2799
    %v3008 = vpack.c.b16 %v2816, %v2808
    %v3009 = vpack.c.b16 %v2817, %v2809
    %v3010 = vpack.c.b16 %v2818, %v2810
    %v3011 = vpack.c.b16 %v2819, %v2811
    %v3012 = vpack.c.b16 %v2820, %v2812
    %v3013 = vpack.c.b16 %v2821, %v2813
    %v3014 = vpack.c.b16 %v2822, %v2814
    %v3015 = vpack.c.b16 %v2823, %v2815
    %v3016 = vpack.c.b16 %v2832, %v2824
    %v3017 = vpack.c.b16 %v2833, %v2825
    %v3018 = vpack.c.b16 %v2834, %v2826
    %v3019 = vpack.c.b16 %v2835, %v2827
    %v3020 = vpack.c.b16 %v2836, %v2828
    %v3021 = vpack.c.b16 %v2837, %v2829
    %v3022 = vpack.c.b16 %v2838, %v2830
    %v3023 = vpack.c.b16 %v2839, %v2831
    %v3024 = vpack.c.b16 %v2848, %v2840
    %v3025 = vpack.c.b16 %v2849, %v2841
    %v3026 = vpack.c.b16 %v2850, %v2842
    %v3027 = vpack.c.b16 %v2851, %v2843
    %v3028 = vpack.c.b16 %v2852, %v2844
    %v3029 = vpack.c.b16 %v2853, %v2845
    %v3030 = vpack.c.b16 %v2854, %v2846
    %v3031 = vpack.c.b16 %v2855, %v2847
    %v3032 = vpack.c.b16 %v2864, %v2856
    %v3033 = vpack.c.b16 %v2865, %v2857
    %v3034 = vpack.c.b16 %v2866, %v2858
    %v3035 = vpack.c.b16 %v2867, %v2859
    %v3036 = vpack.c.b16 %v2868, %v2860
    %v3037 = vpack.c.b16 %v2869, %v2861
    %v3038 = vpack.c.b16 %v2870, %v2862
    %v3039 = vpack.c.b16 %v2871, %v2863
    %v3040 = vpack.c.b16 %v2880, %v2872
    %v3041 = vpack.c.b16 %v2881, %v2873
    %v3042 = vpack.c.b16 %v2882, %v2874
    %v3043 = vpack.c.b16 %v2883, %v2875
    %v3044 = vpack.c.b16 %v2884, %v2876
    %v3045 = vpack.c.b16 %v2885, %v2877
    %v3046 = vpack.c.b16 %v2886, %v2878
    %v3047 = vpack.c.b16 %v2887, %v2879
    %v3048 = vpack.c.b16 %v2896, %v2888
    %v3049 = vpack.c.b16 %v2897, %v2889
    %v3050 = vpack.c.b16 %v2898, %v2890
    %v3051 = vpack.c.b16 %v2899, %v2891
    %v3052 = vpack.c.b16 %v2900, %v2892
    %v3053 = vpack.c.b16 %v2901, %v2893
    %v3054 = vpack.c.b16 %v2902, %v2894
    %v3055 = vpack.c.b16 %v2903, %v2895
    %v3056 = vpack.c.b16 %v2912, %v2904
    %v3057 = vpack.c.b16 %v2913, %v2905
    %v3058 = vpack.c.b16 %v2914, %v2906
    %v3059 = vpack.c.b16 %v2915, %v2907
    %v3060 = vpack.c.b16 %v2916, %v2908
    %v3061 = vpack.c.b16 %v2917, %v2909
    %v3062 = vpack.c.b16 %v2918, %v2910
    %v3063 = vpack.c.b16 %v2919, %v2911
    %v3064 = vpack.c.b16 %v2928, %v2920
    %v3065 = vpack.c.b16 %v2929, %v2921
    %v3066 = vpack.c.b16 %v2930, %v2922
    %v3067 = vpack.c.b16 %v2931, %v2923
    %v3068 = vpack.c.b16 %v2932, %v2924
    %v3069 = vpack.c.b16 %v2933, %v2925
    %v3070 = vpack.c.b16 %v2934, %v2926
    %v3071 = vpack.c.b16 %v2935, %v2927
    %v3072 = vpack.c.b16 %v2944, %v2936
    %v3073 = vpack.c.b16 %v2945, %v2937
    %v3074 = vpack.c.b16 %v2946, %v2938
    %v3075 = vpack.c.b16 %v2947, %v2939
    %v3076 = vpack.c.b16 %v2948, %v2940
    %v3077 = vpack.c.b16 %v2949, %v2941
    %v3078 = vpack.c.b16 %v2950, %v2942
    %v3079 = vpack.c.b16 %v2951, %v2943
    %3208 = vmatprep.subr.bf16.mxu0 %v2953
    %3209 = vmatpush1.bf16.msra.mxu0 %v2952
    %3210 = vmatprep.subr.bf16.mxu0 %v2961
    %3211 = vmatpush1.bf16.msra.mxu0 %v2960
    %3212 = vmatprep.subr.bf16.mxu0 %v2969
    %3213 = vmatpush1.bf16.msra.mxu0 %v2968
    %3214 = vmatprep.subr.bf16.mxu0 %v2977
    %3215 = vmatpush1.bf16.msra.mxu0 %v2976
    %3216 = vmatprep.subr.bf16.mxu0 %v2985
    %3217 = vmatpush1.bf16.msra.mxu0 %v2984
    %3218 = vmatprep.subr.bf16.mxu0 %v2993
    %3219 = vmatpush1.bf16.msra.mxu0 %v2992
    %3220 = vmatprep.subr.bf16.mxu0 %v3001
    %3221 = vmatpush1.bf16.msra.mxu0 %v3000
    %3222 = vmatprep.subr.bf16.mxu0 %v3009
    %3223 = vmatpush1.bf16.msra.mxu0 %v3008
    %3224 = vmatprep.subr.bf16.mxu0 %v3017
    %3225 = vmatpush1.bf16.msra.mxu0 %v3016
    %3226 = vmatprep.subr.bf16.mxu0 %v3025
    %3227 = vmatpush1.bf16.msra.mxu0 %v3024
    %3228 = vmatprep.subr.bf16.mxu0 %v3033
    %3229 = vmatpush1.bf16.msra.mxu0 %v3032
    %3230 = vmatprep.subr.bf16.mxu0 %v3041
    %3231 = vmatpush1.bf16.msra.mxu0 %v3040
    %3232 = vmatprep.subr.bf16.mxu0 %v3049
    %3233 = vmatpush1.bf16.msra.mxu0 %v3048
    %3234 = vmatprep.subr.bf16.mxu0 %v3057
    %3235 = vmatpush1.bf16.msra.mxu0 %v3056
    %3236 = vmatprep.subr.bf16.mxu0 %v3065
    %3237 = vmatpush1.bf16.msra.mxu0 %v3064
    %3238 = vmatprep.subr.bf16.mxu0 %v3073
    %3239 = vmatpush1.bf16.msra.mxu0 %v3072
    %3240 = vmatprep.mubr.bf16.mxu0 %v1756
    %3241 = vmatmul.mubr.bf16.gmra.mrb[0].mxu0 %v1755
    %v3242 = vpop.f32.mrb[0].mxu0
    %v3243 = vadd.f32 0.0, %v3242
    %v3244 = vpop.f32.mrb[0].mxu0
    %v3245 = vadd.f32 0.0, %v3244
    %v3246 = vpop.f32.mrb[0].mxu0
    %v3247 = vpop.f32.mrb[0].mxu0
    %3248 = vdwg.mxu0
    %3249 = vmatprep.subr.bf16.mxu0 %v2955
    %3250 = vmatpush1.bf16.msra.mxu0 %v2954
    %3251 = vmatprep.subr.bf16.mxu0 %v2963
    %3252 = vmatpush1.bf16.msra.mxu0 %v2962
    %3253 = vmatprep.subr.bf16.mxu0 %v2971
    %3254 = vmatpush1.bf16.msra.mxu0 %v2970
    %3255 = vmatprep.subr.bf16.mxu0 %v2979
    %3256 = vmatpush1.bf16.msra.mxu0 %v2978
    %3257 = vmatprep.subr.bf16.mxu0 %v2987
    %3258 = vmatpush1.bf16.msra.mxu0 %v2986
    %3259 = vmatprep.subr.bf16.mxu0 %v2995
    %3260 = vmatpush1.bf16.msra.mxu0 %v2994
    %3261 = vmatprep.subr.bf16.mxu0 %v3003
    %3262 = vmatpush1.bf16.msra.mxu0 %v3002
    %3263 = vmatprep.subr.bf16.mxu0 %v3011
    %3264 = vmatpush1.bf16.msra.mxu0 %v3010
    %3265 = vmatprep.subr.bf16.mxu0 %v3019
    %3266 = vmatpush1.bf16.msra.mxu0 %v3018
    %3267 = vmatprep.subr.bf16.mxu0 %v3027
    %3268 = vmatpush1.bf16.msra.mxu0 %v3026
    %3269 = vmatprep.subr.bf16.mxu0 %v3035
    %3270 = vmatpush1.bf16.msra.mxu0 %v3034
    %3271 = vmatprep.subr.bf16.mxu0 %v3043
    %3272 = vmatpush1.bf16.msra.mxu0 %v3042
    %3273 = vmatprep.subr.bf16.mxu0 %v3051
    %3274 = vmatpush1.bf16.msra.mxu0 %v3050
    %3275 = vmatprep.subr.bf16.mxu0 %v3059
    %3276 = vmatpush1.bf16.msra.mxu0 %v3058
    %3277 = vmatprep.subr.bf16.mxu0 %v3067
    %3278 = vmatpush1.bf16.msra.mxu0 %v3066
    %3279 = vmatprep.subr.bf16.mxu0 %v3075
    %3280 = vmatpush1.bf16.msra.mxu0 %v3074
    %3281 = vmatprep.mubr.bf16.mxu0 %v1756
    %3282 = vmatmul.mubr.bf16.gmra.mrb[0].mxu0 %v1755
    %v3283 = vpop.f32.mrb[0].mxu0
    %v3284 = vadd.f32 0.0, %v3283
    %v3285 = vpop.f32.mrb[0].mxu0
    %v3286 = vadd.f32 0.0, %v3285
    %v3287 = vpop.f32.mrb[0].mxu0
    %v3288 = vpop.f32.mrb[0].mxu0
    %3289 = vdwg.mxu0
    %3290 = vmatprep.subr.bf16.mxu0 %v2957
    %3291 = vmatpush1.bf16.msra.mxu0 %v2956
    %3292 = vmatprep.subr.bf16.mxu0 %v2965
    %3293 = vmatpush1.bf16.msra.mxu0 %v2964
    %3294 = vmatprep.subr.bf16.mxu0 %v2973
    %3295 = vmatpush1.bf16.msra.mxu0 %v2972
    %3296 = vmatprep.subr.bf16.mxu0 %v2981
    %3297 = vmatpush1.bf16.msra.mxu0 %v2980
    %3298 = vmatprep.subr.bf16.mxu0 %v2989
    %3299 = vmatpush1.bf16.msra.mxu0 %v2988
    %3300 = vmatprep.subr.bf16.mxu0 %v2997
    %3301 = vmatpush1.bf16.msra.mxu0 %v2996
    %3302 = vmatprep.subr.bf16.mxu0 %v3005
    %3303 = vmatpush1.bf16.msra.mxu0 %v3004
    %3304 = vmatprep.subr.bf16.mxu0 %v3013
    %3305 = vmatpush1.bf16.msra.mxu0 %v3012
    %3306 = vmatprep.subr.bf16.mxu0 %v3021
    %3307 = vmatpush1.bf16.msra.mxu0 %v3020
    %3308 = vmatprep.subr.bf16.mxu0 %v3029
    %3309 = vmatpush1.bf16.msra.mxu0 %v3028
    %3310 = vmatprep.subr.bf16.mxu0 %v3037
    %3311 = vmatpush1.bf16.msra.mxu0 %v3036
    %3312 = vmatprep.subr.bf16.mxu0 %v3045
    %3313 = vmatpush1.bf16.msra.mxu0 %v3044
    %3314 = vmatprep.subr.bf16.mxu0 %v3053
    %3315 = vmatpush1.bf16.msra.mxu0 %v3052
    %3316 = vmatprep.subr.bf16.mxu0 %v3061
    %3317 = vmatpush1.bf16.msra.mxu0 %v3060
    %3318 = vmatprep.subr.bf16.mxu0 %v3069
    %3319 = vmatpush1.bf16.msra.mxu0 %v3068
    %3320 = vmatprep.subr.bf16.mxu0 %v3077
    %3321 = vmatpush1.bf16.msra.mxu0 %v3076
    %3322 = vmatprep.mubr.bf16.mxu0 %v1756
    %3323 = vmatmul.mubr.bf16.gmra.mrb[0].mxu0 %v1755
    %v3324 = vpop.f32.mrb[0].mxu0
    %v3325 = vadd.f32 0.0, %v3324
    %v3326 = vpop.f32.mrb[0].mxu0
    %v3327 = vadd.f32 0.0, %v3326
    %v3328 = vpop.f32.mrb[0].mxu0
    %v3329 = vpop.f32.mrb[0].mxu0
    %3330 = vdwg.mxu0
    %3331 = vmatprep.subr.bf16.mxu0 %v2959
    %3332 = vmatpush1.bf16.msra.mxu0 %v2958
    %3333 = vmatprep.subr.bf16.mxu0 %v2967
    %3334 = vmatpush1.bf16.msra.mxu0 %v2966
    %3335 = vmatprep.subr.bf16.mxu0 %v2975
    %3336 = vmatpush1.bf16.msra.mxu0 %v2974
    %3337 = vmatprep.subr.bf16.mxu0 %v2983
    %3338 = vmatpush1.bf16.msra.mxu0 %v2982
    %3339 = vmatprep.subr.bf16.mxu0 %v2991
    %3340 = vmatpush1.bf16.msra.mxu0 %v2990
    %3341 = vmatprep.subr.bf16.mxu0 %v2999
    %3342 = vmatpush1.bf16.msra.mxu0 %v2998
    %3343 = vmatprep.subr.bf16.mxu0 %v3007
    %3344 = vmatpush1.bf16.msra.mxu0 %v3006
    %3345 = vmatprep.subr.bf16.mxu0 %v3015
    %3346 = vmatpush1.bf16.msra.mxu0 %v3014
    %3347 = vmatprep.subr.bf16.mxu0 %v3023
    %3348 = vmatpush1.bf16.msra.mxu0 %v3022
    %3349 = vmatprep.subr.bf16.mxu0 %v3031
    %3350 = vmatpush1.bf16.msra.mxu0 %v3030
    %3351 = vmatprep.subr.bf16.mxu0 %v3039
    %3352 = vmatpush1.bf16.msra.mxu0 %v3038
    %3353 = vmatprep.subr.bf16.mxu0 %v3047
    %3354 = vmatpush1.bf16.msra.mxu0 %v3046
    %3355 = vmatprep.subr.bf16.mxu0 %v3055
    %3356 = vmatpush1.bf16.msra.mxu0 %v3054
    %3357 = vmatprep.subr.bf16.mxu0 %v3063
    %3358 = vmatpush1.bf16.msra.mxu0 %v3062
    %3359 = vmatprep.subr.bf16.mxu0 %v3071
    %3360 = vmatpush1.bf16.msra.mxu0 %v3070
    %3361 = vmatprep.subr.bf16.mxu0 %v3079
    %3362 = vmatpush1.bf16.msra.mxu0 %v3078
    %3363 = vmatprep.mubr.bf16.mxu0 %v1756
    %3364 = vmatmul.mubr.bf16.gmra.mrb[0].mxu0 %v1755
    %v3365 = vpop.f32.mrb[0].mxu0
    %v3366 = vadd.f32 0.0, %v3365
    %v3367 = vpop.f32.mrb[0].mxu0
    %v3368 = vadd.f32 0.0, %v3367
    %v3369 = vpop.f32.mrb[0].mxu0
    %v3370 = vpop.f32.mrb[0].mxu0
    %3371 = vdwg.mxu0
    %v3372 = vadd.f32 %v2432, %v3243
    %v3373 = vadd.f32 %v2433, %v3245
    %v3374 = vadd.f32 %v2434, %v3284
    %v3375 = vadd.f32 %v2435, %v3286
    %v3376 = vadd.f32 %v2436, %v3325
    %v3377 = vadd.f32 %v2437, %v3327
    %v3378 = vadd.f32 %v2438, %v3366
    %v3379 = vadd.f32 %v2439, %v3368
    %v3380 = vxor.u32 %v3372, 2147483648
    %v3381 = vxor.u32 %v3373, 2147483648
    %v3382 = vmul.f32 %v3380, 1.442695
    %v3383 = vpow.pop %v3382
    %v3384 = vmul.f32 %v3381, 1.442695
    %v3385 = vpow.pop %v3384
    %v3386 = vadd.f32 %v3383, 1.0
    %v3387 = vadd.f32 %v3385, 1.0
    %v3388 = vrcp.pop %v3386
    %v3389 = vmul.f32 1.0, %v3388
    %v3390 = vrcp.pop %v3387
    %v3391 = vmul.f32 1.0, %v3390
    %v3392 = vxor.u32 %v3374, 2147483648
    %v3393 = vxor.u32 %v3375, 2147483648
    %v3394 = vmul.f32 %v3392, 1.442695
    %v3395 = vpow.pop %v3394
    %v3396 = vmul.f32 %v3393, 1.442695
    %v3397 = vpow.pop %v3396
    %v3398 = vadd.f32 %v3395, 1.0
    %v3399 = vadd.f32 %v3397, 1.0
    %v3400 = vrcp.pop %v3398
    %v3401 = vmul.f32 1.0, %v3400
    %v3402 = vrcp.pop %v3399
    %v3403 = vmul.f32 1.0, %v3402
    %v3404 = vtanh.pop %v3376
    %v3405 = vtanh.pop %v3377
    %v3406 = vxor.u32 %v3378, 2147483648
    %v3407 = vxor.u32 %v3379, 2147483648
    %v3408 = vmul.f32 %v3406, 1.442695
    %v3409 = vpow.pop %v3408
    %v3410 = vmul.f32 %v3407, 1.442695
    %v3411 = vpow.pop %v3410
    %v3412 = vadd.f32 %v3409, 1.0
    %v3413 = vadd.f32 %v3411, 1.0
    %v3414 = vrcp.pop %v3412
    %v3415 = vmul.f32 1.0, %v3414
    %v3416 = vrcp.pop %v3413
    %v3417 = vmul.f32 1.0, %v3416
    %v3418 = vmul.f32 %v3401, %v1745
    %v3419 = vmul.f32 %v3403, %v1746
    %v3420 = vmul.f32 %v3389, %v3404
    %v3421 = vmul.f32 %v3391, %v3405
    %v3422 = vadd.f32 %v3418, %v3420
    %v3423 = vadd.f32 %v3419, %v3421
    %v3424 = vtanh.pop %v3422
    %v3425 = vtanh.pop %v3423
    %v3426 = vmul.f32 %v3415, %v3424
    %v3427 = vmul.f32 %v3417, %v3425
    %v3428 = vpack.c.bf16 %v3426, %v3426
    %v3429 = vpack.c.bf16 %v3427, %v3427
    %v3430 = vpack.c.bf16 %v2430, %v2430
    %v3431 = vpack.c.bf16 %v2431, %v2431
    %3432 = vmatprep.subr.bf16.mxu0 %v1759
    %3433 = vmatpush1.bf16.msra.mxu0 %v1758
    %3434 = vmatprep.subr.bf16.mxu0 %v1767
    %3435 = vmatpush1.bf16.msra.mxu0 %v1766
    %3436 = vmatprep.subr.bf16.mxu0 %v1775
    %3437 = vmatpush1.bf16.msra.mxu0 %v1774
    %3438 = vmatprep.subr.bf16.mxu0 %v1783
    %3439 = vmatpush1.bf16.msra.mxu0 %v1782
    %3440 = vmatprep.subr.bf16.mxu0 %v1791
    %3441 = vmatpush1.bf16.msra.mxu0 %v1790
    %3442 = vmatprep.subr.bf16.mxu0 %v1799
    %3443 = vmatpush1.bf16.msra.mxu0 %v1798
    %3444 = vmatprep.subr.bf16.mxu0 %v1807
    %3445 = vmatpush1.bf16.msra.mxu0 %v1806
    %3446 = vmatprep.subr.bf16.mxu0 %v1815
    %3447 = vmatpush1.bf16.msra.mxu0 %v1814
    %3448 = vmatprep.subr.bf16.mxu0 %v1823
    %3449 = vmatpush1.bf16.msra.mxu0 %v1822
    %3450 = vmatprep.subr.bf16.mxu0 %v1831
    %3451 = vmatpush1.bf16.msra.mxu0 %v1830
    %3452 = vmatprep.subr.bf16.mxu0 %v1839
    %3453 = vmatpush1.bf16.msra.mxu0 %v1838
    %3454 = vmatprep.subr.bf16.mxu0 %v1847
    %3455 = vmatpush1.bf16.msra.mxu0 %v1846
    %3456 = vmatprep.subr.bf16.mxu0 %v1855
    %3457 = vmatpush1.bf16.msra.mxu0 %v1854
    %3458 = vmatprep.subr.bf16.mxu0 %v1863
    %3459 = vmatpush1.bf16.msra.mxu0 %v1862
    %3460 = vmatprep.subr.bf16.mxu0 %v1871
    %3461 = vmatpush1.bf16.msra.mxu0 %v1870
    %3462 = vmatprep.subr.bf16.mxu0 %v1879
    %3463 = vmatpush1.bf16.msra.mxu0 %v1878
    %3464 = vmatprep.mubr.bf16.mxu0 %v3429
    %3465 = vmatmul.mubr.bf16.gmra.mrb[0].mxu0 %v3428
    %v3466 = vpop.f32.mrb[0].mxu0
    %v3467 = vadd.f32 %v2019, %v3466
    %v3468 = vpop.f32.mrb[0].mxu0
    %v3469 = vadd.f32 %v2023, %v3468
    %v3470 = vpop.f32.mrb[0].mxu0
    %v3471 = vpop.f32.mrb[0].mxu0
    %3472 = vdwg.mxu0
    %3473 = vmatprep.subr.bf16.mxu0 %v1887
    %3474 = vmatpush1.bf16.msra.mxu0 %v1886
    %3475 = vmatprep.subr.bf16.mxu0 %v1895
    %3476 = vmatpush1.bf16.msra.mxu0 %v1894
    %3477 = vmatprep.subr.bf16.mxu0 %v1903
    %3478 = vmatpush1.bf16.msra.mxu0 %v1902
    %3479 = vmatprep.subr.bf16.mxu0 %v1911
    %3480 = vmatpush1.bf16.msra.mxu0 %v1910
    %3481 = vmatprep.subr.bf16.mxu0 %v1919
    %3482 = vmatpush1.bf16.msra.mxu0 %v1918
    %3483 = vmatprep.subr.bf16.mxu0 %v1927
    %3484 = vmatpush1.bf16.msra.mxu0 %v1926
    %3485 = vmatprep.subr.bf16.mxu0 %v1935
    %3486 = vmatpush1.bf16.msra.mxu0 %v1934
    %3487 = vmatprep.subr.bf16.mxu0 %v1943
    %3488 = vmatpush1.bf16.msra.mxu0 %v1942
    %3489 = vmatprep.subr.bf16.mxu0 %v1951
    %3490 = vmatpush1.bf16.msra.mxu0 %v1950
    %3491 = vmatprep.subr.bf16.mxu0 %v1959
    %3492 = vmatpush1.bf16.msra.mxu0 %v1958
    %3493 = vmatprep.subr.bf16.mxu0 %v1967
    %3494 = vmatpush1.bf16.msra.mxu0 %v1966
    %3495 = vmatprep.subr.bf16.mxu0 %v1975
    %3496 = vmatpush1.bf16.msra.mxu0 %v1974
    %3497 = vmatprep.subr.bf16.mxu0 %v1983
    %3498 = vmatpush1.bf16.msra.mxu0 %v1982
    %3499 = vmatprep.subr.bf16.mxu0 %v1991
    %3500 = vmatpush1.bf16.msra.mxu0 %v1990
    %3501 = vmatprep.subr.bf16.mxu0 %v1999
    %3502 = vmatpush1.bf16.msra.mxu0 %v1998
    %3503 = vmatprep.subr.bf16.mxu0 %v2007
    %3504 = vmatpush1.bf16.msra.mxu0 %v2006
    %3505 = vmatprep.mubr.bf16.mxu0 %v3431
    %3506 = vmatmul.mubr.bf16.gmra.mrb[0].mxu0 %v3430
    %v3507 = vpop.f32.mrb[0].mxu0
    %v3508 = vadd.f32 %v3467, %v3507
    %v3509 = vpop.f32.mrb[0].mxu0
    %v3510 = vadd.f32 %v3469, %v3509
    %v3511 = vpop.f32.mrb[0].mxu0
    %v3512 = vpop.f32.mrb[0].mxu0
    %3513 = vdwg.mxu0
    %3514 = vmatprep.subr.bf16.mxu0 %v1761
    %3515 = vmatpush1.bf16.msra.mxu0 %v1760
    %3516 = vmatprep.subr.bf16.mxu0 %v1769
    %3517 = vmatpush1.bf16.msra.mxu0 %v1768
    %3518 = vmatprep.subr.bf16.mxu0 %v1777
    %3519 = vmatpush1.bf16.msra.mxu0 %v1776
    %3520 = vmatprep.subr.bf16.mxu0 %v1785
    %3521 = vmatpush1.bf16.msra.mxu0 %v1784
    %3522 = vmatprep.subr.bf16.mxu0 %v1793
    %3523 = vmatpush1.bf16.msra.mxu0 %v1792
    %3524 = vmatprep.subr.bf16.mxu0 %v1801
    %3525 = vmatpush1.bf16.msra.mxu0 %v1800
    %3526 = vmatprep.subr.bf16.mxu0 %v1809
    %3527 = vmatpush1.bf16.msra.mxu0 %v1808
    %3528 = vmatprep.subr.bf16.mxu0 %v1817
    %3529 = vmatpush1.bf16.msra.mxu0 %v1816
    %3530 = vmatprep.subr.bf16.mxu0 %v1825
    %3531 = vmatpush1.bf16.msra.mxu0 %v1824
    %3532 = vmatprep.subr.bf16.mxu0 %v1833
    %3533 = vmatpush1.bf16.msra.mxu0 %v1832
    %3534 = vmatprep.subr.bf16.mxu0 %v1841
    %3535 = vmatpush1.bf16.msra.mxu0 %v1840
    %3536 = vmatprep.subr.bf16.mxu0 %v1849
    %3537 = vmatpush1.bf16.msra.mxu0 %v1848
    %3538 = vmatprep.subr.bf16.mxu0 %v1857
    %3539 = vmatpush1.bf16.msra.mxu0 %v1856
    %3540 = vmatprep.subr.bf16.mxu0 %v1865
    %3541 = vmatpush1.bf16.msra.mxu0 %v1864
    %3542 = vmatprep.subr.bf16.mxu0 %v1873
    %3543 = vmatpush1.bf16.msra.mxu0 %v1872
    %3544 = vmatprep.subr.bf16.mxu0 %v1881
    %3545 = vmatpush1.bf16.msra.mxu0 %v1880
    %3546 = vmatprep.mubr.bf16.mxu0 %v3429
    %3547 = vmatmul.mubr.bf16.gmra.mrb[0].mxu0 %v3428
    %v3548 = vpop.f32.mrb[0].mxu0
    %v3549 = vadd.f32 %v2027, %v3548
    %v3550 = vpop.f32.mrb[0].mxu0
    %v3551 = vadd.f32 %v2031, %v3550
    %v3552 = vpop.f32.mrb[0].mxu0
    %v3553 = vpop.f32.mrb[0].mxu0
    %3554 = vdwg.mxu0
    %3555 = vmatprep.subr.bf16.mxu0 %v1889
    %3556 = vmatpush1.bf16.msra.mxu0 %v1888
    %3557 = vmatprep.subr.bf16.mxu0 %v1897
    %3558 = vmatpush1.bf16.msra.mxu0 %v1896
    %3559 = vmatprep.subr.bf16.mxu0 %v1905
    %3560 = vmatpush1.bf16.msra.mxu0 %v1904
    %3561 = vmatprep.subr.bf16.mxu0 %v1913
    %3562 = vmatpush1.bf16.msra.mxu0 %v1912
    %3563 = vmatprep.subr.bf16.mxu0 %v1921
    %3564 = vmatpush1.bf16.msra.mxu0 %v1920
    %3565 = vmatprep.subr.bf16.mxu0 %v1929
    %3566 = vmatpush1.bf16.msra.mxu0 %v1928
    %3567 = vmatprep.subr.bf16.mxu0 %v1937
    %3568 = vmatpush1.bf16.msra.mxu0 %v1936
    %3569 = vmatprep.subr.bf16.mxu0 %v1945
    %3570 = vmatpush1.bf16.msra.mxu0 %v1944
    %3571 = vmatprep.subr.bf16.mxu0 %v1953
    %3572 = vmatpush1.bf16.msra.mxu0 %v1952
    %3573 = vmatprep.subr.bf16.mxu0 %v1961
    %3574 = vmatpush1.bf16.msra.mxu0 %v1960
    %3575 = vmatprep.subr.bf16.mxu0 %v1969
    %3576 = vmatpush1.bf16.msra.mxu0 %v1968
    %3577 = vmatprep.subr.bf16.mxu0 %v1977
    %3578 = vmatpush1.bf16.msra.mxu0 %v1976
    %3579 = vmatprep.subr.bf16.mxu0 %v1985
    %3580 = vmatpush1.bf16.msra.mxu0 %v1984
    %3581 = vmatprep.subr.bf16.mxu0 %v1993
    %3582 = vmatpush1.bf16.msra.mxu0 %v1992
    %3583 = vmatprep.subr.bf16.mxu0 %v2001
    %3584 = vmatpush1.bf16.msra.mxu0 %v2000
    %3585 = vmatprep.subr.bf16.mxu0 %v2009
    %3586 = vmatpush1.bf16.msra.mxu0 %v2008
    %3587 = vmatprep.mubr.bf16.mxu0 %v3431
    %3588 = vmatmul.mubr.bf16.gmra.mrb[0].mxu0 %v3430
    %v3589 = vpop.f32.mrb[0].mxu0
    %v3590 = vadd.f32 %v3549, %v3589
    %v3591 = vpop.f32.mrb[0].mxu0
    %v3592 = vadd.f32 %v3551, %v3591
    %v3593 = vpop.f32.mrb[0].mxu0
    %v3594 = vpop.f32.mrb[0].mxu0
    %3595 = vdwg.mxu0
    %3596 = vmatprep.subr.bf16.mxu0 %v1763
    %3597 = vmatpush1.bf16.msra.mxu0 %v1762
    %3598 = vmatprep.subr.bf16.mxu0 %v1771
    %3599 = vmatpush1.bf16.msra.mxu0 %v1770
    %3600 = vmatprep.subr.bf16.mxu0 %v1779
    %3601 = vmatpush1.bf16.msra.mxu0 %v1778
    %3602 = vmatprep.subr.bf16.mxu0 %v1787
    %3603 = vmatpush1.bf16.msra.mxu0 %v1786
    %3604 = vmatprep.subr.bf16.mxu0 %v1795
    %3605 = vmatpush1.bf16.msra.mxu0 %v1794
    %3606 = vmatprep.subr.bf16.mxu0 %v1803
    %3607 = vmatpush1.bf16.msra.mxu0 %v1802
    %3608 = vmatprep.subr.bf16.mxu0 %v1811
    %3609 = vmatpush1.bf16.msra.mxu0 %v1810
    %3610 = vmatprep.subr.bf16.mxu0 %v1819
    %3611 = vmatpush1.bf16.msra.mxu0 %v1818
    %3612 = vmatprep.subr.bf16.mxu0 %v1827
    %3613 = vmatpush1.bf16.msra.mxu0 %v1826
    %3614 = vmatprep.subr.bf16.mxu0 %v1835
    %3615 = vmatpush1.bf16.msra.mxu0 %v1834
    %3616 = vmatprep.subr.bf16.mxu0 %v1843
    %3617 = vmatpush1.bf16.msra.mxu0 %v1842
    %3618 = vmatprep.subr.bf16.mxu0 %v1851
    %3619 = vmatpush1.bf16.msra.mxu0 %v1850
    %3620 = vmatprep.subr.bf16.mxu0 %v1859
    %3621 = vmatpush1.bf16.msra.mxu0 %v1858
    %3622 = vmatprep.subr.bf16.mxu0 %v1867
    %3623 = vmatpush1.bf16.msra.mxu0 %v1866
    %3624 = vmatprep.subr.bf16.mxu0 %v1875
    %3625 = vmatpush1.bf16.msra.mxu0 %v1874
    %3626 = vmatprep.subr.bf16.mxu0 %v1883
    %3627 = vmatpush1.bf16.msra.mxu0 %v1882
    %3628 = vmatprep.mubr.bf16.mxu0 %v3429
    %3629 = vmatmul.mubr.bf16.gmra.mrb[0].mxu0 %v3428
    %v3630 = vpop.f32.mrb[0].mxu0
    %v3631 = vadd.f32 %v2035, %v3630
    %v3632 = vpop.f32.mrb[0].mxu0
    %v3633 = vadd.f32 %v2039, %v3632
    %v3634 = vpop.f32.mrb[0].mxu0
    %v3635 = vpop.f32.mrb[0].mxu0
    %3636 = vdwg.mxu0
    %3637 = vmatprep.subr.bf16.mxu0 %v1891
    %3638 = vmatpush1.bf16.msra.mxu0 %v1890
    %3639 = vmatprep.subr.bf16.mxu0 %v1899
    %3640 = vmatpush1.bf16.msra.mxu0 %v1898
    %3641 = vmatprep.subr.bf16.mxu0 %v1907
    %3642 = vmatpush1.bf16.msra.mxu0 %v1906
    %3643 = vmatprep.subr.bf16.mxu0 %v1915
    %3644 = vmatpush1.bf16.msra.mxu0 %v1914
    %3645 = vmatprep.subr.bf16.mxu0 %v1923
    %3646 = vmatpush1.bf16.msra.mxu0 %v1922
    %3647 = vmatprep.subr.bf16.mxu0 %v1931
    %3648 = vmatpush1.bf16.msra.mxu0 %v1930
    %3649 = vmatprep.subr.bf16.mxu0 %v1939
    %3650 = vmatpush1.bf16.msra.mxu0 %v1938
    %3651 = vmatprep.subr.bf16.mxu0 %v1947
    %3652 = vmatpush1.bf16.msra.mxu0 %v1946
    %3653 = vmatprep.subr.bf16.mxu0 %v1955
    %3654 = vmatpush1.bf16.msra.mxu0 %v1954
    %3655 = vmatprep.subr.bf16.mxu0 %v1963
    %3656 = vmatpush1.bf16.msra.mxu0 %v1962
    %3657 = vmatprep.subr.bf16.mxu0 %v1971
    %3658 = vmatpush1.bf16.msra.mxu0 %v1970
    %3659 = vmatprep.subr.bf16.mxu0 %v1979
    %3660 = vmatpush1.bf16.msra.mxu0 %v1978
    %3661 = vmatprep.subr.bf16.mxu0 %v1987
    %3662 = vmatpush1.bf16.msra.mxu0 %v1986
    %3663 = vmatprep.subr.bf16.mxu0 %v1995
    %3664 = vmatpush1.bf16.msra.mxu0 %v1994
    %3665 = vmatprep.subr.bf16.mxu0 %v2003
    %3666 = vmatpush1.bf16.msra.mxu0 %v2002
    %3667 = vmatprep.subr.bf16.mxu0 %v2011
    %3668 = vmatpush1.bf16.msra.mxu0 %v2010
    %3669 = vmatprep.mubr.bf16.mxu0 %v3431
    %3670 = vmatmul.mubr.bf16.gmra.mrb[0].mxu0 %v3430
    %v3671 = vpop.f32.mrb[0].mxu0
    %v3672 = vadd.f32 %v3631, %v3671
    %v3673 = vpop.f32.mrb[0].mxu0
    %v3674 = vadd.f32 %v3633, %v3673
    %v3675 = vpop.f32.mrb[0].mxu0
    %v3676 = vpop.f32.mrb[0].mxu0
    %3677 = vdwg.mxu0
    %3678 = vmatprep.subr.bf16.mxu0 %v1765
    %3679 = vmatpush1.bf16.msra.mxu0 %v1764
    %3680 = vmatprep.subr.bf16.mxu0 %v1773
    %3681 = vmatpush1.bf16.msra.mxu0 %v1772
    %3682 = vmatprep.subr.bf16.mxu0 %v1781
    %3683 = vmatpush1.bf16.msra.mxu0 %v1780
    %3684 = vmatprep.subr.bf16.mxu0 %v1789
    %3685 = vmatpush1.bf16.msra.mxu0 %v1788
    %3686 = vmatprep.subr.bf16.mxu0 %v1797
    %3687 = vmatpush1.bf16.msra.mxu0 %v1796
    %3688 = vmatprep.subr.bf16.mxu0 %v1805
    %3689 = vmatpush1.bf16.msra.mxu0 %v1804
    %3690 = vmatprep.subr.bf16.mxu0 %v1813
    %3691 = vmatpush1.bf16.msra.mxu0 %v1812
    %3692 = vmatprep.subr.bf16.mxu0 %v1821
    %3693 = vmatpush1.bf16.msra.mxu0 %v1820
    %3694 = vmatprep.subr.bf16.mxu0 %v1829
    %3695 = vmatpush1.bf16.msra.mxu0 %v1828
    %3696 = vmatprep.subr.bf16.mxu0 %v1837
    %3697 = vmatpush1.bf16.msra.mxu0 %v1836
    %3698 = vmatprep.subr.bf16.mxu0 %v1845
    %3699 = vmatpush1.bf16.msra.mxu0 %v1844
    %3700 = vmatprep.subr.bf16.mxu0 %v1853
    %3701 = vmatpush1.bf16.msra.mxu0 %v1852
    %3702 = vmatprep.subr.bf16.mxu0 %v1861
    %3703 = vmatpush1.bf16.msra.mxu0 %v1860
    %3704 = vmatprep.subr.bf16.mxu0 %v1869
    %3705 = vmatpush1.bf16.msra.mxu0 %v1868
    %3706 = vmatprep.subr.bf16.mxu0 %v1877
    %3707 = vmatpush1.bf16.msra.mxu0 %v1876
    %3708 = vmatprep.subr.bf16.mxu0 %v1885
    %3709 = vmatpush1.bf16.msra.mxu0 %v1884
    %3710 = vmatprep.mubr.bf16.mxu0 %v3429
    %3711 = vmatmul.mubr.bf16.gmra.mrb[0].mxu0 %v3428
    %v3712 = vpop.f32.mrb[0].mxu0
    %v3713 = vadd.f32 %v2043, %v3712
    %v3714 = vpop.f32.mrb[0].mxu0
    %v3715 = vadd.f32 %v2047, %v3714
    %v3716 = vpop.f32.mrb[0].mxu0
    %v3717 = vpop.f32.mrb[0].mxu0
    %3718 = vdwg.mxu0
    %3719 = vmatprep.subr.bf16.mxu0 %v1893
    %3720 = vmatpush1.bf16.msra.mxu0 %v1892
    %3721 = vmatprep.subr.bf16.mxu0 %v1901
    %3722 = vmatpush1.bf16.msra.mxu0 %v1900
    %3723 = vmatprep.subr.bf16.mxu0 %v1909
    %3724 = vmatpush1.bf16.msra.mxu0 %v1908
    %3725 = vmatprep.subr.bf16.mxu0 %v1917
    %3726 = vmatpush1.bf16.msra.mxu0 %v1916
    %3727 = vmatprep.subr.bf16.mxu0 %v1925
    %3728 = vmatpush1.bf16.msra.mxu0 %v1924
    %3729 = vmatprep.subr.bf16.mxu0 %v1933
    %3730 = vmatpush1.bf16.msra.mxu0 %v1932
    %3731 = vmatprep.subr.bf16.mxu0 %v1941
    %3732 = vmatpush1.bf16.msra.mxu0 %v1940
    %3733 = vmatprep.subr.bf16.mxu0 %v1949
    %3734 = vmatpush1.bf16.msra.mxu0 %v1948
    %3735 = vmatprep.subr.bf16.mxu0 %v1957
    %3736 = vmatpush1.bf16.msra.mxu0 %v1956
    %3737 = vmatprep.subr.bf16.mxu0 %v1965
    %3738 = vmatpush1.bf16.msra.mxu0 %v1964
    %3739 = vmatprep.subr.bf16.mxu0 %v1973
    %3740 = vmatpush1.bf16.msra.mxu0 %v1972
    %3741 = vmatprep.subr.bf16.mxu0 %v1981
    %3742 = vmatpush1.bf16.msra.mxu0 %v1980
    %3743 = vmatprep.subr.bf16.mxu0 %v1989
    %3744 = vmatpush1.bf16.msra.mxu0 %v1988
    %3745 = vmatprep.subr.bf16.mxu0 %v1997
    %3746 = vmatpush1.bf16.msra.mxu0 %v1996
    %3747 = vmatprep.subr.bf16.mxu0 %v2005
    %3748 = vmatpush1.bf16.msra.mxu0 %v2004
    %3749 = vmatprep.subr.bf16.mxu0 %v2013
    %3750 = vmatpush1.bf16.msra.mxu0 %v2012
    %3751 = vmatprep.mubr.bf16.mxu0 %v3431
    %3752 = vmatmul.mubr.bf16.gmra.mrb[0].mxu0 %v3430
    %v3753 = vpop.f32.mrb[0].mxu0
    %v3754 = vadd.f32 %v3713, %v3753
    %v3755 = vpop.f32.mrb[0].mxu0
    %v3756 = vadd.f32 %v3715, %v3755
    %v3757 = vpop.f32.mrb[0].mxu0
    %v3758 = vpop.f32.mrb[0].mxu0
    %3759 = vdwg.mxu0
    %v3760 = vxor.u32 %v3508, 2147483648
    %v3761 = vxor.u32 %v3510, 2147483648
    %v3762 = vmul.f32 %v3760, 1.442695
    %v3763 = vpow.pop %v3762
    %v3764 = vmul.f32 %v3761, 1.442695
    %v3765 = vpow.pop %v3764
    %v3766 = vadd.f32 %v3763, 1.0
    %v3767 = vadd.f32 %v3765, 1.0
    %v3768 = vrcp.pop %v3766
    %v3769 = vmul.f32 1.0, %v3768
    %v3770 = vrcp.pop %v3767
    %v3771 = vmul.f32 1.0, %v3770
    %v3772 = vxor.u32 %v3590, 2147483648
    %v3773 = vxor.u32 %v3592, 2147483648
    %v3774 = vmul.f32 %v3772, 1.442695
    %v3775 = vpow.pop %v3774
    %v3776 = vmul.f32 %v3773, 1.442695
    %v3777 = vpow.pop %v3776
    %v3778 = vadd.f32 %v3775, 1.0
    %v3779 = vadd.f32 %v3777, 1.0
    %v3780 = vrcp.pop %v3778
    %v3781 = vmul.f32 1.0, %v3780
    %v3782 = vrcp.pop %v3779
    %v3783 = vmul.f32 1.0, %v3782
    %v3784 = vtanh.pop %v3672
    %v3785 = vtanh.pop %v3674
    %v3786 = vxor.u32 %v3754, 2147483648
    %v3787 = vxor.u32 %v3756, 2147483648
    %v3788 = vmul.f32 %v3786, 1.442695
    %v3789 = vpow.pop %v3788
    %v3790 = vmul.f32 %v3787, 1.442695
    %v3791 = vpow.pop %v3790
    %v3792 = vadd.f32 %v3789, 1.0
    %v3793 = vadd.f32 %v3791, 1.0
    %v3794 = vrcp.pop %v3792
    %v3795 = vmul.f32 1.0, %v3794
    %v3796 = vrcp.pop %v3793
    %v3797 = vmul.f32 1.0, %v3796
    %v3798 = vmul.f32 %v3781, %v2426
    %v3799 = vmul.f32 %v3783, %v2427
    %v3800 = vmul.f32 %v3769, %v3784
    %v3801 = vmul.f32 %v3771, %v3785
    %v3802 = vadd.f32 %v3798, %v3800
    %v3803 = vadd.f32 %v3799, %v3801
    %v3804 = vtanh.pop %v3802
    %v3805 = vtanh.pop %v3803
    %v3806 = vmul.f32 %v3795, %v3804
    %v3807 = vmul.f32 %v3797, %v3805
    %v3808 = vld [vmem:[#allocation2 + $0x80] sm:$0xff]
    %v3809 = vld [vmem:[#allocation2 + $0x88] sm:$0xff]
    %v3810 = vld [vmem:[#allocation2 + $0x90] sm:$0xff]
    %v3811 = vld [vmem:[#allocation2 + $0x98] sm:$0xff]
    %v3812 = vld [vmem:[#allocation2 + $0xa0] sm:$0xff]
    %v3813 = vld [vmem:[#allocation2 + $0xa8] sm:$0xff]
    %v3814 = vld [vmem:[#allocation2 + $0xb0] sm:$0xff]
    %v3815 = vld [vmem:[#allocation2 + $0xb8] sm:$0xff]
    %3816 = vmatprep.subr.bf16.mxu0 %v2953
    %3817 = vmatpush1.bf16.msra.mxu0 %v2952
    %3818 = vmatprep.subr.bf16.mxu0 %v2961
    %3819 = vmatpush1.bf16.msra.mxu0 %v2960
    %3820 = vmatprep.subr.bf16.mxu0 %v2969
    %3821 = vmatpush1.bf16.msra.mxu0 %v2968
    %3822 = vmatprep.subr.bf16.mxu0 %v2977
    %3823 = vmatpush1.bf16.msra.mxu0 %v2976
    %3824 = vmatprep.subr.bf16.mxu0 %v2985
    %3825 = vmatpush1.bf16.msra.mxu0 %v2984
    %3826 = vmatprep.subr.bf16.mxu0 %v2993
    %3827 = vmatpush1.bf16.msra.mxu0 %v2992
    %3828 = vmatprep.subr.bf16.mxu0 %v3001
    %3829 = vmatpush1.bf16.msra.mxu0 %v3000
    %3830 = vmatprep.subr.bf16.mxu0 %v3009
    %3831 = vmatpush1.bf16.msra.mxu0 %v3008
    %3832 = vmatprep.subr.bf16.mxu0 %v3017
    %3833 = vmatpush1.bf16.msra.mxu0 %v3016
    %3834 = vmatprep.subr.bf16.mxu0 %v3025
    %3835 = vmatpush1.bf16.msra.mxu0 %v3024
    %3836 = vmatprep.subr.bf16.mxu0 %v3033
    %3837 = vmatpush1.bf16.msra.mxu0 %v3032
    %3838 = vmatprep.subr.bf16.mxu0 %v3041
    %3839 = vmatpush1.bf16.msra.mxu0 %v3040
    %3840 = vmatprep.subr.bf16.mxu0 %v3049
    %3841 = vmatpush1.bf16.msra.mxu0 %v3048
    %3842 = vmatprep.subr.bf16.mxu0 %v3057
    %3843 = vmatpush1.bf16.msra.mxu0 %v3056
    %3844 = vmatprep.subr.bf16.mxu0 %v3065
    %3845 = vmatpush1.bf16.msra.mxu0 %v3064
    %3846 = vmatprep.subr.bf16.mxu0 %v3073
    %3847 = vmatpush1.bf16.msra.mxu0 %v3072
    %3848 = vmatprep.mubr.bf16.mxu0 %v3429
    %3849 = vmatmul.mubr.bf16.gmra.mrb[0].mxu0 %v3428
    %v3850 = vpop.f32.mrb[0].mxu0
    %v3851 = vadd.f32 0.0, %v3850
    %v3852 = vpop.f32.mrb[0].mxu0
    %v3853 = vadd.f32 0.0, %v3852
    %v3854 = vpop.f32.mrb[0].mxu0
    %v3855 = vpop.f32.mrb[0].mxu0
    %3856 = vdwg.mxu0
    %3857 = vmatprep.subr.bf16.mxu0 %v2955
    %3858 = vmatpush1.bf16.msra.mxu0 %v2954
    %3859 = vmatprep.subr.bf16.mxu0 %v2963
    %3860 = vmatpush1.bf16.msra.mxu0 %v2962
    %3861 = vmatprep.subr.bf16.mxu0 %v2971
    %3862 = vmatpush1.bf16.msra.mxu0 %v2970
    %3863 = vmatprep.subr.bf16.mxu0 %v2979
    %3864 = vmatpush1.bf16.msra.mxu0 %v2978
    %3865 = vmatprep.subr.bf16.mxu0 %v2987
    %3866 = vmatpush1.bf16.msra.mxu0 %v2986
    %3867 = vmatprep.subr.bf16.mxu0 %v2995
    %3868 = vmatpush1.bf16.msra.mxu0 %v2994
    %3869 = vmatprep.subr.bf16.mxu0 %v3003
    %3870 = vmatpush1.bf16.msra.mxu0 %v3002
    %3871 = vmatprep.subr.bf16.mxu0 %v3011
    %3872 = vmatpush1.bf16.msra.mxu0 %v3010
    %3873 = vmatprep.subr.bf16.mxu0 %v3019
    %3874 = vmatpush1.bf16.msra.mxu0 %v3018
    %3875 = vmatprep.subr.bf16.mxu0 %v3027
    %3876 = vmatpush1.bf16.msra.mxu0 %v3026
    %3877 = vmatprep.subr.bf16.mxu0 %v3035
    %3878 = vmatpush1.bf16.msra.mxu0 %v3034
    %3879 = vmatprep.subr.bf16.mxu0 %v3043
    %3880 = vmatpush1.bf16.msra.mxu0 %v3042
    %3881 = vmatprep.subr.bf16.mxu0 %v3051
    %3882 = vmatpush1.bf16.msra.mxu0 %v3050
    %3883 = vmatprep.subr.bf16.mxu0 %v3059
    %3884 = vmatpush1.bf16.msra.mxu0 %v3058
    %3885 = vmatprep.subr.bf16.mxu0 %v3067
    %3886 = vmatpush1.bf16.msra.mxu0 %v3066
    %3887 = vmatprep.subr.bf16.mxu0 %v3075
    %3888 = vmatpush1.bf16.msra.mxu0 %v3074
    %3889 = vmatprep.mubr.bf16.mxu0 %v3429
    %3890 = vmatmul.mubr.bf16.gmra.mrb[0].mxu0 %v3428
    %v3891 = vpop.f32.mrb[0].mxu0
    %v3892 = vadd.f32 0.0, %v3891
    %v3893 = vpop.f32.mrb[0].mxu0
    %v3894 = vadd.f32 0.0, %v3893
    %v3895 = vpop.f32.mrb[0].mxu0
    %v3896 = vpop.f32.mrb[0].mxu0
    %3897 = vdwg.mxu0
    %3898 = vmatprep.subr.bf16.mxu0 %v2957
    %3899 = vmatpush1.bf16.msra.mxu0 %v2956
    %3900 = vmatprep.subr.bf16.mxu0 %v2965
    %3901 = vmatpush1.bf16.msra.mxu0 %v2964
    %3902 = vmatprep.subr.bf16.mxu0 %v2973
    %3903 = vmatpush1.bf16.msra.mxu0 %v2972
    %3904 = vmatprep.subr.bf16.mxu0 %v2981
    %3905 = vmatpush1.bf16.msra.mxu0 %v2980
    %3906 = vmatprep.subr.bf16.mxu0 %v2989
    %3907 = vmatpush1.bf16.msra.mxu0 %v2988
    %3908 = vmatprep.subr.bf16.mxu0 %v2997
    %3909 = vmatpush1.bf16.msra.mxu0 %v2996
    %3910 = vmatprep.subr.bf16.mxu0 %v3005
    %3911 = vmatpush1.bf16.msra.mxu0 %v3004
    %3912 = vmatprep.subr.bf16.mxu0 %v3013
    %3913 = vmatpush1.bf16.msra.mxu0 %v3012
    %3914 = vmatprep.subr.bf16.mxu0 %v3021
    %3915 = vmatpush1.bf16.msra.mxu0 %v3020
    %3916 = vmatprep.subr.bf16.mxu0 %v3029
    %3917 = vmatpush1.bf16.msra.mxu0 %v3028
    %3918 = vmatprep.subr.bf16.mxu0 %v3037
    %3919 = vmatpush1.bf16.msra.mxu0 %v3036
    %3920 = vmatprep.subr.bf16.mxu0 %v3045
    %3921 = vmatpush1.bf16.msra.mxu0 %v3044
    %3922 = vmatprep.subr.bf16.mxu0 %v3053
    %3923 = vmatpush1.bf16.msra.mxu0 %v3052
    %3924 = vmatprep.subr.bf16.mxu0 %v3061
    %3925 = vmatpush1.bf16.msra.mxu0 %v3060
    %3926 = vmatprep.subr.bf16.mxu0 %v3069
    %3927 = vmatpush1.bf16.msra.mxu0 %v3068
    %3928 = vmatprep.subr.bf16.mxu0 %v3077
    %3929 = vmatpush1.bf16.msra.mxu0 %v3076
    %3930 = vmatprep.mubr.bf16.mxu0 %v3429
    %3931 = vmatmul.mubr.bf16.gmra.mrb[0].mxu0 %v3428
    %v3932 = vpop.f32.mrb[0].mxu0
    %v3933 = vadd.f32 0.0, %v3932
    %v3934 = vpop.f32.mrb[0].mxu0
    %v3935 = vadd.f32 0.0, %v3934
    %v3936 = vpop.f32.mrb[0].mxu0
    %v3937 = vpop.f32.mrb[0].mxu0
    %3938 = vdwg.mxu0
    %3939 = vmatprep.subr.bf16.mxu0 %v2959
    %3940 = vmatpush1.bf16.msra.mxu0 %v2958
    %3941 = vmatprep.subr.bf16.mxu0 %v2967
    %3942 = vmatpush1.bf16.msra.mxu0 %v2966
    %3943 = vmatprep.subr.bf16.mxu0 %v2975
    %3944 = vmatpush1.bf16.msra.mxu0 %v2974
    %3945 = vmatprep.subr.bf16.mxu0 %v2983
    %3946 = vmatpush1.bf16.msra.mxu0 %v2982
    %3947 = vmatprep.subr.bf16.mxu0 %v2991
    %3948 = vmatpush1.bf16.msra.mxu0 %v2990
    %3949 = vmatprep.subr.bf16.mxu0 %v2999
    %3950 = vmatpush1.bf16.msra.mxu0 %v2998
    %3951 = vmatprep.subr.bf16.mxu0 %v3007
    %3952 = vmatpush1.bf16.msra.mxu0 %v3006
    %3953 = vmatprep.subr.bf16.mxu0 %v3015
    %3954 = vmatpush1.bf16.msra.mxu0 %v3014
    %3955 = vmatprep.subr.bf16.mxu0 %v3023
    %3956 = vmatpush1.bf16.msra.mxu0 %v3022
    %3957 = vmatprep.subr.bf16.mxu0 %v3031
    %3958 = vmatpush1.bf16.msra.mxu0 %v3030
    %3959 = vmatprep.subr.bf16.mxu0 %v3039
    %3960 = vmatpush1.bf16.msra.mxu0 %v3038
    %3961 = vmatprep.subr.bf16.mxu0 %v3047
    %3962 = vmatpush1.bf16.msra.mxu0 %v3046
    %3963 = vmatprep.subr.bf16.mxu0 %v3055
    %3964 = vmatpush1.bf16.msra.mxu0 %v3054
    %3965 = vmatprep.subr.bf16.mxu0 %v3063
    %3966 = vmatpush1.bf16.msra.mxu0 %v3062
    %3967 = vmatprep.subr.bf16.mxu0 %v3071
    %3968 = vmatpush1.bf16.msra.mxu0 %v3070
    %3969 = vmatprep.subr.bf16.mxu0 %v3079
    %3970 = vmatpush1.bf16.msra.mxu0 %v3078
    %3971 = vmatprep.mubr.bf16.mxu0 %v3429
    %3972 = vmatmul.mubr.bf16.gmra.mrb[0].mxu0 %v3428
    %v3973 = vpop.f32.mrb[0].mxu0
    %v3974 = vadd.f32 0.0, %v3973
    %v3975 = vpop.f32.mrb[0].mxu0
    %v3976 = vadd.f32 0.0, %v3975
    %v3977 = vpop.f32.mrb[0].mxu0
    %v3978 = vpop.f32.mrb[0].mxu0
    %3979 = vdwg.mxu0
    %v3980 = vadd.f32 %v3808, %v3851
    %v3981 = vadd.f32 %v3809, %v3853
    %v3982 = vadd.f32 %v3810, %v3892
    %v3983 = vadd.f32 %v3811, %v3894
    %v3984 = vadd.f32 %v3812, %v3933
    %v3985 = vadd.f32 %v3813, %v3935
    %v3986 = vadd.f32 %v3814, %v3974
    %v3987 = vadd.f32 %v3815, %v3976
    %v3988 = vxor.u32 %v3980, 2147483648
    %v3989 = vxor.u32 %v3981, 2147483648
    %v3990 = vmul.f32 %v3988, 1.442695
    %v3991 = vpow.pop %v3990
    %v3992 = vmul.f32 %v3989, 1.442695
    %v3993 = vpow.pop %v3992
    %v3994 = vadd.f32 %v3991, 1.0
    %v3995 = vadd.f32 %v3993, 1.0
    %v3996 = vrcp.pop %v3994
    %v3997 = vmul.f32 1.0, %v3996
    %v3998 = vrcp.pop %v3995
    %v3999 = vmul.f32 1.0, %v3998
    %v4000 = vxor.u32 %v3982, 2147483648
    %v4001 = vxor.u32 %v3983, 2147483648
    %v4002 = vmul.f32 %v4000, 1.442695
    %v4003 = vpow.pop %v4002
    %v4004 = vmul.f32 %v4001, 1.442695
    %v4005 = vpow.pop %v4004
    %v4006 = vadd.f32 %v4003, 1.0
    %v4007 = vadd.f32 %v4005, 1.0
    %v4008 = vrcp.pop %v4006
    %v4009 = vmul.f32 1.0, %v4008
    %v4010 = vrcp.pop %v4007
    %v4011 = vmul.f32 1.0, %v4010
    %v4012 = vtanh.pop %v3984
    %v4013 = vtanh.pop %v3985
    %v4014 = vxor.u32 %v3986, 2147483648
    %v4015 = vxor.u32 %v3987, 2147483648
    %v4016 = vmul.f32 %v4014, 1.442695
    %v4017 = vpow.pop %v4016
    %v4018 = vmul.f32 %v4015, 1.442695
    %v4019 = vpow.pop %v4018
    %v4020 = vadd.f32 %v4017, 1.0
    %v4021 = vadd.f32 %v4019, 1.0
    %v4022 = vrcp.pop %v4020
    %v4023 = vmul.f32 1.0, %v4022
    %v4024 = vrcp.pop %v4021
    %v4025 = vmul.f32 1.0, %v4024
    %v4026 = vmul.f32 %v4009, %v3422
    %v4027 = vmul.f32 %v4011, %v3423
    %v4028 = vmul.f32 %v3997, %v4012
    %v4029 = vmul.f32 %v3999, %v4013
    %v4030 = vadd.f32 %v4026, %v4028
    %v4031 = vadd.f32 %v4027, %v4029
    %v4032 = vtanh.pop %v4030
    %v4033 = vtanh.pop %v4031
    %v4034 = vmul.f32 %v4023, %v4032
    %v4035 = vmul.f32 %v4025, %v4033
    %v4036 = vpack.c.bf16 %v4034, %v4034
    %v4037 = vpack.c.bf16 %v4035, %v4035
    %v4038 = vpack.c.bf16 %v3806, %v3806
    %v4039 = vpack.c.bf16 %v3807, %v3807
    %4040 = vmatprep.subr.bf16.mxu0 %v1759
    %4041 = vmatpush1.bf16.msra.mxu0 %v1758
    %4042 = vmatprep.subr.bf16.mxu0 %v1767
    %4043 = vmatpush1.bf16.msra.mxu0 %v1766
    %4044 = vmatprep.subr.bf16.mxu0 %v1775
    %4045 = vmatpush1.bf16.msra.mxu0 %v1774
    %4046 = vmatprep.subr.bf16.mxu0 %v1783
    %4047 = vmatpush1.bf16.msra.mxu0 %v1782
    %4048 = vmatprep.subr.bf16.mxu0 %v1791
    %4049 = vmatpush1.bf16.msra.mxu0 %v1790
    %4050 = vmatprep.subr.bf16.mxu0 %v1799
    %4051 = vmatpush1.bf16.msra.mxu0 %v1798
    %4052 = vmatprep.subr.bf16.mxu0 %v1807
    %4053 = vmatpush1.bf16.msra.mxu0 %v1806
    %4054 = vmatprep.subr.bf16.mxu0 %v1815
    %4055 = vmatpush1.bf16.msra.mxu0 %v1814
    %4056 = vmatprep.subr.bf16.mxu0 %v1823
    %4057 = vmatpush1.bf16.msra.mxu0 %v1822
    %4058 = vmatprep.subr.bf16.mxu0 %v1831
    %4059 = vmatpush1.bf16.msra.mxu0 %v1830
    %4060 = vmatprep.subr.bf16.mxu0 %v1839
    %4061 = vmatpush1.bf16.msra.mxu0 %v1838
    %4062 = vmatprep.subr.bf16.mxu0 %v1847
    %4063 = vmatpush1.bf16.msra.mxu0 %v1846
    %4064 = vmatprep.subr.bf16.mxu0 %v1855
    %4065 = vmatpush1.bf16.msra.mxu0 %v1854
    %4066 = vmatprep.subr.bf16.mxu0 %v1863
    %4067 = vmatpush1.bf16.msra.mxu0 %v1862
    %4068 = vmatprep.subr.bf16.mxu0 %v1871
    %4069 = vmatpush1.bf16.msra.mxu0 %v1870
    %4070 = vmatprep.subr.bf16.mxu0 %v1879
    %4071 = vmatpush1.bf16.msra.mxu0 %v1878
    %4072 = vmatprep.mubr.bf16.mxu0 %v4037
    %4073 = vmatmul.mubr.bf16.gmra.mrb[0].mxu0 %v4036
    %v4074 = vpop.f32.mrb[0].mxu0
    %v4075 = vadd.f32 %v2019, %v4074
    %v4076 = vpop.f32.mrb[0].mxu0
    %v4077 = vadd.f32 %v2023, %v4076
    %v4078 = vpop.f32.mrb[0].mxu0
    %v4079 = vpop.f32.mrb[0].mxu0
    %4080 = vdwg.mxu0
    %4081 = vmatprep.subr.bf16.mxu0 %v1887
    %4082 = vmatpush1.bf16.msra.mxu0 %v1886
    %4083 = vmatprep.subr.bf16.mxu0 %v1895
    %4084 = vmatpush1.bf16.msra.mxu0 %v1894
    %4085 = vmatprep.subr.bf16.mxu0 %v1903
    %4086 = vmatpush1.bf16.msra.mxu0 %v1902
    %4087 = vmatprep.subr.bf16.mxu0 %v1911
    %4088 = vmatpush1.bf16.msra.mxu0 %v1910
    %4089 = vmatprep.subr.bf16.mxu0 %v1919
    %4090 = vmatpush1.bf16.msra.mxu0 %v1918
    %4091 = vmatprep.subr.bf16.mxu0 %v1927
    %4092 = vmatpush1.bf16.msra.mxu0 %v1926
    %4093 = vmatprep.subr.bf16.mxu0 %v1935
    %4094 = vmatpush1.bf16.msra.mxu0 %v1934
    %4095 = vmatprep.subr.bf16.mxu0 %v1943
    %4096 = vmatpush1.bf16.msra.mxu0 %v1942
    %4097 = vmatprep.subr.bf16.mxu0 %v1951
    %4098 = vmatpush1.bf16.msra.mxu0 %v1950
    %4099 = vmatprep.subr.bf16.mxu0 %v1959
    %4100 = vmatpush1.bf16.msra.mxu0 %v1958
    %4101 = vmatprep.subr.bf16.mxu0 %v1967
    %4102 = vmatpush1.bf16.msra.mxu0 %v1966
    %4103 = vmatprep.subr.bf16.mxu0 %v1975
    %4104 = vmatpush1.bf16.msra.mxu0 %v1974
    %4105 = vmatprep.subr.bf16.mxu0 %v1983
    %4106 = vmatpush1.bf16.msra.mxu0 %v1982
    %4107 = vmatprep.subr.bf16.mxu0 %v1991
    %4108 = vmatpush1.bf16.msra.mxu0 %v1990
    %4109 = vmatprep.subr.bf16.mxu0 %v1999
    %4110 = vmatpush1.bf16.msra.mxu0 %v1998
    %4111 = vmatprep.subr.bf16.mxu0 %v2007
    %4112 = vmatpush1.bf16.msra.mxu0 %v2006
    %4113 = vmatprep.mubr.bf16.mxu0 %v4039
    %4114 = vmatmul.mubr.bf16.gmra.mrb[0].mxu0 %v4038
    %v4115 = vpop.f32.mrb[0].mxu0
    %v4116 = vadd.f32 %v4075, %v4115
    %v4117 = vpop.f32.mrb[0].mxu0
    %v4118 = vadd.f32 %v4077, %v4117
    %v4119 = vpop.f32.mrb[0].mxu0
    %v4120 = vpop.f32.mrb[0].mxu0
    %4121 = vdwg.mxu0
    %4122 = vmatprep.subr.bf16.mxu0 %v1761
    %4123 = vmatpush1.bf16.msra.mxu0 %v1760
    %4124 = vmatprep.subr.bf16.mxu0 %v1769
    %4125 = vmatpush1.bf16.msra.mxu0 %v1768
    %4126 = vmatprep.subr.bf16.mxu0 %v1777
    %4127 = vmatpush1.bf16.msra.mxu0 %v1776
    %4128 = vmatprep.subr.bf16.mxu0 %v1785
    %4129 = vmatpush1.bf16.msra.mxu0 %v1784
    %4130 = vmatprep.subr.bf16.mxu0 %v1793
    %4131 = vmatpush1.bf16.msra.mxu0 %v1792
    %4132 = vmatprep.subr.bf16.mxu0 %v1801
    %4133 = vmatpush1.bf16.msra.mxu0 %v1800
    %4134 = vmatprep.subr.bf16.mxu0 %v1809
    %4135 = vmatpush1.bf16.msra.mxu0 %v1808
    %4136 = vmatprep.subr.bf16.mxu0 %v1817
    %4137 = vmatpush1.bf16.msra.mxu0 %v1816
    %4138 = vmatprep.subr.bf16.mxu0 %v1825
    %4139 = vmatpush1.bf16.msra.mxu0 %v1824
    %4140 = vmatprep.subr.bf16.mxu0 %v1833
    %4141 = vmatpush1.bf16.msra.mxu0 %v1832
    %4142 = vmatprep.subr.bf16.mxu0 %v1841
    %4143 = vmatpush1.bf16.msra.mxu0 %v1840
    %4144 = vmatprep.subr.bf16.mxu0 %v1849
    %4145 = vmatpush1.bf16.msra.mxu0 %v1848
    %4146 = vmatprep.subr.bf16.mxu0 %v1857
    %4147 = vmatpush1.bf16.msra.mxu0 %v1856
    %4148 = vmatprep.subr.bf16.mxu0 %v1865
    %4149 = vmatpush1.bf16.msra.mxu0 %v1864
    %4150 = vmatprep.subr.bf16.mxu0 %v1873
    %4151 = vmatpush1.bf16.msra.mxu0 %v1872
    %4152 = vmatprep.subr.bf16.mxu0 %v1881
    %4153 = vmatpush1.bf16.msra.mxu0 %v1880
    %4154 = vmatprep.mubr.bf16.mxu0 %v4037
    %4155 = vmatmul.mubr.bf16.gmra.mrb[0].mxu0 %v4036
    %v4156 = vpop.f32.mrb[0].mxu0
    %v4157 = vadd.f32 %v2027, %v4156
    %v4158 = vpop.f32.mrb[0].mxu0
    %v4159 = vadd.f32 %v2031, %v4158
    %v4160 = vpop.f32.mrb[0].mxu0
    %v4161 = vpop.f32.mrb[0].mxu0
    %4162 = vdwg.mxu0
    %4163 = vmatprep.subr.bf16.mxu0 %v1889
    %4164 = vmatpush1.bf16.msra.mxu0 %v1888
    %4165 = vmatprep.subr.bf16.mxu0 %v1897
    %4166 = vmatpush1.bf16.msra.mxu0 %v1896
    %4167 = vmatprep.subr.bf16.mxu0 %v1905
    %4168 = vmatpush1.bf16.msra.mxu0 %v1904
    %4169 = vmatprep.subr.bf16.mxu0 %v1913
    %4170 = vmatpush1.bf16.msra.mxu0 %v1912
    %4171 = vmatprep.subr.bf16.mxu0 %v1921
    %4172 = vmatpush1.bf16.msra.mxu0 %v1920
    %4173 = vmatprep.subr.bf16.mxu0 %v1929
    %4174 = vmatpush1.bf16.msra.mxu0 %v1928
    %4175 = vmatprep.subr.bf16.mxu0 %v1937
    %4176 = vmatpush1.bf16.msra.mxu0 %v1936
    %4177 = vmatprep.subr.bf16.mxu0 %v1945
    %4178 = vmatpush1.bf16.msra.mxu0 %v1944
    %4179 = vmatprep.subr.bf16.mxu0 %v1953
    %4180 = vmatpush1.bf16.msra.mxu0 %v1952
    %4181 = vmatprep.subr.bf16.mxu0 %v1961
    %4182 = vmatpush1.bf16.msra.mxu0 %v1960
    %4183 = vmatprep.subr.bf16.mxu0 %v1969
    %4184 = vmatpush1.bf16.msra.mxu0 %v1968
    %4185 = vmatprep.subr.bf16.mxu0 %v1977
    %4186 = vmatpush1.bf16.msra.mxu0 %v1976
    %4187 = vmatprep.subr.bf16.mxu0 %v1985
    %4188 = vmatpush1.bf16.msra.mxu0 %v1984
    %4189 = vmatprep.subr.bf16.mxu0 %v1993
    %4190 = vmatpush1.bf16.msra.mxu0 %v1992
    %4191 = vmatprep.subr.bf16.mxu0 %v2001
    %4192 = vmatpush1.bf16.msra.mxu0 %v2000
    %4193 = vmatprep.subr.bf16.mxu0 %v2009
    %4194 = vmatpush1.bf16.msra.mxu0 %v2008
    %4195 = vmatprep.mubr.bf16.mxu0 %v4039
    %4196 = vmatmul.mubr.bf16.gmra.mrb[0].mxu0 %v4038
    %v4197 = vpop.f32.mrb[0].mxu0
    %v4198 = vadd.f32 %v4157, %v4197
    %v4199 = vpop.f32.mrb[0].mxu0
    %v4200 = vadd.f32 %v4159, %v4199
    %v4201 = vpop.f32.mrb[0].mxu0
    %v4202 = vpop.f32.mrb[0].mxu0
    %4203 = vdwg.mxu0
    %4204 = vmatprep.subr.bf16.mxu0 %v1763
    %4205 = vmatpush1.bf16.msra.mxu0 %v1762
    %4206 = vmatprep.subr.bf16.mxu0 %v1771
    %4207 = vmatpush1.bf16.msra.mxu0 %v1770
    %4208 = vmatprep.subr.bf16.mxu0 %v1779
    %4209 = vmatpush1.bf16.msra.mxu0 %v1778
    %4210 = vmatprep.subr.bf16.mxu0 %v1787
    %4211 = vmatpush1.bf16.msra.mxu0 %v1786
    %4212 = vmatprep.subr.bf16.mxu0 %v1795
    %4213 = vmatpush1.bf16.msra.mxu0 %v1794
    %4214 = vmatprep.subr.bf16.mxu0 %v1803
    %4215 = vmatpush1.bf16.msra.mxu0 %v1802
    %4216 = vmatprep.subr.bf16.mxu0 %v1811
    %4217 = vmatpush1.bf16.msra.mxu0 %v1810
    %4218 = vmatprep.subr.bf16.mxu0 %v1819
    %4219 = vmatpush1.bf16.msra.mxu0 %v1818
    %4220 = vmatprep.subr.bf16.mxu0 %v1827
    %4221 = vmatpush1.bf16.msra.mxu0 %v1826
    %4222 = vmatprep.subr.bf16.mxu0 %v1835
    %4223 = vmatpush1.bf16.msra.mxu0 %v1834
    %4224 = vmatprep.subr.bf16.mxu0 %v1843
    %4225 = vmatpush1.bf16.msra.mxu0 %v1842
    %4226 = vmatprep.subr.bf16.mxu0 %v1851
    %4227 = vmatpush1.bf16.msra.mxu0 %v1850
    %4228 = vmatprep.subr.bf16.mxu0 %v1859
    %4229 = vmatpush1.bf16.msra.mxu0 %v1858
    %4230 = vmatprep.subr.bf16.mxu0 %v1867
    %4231 = vmatpush1.bf16.msra.mxu0 %v1866
    %4232 = vmatprep.subr.bf16.mxu0 %v1875
    %4233 = vmatpush1.bf16.msra.mxu0 %v1874
    %4234 = vmatprep.subr.bf16.mxu0 %v1883
    %4235 = vmatpush1.bf16.msra.mxu0 %v1882
    %4236 = vmatprep.mubr.bf16.mxu0 %v4037
    %4237 = vmatmul.mubr.bf16.gmra.mrb[0].mxu0 %v4036
    %v4238 = vpop.f32.mrb[0].mxu0
    %v4239 = vadd.f32 %v2035, %v4238
    %v4240 = vpop.f32.mrb[0].mxu0
    %v4241 = vadd.f32 %v2039, %v4240
    %v4242 = vpop.f32.mrb[0].mxu0
    %v4243 = vpop.f32.mrb[0].mxu0
    %4244 = vdwg.mxu0
    %4245 = vmatprep.subr.bf16.mxu0 %v1891
    %4246 = vmatpush1.bf16.msra.mxu0 %v1890
    %4247 = vmatprep.subr.bf16.mxu0 %v1899
    %4248 = vmatpush1.bf16.msra.mxu0 %v1898
    %4249 = vmatprep.subr.bf16.mxu0 %v1907
    %4250 = vmatpush1.bf16.msra.mxu0 %v1906
    %4251 = vmatprep.subr.bf16.mxu0 %v1915
    %4252 = vmatpush1.bf16.msra.mxu0 %v1914
    %4253 = vmatprep.subr.bf16.mxu0 %v1923
    %4254 = vmatpush1.bf16.msra.mxu0 %v1922
    %4255 = vmatprep.subr.bf16.mxu0 %v1931
    %4256 = vmatpush1.bf16.msra.mxu0 %v1930
    %4257 = vmatprep.subr.bf16.mxu0 %v1939
    %4258 = vmatpush1.bf16.msra.mxu0 %v1938
    %4259 = vmatprep.subr.bf16.mxu0 %v1947
    %4260 = vmatpush1.bf16.msra.mxu0 %v1946
    %4261 = vmatprep.subr.bf16.mxu0 %v1955
    %4262 = vmatpush1.bf16.msra.mxu0 %v1954
    %4263 = vmatprep.subr.bf16.mxu0 %v1963
    %4264 = vmatpush1.bf16.msra.mxu0 %v1962
    %4265 = vmatprep.subr.bf16.mxu0 %v1971
    %4266 = vmatpush1.bf16.msra.mxu0 %v1970
    %4267 = vmatprep.subr.bf16.mxu0 %v1979
    %4268 = vmatpush1.bf16.msra.mxu0 %v1978
    %4269 = vmatprep.subr.bf16.mxu0 %v1987
    %4270 = vmatpush1.bf16.msra.mxu0 %v1986
    %4271 = vmatprep.subr.bf16.mxu0 %v1995
    %4272 = vmatpush1.bf16.msra.mxu0 %v1994
    %4273 = vmatprep.subr.bf16.mxu0 %v2003
    %4274 = vmatpush1.bf16.msra.mxu0 %v2002
    %4275 = vmatprep.subr.bf16.mxu0 %v2011
    %4276 = vmatpush1.bf16.msra.mxu0 %v2010
    %4277 = vmatprep.mubr.bf16.mxu0 %v4039
    %4278 = vmatmul.mubr.bf16.gmra.mrb[0].mxu0 %v4038
    %v4279 = vpop.f32.mrb[0].mxu0
    %v4280 = vadd.f32 %v4239, %v4279
    %v4281 = vpop.f32.mrb[0].mxu0
    %v4282 = vadd.f32 %v4241, %v4281
    %v4283 = vpop.f32.mrb[0].mxu0
    %v4284 = vpop.f32.mrb[0].mxu0
    %4285 = vdwg.mxu0
    %4286 = vmatprep.subr.bf16.mxu0 %v1765
    %4287 = vmatpush1.bf16.msra.mxu0 %v1764
    %4288 = vmatprep.subr.bf16.mxu0 %v1773
    %4289 = vmatpush1.bf16.msra.mxu0 %v1772
    %4290 = vmatprep.subr.bf16.mxu0 %v1781
    %4291 = vmatpush1.bf16.msra.mxu0 %v1780
    %4292 = vmatprep.subr.bf16.mxu0 %v1789
    %4293 = vmatpush1.bf16.msra.mxu0 %v1788
    %4294 = vmatprep.subr.bf16.mxu0 %v1797
    %4295 = vmatpush1.bf16.msra.mxu0 %v1796
    %4296 = vmatprep.subr.bf16.mxu0 %v1805
    %4297 = vmatpush1.bf16.msra.mxu0 %v1804
    %4298 = vmatprep.subr.bf16.mxu0 %v1813
    %4299 = vmatpush1.bf16.msra.mxu0 %v1812
    %4300 = vmatprep.subr.bf16.mxu0 %v1821
    %4301 = vmatpush1.bf16.msra.mxu0 %v1820
    %4302 = vmatprep.subr.bf16.mxu0 %v1829
    %4303 = vmatpush1.bf16.msra.mxu0 %v1828
    %4304 = vmatprep.subr.bf16.mxu0 %v1837
    %4305 = vmatpush1.bf16.msra.mxu0 %v1836
    %4306 = vmatprep.subr.bf16.mxu0 %v1845
    %4307 = vmatpush1.bf16.msra.mxu0 %v1844
    %4308 = vmatprep.subr.bf16.mxu0 %v1853
    %4309 = vmatpush1.bf16.msra.mxu0 %v1852
    %4310 = vmatprep.subr.bf16.mxu0 %v1861
    %4311 = vmatpush1.bf16.msra.mxu0 %v1860
    %4312 = vmatprep.subr.bf16.mxu0 %v1869
    %4313 = vmatpush1.bf16.msra.mxu0 %v1868
    %4314 = vmatprep.subr.bf16.mxu0 %v1877
    %4315 = vmatpush1.bf16.msra.mxu0 %v1876
    %4316 = vmatprep.subr.bf16.mxu0 %v1885
    %4317 = vmatpush1.bf16.msra.mxu0 %v1884
    %4318 = vmatprep.mubr.bf16.mxu0 %v4037
    %4319 = vmatmul.mubr.bf16.gmra.mrb[0].mxu0 %v4036
    %v4320 = vpop.f32.mrb[0].mxu0
    %v4321 = vadd.f32 %v2043, %v4320
    %v4322 = vpop.f32.mrb[0].mxu0
    %v4323 = vadd.f32 %v2047, %v4322
    %v4324 = vpop.f32.mrb[0].mxu0
    %v4325 = vpop.f32.mrb[0].mxu0
    %4326 = vdwg.mxu0
    %4327 = vmatprep.subr.bf16.mxu0 %v1893
    %4328 = vmatpush1.bf16.msra.mxu0 %v1892
    %4329 = vmatprep.subr.bf16.mxu0 %v1901
    %4330 = vmatpush1.bf16.msra.mxu0 %v1900
    %4331 = vmatprep.subr.bf16.mxu0 %v1909
    %4332 = vmatpush1.bf16.msra.mxu0 %v1908
    %4333 = vmatprep.subr.bf16.mxu0 %v1917
    %4334 = vmatpush1.bf16.msra.mxu0 %v1916
    %4335 = vmatprep.subr.bf16.mxu0 %v1925
    %4336 = vmatpush1.bf16.msra.mxu0 %v1924
    %4337 = vmatprep.subr.bf16.mxu0 %v1933
    %4338 = vmatpush1.bf16.msra.mxu0 %v1932
    %4339 = vmatprep.subr.bf16.mxu0 %v1941
    %4340 = vmatpush1.bf16.msra.mxu0 %v1940
    %4341 = vmatprep.subr.bf16.mxu0 %v1949
    %4342 = vmatpush1.bf16.msra.mxu0 %v1948
    %4343 = vmatprep.subr.bf16.mxu0 %v1957
    %4344 = vmatpush1.bf16.msra.mxu0 %v1956
    %4345 = vmatprep.subr.bf16.mxu0 %v1965
    %4346 = vmatpush1.bf16.msra.mxu0 %v1964
    %4347 = vmatprep.subr.bf16.mxu0 %v1973
    %4348 = vmatpush1.bf16.msra.mxu0 %v1972
    %4349 = vmatprep.subr.bf16.mxu0 %v1981
    %4350 = vmatpush1.bf16.msra.mxu0 %v1980
    %4351 = vmatprep.subr.bf16.mxu0 %v1989
    %4352 = vmatpush1.bf16.msra.mxu0 %v1988
    %4353 = vmatprep.subr.bf16.mxu0 %v1997
    %4354 = vmatpush1.bf16.msra.mxu0 %v1996
    %4355 = vmatprep.subr.bf16.mxu0 %v2005
    %4356 = vmatpush1.bf16.msra.mxu0 %v2004
    %4357 = vmatprep.subr.bf16.mxu0 %v2013
    %4358 = vmatpush1.bf16.msra.mxu0 %v2012
    %4359 = vmatprep.mubr.bf16.mxu0 %v4039
    %4360 = vmatmul.mubr.bf16.gmra.mrb[0].mxu0 %v4038
    %v4361 = vpop.f32.mrb[0].mxu0
    %v4362 = vadd.f32 %v4321, %v4361
    %v4363 = vpop.f32.mrb[0].mxu0
    %v4364 = vadd.f32 %v4323, %v4363
    %v4365 = vpop.f32.mrb[0].mxu0
    %v4366 = vpop.f32.mrb[0].mxu0
    %4367 = vdwg.mxu0
    %v4368 = vxor.u32 %v4116, 2147483648
    %v4369 = vxor.u32 %v4118, 2147483648
    %v4370 = vmul.f32 %v4368, 1.442695
    %v4371 = vpow.pop %v4370
    %v4372 = vmul.f32 %v4369, 1.442695
    %v4373 = vpow.pop %v4372
    %v4374 = vadd.f32 %v4371, 1.0
    %v4375 = vadd.f32 %v4373, 1.0
    %v4376 = vrcp.pop %v4374
    %v4377 = vmul.f32 1.0, %v4376
    %v4378 = vrcp.pop %v4375
    %v4379 = vmul.f32 1.0, %v4378
    %v4380 = vxor.u32 %v4198, 2147483648
    %v4381 = vxor.u32 %v4200, 2147483648
    %v4382 = vmul.f32 %v4380, 1.442695
    %v4383 = vpow.pop %v4382
    %v4384 = vmul.f32 %v4381, 1.442695
    %v4385 = vpow.pop %v4384
    %v4386 = vadd.f32 %v4383, 1.0
    %v4387 = vadd.f32 %v4385, 1.0
    %v4388 = vrcp.pop %v4386
    %v4389 = vmul.f32 1.0, %v4388
    %v4390 = vrcp.pop %v4387
    %v4391 = vmul.f32 1.0, %v4390
    %v4392 = vtanh.pop %v4280
    %v4393 = vtanh.pop %v4282
    %v4394 = vxor.u32 %v4362, 2147483648
    %v4395 = vxor.u32 %v4364, 2147483648
    %v4396 = vmul.f32 %v4394, 1.442695
    %v4397 = vpow.pop %v4396
    %v4398 = vmul.f32 %v4395, 1.442695
    %v4399 = vpow.pop %v4398
    %v4400 = vadd.f32 %v4397, 1.0
    %v4401 = vadd.f32 %v4399, 1.0
    %v4402 = vrcp.pop %v4400
    %v4403 = vmul.f32 1.0, %v4402
    %v4404 = vrcp.pop %v4401
    %v4405 = vmul.f32 1.0, %v4404
    %v4406 = vmul.f32 %v4389, %v3802
    %v4407 = vmul.f32 %v4391, %v3803
    %v4408 = vmul.f32 %v4377, %v4392
    %v4409 = vmul.f32 %v4379, %v4393
    %v4410 = vadd.f32 %v4406, %v4408
    %v4411 = vadd.f32 %v4407, %v4409
    %v4412 = vtanh.pop %v4410
    %v4413 = vtanh.pop %v4411
    %v4414 = vmul.f32 %v4403, %v4412
    %v4415 = vmul.f32 %v4405, %v4413
    %v4416 = vld [vmem:[#allocation2 + $0xc0] sm:$0xff]
    %v4417 = vld [vmem:[#allocation2 + $0xc8] sm:$0xff]
    %v4418 = vld [vmem:[#allocation2 + $0xd0] sm:$0xff]
    %v4419 = vld [vmem:[#allocation2 + $0xd8] sm:$0xff]
    %v4420 = vld [vmem:[#allocation2 + $0xe0] sm:$0xff]
    %v4421 = vld [vmem:[#allocation2 + $0xe8] sm:$0xff]
    %v4422 = vld [vmem:[#allocation2 + $0xf0] sm:$0xff]
    %v4423 = vld [vmem:[#allocation2 + $0xf8] sm:$0xff]
    %4424 = vmatprep.subr.bf16.mxu0 %v2953
    %4425 = vmatpush1.bf16.msra.mxu0 %v2952
    %4426 = vmatprep.subr.bf16.mxu0 %v2961
    %4427 = vmatpush1.bf16.msra.mxu0 %v2960
    %4428 = vmatprep.subr.bf16.mxu0 %v2969
    %4429 = vmatpush1.bf16.msra.mxu0 %v2968
    %4430 = vmatprep.subr.bf16.mxu0 %v2977
    %4431 = vmatpush1.bf16.msra.mxu0 %v2976
    %4432 = vmatprep.subr.bf16.mxu0 %v2985
    %4433 = vmatpush1.bf16.msra.mxu0 %v2984
    %4434 = vmatprep.subr.bf16.mxu0 %v2993
    %4435 = vmatpush1.bf16.msra.mxu0 %v2992
    %4436 = vmatprep.subr.bf16.mxu0 %v3001
    %4437 = vmatpush1.bf16.msra.mxu0 %v3000
    %4438 = vmatprep.subr.bf16.mxu0 %v3009
    %4439 = vmatpush1.bf16.msra.mxu0 %v3008
    %4440 = vmatprep.subr.bf16.mxu0 %v3017
    %4441 = vmatpush1.bf16.msra.mxu0 %v3016
    %4442 = vmatprep.subr.bf16.mxu0 %v3025
    %4443 = vmatpush1.bf16.msra.mxu0 %v3024
    %4444 = vmatprep.subr.bf16.mxu0 %v3033
    %4445 = vmatpush1.bf16.msra.mxu0 %v3032
    %4446 = vmatprep.subr.bf16.mxu0 %v3041
    %4447 = vmatpush1.bf16.msra.mxu0 %v3040
    %4448 = vmatprep.subr.bf16.mxu0 %v3049
    %4449 = vmatpush1.bf16.msra.mxu0 %v3048
    %4450 = vmatprep.subr.bf16.mxu0 %v3057
    %4451 = vmatpush1.bf16.msra.mxu0 %v3056
    %4452 = vmatprep.subr.bf16.mxu0 %v3065
    %4453 = vmatpush1.bf16.msra.mxu0 %v3064
    %4454 = vmatprep.subr.bf16.mxu0 %v3073
    %4455 = vmatpush1.bf16.msra.mxu0 %v3072
    %4456 = vmatprep.mubr.bf16.mxu0 %v4037
    %4457 = vmatmul.mubr.bf16.gmra.mrb[0].mxu0 %v4036
    %v4458 = vpop.f32.mrb[0].mxu0
    %v4459 = vadd.f32 0.0, %v4458
    %v4460 = vpop.f32.mrb[0].mxu0
    %v4461 = vadd.f32 0.0, %v4460
    %v4462 = vpop.f32.mrb[0].mxu0
    %v4463 = vpop.f32.mrb[0].mxu0
    %4464 = vdwg.mxu0
    %4465 = vmatprep.subr.bf16.mxu0 %v2955
    %4466 = vmatpush1.bf16.msra.mxu0 %v2954
    %4467 = vmatprep.subr.bf16.mxu0 %v2963
    %4468 = vmatpush1.bf16.msra.mxu0 %v2962
    %4469 = vmatprep.subr.bf16.mxu0 %v2971
    %4470 = vmatpush1.bf16.msra.mxu0 %v2970
    %4471 = vmatprep.subr.bf16.mxu0 %v2979
    %4472 = vmatpush1.bf16.msra.mxu0 %v2978
    %4473 = vmatprep.subr.bf16.mxu0 %v2987
    %4474 = vmatpush1.bf16.msra.mxu0 %v2986
    %4475 = vmatprep.subr.bf16.mxu0 %v2995
    %4476 = vmatpush1.bf16.msra.mxu0 %v2994
    %4477 = vmatprep.subr.bf16.mxu0 %v3003
    %4478 = vmatpush1.bf16.msra.mxu0 %v3002
    %4479 = vmatprep.subr.bf16.mxu0 %v3011
    %4480 = vmatpush1.bf16.msra.mxu0 %v3010
    %4481 = vmatprep.subr.bf16.mxu0 %v3019
    %4482 = vmatpush1.bf16.msra.mxu0 %v3018
    %4483 = vmatprep.subr.bf16.mxu0 %v3027
    %4484 = vmatpush1.bf16.msra.mxu0 %v3026
    %4485 = vmatprep.subr.bf16.mxu0 %v3035
    %4486 = vmatpush1.bf16.msra.mxu0 %v3034
    %4487 = vmatprep.subr.bf16.mxu0 %v3043
    %4488 = vmatpush1.bf16.msra.mxu0 %v3042
    %4489 = vmatprep.subr.bf16.mxu0 %v3051
    %4490 = vmatpush1.bf16.msra.mxu0 %v3050
    %4491 = vmatprep.subr.bf16.mxu0 %v3059
    %4492 = vmatpush1.bf16.msra.mxu0 %v3058
    %4493 = vmatprep.subr.bf16.mxu0 %v3067
    %4494 = vmatpush1.bf16.msra.mxu0 %v3066
    %4495 = vmatprep.subr.bf16.mxu0 %v3075
    %4496 = vmatpush1.bf16.msra.mxu0 %v3074
    %4497 = vmatprep.mubr.bf16.mxu0 %v4037
    %4498 = vmatmul.mubr.bf16.gmra.mrb[0].mxu0 %v4036
    %v4499 = vpop.f32.mrb[0].mxu0
    %v4500 = vadd.f32 0.0, %v4499
    %v4501 = vpop.f32.mrb[0].mxu0
    %v4502 = vadd.f32 0.0, %v4501
    %v4503 = vpop.f32.mrb[0].mxu0
    %v4504 = vpop.f32.mrb[0].mxu0
    %4505 = vdwg.mxu0
    %4506 = vmatprep.subr.bf16.mxu0 %v2957
    %4507 = vmatpush1.bf16.msra.mxu0 %v2956
    %4508 = vmatprep.subr.bf16.mxu0 %v2965
    %4509 = vmatpush1.bf16.msra.mxu0 %v2964
    %4510 = vmatprep.subr.bf16.mxu0 %v2973
    %4511 = vmatpush1.bf16.msra.mxu0 %v2972
    %4512 = vmatprep.subr.bf16.mxu0 %v2981
    %4513 = vmatpush1.bf16.msra.mxu0 %v2980
    %4514 = vmatprep.subr.bf16.mxu0 %v2989
    %4515 = vmatpush1.bf16.msra.mxu0 %v2988
    %4516 = vmatprep.subr.bf16.mxu0 %v2997
    %4517 = vmatpush1.bf16.msra.mxu0 %v2996
    %4518 = vmatprep.subr.bf16.mxu0 %v3005
    %4519 = vmatpush1.bf16.msra.mxu0 %v3004
    %4520 = vmatprep.subr.bf16.mxu0 %v3013
    %4521 = vmatpush1.bf16.msra.mxu0 %v3012
    %4522 = vmatprep.subr.bf16.mxu0 %v3021
    %4523 = vmatpush1.bf16.msra.mxu0 %v3020
    %4524 = vmatprep.subr.bf16.mxu0 %v3029
    %4525 = vmatpush1.bf16.msra.mxu0 %v3028
    %4526 = vmatprep.subr.bf16.mxu0 %v3037
    %4527 = vmatpush1.bf16.msra.mxu0 %v3036
    %4528 = vmatprep.subr.bf16.mxu0 %v3045
    %4529 = vmatpush1.bf16.msra.mxu0 %v3044
    %4530 = vmatprep.subr.bf16.mxu0 %v3053
    %4531 = vmatpush1.bf16.msra.mxu0 %v3052
    %4532 = vmatprep.subr.bf16.mxu0 %v3061
    %4533 = vmatpush1.bf16.msra.mxu0 %v3060
    %4534 = vmatprep.subr.bf16.mxu0 %v3069
    %4535 = vmatpush1.bf16.msra.mxu0 %v3068
    %4536 = vmatprep.subr.bf16.mxu0 %v3077
    %4537 = vmatpush1.bf16.msra.mxu0 %v3076
    %4538 = vmatprep.mubr.bf16.mxu0 %v4037
    %4539 = vmatmul.mubr.bf16.gmra.mrb[0].mxu0 %v4036
    %v4540 = vpop.f32.mrb[0].mxu0
    %v4541 = vadd.f32 0.0, %v4540
    %v4542 = vpop.f32.mrb[0].mxu0
    %v4543 = vadd.f32 0.0, %v4542
    %v4544 = vpop.f32.mrb[0].mxu0
    %v4545 = vpop.f32.mrb[0].mxu0
    %4546 = vdwg.mxu0
    %4547 = vmatprep.subr.bf16.mxu0 %v2959
    %4548 = vmatpush1.bf16.msra.mxu0 %v2958
    %4549 = vmatprep.subr.bf16.mxu0 %v2967
    %4550 = vmatpush1.bf16.msra.mxu0 %v2966
    %4551 = vmatprep.subr.bf16.mxu0 %v2975
    %4552 = vmatpush1.bf16.msra.mxu0 %v2974
    %4553 = vmatprep.subr.bf16.mxu0 %v2983
    %4554 = vmatpush1.bf16.msra.mxu0 %v2982
    %4555 = vmatprep.subr.bf16.mxu0 %v2991
    %4556 = vmatpush1.bf16.msra.mxu0 %v2990
    %4557 = vmatprep.subr.bf16.mxu0 %v2999
    %4558 = vmatpush1.bf16.msra.mxu0 %v2998
    %4559 = vmatprep.subr.bf16.mxu0 %v3007
    %4560 = vmatpush1.bf16.msra.mxu0 %v3006
    %4561 = vmatprep.subr.bf16.mxu0 %v3015
    %4562 = vmatpush1.bf16.msra.mxu0 %v3014
    %4563 = vmatprep.subr.bf16.mxu0 %v3023
    %4564 = vmatpush1.bf16.msra.mxu0 %v3022
    %4565 = vmatprep.subr.bf16.mxu0 %v3031
    %4566 = vmatpush1.bf16.msra.mxu0 %v3030
    %4567 = vmatprep.subr.bf16.mxu0 %v3039
    %4568 = vmatpush1.bf16.msra.mxu0 %v3038
    %4569 = vmatprep.subr.bf16.mxu0 %v3047
    %4570 = vmatpush1.bf16.msra.mxu0 %v3046
    %4571 = vmatprep.subr.bf16.mxu0 %v3055
    %4572 = vmatpush1.bf16.msra.mxu0 %v3054
    %4573 = vmatprep.subr.bf16.mxu0 %v3063
    %4574 = vmatpush1.bf16.msra.mxu0 %v3062
    %4575 = vmatprep.subr.bf16.mxu0 %v3071
    %4576 = vmatpush1.bf16.msra.mxu0 %v3070
    %4577 = vmatprep.subr.bf16.mxu0 %v3079
    %4578 = vmatpush1.bf16.msra.mxu0 %v3078
    %4579 = vmatprep.mubr.bf16.mxu0 %v4037
    %4580 = vmatmul.mubr.bf16.gmra.mrb[0].mxu0 %v4036
    %v4581 = vpop.f32.mrb[0].mxu0
    %v4582 = vadd.f32 0.0, %v4581
    %v4583 = vpop.f32.mrb[0].mxu0
    %v4584 = vadd.f32 0.0, %v4583
    %v4585 = vpop.f32.mrb[0].mxu0
    %v4586 = vpop.f32.mrb[0].mxu0
    %4587 = vdwg.mxu0
    %v4588 = vadd.f32 %v4416, %v4459
    %v4589 = vadd.f32 %v4417, %v4461
    %v4590 = vadd.f32 %v4418, %v4500
    %v4591 = vadd.f32 %v4419, %v4502
    %v4592 = vadd.f32 %v4420, %v4541
    %v4593 = vadd.f32 %v4421, %v4543
    %v4594 = vadd.f32 %v4422, %v4582
    %v4595 = vadd.f32 %v4423, %v4584
    %v4596 = vxor.u32 %v4588, 2147483648
    %v4597 = vxor.u32 %v4589, 2147483648
    %v4598 = vmul.f32 %v4596, 1.442695
    %v4599 = vpow.pop %v4598
    %v4600 = vmul.f32 %v4597, 1.442695
    %v4601 = vpow.pop %v4600
    %v4602 = vadd.f32 %v4599, 1.0
    %v4603 = vadd.f32 %v4601, 1.0
    %v4604 = vrcp.pop %v4602
    %v4605 = vmul.f32 1.0, %v4604
    %v4606 = vrcp.pop %v4603
    %v4607 = vmul.f32 1.0, %v4606
    %v4608 = vxor.u32 %v4590, 2147483648
    %v4609 = vxor.u32 %v4591, 2147483648
    %v4610 = vmul.f32 %v4608, 1.442695
    %v4611 = vpow.pop %v4610
    %v4612 = vmul.f32 %v4609, 1.442695
    %v4613 = vpow.pop %v4612
    %v4614 = vadd.f32 %v4611, 1.0
    %v4615 = vadd.f32 %v4613, 1.0
    %v4616 = vrcp.pop %v4614
    %v4617 = vmul.f32 1.0, %v4616
    %v4618 = vrcp.pop %v4615
    %v4619 = vmul.f32 1.0, %v4618
    %v4620 = vtanh.pop %v4592
    %v4621 = vtanh.pop %v4593
    %v4622 = vxor.u32 %v4594, 2147483648
    %v4623 = vxor.u32 %v4595, 2147483648
    %v4624 = vmul.f32 %v4622, 1.442695
    %v4625 = vpow.pop %v4624
    %v4626 = vmul.f32 %v4623, 1.442695
    %v4627 = vpow.pop %v4626
    %v4628 = vadd.f32 %v4625, 1.0
    %v4629 = vadd.f32 %v4627, 1.0
    %v4630 = vrcp.pop %v4628
    %v4631 = vmul.f32 1.0, %v4630
    %v4632 = vrcp.pop %v4629
    %v4633 = vmul.f32 1.0, %v4632
    %v4634 = vmul.f32 %v4617, %v4030
    %v4635 = vmul.f32 %v4619, %v4031
    %v4636 = vmul.f32 %v4605, %v4620
    %v4637 = vmul.f32 %v4607, %v4621
    %v4638 = vadd.f32 %v4634, %v4636
    %v4639 = vadd.f32 %v4635, %v4637
    %v4640 = vtanh.pop %v4638
    %v4641 = vtanh.pop %v4639
    %v4642 = vmul.f32 %v4631, %v4640
    %v4643 = vmul.f32 %v4633, %v4641
    %v4644 = vpack.c.bf16 %v4642, %v4642
    %v4645 = vpack.c.bf16 %v4643, %v4643
    %v4646 = vpack.c.bf16 %v4414, %v4414
    %v4647 = vpack.c.bf16 %v4415, %v4415
    %4648 = vmatprep.subr.bf16.mxu0 %v1759
    %4649 = vmatpush1.bf16.msra.mxu0 %v1758
    %4650 = vmatprep.subr.bf16.mxu0 %v1767
    %4651 = vmatpush1.bf16.msra.mxu0 %v1766
    %4652 = vmatprep.subr.bf16.mxu0 %v1775
    %4653 = vmatpush1.bf16.msra.mxu0 %v1774
    %4654 = vmatprep.subr.bf16.mxu0 %v1783
    %4655 = vmatpush1.bf16.msra.mxu0 %v1782
    %4656 = vmatprep.subr.bf16.mxu0 %v1791
    %4657 = vmatpush1.bf16.msra.mxu0 %v1790
    %4658 = vmatprep.subr.bf16.mxu0 %v1799
    %4659 = vmatpush1.bf16.msra.mxu0 %v1798
    %4660 = vmatprep.subr.bf16.mxu0 %v1807
    %4661 = vmatpush1.bf16.msra.mxu0 %v1806
    %4662 = vmatprep.subr.bf16.mxu0 %v1815
    %4663 = vmatpush1.bf16.msra.mxu0 %v1814
    %4664 = vmatprep.subr.bf16.mxu0 %v1823
    %4665 = vmatpush1.bf16.msra.mxu0 %v1822
    %4666 = vmatprep.subr.bf16.mxu0 %v1831
    %4667 = vmatpush1.bf16.msra.mxu0 %v1830
    %4668 = vmatprep.subr.bf16.mxu0 %v1839
    %4669 = vmatpush1.bf16.msra.mxu0 %v1838
    %4670 = vmatprep.subr.bf16.mxu0 %v1847
    %4671 = vmatpush1.bf16.msra.mxu0 %v1846
    %4672 = vmatprep.subr.bf16.mxu0 %v1855
    %4673 = vmatpush1.bf16.msra.mxu0 %v1854
    %4674 = vmatprep.subr.bf16.mxu0 %v1863
    %4675 = vmatpush1.bf16.msra.mxu0 %v1862
    %4676 = vmatprep.subr.bf16.mxu0 %v1871
    %4677 = vmatpush1.bf16.msra.mxu0 %v1870
    %4678 = vmatprep.subr.bf16.mxu0 %v1879
    %4679 = vmatpush1.bf16.msra.mxu0 %v1878
    %4680 = vmatprep.mubr.bf16.mxu0 %v4645
    %4681 = vmatmul.mubr.bf16.gmra.mrb[0].mxu0 %v4644
    %v4682 = vpop.f32.mrb[0].mxu0
    %v4683 = vadd.f32 %v2019, %v4682
    %v4684 = vpop.f32.mrb[0].mxu0
    %v4685 = vadd.f32 %v2023, %v4684
    %v4686 = vpop.f32.mrb[0].mxu0
    %v4687 = vpop.f32.mrb[0].mxu0
    %4688 = vdwg.mxu0
    %4689 = vmatprep.subr.bf16.mxu0 %v1887
    %4690 = vmatpush1.bf16.msra.mxu0 %v1886
    %4691 = vmatprep.subr.bf16.mxu0 %v1895
    %4692 = vmatpush1.bf16.msra.mxu0 %v1894
    %4693 = vmatprep.subr.bf16.mxu0 %v1903
    %4694 = vmatpush1.bf16.msra.mxu0 %v1902
    %4695 = vmatprep.subr.bf16.mxu0 %v1911
    %4696 = vmatpush1.bf16.msra.mxu0 %v1910
    %4697 = vmatprep.subr.bf16.mxu0 %v1919
    %4698 = vmatpush1.bf16.msra.mxu0 %v1918
    %4699 = vmatprep.subr.bf16.mxu0 %v1927
    %4700 = vmatpush1.bf16.msra.mxu0 %v1926
    %4701 = vmatprep.subr.bf16.mxu0 %v1935
    %4702 = vmatpush1.bf16.msra.mxu0 %v1934
    %4703 = vmatprep.subr.bf16.mxu0 %v1943
    %4704 = vmatpush1.bf16.msra.mxu0 %v1942
    %4705 = vmatprep.subr.bf16.mxu0 %v1951
    %4706 = vmatpush1.bf16.msra.mxu0 %v1950
    %4707 = vmatprep.subr.bf16.mxu0 %v1959
    %4708 = vmatpush1.bf16.msra.mxu0 %v1958
    %4709 = vmatprep.subr.bf16.mxu0 %v1967
    %4710 = vmatpush1.bf16.msra.mxu0 %v1966
    %4711 = vmatprep.subr.bf16.mxu0 %v1975
    %4712 = vmatpush1.bf16.msra.mxu0 %v1974
    %4713 = vmatprep.subr.bf16.mxu0 %v1983
    %4714 = vmatpush1.bf16.msra.mxu0 %v1982
    %4715 = vmatprep.subr.bf16.mxu0 %v1991
    %4716 = vmatpush1.bf16.msra.mxu0 %v1990
    %4717 = vmatprep.subr.bf16.mxu0 %v1999
    %4718 = vmatpush1.bf16.msra.mxu0 %v1998
    %4719 = vmatprep.subr.bf16.mxu0 %v2007
    %4720 = vmatpush1.bf16.msra.mxu0 %v2006
    %4721 = vmatprep.mubr.bf16.mxu0 %v4647
    %4722 = vmatmul.mubr.bf16.gmra.mrb[0].mxu0 %v4646
    %v4723 = vpop.f32.mrb[0].mxu0
    %v4724 = vadd.f32 %v4683, %v4723
    %v4725 = vpop.f32.mrb[0].mxu0
    %v4726 = vadd.f32 %v4685, %v4725
    %v4727 = vpop.f32.mrb[0].mxu0
    %v4728 = vpop.f32.mrb[0].mxu0
    %4729 = vdwg.mxu0
    %4730 = vmatprep.subr.bf16.mxu0 %v1761
    %4731 = vmatpush1.bf16.msra.mxu0 %v1760
    %4732 = vmatprep.subr.bf16.mxu0 %v1769
    %4733 = vmatpush1.bf16.msra.mxu0 %v1768
    %4734 = vmatprep.subr.bf16.mxu0 %v1777
    %4735 = vmatpush1.bf16.msra.mxu0 %v1776
    %4736 = vmatprep.subr.bf16.mxu0 %v1785
    %4737 = vmatpush1.bf16.msra.mxu0 %v1784
    %4738 = vmatprep.subr.bf16.mxu0 %v1793
    %4739 = vmatpush1.bf16.msra.mxu0 %v1792
    %4740 = vmatprep.subr.bf16.mxu0 %v1801
    %4741 = vmatpush1.bf16.msra.mxu0 %v1800
    %4742 = vmatprep.subr.bf16.mxu0 %v1809
    %4743 = vmatpush1.bf16.msra.mxu0 %v1808
    %4744 = vmatprep.subr.bf16.mxu0 %v1817
    %4745 = vmatpush1.bf16.msra.mxu0 %v1816
    %4746 = vmatprep.subr.bf16.mxu0 %v1825
    %4747 = vmatpush1.bf16.msra.mxu0 %v1824
    %4748 = vmatprep.subr.bf16.mxu0 %v1833
    %4749 = vmatpush1.bf16.msra.mxu0 %v1832
    %4750 = vmatprep.subr.bf16.mxu0 %v1841
    %4751 = vmatpush1.bf16.msra.mxu0 %v1840
    %4752 = vmatprep.subr.bf16.mxu0 %v1849
    %4753 = vmatpush1.bf16.msra.mxu0 %v1848
    %4754 = vmatprep.subr.bf16.mxu0 %v1857
    %4755 = vmatpush1.bf16.msra.mxu0 %v1856
    %4756 = vmatprep.subr.bf16.mxu0 %v1865
    %4757 = vmatpush1.bf16.msra.mxu0 %v1864
    %4758 = vmatprep.subr.bf16.mxu0 %v1873
    %4759 = vmatpush1.bf16.msra.mxu0 %v1872
    %4760 = vmatprep.subr.bf16.mxu0 %v1881
    %4761 = vmatpush1.bf16.msra.mxu0 %v1880
    %4762 = vmatprep.mubr.bf16.mxu0 %v4645
    %4763 = vmatmul.mubr.bf16.gmra.mrb[0].mxu0 %v4644
    %v4764 = vpop.f32.mrb[0].mxu0
    %v4765 = vadd.f32 %v2027, %v4764
    %v4766 = vpop.f32.mrb[0].mxu0
    %v4767 = vadd.f32 %v2031, %v4766
    %v4768 = vpop.f32.mrb[0].mxu0
    %v4769 = vpop.f32.mrb[0].mxu0
    %4770 = vdwg.mxu0
    %4771 = vmatprep.subr.bf16.mxu0 %v1889
    %4772 = vmatpush1.bf16.msra.mxu0 %v1888
    %4773 = vmatprep.subr.bf16.mxu0 %v1897
    %4774 = vmatpush1.bf16.msra.mxu0 %v1896
    %4775 = vmatprep.subr.bf16.mxu0 %v1905
    %4776 = vmatpush1.bf16.msra.mxu0 %v1904
    %4777 = vmatprep.subr.bf16.mxu0 %v1913
    %4778 = vmatpush1.bf16.msra.mxu0 %v1912
    %4779 = vmatprep.subr.bf16.mxu0 %v1921
    %4780 = vmatpush1.bf16.msra.mxu0 %v1920
    %4781 = vmatprep.subr.bf16.mxu0 %v1929
    %4782 = vmatpush1.bf16.msra.mxu0 %v1928
    %4783 = vmatprep.subr.bf16.mxu0 %v1937
    %4784 = vmatpush1.bf16.msra.mxu0 %v1936
    %4785 = vmatprep.subr.bf16.mxu0 %v1945
    %4786 = vmatpush1.bf16.msra.mxu0 %v1944
    %4787 = vmatprep.subr.bf16.mxu0 %v1953
    %4788 = vmatpush1.bf16.msra.mxu0 %v1952
    %4789 = vmatprep.subr.bf16.mxu0 %v1961
    %4790 = vmatpush1.bf16.msra.mxu0 %v1960
    %4791 = vmatprep.subr.bf16.mxu0 %v1969
    %4792 = vmatpush1.bf16.msra.mxu0 %v1968
    %4793 = vmatprep.subr.bf16.mxu0 %v1977
    %4794 = vmatpush1.bf16.msra.mxu0 %v1976
    %4795 = vmatprep.subr.bf16.mxu0 %v1985
    %4796 = vmatpush1.bf16.msra.mxu0 %v1984
    %4797 = vmatprep.subr.bf16.mxu0 %v1993
    %4798 = vmatpush1.bf16.msra.mxu0 %v1992
    %4799 = vmatprep.subr.bf16.mxu0 %v2001
    %4800 = vmatpush1.bf16.msra.mxu0 %v2000
    %4801 = vmatprep.subr.bf16.mxu0 %v2009
    %4802 = vmatpush1.bf16.msra.mxu0 %v2008
    %4803 = vmatprep.mubr.bf16.mxu0 %v4647
    %4804 = vmatmul.mubr.bf16.gmra.mrb[0].mxu0 %v4646
    %v4805 = vpop.f32.mrb[0].mxu0
    %v4806 = vadd.f32 %v4765, %v4805
    %v4807 = vpop.f32.mrb[0].mxu0
    %v4808 = vadd.f32 %v4767, %v4807
    %v4809 = vpop.f32.mrb[0].mxu0
    %v4810 = vpop.f32.mrb[0].mxu0
    %4811 = vdwg.mxu0
    %4812 = vmatprep.subr.bf16.mxu0 %v1763
    %4813 = vmatpush1.bf16.msra.mxu0 %v1762
    %4814 = vmatprep.subr.bf16.mxu0 %v1771
    %4815 = vmatpush1.bf16.msra.mxu0 %v1770
    %4816 = vmatprep.subr.bf16.mxu0 %v1779
    %4817 = vmatpush1.bf16.msra.mxu0 %v1778
    %4818 = vmatprep.subr.bf16.mxu0 %v1787
    %4819 = vmatpush1.bf16.msra.mxu0 %v1786
    %4820 = vmatprep.subr.bf16.mxu0 %v1795
    %4821 = vmatpush1.bf16.msra.mxu0 %v1794
    %4822 = vmatprep.subr.bf16.mxu0 %v1803
    %4823 = vmatpush1.bf16.msra.mxu0 %v1802
    %4824 = vmatprep.subr.bf16.mxu0 %v1811
    %4825 = vmatpush1.bf16.msra.mxu0 %v1810
    %4826 = vmatprep.subr.bf16.mxu0 %v1819
    %4827 = vmatpush1.bf16.msra.mxu0 %v1818
    %4828 = vmatprep.subr.bf16.mxu0 %v1827
    %4829 = vmatpush1.bf16.msra.mxu0 %v1826
    %4830 = vmatprep.subr.bf16.mxu0 %v1835
    %4831 = vmatpush1.bf16.msra.mxu0 %v1834
    %4832 = vmatprep.subr.bf16.mxu0 %v1843
    %4833 = vmatpush1.bf16.msra.mxu0 %v1842
    %4834 = vmatprep.subr.bf16.mxu0 %v1851
    %4835 = vmatpush1.bf16.msra.mxu0 %v1850
    %4836 = vmatprep.subr.bf16.mxu0 %v1859
    %4837 = vmatpush1.bf16.msra.mxu0 %v1858
    %4838 = vmatprep.subr.bf16.mxu0 %v1867
    %4839 = vmatpush1.bf16.msra.mxu0 %v1866
    %4840 = vmatprep.subr.bf16.mxu0 %v1875
    %4841 = vmatpush1.bf16.msra.mxu0 %v1874
    %4842 = vmatprep.subr.bf16.mxu0 %v1883
    %4843 = vmatpush1.bf16.msra.mxu0 %v1882
    %4844 = vmatprep.mubr.bf16.mxu0 %v4645
    %4845 = vmatmul.mubr.bf16.gmra.mrb[0].mxu0 %v4644
    %v4846 = vpop.f32.mrb[0].mxu0
    %v4847 = vadd.f32 %v2035, %v4846
    %v4848 = vpop.f32.mrb[0].mxu0
    %v4849 = vadd.f32 %v2039, %v4848
    %v4850 = vpop.f32.mrb[0].mxu0
    %v4851 = vpop.f32.mrb[0].mxu0
    %4852 = vdwg.mxu0
    %4853 = vmatprep.subr.bf16.mxu0 %v1891
    %4854 = vmatpush1.bf16.msra.mxu0 %v1890
    %4855 = vmatprep.subr.bf16.mxu0 %v1899
    %4856 = vmatpush1.bf16.msra.mxu0 %v1898
    %4857 = vmatprep.subr.bf16.mxu0 %v1907
    %4858 = vmatpush1.bf16.msra.mxu0 %v1906
    %4859 = vmatprep.subr.bf16.mxu0 %v1915
    %4860 = vmatpush1.bf16.msra.mxu0 %v1914
    %4861 = vmatprep.subr.bf16.mxu0 %v1923
    %4862 = vmatpush1.bf16.msra.mxu0 %v1922
    %4863 = vmatprep.subr.bf16.mxu0 %v1931
    %4864 = vmatpush1.bf16.msra.mxu0 %v1930
    %4865 = vmatprep.subr.bf16.mxu0 %v1939
    %4866 = vmatpush1.bf16.msra.mxu0 %v1938
    %4867 = vmatprep.subr.bf16.mxu0 %v1947
    %4868 = vmatpush1.bf16.msra.mxu0 %v1946
    %4869 = vmatprep.subr.bf16.mxu0 %v1955
    %4870 = vmatpush1.bf16.msra.mxu0 %v1954
    %4871 = vmatprep.subr.bf16.mxu0 %v1963
    %4872 = vmatpush1.bf16.msra.mxu0 %v1962
    %4873 = vmatprep.subr.bf16.mxu0 %v1971
    %4874 = vmatpush1.bf16.msra.mxu0 %v1970
    %4875 = vmatprep.subr.bf16.mxu0 %v1979
    %4876 = vmatpush1.bf16.msra.mxu0 %v1978
    %4877 = vmatprep.subr.bf16.mxu0 %v1987
    %4878 = vmatpush1.bf16.msra.mxu0 %v1986
    %4879 = vmatprep.subr.bf16.mxu0 %v1995
    %4880 = vmatpush1.bf16.msra.mxu0 %v1994
    %4881 = vmatprep.subr.bf16.mxu0 %v2003
    %4882 = vmatpush1.bf16.msra.mxu0 %v2002
    %4883 = vmatprep.subr.bf16.mxu0 %v2011
    %4884 = vmatpush1.bf16.msra.mxu0 %v2010
    %4885 = vmatprep.mubr.bf16.mxu0 %v4647
    %4886 = vmatmul.mubr.bf16.gmra.mrb[0].mxu0 %v4646
    %v4887 = vpop.f32.mrb[0].mxu0
    %v4888 = vadd.f32 %v4847, %v4887
    %v4889 = vpop.f32.mrb[0].mxu0
    %v4890 = vadd.f32 %v4849, %v4889
    %v4891 = vpop.f32.mrb[0].mxu0
    %v4892 = vpop.f32.mrb[0].mxu0
    %4893 = vdwg.mxu0
    %4894 = vmatprep.subr.bf16.mxu0 %v1765
    %4895 = vmatpush1.bf16.msra.mxu0 %v1764
    %4896 = vmatprep.subr.bf16.mxu0 %v1773
    %4897 = vmatpush1.bf16.msra.mxu0 %v1772
    %4898 = vmatprep.subr.bf16.mxu0 %v1781
    %4899 = vmatpush1.bf16.msra.mxu0 %v1780
    %4900 = vmatprep.subr.bf16.mxu0 %v1789
    %4901 = vmatpush1.bf16.msra.mxu0 %v1788
    %4902 = vmatprep.subr.bf16.mxu0 %v1797
    %4903 = vmatpush1.bf16.msra.mxu0 %v1796
    %4904 = vmatprep.subr.bf16.mxu0 %v1805
    %4905 = vmatpush1.bf16.msra.mxu0 %v1804
    %4906 = vmatprep.subr.bf16.mxu0 %v1813
    %4907 = vmatpush1.bf16.msra.mxu0 %v1812
    %4908 = vmatprep.subr.bf16.mxu0 %v1821
    %4909 = vmatpush1.bf16.msra.mxu0 %v1820
    %4910 = vmatprep.subr.bf16.mxu0 %v1829
    %4911 = vmatpush1.bf16.msra.mxu0 %v1828
    %4912 = vmatprep.subr.bf16.mxu0 %v1837
    %4913 = vmatpush1.bf16.msra.mxu0 %v1836
    %4914 = vmatprep.subr.bf16.mxu0 %v1845
    %4915 = vmatpush1.bf16.msra.mxu0 %v1844
    %4916 = vmatprep.subr.bf16.mxu0 %v1853
    %4917 = vmatpush1.bf16.msra.mxu0 %v1852
    %4918 = vmatprep.subr.bf16.mxu0 %v1861
    %4919 = vmatpush1.bf16.msra.mxu0 %v1860
    %4920 = vmatprep.subr.bf16.mxu0 %v1869
    %4921 = vmatpush1.bf16.msra.mxu0 %v1868
    %4922 = vmatprep.subr.bf16.mxu0 %v1877
    %4923 = vmatpush1.bf16.msra.mxu0 %v1876
    %4924 = vmatprep.subr.bf16.mxu0 %v1885
    %4925 = vmatpush1.bf16.msra.mxu0 %v1884
    %4926 = vmatprep.mubr.bf16.mxu0 %v4645
    %4927 = vmatmul.mubr.bf16.gmra.mrb[0].mxu0 %v4644
    %v4928 = vpop.f32.mrb[0].mxu0
    %v4929 = vadd.f32 %v2043, %v4928
    %v4930 = vpop.f32.mrb[0].mxu0
    %v4931 = vadd.f32 %v2047, %v4930
    %v4932 = vpop.f32.mrb[0].mxu0
    %v4933 = vpop.f32.mrb[0].mxu0
    %4934 = vdwg.mxu0
    %4935 = vmatprep.subr.bf16.mxu0 %v1893
    %4936 = vmatpush1.bf16.msra.mxu0 %v1892
    %4937 = vmatprep.subr.bf16.mxu0 %v1901
    %4938 = vmatpush1.bf16.msra.mxu0 %v1900
    %4939 = vmatprep.subr.bf16.mxu0 %v1909
    %4940 = vmatpush1.bf16.msra.mxu0 %v1908
    %4941 = vmatprep.subr.bf16.mxu0 %v1917
    %4942 = vmatpush1.bf16.msra.mxu0 %v1916
    %4943 = vmatprep.subr.bf16.mxu0 %v1925
    %4944 = vmatpush1.bf16.msra.mxu0 %v1924
    %4945 = vmatprep.subr.bf16.mxu0 %v1933
    %4946 = vmatpush1.bf16.msra.mxu0 %v1932
    %4947 = vmatprep.subr.bf16.mxu0 %v1941
    %4948 = vmatpush1.bf16.msra.mxu0 %v1940
    %4949 = vmatprep.subr.bf16.mxu0 %v1949
    %4950 = vmatpush1.bf16.msra.mxu0 %v1948
    %4951 = vmatprep.subr.bf16.mxu0 %v1957
    %4952 = vmatpush1.bf16.msra.mxu0 %v1956
    %4953 = vmatprep.subr.bf16.mxu0 %v1965
    %4954 = vmatpush1.bf16.msra.mxu0 %v1964
    %4955 = vmatprep.subr.bf16.mxu0 %v1973
    %4956 = vmatpush1.bf16.msra.mxu0 %v1972
    %4957 = vmatprep.subr.bf16.mxu0 %v1981
    %4958 = vmatpush1.bf16.msra.mxu0 %v1980
    %4959 = vmatprep.subr.bf16.mxu0 %v1989
    %4960 = vmatpush1.bf16.msra.mxu0 %v1988
    %4961 = vmatprep.subr.bf16.mxu0 %v1997
    %4962 = vmatpush1.bf16.msra.mxu0 %v1996
    %4963 = vmatprep.subr.bf16.mxu0 %v2005
    %4964 = vmatpush1.bf16.msra.mxu0 %v2004
    %4965 = vmatprep.subr.bf16.mxu0 %v2013
    %4966 = vmatpush1.bf16.msra.mxu0 %v2012
    %4967 = vmatprep.mubr.bf16.mxu0 %v4647
    %4968 = vmatmul.mubr.bf16.gmra.mrb[0].mxu0 %v4646
    %v4969 = vpop.f32.mrb[0].mxu0
    %v4970 = vadd.f32 %v4929, %v4969
    %v4971 = vpop.f32.mrb[0].mxu0
    %v4972 = vadd.f32 %v4931, %v4971
    %v4973 = vpop.f32.mrb[0].mxu0
    %v4974 = vpop.f32.mrb[0].mxu0
    %4975 = vdwg.mxu0
    %v4976 = vxor.u32 %v4724, 2147483648
    %v4977 = vxor.u32 %v4726, 2147483648
    %v4978 = vmul.f32 %v4976, 1.442695
    %v4979 = vpow.pop %v4978
    %v4980 = vmul.f32 %v4977, 1.442695
    %v4981 = vpow.pop %v4980
    %v4982 = vadd.f32 %v4979, 1.0
    %v4983 = vadd.f32 %v4981, 1.0
    %v4984 = vrcp.pop %v4982
    %v4985 = vmul.f32 1.0, %v4984
    %v4986 = vrcp.pop %v4983
    %v4987 = vmul.f32 1.0, %v4986
    %v4988 = vxor.u32 %v4806, 2147483648
    %v4989 = vxor.u32 %v4808, 2147483648
    %v4990 = vmul.f32 %v4988, 1.442695
    %v4991 = vpow.pop %v4990
    %v4992 = vmul.f32 %v4989, 1.442695
    %v4993 = vpow.pop %v4992
    %v4994 = vadd.f32 %v4991, 1.0
    %v4995 = vadd.f32 %v4993, 1.0
    %v4996 = vrcp.pop %v4994
    %v4997 = vmul.f32 1.0, %v4996
    %v4998 = vrcp.pop %v4995
    %v4999 = vmul.f32 1.0, %v4998
    %v5000 = vtanh.pop %v4888
    %v5001 = vtanh.pop %v4890
    %v5002 = vxor.u32 %v4970, 2147483648
    %v5003 = vxor.u32 %v4972, 2147483648
    %v5004 = vmul.f32 %v5002, 1.442695
    %v5005 = vpow.pop %v5004
    %v5006 = vmul.f32 %v5003, 1.442695
    %v5007 = vpow.pop %v5006
    %v5008 = vadd.f32 %v5005, 1.0
    %v5009 = vadd.f32 %v5007, 1.0
    %v5010 = vrcp.pop %v5008
    %v5011 = vmul.f32 1.0, %v5010
    %v5012 = vrcp.pop %v5009
    %v5013 = vmul.f32 1.0, %v5012
    %v5014 = vmul.f32 %v4997, %v4410
    %v5015 = vmul.f32 %v4999, %v4411
    %v5016 = vmul.f32 %v4985, %v5000
    %v5017 = vmul.f32 %v4987, %v5001
    %v5018 = vadd.f32 %v5014, %v5016
    %v5019 = vadd.f32 %v5015, %v5017
    %v5020 = vtanh.pop %v5018
    %v5021 = vtanh.pop %v5019
    %v5022 = vmul.f32 %v5011, %v5020
    %v5023 = vmul.f32 %v5013, %v5021
    %v5024 = vld [vmem:[#allocation2 + $0x100] sm:$0xff]
    %v5025 = vld [vmem:[#allocation2 + $0x108] sm:$0xff]
    %v5026 = vld [vmem:[#allocation2 + $0x110] sm:$0xff]
    %v5027 = vld [vmem:[#allocation2 + $0x118] sm:$0xff]
    %v5028 = vld [vmem:[#allocation2 + $0x120] sm:$0xff]
    %v5029 = vld [vmem:[#allocation2 + $0x128] sm:$0xff]
    %v5030 = vld [vmem:[#allocation2 + $0x130] sm:$0xff]
    %v5031 = vld [vmem:[#allocation2 + $0x138] sm:$0xff]
    %5032 = vmatprep.subr.bf16.mxu0 %v2953
    %5033 = vmatpush1.bf16.msra.mxu0 %v2952
    %5034 = vmatprep.subr.bf16.mxu0 %v2961
    %5035 = vmatpush1.bf16.msra.mxu0 %v2960
    %5036 = vmatprep.subr.bf16.mxu0 %v2969
    %5037 = vmatpush1.bf16.msra.mxu0 %v2968
    %5038 = vmatprep.subr.bf16.mxu0 %v2977
    %5039 = vmatpush1.bf16.msra.mxu0 %v2976
    %5040 = vmatprep.subr.bf16.mxu0 %v2985
    %5041 = vmatpush1.bf16.msra.mxu0 %v2984
    %5042 = vmatprep.subr.bf16.mxu0 %v2993
    %5043 = vmatpush1.bf16.msra.mxu0 %v2992
    %5044 = vmatprep.subr.bf16.mxu0 %v3001
    %5045 = vmatpush1.bf16.msra.mxu0 %v3000
    %5046 = vmatprep.subr.bf16.mxu0 %v3009
    %5047 = vmatpush1.bf16.msra.mxu0 %v3008
    %5048 = vmatprep.subr.bf16.mxu0 %v3017
    %5049 = vmatpush1.bf16.msra.mxu0 %v3016
    %5050 = vmatprep.subr.bf16.mxu0 %v3025
    %5051 = vmatpush1.bf16.msra.mxu0 %v3024
    %5052 = vmatprep.subr.bf16.mxu0 %v3033
    %5053 = vmatpush1.bf16.msra.mxu0 %v3032
    %5054 = vmatprep.subr.bf16.mxu0 %v3041
    %5055 = vmatpush1.bf16.msra.mxu0 %v3040
    %5056 = vmatprep.subr.bf16.mxu0 %v3049
    %5057 = vmatpush1.bf16.msra.mxu0 %v3048
    %5058 = vmatprep.subr.bf16.mxu0 %v3057
    %5059 = vmatpush1.bf16.msra.mxu0 %v3056
    %5060 = vmatprep.subr.bf16.mxu0 %v3065
    %5061 = vmatpush1.bf16.msra.mxu0 %v3064
    %5062 = vmatprep.subr.bf16.mxu0 %v3073
    %5063 = vmatpush1.bf16.msra.mxu0 %v3072
    %5064 = vmatprep.mubr.bf16.mxu0 %v4645
    %5065 = vmatmul.mubr.bf16.gmra.mrb[0].mxu0 %v4644
    %v5066 = vpop.f32.mrb[0].mxu0
    %v5067 = vadd.f32 0.0, %v5066
    %v5068 = vpop.f32.mrb[0].mxu0
    %v5069 = vadd.f32 0.0, %v5068
    %v5070 = vpop.f32.mrb[0].mxu0
    %v5071 = vpop.f32.mrb[0].mxu0
    %5072 = vdwg.mxu0
    %5073 = vmatprep.subr.bf16.mxu0 %v2955
    %5074 = vmatpush1.bf16.msra.mxu0 %v2954
    %5075 = vmatprep.subr.bf16.mxu0 %v2963
    %5076 = vmatpush1.bf16.msra.mxu0 %v2962
    %5077 = vmatprep.subr.bf16.mxu0 %v2971
    %5078 = vmatpush1.bf16.msra.mxu0 %v2970
    %5079 = vmatprep.subr.bf16.mxu0 %v2979
    %5080 = vmatpush1.bf16.msra.mxu0 %v2978
    %5081 = vmatprep.subr.bf16.mxu0 %v2987
    %5082 = vmatpush1.bf16.msra.mxu0 %v2986
    %5083 = vmatprep.subr.bf16.mxu0 %v2995
    %5084 = vmatpush1.bf16.msra.mxu0 %v2994
    %5085 = vmatprep.subr.bf16.mxu0 %v3003
    %5086 = vmatpush1.bf16.msra.mxu0 %v3002
    %5087 = vmatprep.subr.bf16.mxu0 %v3011
    %5088 = vmatpush1.bf16.msra.mxu0 %v3010
    %5089 = vmatprep.subr.bf16.mxu0 %v3019
    %5090 = vmatpush1.bf16.msra.mxu0 %v3018
    %5091 = vmatprep.subr.bf16.mxu0 %v3027
    %5092 = vmatpush1.bf16.msra.mxu0 %v3026
    %5093 = vmatprep.subr.bf16.mxu0 %v3035
    %5094 = vmatpush1.bf16.msra.mxu0 %v3034
    %5095 = vmatprep.subr.bf16.mxu0 %v3043
    %5096 = vmatpush1.bf16.msra.mxu0 %v3042
    %5097 = vmatprep.subr.bf16.mxu0 %v3051
    %5098 = vmatpush1.bf16.msra.mxu0 %v3050
    %5099 = vmatprep.subr.bf16.mxu0 %v3059
    %5100 = vmatpush1.bf16.msra.mxu0 %v3058
    %5101 = vmatprep.subr.bf16.mxu0 %v3067
    %5102 = vmatpush1.bf16.msra.mxu0 %v3066
    %5103 = vmatprep.subr.bf16.mxu0 %v3075
    %5104 = vmatpush1.bf16.msra.mxu0 %v3074
    %5105 = vmatprep.mubr.bf16.mxu0 %v4645
    %5106 = vmatmul.mubr.bf16.gmra.mrb[0].mxu0 %v4644
    %v5107 = vpop.f32.mrb[0].mxu0
    %v5108 = vadd.f32 0.0, %v5107
    %v5109 = vpop.f32.mrb[0].mxu0
    %v5110 = vadd.f32 0.0, %v5109
    %v5111 = vpop.f32.mrb[0].mxu0
    %v5112 = vpop.f32.mrb[0].mxu0
    %5113 = vdwg.mxu0
    %5114 = vmatprep.subr.bf16.mxu0 %v2957
    %5115 = vmatpush1.bf16.msra.mxu0 %v2956
    %5116 = vmatprep.subr.bf16.mxu0 %v2965
    %5117 = vmatpush1.bf16.msra.mxu0 %v2964
    %5118 = vmatprep.subr.bf16.mxu0 %v2973
    %5119 = vmatpush1.bf16.msra.mxu0 %v2972
    %5120 = vmatprep.subr.bf16.mxu0 %v2981
    %5121 = vmatpush1.bf16.msra.mxu0 %v2980
    %5122 = vmatprep.subr.bf16.mxu0 %v2989
    %5123 = vmatpush1.bf16.msra.mxu0 %v2988
    %5124 = vmatprep.subr.bf16.mxu0 %v2997
    %5125 = vmatpush1.bf16.msra.mxu0 %v2996
    %5126 = vmatprep.subr.bf16.mxu0 %v3005
    %5127 = vmatpush1.bf16.msra.mxu0 %v3004
    %5128 = vmatprep.subr.bf16.mxu0 %v3013
    %5129 = vmatpush1.bf16.msra.mxu0 %v3012
    %5130 = vmatprep.subr.bf16.mxu0 %v3021
    %5131 = vmatpush1.bf16.msra.mxu0 %v3020
    %5132 = vmatprep.subr.bf16.mxu0 %v3029
    %5133 = vmatpush1.bf16.msra.mxu0 %v3028
    %5134 = vmatprep.subr.bf16.mxu0 %v3037
    %5135 = vmatpush1.bf16.msra.mxu0 %v3036
    %5136 = vmatprep.subr.bf16.mxu0 %v3045
    %5137 = vmatpush1.bf16.msra.mxu0 %v3044
    %5138 = vmatprep.subr.bf16.mxu0 %v3053
    %5139 = vmatpush1.bf16.msra.mxu0 %v3052
    %5140 = vmatprep.subr.bf16.mxu0 %v3061
    %5141 = vmatpush1.bf16.msra.mxu0 %v3060
    %5142 = vmatprep.subr.bf16.mxu0 %v3069
    %5143 = vmatpush1.bf16.msra.mxu0 %v3068
    %5144 = vmatprep.subr.bf16.mxu0 %v3077
    %5145 = vmatpush1.bf16.msra.mxu0 %v3076
    %5146 = vmatprep.mubr.bf16.mxu0 %v4645
    %5147 = vmatmul.mubr.bf16.gmra.mrb[0].mxu0 %v4644
    %v5148 = vpop.f32.mrb[0].mxu0
    %v5149 = vadd.f32 0.0, %v5148
    %v5150 = vpop.f32.mrb[0].mxu0
    %v5151 = vadd.f32 0.0, %v5150
    %v5152 = vpop.f32.mrb[0].mxu0
    %v5153 = vpop.f32.mrb[0].mxu0
    %5154 = vdwg.mxu0
    %5155 = vmatprep.subr.bf16.mxu0 %v2959
    %5156 = vmatpush1.bf16.msra.mxu0 %v2958
    %5157 = vmatprep.subr.bf16.mxu0 %v2967
    %5158 = vmatpush1.bf16.msra.mxu0 %v2966
    %5159 = vmatprep.subr.bf16.mxu0 %v2975
    %5160 = vmatpush1.bf16.msra.mxu0 %v2974
    %5161 = vmatprep.subr.bf16.mxu0 %v2983
    %5162 = vmatpush1.bf16.msra.mxu0 %v2982
    %5163 = vmatprep.subr.bf16.mxu0 %v2991
    %5164 = vmatpush1.bf16.msra.mxu0 %v2990
    %5165 = vmatprep.subr.bf16.mxu0 %v2999
    %5166 = vmatpush1.bf16.msra.mxu0 %v2998
    %5167 = vmatprep.subr.bf16.mxu0 %v3007
    %5168 = vmatpush1.bf16.msra.mxu0 %v3006
    %5169 = vmatprep.subr.bf16.mxu0 %v3015
    %5170 = vmatpush1.bf16.msra.mxu0 %v3014
    %5171 = vmatprep.subr.bf16.mxu0 %v3023
    %5172 = vmatpush1.bf16.msra.mxu0 %v3022
    %5173 = vmatprep.subr.bf16.mxu0 %v3031
    %5174 = vmatpush1.bf16.msra.mxu0 %v3030
    %5175 = vmatprep.subr.bf16.mxu0 %v3039
    %5176 = vmatpush1.bf16.msra.mxu0 %v3038
    %5177 = vmatprep.subr.bf16.mxu0 %v3047
    %5178 = vmatpush1.bf16.msra.mxu0 %v3046
    %5179 = vmatprep.subr.bf16.mxu0 %v3055
    %5180 = vmatpush1.bf16.msra.mxu0 %v3054
    %5181 = vmatprep.subr.bf16.mxu0 %v3063
    %5182 = vmatpush1.bf16.msra.mxu0 %v3062
    %5183 = vmatprep.subr.bf16.mxu0 %v3071
    %5184 = vmatpush1.bf16.msra.mxu0 %v3070
    %5185 = vmatprep.subr.bf16.mxu0 %v3079
    %5186 = vmatpush1.bf16.msra.mxu0 %v3078
    %5187 = vmatprep.mubr.bf16.mxu0 %v4645
    %5188 = vmatmul.mubr.bf16.gmra.mrb[0].mxu0 %v4644
    %v5189 = vpop.f32.mrb[0].mxu0
    %v5190 = vadd.f32 0.0, %v5189
    %v5191 = vpop.f32.mrb[0].mxu0
    %v5192 = vadd.f32 0.0, %v5191
    %v5193 = vpop.f32.mrb[0].mxu0
    %v5194 = vpop.f32.mrb[0].mxu0
    %5195 = vdwg.mxu0
    %v5196 = vadd.f32 %v5024, %v5067
    %v5197 = vadd.f32 %v5025, %v5069
    %v5198 = vadd.f32 %v5026, %v5108
    %v5199 = vadd.f32 %v5027, %v5110
    %v5200 = vadd.f32 %v5028, %v5149
    %v5201 = vadd.f32 %v5029, %v5151
    %v5202 = vadd.f32 %v5030, %v5190
    %v5203 = vadd.f32 %v5031, %v5192
    %v5204 = vxor.u32 %v5196, 2147483648
    %v5205 = vxor.u32 %v5197, 2147483648
    %v5206 = vmul.f32 %v5204, 1.442695
    %v5207 = vpow.pop %v5206
    %v5208 = vmul.f32 %v5205, 1.442695
    %v5209 = vpow.pop %v5208
    %v5210 = vadd.f32 %v5207, 1.0
    %v5211 = vadd.f32 %v5209, 1.0
    %v5212 = vrcp.pop %v5210
    %v5213 = vmul.f32 1.0, %v5212
    %v5214 = vrcp.pop %v5211
    %v5215 = vmul.f32 1.0, %v5214
    %v5216 = vxor.u32 %v5198, 2147483648
    %v5217 = vxor.u32 %v5199, 2147483648
    %v5218 = vmul.f32 %v5216, 1.442695
    %v5219 = vpow.pop %v5218
    %v5220 = vmul.f32 %v5217, 1.442695
    %v5221 = vpow.pop %v5220
    %v5222 = vadd.f32 %v5219, 1.0
    %v5223 = vadd.f32 %v5221, 1.0
    %v5224 = vrcp.pop %v5222
    %v5225 = vmul.f32 1.0, %v5224
    %v5226 = vrcp.pop %v5223
    %v5227 = vmul.f32 1.0, %v5226
    %v5228 = vtanh.pop %v5200
    %v5229 = vtanh.pop %v5201
    %v5230 = vxor.u32 %v5202, 2147483648
    %v5231 = vxor.u32 %v5203, 2147483648
    %v5232 = vmul.f32 %v5230, 1.442695
    %v5233 = vpow.pop %v5232
    %v5234 = vmul.f32 %v5231, 1.442695
    %v5235 = vpow.pop %v5234
    %v5236 = vadd.f32 %v5233, 1.0
    %v5237 = vadd.f32 %v5235, 1.0
    %v5238 = vrcp.pop %v5236
    %v5239 = vmul.f32 1.0, %v5238
    %v5240 = vrcp.pop %v5237
    %v5241 = vmul.f32 1.0, %v5240
    %v5242 = vmul.f32 %v5225, %v4638
    %v5243 = vmul.f32 %v5227, %v4639
    %v5244 = vmul.f32 %v5213, %v5228
    %v5245 = vmul.f32 %v5215, %v5229
    %v5246 = vadd.f32 %v5242, %v5244
    %v5247 = vadd.f32 %v5243, %v5245
    %v5248 = vtanh.pop %v5246
    %v5249 = vtanh.pop %v5247
    %v5250 = vmul.f32 %v5239, %v5248
    %v5251 = vmul.f32 %v5241, %v5249
    %v5252 = vpack.c.bf16 %v5250, %v5250
    %v5253 = vpack.c.bf16 %v5251, %v5251
    %v5254 = vpack.c.bf16 %v5022, %v5022
    %v5255 = vpack.c.bf16 %v5023, %v5023
    %5256 = vmatprep.subr.bf16.mxu0 %v1759
    %5257 = vmatpush1.bf16.msra.mxu0 %v1758
    %5258 = vmatprep.subr.bf16.mxu0 %v1767
    %5259 = vmatpush1.bf16.msra.mxu0 %v1766
    %5260 = vmatprep.subr.bf16.mxu0 %v1775
    %5261 = vmatpush1.bf16.msra.mxu0 %v1774
    %5262 = vmatprep.subr.bf16.mxu0 %v1783
    %5263 = vmatpush1.bf16.msra.mxu0 %v1782
    %5264 = vmatprep.subr.bf16.mxu0 %v1791
    %5265 = vmatpush1.bf16.msra.mxu0 %v1790
    %5266 = vmatprep.subr.bf16.mxu0 %v1799
    %5267 = vmatpush1.bf16.msra.mxu0 %v1798
    %5268 = vmatprep.subr.bf16.mxu0 %v1807
    %5269 = vmatpush1.bf16.msra.mxu0 %v1806
    %5270 = vmatprep.subr.bf16.mxu0 %v1815
    %5271 = vmatpush1.bf16.msra.mxu0 %v1814
    %5272 = vmatprep.subr.bf16.mxu0 %v1823
    %5273 = vmatpush1.bf16.msra.mxu0 %v1822
    %5274 = vmatprep.subr.bf16.mxu0 %v1831
    %5275 = vmatpush1.bf16.msra.mxu0 %v1830
    %5276 = vmatprep.subr.bf16.mxu0 %v1839
    %5277 = vmatpush1.bf16.msra.mxu0 %v1838
    %5278 = vmatprep.subr.bf16.mxu0 %v1847
    %5279 = vmatpush1.bf16.msra.mxu0 %v1846
    %5280 = vmatprep.subr.bf16.mxu0 %v1855
    %5281 = vmatpush1.bf16.msra.mxu0 %v1854
    %5282 = vmatprep.subr.bf16.mxu0 %v1863
    %5283 = vmatpush1.bf16.msra.mxu0 %v1862
    %5284 = vmatprep.subr.bf16.mxu0 %v1871
    %5285 = vmatpush1.bf16.msra.mxu0 %v1870
    %5286 = vmatprep.subr.bf16.mxu0 %v1879
    %5287 = vmatpush1.bf16.msra.mxu0 %v1878
    %5288 = vmatprep.mubr.bf16.mxu0 %v5253
    %5289 = vmatmul.mubr.bf16.gmra.mrb[0].mxu0 %v5252
    %v5290 = vpop.f32.mrb[0].mxu0
    %v5291 = vadd.f32 %v2019, %v5290
    %v5292 = vpop.f32.mrb[0].mxu0
    %v5293 = vadd.f32 %v2023, %v5292
    %v5294 = vpop.f32.mrb[0].mxu0
    %v5295 = vpop.f32.mrb[0].mxu0
    %5296 = vdwg.mxu0
    %5297 = vmatprep.subr.bf16.mxu0 %v1887
    %5298 = vmatpush1.bf16.msra.mxu0 %v1886
    %5299 = vmatprep.subr.bf16.mxu0 %v1895
    %5300 = vmatpush1.bf16.msra.mxu0 %v1894
    %5301 = vmatprep.subr.bf16.mxu0 %v1903
    %5302 = vmatpush1.bf16.msra.mxu0 %v1902
    %5303 = vmatprep.subr.bf16.mxu0 %v1911
    %5304 = vmatpush1.bf16.msra.mxu0 %v1910
    %5305 = vmatprep.subr.bf16.mxu0 %v1919
    %5306 = vmatpush1.bf16.msra.mxu0 %v1918
    %5307 = vmatprep.subr.bf16.mxu0 %v1927
    %5308 = vmatpush1.bf16.msra.mxu0 %v1926
    %5309 = vmatprep.subr.bf16.mxu0 %v1935
    %5310 = vmatpush1.bf16.msra.mxu0 %v1934
    %5311 = vmatprep.subr.bf16.mxu0 %v1943
    %5312 = vmatpush1.bf16.msra.mxu0 %v1942
    %5313 = vmatprep.subr.bf16.mxu0 %v1951
    %5314 = vmatpush1.bf16.msra.mxu0 %v1950
    %5315 = vmatprep.subr.bf16.mxu0 %v1959
    %5316 = vmatpush1.bf16.msra.mxu0 %v1958
    %5317 = vmatprep.subr.bf16.mxu0 %v1967
    %5318 = vmatpush1.bf16.msra.mxu0 %v1966
    %5319 = vmatprep.subr.bf16.mxu0 %v1975
    %5320 = vmatpush1.bf16.msra.mxu0 %v1974
    %5321 = vmatprep.subr.bf16.mxu0 %v1983
    %5322 = vmatpush1.bf16.msra.mxu0 %v1982
    %5323 = vmatprep.subr.bf16.mxu0 %v1991
    %5324 = vmatpush1.bf16.msra.mxu0 %v1990
    %5325 = vmatprep.subr.bf16.mxu0 %v1999
    %5326 = vmatpush1.bf16.msra.mxu0 %v1998
    %5327 = vmatprep.subr.bf16.mxu0 %v2007
    %5328 = vmatpush1.bf16.msra.mxu0 %v2006
    %5329 = vmatprep.mubr.bf16.mxu0 %v5255
    %5330 = vmatmul.mubr.bf16.gmra.mrb[0].mxu0 %v5254
    %v5331 = vpop.f32.mrb[0].mxu0
    %v5332 = vadd.f32 %v5291, %v5331
    %v5333 = vpop.f32.mrb[0].mxu0
    %v5334 = vadd.f32 %v5293, %v5333
    %v5335 = vpop.f32.mrb[0].mxu0
    %v5336 = vpop.f32.mrb[0].mxu0
    %5337 = vdwg.mxu0
    %5338 = vmatprep.subr.bf16.mxu0 %v1761
    %5339 = vmatpush1.bf16.msra.mxu0 %v1760
    %5340 = vmatprep.subr.bf16.mxu0 %v1769
    %5341 = vmatpush1.bf16.msra.mxu0 %v1768
    %5342 = vmatprep.subr.bf16.mxu0 %v1777
    %5343 = vmatpush1.bf16.msra.mxu0 %v1776
    %5344 = vmatprep.subr.bf16.mxu0 %v1785
    %5345 = vmatpush1.bf16.msra.mxu0 %v1784
    %5346 = vmatprep.subr.bf16.mxu0 %v1793
    %5347 = vmatpush1.bf16.msra.mxu0 %v1792
    %5348 = vmatprep.subr.bf16.mxu0 %v1801
    %5349 = vmatpush1.bf16.msra.mxu0 %v1800
    %5350 = vmatprep.subr.bf16.mxu0 %v1809
    %5351 = vmatpush1.bf16.msra.mxu0 %v1808
    %5352 = vmatprep.subr.bf16.mxu0 %v1817
    %5353 = vmatpush1.bf16.msra.mxu0 %v1816
    %5354 = vmatprep.subr.bf16.mxu0 %v1825
    %5355 = vmatpush1.bf16.msra.mxu0 %v1824
    %5356 = vmatprep.subr.bf16.mxu0 %v1833
    %5357 = vmatpush1.bf16.msra.mxu0 %v1832
    %5358 = vmatprep.subr.bf16.mxu0 %v1841
    %5359 = vmatpush1.bf16.msra.mxu0 %v1840
    %5360 = vmatprep.subr.bf16.mxu0 %v1849
    %5361 = vmatpush1.bf16.msra.mxu0 %v1848
    %5362 = vmatprep.subr.bf16.mxu0 %v1857
    %5363 = vmatpush1.bf16.msra.mxu0 %v1856
    %5364 = vmatprep.subr.bf16.mxu0 %v1865
    %5365 = vmatpush1.bf16.msra.mxu0 %v1864
    %5366 = vmatprep.subr.bf16.mxu0 %v1873
    %5367 = vmatpush1.bf16.msra.mxu0 %v1872
    %5368 = vmatprep.subr.bf16.mxu0 %v1881
    %5369 = vmatpush1.bf16.msra.mxu0 %v1880
    %5370 = vmatprep.mubr.bf16.mxu0 %v5253
    %5371 = vmatmul.mubr.bf16.gmra.mrb[0].mxu0 %v5252
    %v5372 = vpop.f32.mrb[0].mxu0
    %v5373 = vadd.f32 %v2027, %v5372
    %v5374 = vpop.f32.mrb[0].mxu0
    %v5375 = vadd.f32 %v2031, %v5374
    %v5376 = vpop.f32.mrb[0].mxu0
    %v5377 = vpop.f32.mrb[0].mxu0
    %5378 = vdwg.mxu0
    %5379 = vmatprep.subr.bf16.mxu0 %v1889
    %5380 = vmatpush1.bf16.msra.mxu0 %v1888
    %5381 = vmatprep.subr.bf16.mxu0 %v1897
    %5382 = vmatpush1.bf16.msra.mxu0 %v1896
    %5383 = vmatprep.subr.bf16.mxu0 %v1905
    %5384 = vmatpush1.bf16.msra.mxu0 %v1904
    %5385 = vmatprep.subr.bf16.mxu0 %v1913
    %5386 = vmatpush1.bf16.msra.mxu0 %v1912
    %5387 = vmatprep.subr.bf16.mxu0 %v1921
    %5388 = vmatpush1.bf16.msra.mxu0 %v1920
    %5389 = vmatprep.subr.bf16.mxu0 %v1929
    %5390 = vmatpush1.bf16.msra.mxu0 %v1928
    %5391 = vmatprep.subr.bf16.mxu0 %v1937
    %5392 = vmatpush1.bf16.msra.mxu0 %v1936
    %5393 = vmatprep.subr.bf16.mxu0 %v1945
    %5394 = vmatpush1.bf16.msra.mxu0 %v1944
    %5395 = vmatprep.subr.bf16.mxu0 %v1953
    %5396 = vmatpush1.bf16.msra.mxu0 %v1952
    %5397 = vmatprep.subr.bf16.mxu0 %v1961
    %5398 = vmatpush1.bf16.msra.mxu0 %v1960
    %5399 = vmatprep.subr.bf16.mxu0 %v1969
    %5400 = vmatpush1.bf16.msra.mxu0 %v1968
    %5401 = vmatprep.subr.bf16.mxu0 %v1977
    %5402 = vmatpush1.bf16.msra.mxu0 %v1976
    %5403 = vmatprep.subr.bf16.mxu0 %v1985
    %5404 = vmatpush1.bf16.msra.mxu0 %v1984
    %5405 = vmatprep.subr.bf16.mxu0 %v1993
    %5406 = vmatpush1.bf16.msra.mxu0 %v1992
    %5407 = vmatprep.subr.bf16.mxu0 %v2001
    %5408 = vmatpush1.bf16.msra.mxu0 %v2000
    %5409 = vmatprep.subr.bf16.mxu0 %v2009
    %5410 = vmatpush1.bf16.msra.mxu0 %v2008
    %5411 = vmatprep.mubr.bf16.mxu0 %v5255
    %5412 = vmatmul.mubr.bf16.gmra.mrb[0].mxu0 %v5254
    %v5413 = vpop.f32.mrb[0].mxu0
    %v5414 = vadd.f32 %v5373, %v5413
    %v5415 = vpop.f32.mrb[0].mxu0
    %v5416 = vadd.f32 %v5375, %v5415
    %v5417 = vpop.f32.mrb[0].mxu0
    %v5418 = vpop.f32.mrb[0].mxu0
    %5419 = vdwg.mxu0
    %5420 = vmatprep.subr.bf16.mxu0 %v1763
    %5421 = vmatpush1.bf16.msra.mxu0 %v1762
    %5422 = vmatprep.subr.bf16.mxu0 %v1771
    %5423 = vmatpush1.bf16.msra.mxu0 %v1770
    %5424 = vmatprep.subr.bf16.mxu0 %v1779
    %5425 = vmatpush1.bf16.msra.mxu0 %v1778
    %5426 = vmatprep.subr.bf16.mxu0 %v1787
    %5427 = vmatpush1.bf16.msra.mxu0 %v1786
    %5428 = vmatprep.subr.bf16.mxu0 %v1795
    %5429 = vmatpush1.bf16.msra.mxu0 %v1794
    %5430 = vmatprep.subr.bf16.mxu0 %v1803
    %5431 = vmatpush1.bf16.msra.mxu0 %v1802
    %5432 = vmatprep.subr.bf16.mxu0 %v1811
    %5433 = vmatpush1.bf16.msra.mxu0 %v1810
    %5434 = vmatprep.subr.bf16.mxu0 %v1819
    %5435 = vmatpush1.bf16.msra.mxu0 %v1818
    %5436 = vmatprep.subr.bf16.mxu0 %v1827
    %5437 = vmatpush1.bf16.msra.mxu0 %v1826
    %5438 = vmatprep.subr.bf16.mxu0 %v1835
    %5439 = vmatpush1.bf16.msra.mxu0 %v1834
    %5440 = vmatprep.subr.bf16.mxu0 %v1843
    %5441 = vmatpush1.bf16.msra.mxu0 %v1842
    %5442 = vmatprep.subr.bf16.mxu0 %v1851
    %5443 = vmatpush1.bf16.msra.mxu0 %v1850
    %5444 = vmatprep.subr.bf16.mxu0 %v1859
    %5445 = vmatpush1.bf16.msra.mxu0 %v1858
    %5446 = vmatprep.subr.bf16.mxu0 %v1867
    %5447 = vmatpush1.bf16.msra.mxu0 %v1866
    %5448 = vmatprep.subr.bf16.mxu0 %v1875
    %5449 = vmatpush1.bf16.msra.mxu0 %v1874
    %5450 = vmatprep.subr.bf16.mxu0 %v1883
    %5451 = vmatpush1.bf16.msra.mxu0 %v1882
    %5452 = vmatprep.mubr.bf16.mxu0 %v5253
    %5453 = vmatmul.mubr.bf16.gmra.mrb[0].mxu0 %v5252
    %v5454 = vpop.f32.mrb[0].mxu0
    %v5455 = vadd.f32 %v2035, %v5454
    %v5456 = vpop.f32.mrb[0].mxu0
    %v5457 = vadd.f32 %v2039, %v5456
    %v5458 = vpop.f32.mrb[0].mxu0
    %v5459 = vpop.f32.mrb[0].mxu0
    %5460 = vdwg.mxu0
    %5461 = vmatprep.subr.bf16.mxu0 %v1891
    %5462 = vmatpush1.bf16.msra.mxu0 %v1890
    %5463 = vmatprep.subr.bf16.mxu0 %v1899
    %5464 = vmatpush1.bf16.msra.mxu0 %v1898
    %5465 = vmatprep.subr.bf16.mxu0 %v1907
    %5466 = vmatpush1.bf16.msra.mxu0 %v1906
    %5467 = vmatprep.subr.bf16.mxu0 %v1915
    %5468 = vmatpush1.bf16.msra.mxu0 %v1914
    %5469 = vmatprep.subr.bf16.mxu0 %v1923
    %5470 = vmatpush1.bf16.msra.mxu0 %v1922
    %5471 = vmatprep.subr.bf16.mxu0 %v1931
    %5472 = vmatpush1.bf16.msra.mxu0 %v1930
    %5473 = vmatprep.subr.bf16.mxu0 %v1939
    %5474 = vmatpush1.bf16.msra.mxu0 %v1938
    %5475 = vmatprep.subr.bf16.mxu0 %v1947
    %5476 = vmatpush1.bf16.msra.mxu0 %v1946
    %5477 = vmatprep.subr.bf16.mxu0 %v1955
    %5478 = vmatpush1.bf16.msra.mxu0 %v1954
    %5479 = vmatprep.subr.bf16.mxu0 %v1963
    %5480 = vmatpush1.bf16.msra.mxu0 %v1962
    %5481 = vmatprep.subr.bf16.mxu0 %v1971
    %5482 = vmatpush1.bf16.msra.mxu0 %v1970
    %5483 = vmatprep.subr.bf16.mxu0 %v1979
    %5484 = vmatpush1.bf16.msra.mxu0 %v1978
    %5485 = vmatprep.subr.bf16.mxu0 %v1987
    %5486 = vmatpush1.bf16.msra.mxu0 %v1986
    %5487 = vmatprep.subr.bf16.mxu0 %v1995
    %5488 = vmatpush1.bf16.msra.mxu0 %v1994
    %5489 = vmatprep.subr.bf16.mxu0 %v2003
    %5490 = vmatpush1.bf16.msra.mxu0 %v2002
    %5491 = vmatprep.subr.bf16.mxu0 %v2011
    %5492 = vmatpush1.bf16.msra.mxu0 %v2010
    %5493 = vmatprep.mubr.bf16.mxu0 %v5255
    %5494 = vmatmul.mubr.bf16.gmra.mrb[0].mxu0 %v5254
    %v5495 = vpop.f32.mrb[0].mxu0
    %v5496 = vadd.f32 %v5455, %v5495
    %v5497 = vpop.f32.mrb[0].mxu0
    %v5498 = vadd.f32 %v5457, %v5497
    %v5499 = vpop.f32.mrb[0].mxu0
    %v5500 = vpop.f32.mrb[0].mxu0
    %5501 = vdwg.mxu0
    %5502 = vmatprep.subr.bf16.mxu0 %v1765
    %5503 = vmatpush1.bf16.msra.mxu0 %v1764
    %5504 = vmatprep.subr.bf16.mxu0 %v1773
    %5505 = vmatpush1.bf16.msra.mxu0 %v1772
    %5506 = vmatprep.subr.bf16.mxu0 %v1781
    %5507 = vmatpush1.bf16.msra.mxu0 %v1780
    %5508 = vmatprep.subr.bf16.mxu0 %v1789
    %5509 = vmatpush1.bf16.msra.mxu0 %v1788
    %5510 = vmatprep.subr.bf16.mxu0 %v1797
    %5511 = vmatpush1.bf16.msra.mxu0 %v1796
    %5512 = vmatprep.subr.bf16.mxu0 %v1805
    %5513 = vmatpush1.bf16.msra.mxu0 %v1804
    %5514 = vmatprep.subr.bf16.mxu0 %v1813
    %5515 = vmatpush1.bf16.msra.mxu0 %v1812
    %5516 = vmatprep.subr.bf16.mxu0 %v1821
    %5517 = vmatpush1.bf16.msra.mxu0 %v1820
    %5518 = vmatprep.subr.bf16.mxu0 %v1829
    %5519 = vmatpush1.bf16.msra.mxu0 %v1828
    %5520 = vmatprep.subr.bf16.mxu0 %v1837
    %5521 = vmatpush1.bf16.msra.mxu0 %v1836
    %5522 = vmatprep.subr.bf16.mxu0 %v1845
    %5523 = vmatpush1.bf16.msra.mxu0 %v1844
    %5524 = vmatprep.subr.bf16.mxu0 %v1853
    %5525 = vmatpush1.bf16.msra.mxu0 %v1852
    %5526 = vmatprep.subr.bf16.mxu0 %v1861
    %5527 = vmatpush1.bf16.msra.mxu0 %v1860
    %5528 = vmatprep.subr.bf16.mxu0 %v1869
    %5529 = vmatpush1.bf16.msra.mxu0 %v1868
    %5530 = vmatprep.subr.bf16.mxu0 %v1877
    %5531 = vmatpush1.bf16.msra.mxu0 %v1876
    %5532 = vmatprep.subr.bf16.mxu0 %v1885
    %5533 = vmatpush1.bf16.msra.mxu0 %v1884
    %5534 = vmatprep.mubr.bf16.mxu0 %v5253
    %5535 = vmatmul.mubr.bf16.gmra.mrb[0].mxu0 %v5252
    %v5536 = vpop.f32.mrb[0].mxu0
    %v5537 = vadd.f32 %v2043, %v5536
    %v5538 = vpop.f32.mrb[0].mxu0
    %v5539 = vadd.f32 %v2047, %v5538
    %v5540 = vpop.f32.mrb[0].mxu0
    %v5541 = vpop.f32.mrb[0].mxu0
    %5542 = vdwg.mxu0
    %5543 = vmatprep.subr.bf16.mxu0 %v1893
    %5544 = vmatpush1.bf16.msra.mxu0 %v1892
    %5545 = vmatprep.subr.bf16.mxu0 %v1901
    %5546 = vmatpush1.bf16.msra.mxu0 %v1900
    %5547 = vmatprep.subr.bf16.mxu0 %v1909
    %5548 = vmatpush1.bf16.msra.mxu0 %v1908
    %5549 = vmatprep.subr.bf16.mxu0 %v1917
    %5550 = vmatpush1.bf16.msra.mxu0 %v1916
    %5551 = vmatprep.subr.bf16.mxu0 %v1925
    %5552 = vmatpush1.bf16.msra.mxu0 %v1924
    %5553 = vmatprep.subr.bf16.mxu0 %v1933
    %5554 = vmatpush1.bf16.msra.mxu0 %v1932
    %5555 = vmatprep.subr.bf16.mxu0 %v1941
    %5556 = vmatpush1.bf16.msra.mxu0 %v1940
    %5557 = vmatprep.subr.bf16.mxu0 %v1949
    %5558 = vmatpush1.bf16.msra.mxu0 %v1948
    %5559 = vmatprep.subr.bf16.mxu0 %v1957
    %5560 = vmatpush1.bf16.msra.mxu0 %v1956
    %5561 = vmatprep.subr.bf16.mxu0 %v1965
    %5562 = vmatpush1.bf16.msra.mxu0 %v1964
    %5563 = vmatprep.subr.bf16.mxu0 %v1973
    %5564 = vmatpush1.bf16.msra.mxu0 %v1972
    %5565 = vmatprep.subr.bf16.mxu0 %v1981
    %5566 = vmatpush1.bf16.msra.mxu0 %v1980
    %5567 = vmatprep.subr.bf16.mxu0 %v1989
    %5568 = vmatpush1.bf16.msra.mxu0 %v1988
    %5569 = vmatprep.subr.bf16.mxu0 %v1997
    %5570 = vmatpush1.bf16.msra.mxu0 %v1996
    %5571 = vmatprep.subr.bf16.mxu0 %v2005
    %5572 = vmatpush1.bf16.msra.mxu0 %v2004
    %5573 = vmatprep.subr.bf16.mxu0 %v2013
    %5574 = vmatpush1.bf16.msra.mxu0 %v2012
    %5575 = vmatprep.mubr.bf16.mxu0 %v5255
    %5576 = vmatmul.mubr.bf16.gmra.mrb[0].mxu0 %v5254
    %v5577 = vpop.f32.mrb[0].mxu0
    %v5578 = vadd.f32 %v5537, %v5577
    %v5579 = vpop.f32.mrb[0].mxu0
    %v5580 = vadd.f32 %v5539, %v5579
    %v5581 = vpop.f32.mrb[0].mxu0
    %v5582 = vpop.f32.mrb[0].mxu0
    %5583 = vdwg.mxu0
    %v5584 = vxor.u32 %v5332, 2147483648
    %v5585 = vxor.u32 %v5334, 2147483648
    %v5586 = vmul.f32 %v5584, 1.442695
    %v5587 = vpow.pop %v5586
    %v5588 = vmul.f32 %v5585, 1.442695
    %v5589 = vpow.pop %v5588
    %v5590 = vadd.f32 %v5587, 1.0
    %v5591 = vadd.f32 %v5589, 1.0
    %v5592 = vrcp.pop %v5590
    %v5593 = vmul.f32 1.0, %v5592
    %v5594 = vrcp.pop %v5591
    %v5595 = vmul.f32 1.0, %v5594
    %v5596 = vxor.u32 %v5414, 2147483648
    %v5597 = vxor.u32 %v5416, 2147483648
    %v5598 = vmul.f32 %v5596, 1.442695
    %v5599 = vpow.pop %v5598
    %v5600 = vmul.f32 %v5597, 1.442695
    %v5601 = vpow.pop %v5600
    %v5602 = vadd.f32 %v5599, 1.0
    %v5603 = vadd.f32 %v5601, 1.0
    %v5604 = vrcp.pop %v5602
    %v5605 = vmul.f32 1.0, %v5604
    %v5606 = vrcp.pop %v5603
    %v5607 = vmul.f32 1.0, %v5606
    %v5608 = vtanh.pop %v5496
    %v5609 = vtanh.pop %v5498
    %v5610 = vxor.u32 %v5578, 2147483648
    %v5611 = vxor.u32 %v5580, 2147483648
    %v5612 = vmul.f32 %v5610, 1.442695
    %v5613 = vpow.pop %v5612
    %v5614 = vmul.f32 %v5611, 1.442695
    %v5615 = vpow.pop %v5614
    %v5616 = vadd.f32 %v5613, 1.0
    %v5617 = vadd.f32 %v5615, 1.0
    %v5618 = vrcp.pop %v5616
    %v5619 = vmul.f32 1.0, %v5618
    %v5620 = vrcp.pop %v5617
    %v5621 = vmul.f32 1.0, %v5620
    %v5622 = vmul.f32 %v5605, %v5018
    %v5623 = vmul.f32 %v5607, %v5019
    %v5624 = vmul.f32 %v5593, %v5608
    %v5625 = vmul.f32 %v5595, %v5609
    %v5626 = vadd.f32 %v5622, %v5624
    %v5627 = vadd.f32 %v5623, %v5625
    %v5628 = vtanh.pop %v5626
    %v5629 = vtanh.pop %v5627
    %v5630 = vmul.f32 %v5619, %v5628
    %v5631 = vmul.f32 %v5621, %v5629
    %v5632 = vld [vmem:[#allocation2 + $0x140] sm:$0xff]
    %v5633 = vld [vmem:[#allocation2 + $0x148] sm:$0xff]
    %v5634 = vld [vmem:[#allocation2 + $0x150] sm:$0xff]
    %v5635 = vld [vmem:[#allocation2 + $0x158] sm:$0xff]
    %v5636 = vld [vmem:[#allocation2 + $0x160] sm:$0xff]
    %v5637 = vld [vmem:[#allocation2 + $0x168] sm:$0xff]
    %v5638 = vld [vmem:[#allocation2 + $0x170] sm:$0xff]
    %v5639 = vld [vmem:[#allocation2 + $0x178] sm:$0xff]
    %5640 = vmatprep.subr.bf16.mxu0 %v2953
    %5641 = vmatpush1.bf16.msra.mxu0 %v2952
    %5642 = vmatprep.subr.bf16.mxu0 %v2961
    %5643 = vmatpush1.bf16.msra.mxu0 %v2960
    %5644 = vmatprep.subr.bf16.mxu0 %v2969
    %5645 = vmatpush1.bf16.msra.mxu0 %v2968
    %5646 = vmatprep.subr.bf16.mxu0 %v2977
    %5647 = vmatpush1.bf16.msra.mxu0 %v2976
    %5648 = vmatprep.subr.bf16.mxu0 %v2985
    %5649 = vmatpush1.bf16.msra.mxu0 %v2984
    %5650 = vmatprep.subr.bf16.mxu0 %v2993
    %5651 = vmatpush1.bf16.msra.mxu0 %v2992
    %5652 = vmatprep.subr.bf16.mxu0 %v3001
    %5653 = vmatpush1.bf16.msra.mxu0 %v3000
    %5654 = vmatprep.subr.bf16.mxu0 %v3009
    %5655 = vmatpush1.bf16.msra.mxu0 %v3008
    %5656 = vmatprep.subr.bf16.mxu0 %v3017
    %5657 = vmatpush1.bf16.msra.mxu0 %v3016
    %5658 = vmatprep.subr.bf16.mxu0 %v3025
    %5659 = vmatpush1.bf16.msra.mxu0 %v3024
    %5660 = vmatprep.subr.bf16.mxu0 %v3033
    %5661 = vmatpush1.bf16.msra.mxu0 %v3032
    %5662 = vmatprep.subr.bf16.mxu0 %v3041
    %5663 = vmatpush1.bf16.msra.mxu0 %v3040
    %5664 = vmatprep.subr.bf16.mxu0 %v3049
    %5665 = vmatpush1.bf16.msra.mxu0 %v3048
    %5666 = vmatprep.subr.bf16.mxu0 %v3057
    %5667 = vmatpush1.bf16.msra.mxu0 %v3056
    %5668 = vmatprep.subr.bf16.mxu0 %v3065
    %5669 = vmatpush1.bf16.msra.mxu0 %v3064
    %5670 = vmatprep.subr.bf16.mxu0 %v3073
    %5671 = vmatpush1.bf16.msra.mxu0 %v3072
    %5672 = vmatprep.mubr.bf16.mxu0 %v5253
    %5673 = vmatmul.mubr.bf16.gmra.mrb[0].mxu0 %v5252
    %v5674 = vpop.f32.mrb[0].mxu0
    %v5675 = vadd.f32 0.0, %v5674
    %v5676 = vpop.f32.mrb[0].mxu0
    %v5677 = vadd.f32 0.0, %v5676
    %v5678 = vpop.f32.mrb[0].mxu0
    %v5679 = vpop.f32.mrb[0].mxu0
    %5680 = vdwg.mxu0
    %5681 = vmatprep.subr.bf16.mxu0 %v2955
    %5682 = vmatpush1.bf16.msra.mxu0 %v2954
    %5683 = vmatprep.subr.bf16.mxu0 %v2963
    %5684 = vmatpush1.bf16.msra.mxu0 %v2962
    %5685 = vmatprep.subr.bf16.mxu0 %v2971
    %5686 = vmatpush1.bf16.msra.mxu0 %v2970
    %5687 = vmatprep.subr.bf16.mxu0 %v2979
    %5688 = vmatpush1.bf16.msra.mxu0 %v2978
    %5689 = vmatprep.subr.bf16.mxu0 %v2987
    %5690 = vmatpush1.bf16.msra.mxu0 %v2986
    %5691 = vmatprep.subr.bf16.mxu0 %v2995
    %5692 = vmatpush1.bf16.msra.mxu0 %v2994
    %5693 = vmatprep.subr.bf16.mxu0 %v3003
    %5694 = vmatpush1.bf16.msra.mxu0 %v3002
    %5695 = vmatprep.subr.bf16.mxu0 %v3011
    %5696 = vmatpush1.bf16.msra.mxu0 %v3010
    %5697 = vmatprep.subr.bf16.mxu0 %v3019
    %5698 = vmatpush1.bf16.msra.mxu0 %v3018
    %5699 = vmatprep.subr.bf16.mxu0 %v3027
    %5700 = vmatpush1.bf16.msra.mxu0 %v3026
    %5701 = vmatprep.subr.bf16.mxu0 %v3035
    %5702 = vmatpush1.bf16.msra.mxu0 %v3034
    %5703 = vmatprep.subr.bf16.mxu0 %v3043
    %5704 = vmatpush1.bf16.msra.mxu0 %v3042
    %5705 = vmatprep.subr.bf16.mxu0 %v3051
    %5706 = vmatpush1.bf16.msra.mxu0 %v3050
    %5707 = vmatprep.subr.bf16.mxu0 %v3059
    %5708 = vmatpush1.bf16.msra.mxu0 %v3058
    %5709 = vmatprep.subr.bf16.mxu0 %v3067
    %5710 = vmatpush1.bf16.msra.mxu0 %v3066
    %5711 = vmatprep.subr.bf16.mxu0 %v3075
    %5712 = vmatpush1.bf16.msra.mxu0 %v3074
    %5713 = vmatprep.mubr.bf16.mxu0 %v5253
    %5714 = vmatmul.mubr.bf16.gmra.mrb[0].mxu0 %v5252
    %v5715 = vpop.f32.mrb[0].mxu0
    %v5716 = vadd.f32 0.0, %v5715
    %v5717 = vpop.f32.mrb[0].mxu0
    %v5718 = vadd.f32 0.0, %v5717
    %v5719 = vpop.f32.mrb[0].mxu0
    %v5720 = vpop.f32.mrb[0].mxu0
    %5721 = vdwg.mxu0
    %5722 = vmatprep.subr.bf16.mxu0 %v2957
    %5723 = vmatpush1.bf16.msra.mxu0 %v2956
    %5724 = vmatprep.subr.bf16.mxu0 %v2965
    %5725 = vmatpush1.bf16.msra.mxu0 %v2964
    %5726 = vmatprep.subr.bf16.mxu0 %v2973
    %5727 = vmatpush1.bf16.msra.mxu0 %v2972
    %5728 = vmatprep.subr.bf16.mxu0 %v2981
    %5729 = vmatpush1.bf16.msra.mxu0 %v2980
    %5730 = vmatprep.subr.bf16.mxu0 %v2989
    %5731 = vmatpush1.bf16.msra.mxu0 %v2988
    %5732 = vmatprep.subr.bf16.mxu0 %v2997
    %5733 = vmatpush1.bf16.msra.mxu0 %v2996
    %5734 = vmatprep.subr.bf16.mxu0 %v3005
    %5735 = vmatpush1.bf16.msra.mxu0 %v3004
    %5736 = vmatprep.subr.bf16.mxu0 %v3013
    %5737 = vmatpush1.bf16.msra.mxu0 %v3012
    %5738 = vmatprep.subr.bf16.mxu0 %v3021
    %5739 = vmatpush1.bf16.msra.mxu0 %v3020
    %5740 = vmatprep.subr.bf16.mxu0 %v3029
    %5741 = vmatpush1.bf16.msra.mxu0 %v3028
    %5742 = vmatprep.subr.bf16.mxu0 %v3037
    %5743 = vmatpush1.bf16.msra.mxu0 %v3036
    %5744 = vmatprep.subr.bf16.mxu0 %v3045
    %5745 = vmatpush1.bf16.msra.mxu0 %v3044
    %5746 = vmatprep.subr.bf16.mxu0 %v3053
    %5747 = vmatpush1.bf16.msra.mxu0 %v3052
    %5748 = vmatprep.subr.bf16.mxu0 %v3061
    %5749 = vmatpush1.bf16.msra.mxu0 %v3060
    %5750 = vmatprep.subr.bf16.mxu0 %v3069
    %5751 = vmatpush1.bf16.msra.mxu0 %v3068
    %5752 = vmatprep.subr.bf16.mxu0 %v3077
    %5753 = vmatpush1.bf16.msra.mxu0 %v3076
    %5754 = vmatprep.mubr.bf16.mxu0 %v5253
    %5755 = vmatmul.mubr.bf16.gmra.mrb[0].mxu0 %v5252
    %v5756 = vpop.f32.mrb[0].mxu0
    %v5757 = vadd.f32 0.0, %v5756
    %v5758 = vpop.f32.mrb[0].mxu0
    %v5759 = vadd.f32 0.0, %v5758
    %v5760 = vpop.f32.mrb[0].mxu0
    %v5761 = vpop.f32.mrb[0].mxu0
    %5762 = vdwg.mxu0
    %5763 = vmatprep.subr.bf16.mxu0 %v2959
    %5764 = vmatpush1.bf16.msra.mxu0 %v2958
    %5765 = vmatprep.subr.bf16.mxu0 %v2967
    %5766 = vmatpush1.bf16.msra.mxu0 %v2966
    %5767 = vmatprep.subr.bf16.mxu0 %v2975
    %5768 = vmatpush1.bf16.msra.mxu0 %v2974
    %5769 = vmatprep.subr.bf16.mxu0 %v2983
    %5770 = vmatpush1.bf16.msra.mxu0 %v2982
    %5771 = vmatprep.subr.bf16.mxu0 %v2991
    %5772 = vmatpush1.bf16.msra.mxu0 %v2990
    %5773 = vmatprep.subr.bf16.mxu0 %v2999
    %5774 = vmatpush1.bf16.msra.mxu0 %v2998
    %5775 = vmatprep.subr.bf16.mxu0 %v3007
    %5776 = vmatpush1.bf16.msra.mxu0 %v3006
    %5777 = vmatprep.subr.bf16.mxu0 %v3015
    %5778 = vmatpush1.bf16.msra.mxu0 %v3014
    %5779 = vmatprep.subr.bf16.mxu0 %v3023
    %5780 = vmatpush1.bf16.msra.mxu0 %v3022
    %5781 = vmatprep.subr.bf16.mxu0 %v3031
    %5782 = vmatpush1.bf16.msra.mxu0 %v3030
    %5783 = vmatprep.subr.bf16.mxu0 %v3039
    %5784 = vmatpush1.bf16.msra.mxu0 %v3038
    %5785 = vmatprep.subr.bf16.mxu0 %v3047
    %5786 = vmatpush1.bf16.msra.mxu0 %v3046
    %5787 = vmatprep.subr.bf16.mxu0 %v3055
    %5788 = vmatpush1.bf16.msra.mxu0 %v3054
    %5789 = vmatprep.subr.bf16.mxu0 %v3063
    %5790 = vmatpush1.bf16.msra.mxu0 %v3062
    %5791 = vmatprep.subr.bf16.mxu0 %v3071
    %5792 = vmatpush1.bf16.msra.mxu0 %v3070
    %5793 = vmatprep.subr.bf16.mxu0 %v3079
    %5794 = vmatpush1.bf16.msra.mxu0 %v3078
    %5795 = vmatprep.mubr.bf16.mxu0 %v5253
    %5796 = vmatmul.mubr.bf16.gmra.mrb[0].mxu0 %v5252
    %v5797 = vpop.f32.mrb[0].mxu0
    %v5798 = vadd.f32 0.0, %v5797
    %v5799 = vpop.f32.mrb[0].mxu0
    %v5800 = vadd.f32 0.0, %v5799
    %v5801 = vpop.f32.mrb[0].mxu0
    %v5802 = vpop.f32.mrb[0].mxu0
    %5803 = vdwg.mxu0
    %v5804 = vadd.f32 %v5632, %v5675
    %v5805 = vadd.f32 %v5633, %v5677
    %v5806 = vadd.f32 %v5634, %v5716
    %v5807 = vadd.f32 %v5635, %v5718
    %v5808 = vadd.f32 %v5636, %v5757
    %v5809 = vadd.f32 %v5637, %v5759
    %v5810 = vadd.f32 %v5638, %v5798
    %v5811 = vadd.f32 %v5639, %v5800
    %v5812 = vxor.u32 %v5804, 2147483648
    %v5813 = vxor.u32 %v5805, 2147483648
    %v5814 = vmul.f32 %v5812, 1.442695
    %v5815 = vpow.pop %v5814
    %v5816 = vmul.f32 %v5813, 1.442695
    %v5817 = vpow.pop %v5816
    %v5818 = vadd.f32 %v5815, 1.0
    %v5819 = vadd.f32 %v5817, 1.0
    %v5820 = vrcp.pop %v5818
    %v5821 = vmul.f32 1.0, %v5820
    %v5822 = vrcp.pop %v5819
    %v5823 = vmul.f32 1.0, %v5822
    %v5824 = vxor.u32 %v5806, 2147483648
    %v5825 = vxor.u32 %v5807, 2147483648
    %v5826 = vmul.f32 %v5824, 1.442695
    %v5827 = vpow.pop %v5826
    %v5828 = vmul.f32 %v5825, 1.442695
    %v5829 = vpow.pop %v5828
    %v5830 = vadd.f32 %v5827, 1.0
    %v5831 = vadd.f32 %v5829, 1.0
    %v5832 = vrcp.pop %v5830
    %v5833 = vmul.f32 1.0, %v5832
    %v5834 = vrcp.pop %v5831
    %v5835 = vmul.f32 1.0, %v5834
    %v5836 = vtanh.pop %v5808
    %v5837 = vtanh.pop %v5809
    %v5838 = vxor.u32 %v5810, 2147483648
    %v5839 = vxor.u32 %v5811, 2147483648
    %v5840 = vmul.f32 %v5838, 1.442695
    %v5841 = vpow.pop %v5840
    %v5842 = vmul.f32 %v5839, 1.442695
    %v5843 = vpow.pop %v5842
    %v5844 = vadd.f32 %v5841, 1.0
    %v5845 = vadd.f32 %v5843, 1.0
    %v5846 = vrcp.pop %v5844
    %v5847 = vmul.f32 1.0, %v5846
    %v5848 = vrcp.pop %v5845
    %v5849 = vmul.f32 1.0, %v5848
    %v5850 = vmul.f32 %v5833, %v5246
    %v5851 = vmul.f32 %v5835, %v5247
    %v5852 = vmul.f32 %v5821, %v5836
    %v5853 = vmul.f32 %v5823, %v5837
    %v5854 = vadd.f32 %v5850, %v5852
    %v5855 = vadd.f32 %v5851, %v5853
    %v5856 = vtanh.pop %v5854
    %v5857 = vtanh.pop %v5855
    %v5858 = vmul.f32 %v5847, %v5856
    %v5859 = vmul.f32 %v5849, %v5857
    %v5860 = vpack.c.bf16 %v5858, %v5858
    %v5861 = vpack.c.bf16 %v5859, %v5859
    %v5862 = vpack.c.bf16 %v5630, %v5630
    %v5863 = vpack.c.bf16 %v5631, %v5631
    %5864 = vmatprep.subr.bf16.mxu0 %v1759
    %5865 = vmatpush1.bf16.msra.mxu0 %v1758
    %5866 = vmatprep.subr.bf16.mxu0 %v1767
    %5867 = vmatpush1.bf16.msra.mxu0 %v1766
    %5868 = vmatprep.subr.bf16.mxu0 %v1775
    %5869 = vmatpush1.bf16.msra.mxu0 %v1774
    %5870 = vmatprep.subr.bf16.mxu0 %v1783
    %5871 = vmatpush1.bf16.msra.mxu0 %v1782
    %5872 = vmatprep.subr.bf16.mxu0 %v1791
    %5873 = vmatpush1.bf16.msra.mxu0 %v1790
    %5874 = vmatprep.subr.bf16.mxu0 %v1799
    %5875 = vmatpush1.bf16.msra.mxu0 %v1798
    %5876 = vmatprep.subr.bf16.mxu0 %v1807
    %5877 = vmatpush1.bf16.msra.mxu0 %v1806
    %5878 = vmatprep.subr.bf16.mxu0 %v1815
    %5879 = vmatpush1.bf16.msra.mxu0 %v1814
    %5880 = vmatprep.subr.bf16.mxu0 %v1823
    %5881 = vmatpush1.bf16.msra.mxu0 %v1822
    %5882 = vmatprep.subr.bf16.mxu0 %v1831
    %5883 = vmatpush1.bf16.msra.mxu0 %v1830
    %5884 = vmatprep.subr.bf16.mxu0 %v1839
    %5885 = vmatpush1.bf16.msra.mxu0 %v1838
    %5886 = vmatprep.subr.bf16.mxu0 %v1847
    %5887 = vmatpush1.bf16.msra.mxu0 %v1846
    %5888 = vmatprep.subr.bf16.mxu0 %v1855
    %5889 = vmatpush1.bf16.msra.mxu0 %v1854
    %5890 = vmatprep.subr.bf16.mxu0 %v1863
    %5891 = vmatpush1.bf16.msra.mxu0 %v1862
    %5892 = vmatprep.subr.bf16.mxu0 %v1871
    %5893 = vmatpush1.bf16.msra.mxu0 %v1870
    %5894 = vmatprep.subr.bf16.mxu0 %v1879
    %5895 = vmatpush1.bf16.msra.mxu0 %v1878
    %5896 = vmatprep.mubr.bf16.mxu0 %v5861
    %5897 = vmatmul.mubr.bf16.gmra.mrb[0].mxu0 %v5860
    %v5898 = vpop.f32.mrb[0].mxu0
    %v5899 = vadd.f32 %v2019, %v5898
    %v5900 = vpop.f32.mrb[0].mxu0
    %v5901 = vadd.f32 %v2023, %v5900
    %v5902 = vpop.f32.mrb[0].mxu0
    %v5903 = vpop.f32.mrb[0].mxu0
    %5904 = vdwg.mxu0
    %5905 = vmatprep.subr.bf16.mxu0 %v1887
    %5906 = vmatpush1.bf16.msra.mxu0 %v1886
    %5907 = vmatprep.subr.bf16.mxu0 %v1895
    %5908 = vmatpush1.bf16.msra.mxu0 %v1894
    %5909 = vmatprep.subr.bf16.mxu0 %v1903
    %5910 = vmatpush1.bf16.msra.mxu0 %v1902
    %5911 = vmatprep.subr.bf16.mxu0 %v1911
    %5912 = vmatpush1.bf16.msra.mxu0 %v1910
    %5913 = vmatprep.subr.bf16.mxu0 %v1919
    %5914 = vmatpush1.bf16.msra.mxu0 %v1918
    %5915 = vmatprep.subr.bf16.mxu0 %v1927
    %5916 = vmatpush1.bf16.msra.mxu0 %v1926
    %5917 = vmatprep.subr.bf16.mxu0 %v1935
    %5918 = vmatpush1.bf16.msra.mxu0 %v1934
    %5919 = vmatprep.subr.bf16.mxu0 %v1943
    %5920 = vmatpush1.bf16.msra.mxu0 %v1942
    %5921 = vmatprep.subr.bf16.mxu0 %v1951
    %5922 = vmatpush1.bf16.msra.mxu0 %v1950
    %5923 = vmatprep.subr.bf16.mxu0 %v1959
    %5924 = vmatpush1.bf16.msra.mxu0 %v1958
    %5925 = vmatprep.subr.bf16.mxu0 %v1967
    %5926 = vmatpush1.bf16.msra.mxu0 %v1966
    %5927 = vmatprep.subr.bf16.mxu0 %v1975
    %5928 = vmatpush1.bf16.msra.mxu0 %v1974
    %5929 = vmatprep.subr.bf16.mxu0 %v1983
    %5930 = vmatpush1.bf16.msra.mxu0 %v1982
    %5931 = vmatprep.subr.bf16.mxu0 %v1991
    %5932 = vmatpush1.bf16.msra.mxu0 %v1990
    %5933 = vmatprep.subr.bf16.mxu0 %v1999
    %5934 = vmatpush1.bf16.msra.mxu0 %v1998
    %5935 = vmatprep.subr.bf16.mxu0 %v2007
    %5936 = vmatpush1.bf16.msra.mxu0 %v2006
    %5937 = vmatprep.mubr.bf16.mxu0 %v5863
    %5938 = vmatmul.mubr.bf16.gmra.mrb[0].mxu0 %v5862
    %v5939 = vpop.f32.mrb[0].mxu0
    %v5940 = vadd.f32 %v5899, %v5939
    %v5941 = vpop.f32.mrb[0].mxu0
    %v5942 = vadd.f32 %v5901, %v5941
    %v5943 = vpop.f32.mrb[0].mxu0
    %v5944 = vpop.f32.mrb[0].mxu0
    %5945 = vdwg.mxu0
    %5946 = vmatprep.subr.bf16.mxu0 %v1761
    %5947 = vmatpush1.bf16.msra.mxu0 %v1760
    %5948 = vmatprep.subr.bf16.mxu0 %v1769
    %5949 = vmatpush1.bf16.msra.mxu0 %v1768
    %5950 = vmatprep.subr.bf16.mxu0 %v1777
    %5951 = vmatpush1.bf16.msra.mxu0 %v1776
    %5952 = vmatprep.subr.bf16.mxu0 %v1785
    %5953 = vmatpush1.bf16.msra.mxu0 %v1784
    %5954 = vmatprep.subr.bf16.mxu0 %v1793
    %5955 = vmatpush1.bf16.msra.mxu0 %v1792
    %5956 = vmatprep.subr.bf16.mxu0 %v1801
    %5957 = vmatpush1.bf16.msra.mxu0 %v1800
    %5958 = vmatprep.subr.bf16.mxu0 %v1809
    %5959 = vmatpush1.bf16.msra.mxu0 %v1808
    %5960 = vmatprep.subr.bf16.mxu0 %v1817
    %5961 = vmatpush1.bf16.msra.mxu0 %v1816
    %5962 = vmatprep.subr.bf16.mxu0 %v1825
    %5963 = vmatpush1.bf16.msra.mxu0 %v1824
    %5964 = vmatprep.subr.bf16.mxu0 %v1833
    %5965 = vmatpush1.bf16.msra.mxu0 %v1832
    %5966 = vmatprep.subr.bf16.mxu0 %v1841
    %5967 = vmatpush1.bf16.msra.mxu0 %v1840
    %5968 = vmatprep.subr.bf16.mxu0 %v1849
    %5969 = vmatpush1.bf16.msra.mxu0 %v1848
    %5970 = vmatprep.subr.bf16.mxu0 %v1857
    %5971 = vmatpush1.bf16.msra.mxu0 %v1856
    %5972 = vmatprep.subr.bf16.mxu0 %v1865
    %5973 = vmatpush1.bf16.msra.mxu0 %v1864
    %5974 = vmatprep.subr.bf16.mxu0 %v1873
    %5975 = vmatpush1.bf16.msra.mxu0 %v1872
    %5976 = vmatprep.subr.bf16.mxu0 %v1881
    %5977 = vmatpush1.bf16.msra.mxu0 %v1880
    %5978 = vmatprep.mubr.bf16.mxu0 %v5861
    %5979 = vmatmul.mubr.bf16.gmra.mrb[0].mxu0 %v5860
    %v5980 = vpop.f32.mrb[0].mxu0
    %v5981 = vadd.f32 %v2027, %v5980
    %v5982 = vpop.f32.mrb[0].mxu0
    %v5983 = vadd.f32 %v2031, %v5982
    %v5984 = vpop.f32.mrb[0].mxu0
    %v5985 = vpop.f32.mrb[0].mxu0
    %5986 = vdwg.mxu0
    %5987 = vmatprep.subr.bf16.mxu0 %v1889
    %5988 = vmatpush1.bf16.msra.mxu0 %v1888
    %5989 = vmatprep.subr.bf16.mxu0 %v1897
    %5990 = vmatpush1.bf16.msra.mxu0 %v1896
    %5991 = vmatprep.subr.bf16.mxu0 %v1905
    %5992 = vmatpush1.bf16.msra.mxu0 %v1904
    %5993 = vmatprep.subr.bf16.mxu0 %v1913
    %5994 = vmatpush1.bf16.msra.mxu0 %v1912
    %5995 = vmatprep.subr.bf16.mxu0 %v1921
    %5996 = vmatpush1.bf16.msra.mxu0 %v1920
    %5997 = vmatprep.subr.bf16.mxu0 %v1929
    %5998 = vmatpush1.bf16.msra.mxu0 %v1928
    %5999 = vmatprep.subr.bf16.mxu0 %v1937
    %6000 = vmatpush1.bf16.msra.mxu0 %v1936
    %6001 = vmatprep.subr.bf16.mxu0 %v1945
    %6002 = vmatpush1.bf16.msra.mxu0 %v1944
    %6003 = vmatprep.subr.bf16.mxu0 %v1953
    %6004 = vmatpush1.bf16.msra.mxu0 %v1952
    %6005 = vmatprep.subr.bf16.mxu0 %v1961
    %6006 = vmatpush1.bf16.msra.mxu0 %v1960
    %6007 = vmatprep.subr.bf16.mxu0 %v1969
    %6008 = vmatpush1.bf16.msra.mxu0 %v1968
    %6009 = vmatprep.subr.bf16.mxu0 %v1977
    %6010 = vmatpush1.bf16.msra.mxu0 %v1976
    %6011 = vmatprep.subr.bf16.mxu0 %v1985
    %6012 = vmatpush1.bf16.msra.mxu0 %v1984
    %6013 = vmatprep.subr.bf16.mxu0 %v1993
    %6014 = vmatpush1.bf16.msra.mxu0 %v1992
    %6015 = vmatprep.subr.bf16.mxu0 %v2001
    %6016 = vmatpush1.bf16.msra.mxu0 %v2000
    %6017 = vmatprep.subr.bf16.mxu0 %v2009
    %6018 = vmatpush1.bf16.msra.mxu0 %v2008
    %6019 = vmatprep.mubr.bf16.mxu0 %v5863
    %6020 = vmatmul.mubr.bf16.gmra.mrb[0].mxu0 %v5862
    %v6021 = vpop.f32.mrb[0].mxu0
    %v6022 = vadd.f32 %v5981, %v6021
    %v6023 = vpop.f32.mrb[0].mxu0
    %v6024 = vadd.f32 %v5983, %v6023
    %v6025 = vpop.f32.mrb[0].mxu0
    %v6026 = vpop.f32.mrb[0].mxu0
    %6027 = vdwg.mxu0
    %6028 = vmatprep.subr.bf16.mxu0 %v1763
    %6029 = vmatpush1.bf16.msra.mxu0 %v1762
    %6030 = vmatprep.subr.bf16.mxu0 %v1771
    %6031 = vmatpush1.bf16.msra.mxu0 %v1770
    %6032 = vmatprep.subr.bf16.mxu0 %v1779
    %6033 = vmatpush1.bf16.msra.mxu0 %v1778
    %6034 = vmatprep.subr.bf16.mxu0 %v1787
    %6035 = vmatpush1.bf16.msra.mxu0 %v1786
    %6036 = vmatprep.subr.bf16.mxu0 %v1795
    %6037 = vmatpush1.bf16.msra.mxu0 %v1794
    %6038 = vmatprep.subr.bf16.mxu0 %v1803
    %6039 = vmatpush1.bf16.msra.mxu0 %v1802
    %6040 = vmatprep.subr.bf16.mxu0 %v1811
    %6041 = vmatpush1.bf16.msra.mxu0 %v1810
    %6042 = vmatprep.subr.bf16.mxu0 %v1819
    %6043 = vmatpush1.bf16.msra.mxu0 %v1818
    %6044 = vmatprep.subr.bf16.mxu0 %v1827
    %6045 = vmatpush1.bf16.msra.mxu0 %v1826
    %6046 = vmatprep.subr.bf16.mxu0 %v1835
    %6047 = vmatpush1.bf16.msra.mxu0 %v1834
    %6048 = vmatprep.subr.bf16.mxu0 %v1843
    %6049 = vmatpush1.bf16.msra.mxu0 %v1842
    %6050 = vmatprep.subr.bf16.mxu0 %v1851
    %6051 = vmatpush1.bf16.msra.mxu0 %v1850
    %6052 = vmatprep.subr.bf16.mxu0 %v1859
    %6053 = vmatpush1.bf16.msra.mxu0 %v1858
    %6054 = vmatprep.subr.bf16.mxu0 %v1867
    %6055 = vmatpush1.bf16.msra.mxu0 %v1866
    %6056 = vmatprep.subr.bf16.mxu0 %v1875
    %6057 = vmatpush1.bf16.msra.mxu0 %v1874
    %6058 = vmatprep.subr.bf16.mxu0 %v1883
    %6059 = vmatpush1.bf16.msra.mxu0 %v1882
    %6060 = vmatprep.mubr.bf16.mxu0 %v5861
    %6061 = vmatmul.mubr.bf16.gmra.mrb[0].mxu0 %v5860
    %v6062 = vpop.f32.mrb[0].mxu0
    %v6063 = vadd.f32 %v2035, %v6062
    %v6064 = vpop.f32.mrb[0].mxu0
    %v6065 = vadd.f32 %v2039, %v6064
    %v6066 = vpop.f32.mrb[0].mxu0
    %v6067 = vpop.f32.mrb[0].mxu0
    %6068 = vdwg.mxu0
    %6069 = vmatprep.subr.bf16.mxu0 %v1891
    %6070 = vmatpush1.bf16.msra.mxu0 %v1890
    %6071 = vmatprep.subr.bf16.mxu0 %v1899
    %6072 = vmatpush1.bf16.msra.mxu0 %v1898
    %6073 = vmatprep.subr.bf16.mxu0 %v1907
    %6074 = vmatpush1.bf16.msra.mxu0 %v1906
    %6075 = vmatprep.subr.bf16.mxu0 %v1915
    %6076 = vmatpush1.bf16.msra.mxu0 %v1914
    %6077 = vmatprep.subr.bf16.mxu0 %v1923
    %6078 = vmatpush1.bf16.msra.mxu0 %v1922
    %6079 = vmatprep.subr.bf16.mxu0 %v1931
    %6080 = vmatpush1.bf16.msra.mxu0 %v1930
    %6081 = vmatprep.subr.bf16.mxu0 %v1939
    %6082 = vmatpush1.bf16.msra.mxu0 %v1938
    %6083 = vmatprep.subr.bf16.mxu0 %v1947
    %6084 = vmatpush1.bf16.msra.mxu0 %v1946
    %6085 = vmatprep.subr.bf16.mxu0 %v1955
    %6086 = vmatpush1.bf16.msra.mxu0 %v1954
    %6087 = vmatprep.subr.bf16.mxu0 %v1963
    %6088 = vmatpush1.bf16.msra.mxu0 %v1962
    %6089 = vmatprep.subr.bf16.mxu0 %v1971
    %6090 = vmatpush1.bf16.msra.mxu0 %v1970
    %6091 = vmatprep.subr.bf16.mxu0 %v1979
    %6092 = vmatpush1.bf16.msra.mxu0 %v1978
    %6093 = vmatprep.subr.bf16.mxu0 %v1987
    %6094 = vmatpush1.bf16.msra.mxu0 %v1986
    %6095 = vmatprep.subr.bf16.mxu0 %v1995
    %6096 = vmatpush1.bf16.msra.mxu0 %v1994
    %6097 = vmatprep.subr.bf16.mxu0 %v2003
    %6098 = vmatpush1.bf16.msra.mxu0 %v2002
    %6099 = vmatprep.subr.bf16.mxu0 %v2011
    %6100 = vmatpush1.bf16.msra.mxu0 %v2010
    %6101 = vmatprep.mubr.bf16.mxu0 %v5863
    %6102 = vmatmul.mubr.bf16.gmra.mrb[0].mxu0 %v5862
    %v6103 = vpop.f32.mrb[0].mxu0
    %v6104 = vadd.f32 %v6063, %v6103
    %v6105 = vpop.f32.mrb[0].mxu0
    %v6106 = vadd.f32 %v6065, %v6105
    %v6107 = vpop.f32.mrb[0].mxu0
    %v6108 = vpop.f32.mrb[0].mxu0
    %6109 = vdwg.mxu0
    %6110 = vmatprep.subr.bf16.mxu0 %v1765
    %6111 = vmatpush1.bf16.msra.mxu0 %v1764
    %6112 = vmatprep.subr.bf16.mxu0 %v1773
    %6113 = vmatpush1.bf16.msra.mxu0 %v1772
    %6114 = vmatprep.subr.bf16.mxu0 %v1781
    %6115 = vmatpush1.bf16.msra.mxu0 %v1780
    %6116 = vmatprep.subr.bf16.mxu0 %v1789
    %6117 = vmatpush1.bf16.msra.mxu0 %v1788
    %6118 = vmatprep.subr.bf16.mxu0 %v1797
    %6119 = vmatpush1.bf16.msra.mxu0 %v1796
    %6120 = vmatprep.subr.bf16.mxu0 %v1805
    %6121 = vmatpush1.bf16.msra.mxu0 %v1804
    %6122 = vmatprep.subr.bf16.mxu0 %v1813
    %6123 = vmatpush1.bf16.msra.mxu0 %v1812
    %6124 = vmatprep.subr.bf16.mxu0 %v1821
    %6125 = vmatpush1.bf16.msra.mxu0 %v1820
    %6126 = vmatprep.subr.bf16.mxu0 %v1829
    %6127 = vmatpush1.bf16.msra.mxu0 %v1828
    %6128 = vmatprep.subr.bf16.mxu0 %v1837
    %6129 = vmatpush1.bf16.msra.mxu0 %v1836
    %6130 = vmatprep.subr.bf16.mxu0 %v1845
    %6131 = vmatpush1.bf16.msra.mxu0 %v1844
    %6132 = vmatprep.subr.bf16.mxu0 %v1853
    %6133 = vmatpush1.bf16.msra.mxu0 %v1852
    %6134 = vmatprep.subr.bf16.mxu0 %v1861
    %6135 = vmatpush1.bf16.msra.mxu0 %v1860
    %6136 = vmatprep.subr.bf16.mxu0 %v1869
    %6137 = vmatpush1.bf16.msra.mxu0 %v1868
    %6138 = vmatprep.subr.bf16.mxu0 %v1877
    %6139 = vmatpush1.bf16.msra.mxu0 %v1876
    %6140 = vmatprep.subr.bf16.mxu0 %v1885
    %6141 = vmatpush1.bf16.msra.mxu0 %v1884
    %6142 = vmatprep.mubr.bf16.mxu0 %v5861
    %6143 = vmatmul.mubr.bf16.gmra.mrb[0].mxu0 %v5860
    %v6144 = vpop.f32.mrb[0].mxu0
    %v6145 = vadd.f32 %v2043, %v6144
    %v6146 = vpop.f32.mrb[0].mxu0
    %v6147 = vadd.f32 %v2047, %v6146
    %v6148 = vpop.f32.mrb[0].mxu0
    %v6149 = vpop.f32.mrb[0].mxu0
    %6150 = vdwg.mxu0
    %6151 = vmatprep.subr.bf16.mxu0 %v1893
    %6152 = vmatpush1.bf16.msra.mxu0 %v1892
    %6153 = vmatprep.subr.bf16.mxu0 %v1901
    %6154 = vmatpush1.bf16.msra.mxu0 %v1900
    %6155 = vmatprep.subr.bf16.mxu0 %v1909
    %6156 = vmatpush1.bf16.msra.mxu0 %v1908
    %6157 = vmatprep.subr.bf16.mxu0 %v1917
    %6158 = vmatpush1.bf16.msra.mxu0 %v1916
    %6159 = vmatprep.subr.bf16.mxu0 %v1925
    %6160 = vmatpush1.bf16.msra.mxu0 %v1924
    %6161 = vmatprep.subr.bf16.mxu0 %v1933
    %6162 = vmatpush1.bf16.msra.mxu0 %v1932
    %6163 = vmatprep.subr.bf16.mxu0 %v1941
    %6164 = vmatpush1.bf16.msra.mxu0 %v1940
    %6165 = vmatprep.subr.bf16.mxu0 %v1949
    %6166 = vmatpush1.bf16.msra.mxu0 %v1948
    %6167 = vmatprep.subr.bf16.mxu0 %v1957
    %6168 = vmatpush1.bf16.msra.mxu0 %v1956
    %6169 = vmatprep.subr.bf16.mxu0 %v1965
    %6170 = vmatpush1.bf16.msra.mxu0 %v1964
    %6171 = vmatprep.subr.bf16.mxu0 %v1973
    %6172 = vmatpush1.bf16.msra.mxu0 %v1972
    %6173 = vmatprep.subr.bf16.mxu0 %v1981
    %6174 = vmatpush1.bf16.msra.mxu0 %v1980
    %6175 = vmatprep.subr.bf16.mxu0 %v1989
    %6176 = vmatpush1.bf16.msra.mxu0 %v1988
    %6177 = vmatprep.subr.bf16.mxu0 %v1997
    %6178 = vmatpush1.bf16.msra.mxu0 %v1996
    %6179 = vmatprep.subr.bf16.mxu0 %v2005
    %6180 = vmatpush1.bf16.msra.mxu0 %v2004
    %6181 = vmatprep.subr.bf16.mxu0 %v2013
    %6182 = vmatpush1.bf16.msra.mxu0 %v2012
    %6183 = vmatprep.mubr.bf16.mxu0 %v5863
    %6184 = vmatmul.mubr.bf16.gmra.mrb[0].mxu0 %v5862
    %v6185 = vpop.f32.mrb[0].mxu0
    %v6186 = vadd.f32 %v6145, %v6185
    %v6187 = vpop.f32.mrb[0].mxu0
    %v6188 = vadd.f32 %v6147, %v6187
    %v6189 = vpop.f32.mrb[0].mxu0
    %v6190 = vpop.f32.mrb[0].mxu0
    %6191 = vdwg.mxu0
    %v6192 = vxor.u32 %v5940, 2147483648
    %v6193 = vxor.u32 %v5942, 2147483648
    %v6194 = vmul.f32 %v6192, 1.442695
    %v6195 = vpow.pop %v6194
    %v6196 = vmul.f32 %v6193, 1.442695
    %v6197 = vpow.pop %v6196
    %v6198 = vadd.f32 %v6195, 1.0
    %v6199 = vadd.f32 %v6197, 1.0
    %v6200 = vrcp.pop %v6198
    %v6201 = vmul.f32 1.0, %v6200
    %v6202 = vrcp.pop %v6199
    %v6203 = vmul.f32 1.0, %v6202
    %v6204 = vxor.u32 %v6022, 2147483648
    %v6205 = vxor.u32 %v6024, 2147483648
    %v6206 = vmul.f32 %v6204, 1.442695
    %v6207 = vpow.pop %v6206
    %v6208 = vmul.f32 %v6205, 1.442695
    %v6209 = vpow.pop %v6208
    %v6210 = vadd.f32 %v6207, 1.0
    %v6211 = vadd.f32 %v6209, 1.0
    %v6212 = vrcp.pop %v6210
    %v6213 = vmul.f32 1.0, %v6212
    %v6214 = vrcp.pop %v6211
    %v6215 = vmul.f32 1.0, %v6214
    %v6216 = vtanh.pop %v6104
    %v6217 = vtanh.pop %v6106
    %v6218 = vxor.u32 %v6186, 2147483648
    %v6219 = vxor.u32 %v6188, 2147483648
    %v6220 = vmul.f32 %v6218, 1.442695
    %v6221 = vpow.pop %v6220
    %v6222 = vmul.f32 %v6219, 1.442695
    %v6223 = vpow.pop %v6222
    %v6224 = vadd.f32 %v6221, 1.0
    %v6225 = vadd.f32 %v6223, 1.0
    %v6226 = vrcp.pop %v6224
    %v6227 = vmul.f32 1.0, %v6226
    %v6228 = vrcp.pop %v6225
    %v6229 = vmul.f32 1.0, %v6228
    %v6230 = vmul.f32 %v6213, %v5626
    %v6231 = vmul.f32 %v6215, %v5627
    %v6232 = vmul.f32 %v6201, %v6216
    %v6233 = vmul.f32 %v6203, %v6217
    %v6234 = vadd.f32 %v6230, %v6232
    %v6235 = vadd.f32 %v6231, %v6233
    %v6236 = vtanh.pop %v6234
    %v6237 = vtanh.pop %v6235
    %v6238 = vmul.f32 %v6227, %v6236
    %v6239 = vmul.f32 %v6229, %v6237
    %v6240 = vld [vmem:[#allocation2 + $0x180] sm:$0xff]
    %v6241 = vld [vmem:[#allocation2 + $0x188] sm:$0xff]
    %v6242 = vld [vmem:[#allocation2 + $0x190] sm:$0xff]
    %v6243 = vld [vmem:[#allocation2 + $0x198] sm:$0xff]
    %v6244 = vld [vmem:[#allocation2 + $0x1a0] sm:$0xff]
    %v6245 = vld [vmem:[#allocation2 + $0x1a8] sm:$0xff]
    %v6246 = vld [vmem:[#allocation2 + $0x1b0] sm:$0xff]
    %v6247 = vld [vmem:[#allocation2 + $0x1b8] sm:$0xff]
    %6248 = vmatprep.subr.bf16.mxu0 %v2953
    %6249 = vmatpush1.bf16.msra.mxu0 %v2952
    %6250 = vmatprep.subr.bf16.mxu0 %v2961
    %6251 = vmatpush1.bf16.msra.mxu0 %v2960
    %6252 = vmatprep.subr.bf16.mxu0 %v2969
    %6253 = vmatpush1.bf16.msra.mxu0 %v2968
    %6254 = vmatprep.subr.bf16.mxu0 %v2977
    %6255 = vmatpush1.bf16.msra.mxu0 %v2976
    %6256 = vmatprep.subr.bf16.mxu0 %v2985
    %6257 = vmatpush1.bf16.msra.mxu0 %v2984
    %6258 = vmatprep.subr.bf16.mxu0 %v2993
    %6259 = vmatpush1.bf16.msra.mxu0 %v2992
    %6260 = vmatprep.subr.bf16.mxu0 %v3001
    %6261 = vmatpush1.bf16.msra.mxu0 %v3000
    %6262 = vmatprep.subr.bf16.mxu0 %v3009
    %6263 = vmatpush1.bf16.msra.mxu0 %v3008
    %6264 = vmatprep.subr.bf16.mxu0 %v3017
    %6265 = vmatpush1.bf16.msra.mxu0 %v3016
    %6266 = vmatprep.subr.bf16.mxu0 %v3025
    %6267 = vmatpush1.bf16.msra.mxu0 %v3024
    %6268 = vmatprep.subr.bf16.mxu0 %v3033
    %6269 = vmatpush1.bf16.msra.mxu0 %v3032
    %6270 = vmatprep.subr.bf16.mxu0 %v3041
    %6271 = vmatpush1.bf16.msra.mxu0 %v3040
    %6272 = vmatprep.subr.bf16.mxu0 %v3049
    %6273 = vmatpush1.bf16.msra.mxu0 %v3048
    %6274 = vmatprep.subr.bf16.mxu0 %v3057
    %6275 = vmatpush1.bf16.msra.mxu0 %v3056
    %6276 = vmatprep.subr.bf16.mxu0 %v3065
    %6277 = vmatpush1.bf16.msra.mxu0 %v3064
    %6278 = vmatprep.subr.bf16.mxu0 %v3073
    %6279 = vmatpush1.bf16.msra.mxu0 %v3072
    %6280 = vmatprep.mubr.bf16.mxu0 %v5861
    %6281 = vmatmul.mubr.bf16.gmra.mrb[0].mxu0 %v5860
    %v6282 = vpop.f32.mrb[0].mxu0
    %v6283 = vadd.f32 0.0, %v6282
    %v6284 = vpop.f32.mrb[0].mxu0
    %v6285 = vadd.f32 0.0, %v6284
    %v6286 = vpop.f32.mrb[0].mxu0
    %v6287 = vpop.f32.mrb[0].mxu0
    %6288 = vdwg.mxu0
    %6289 = vmatprep.subr.bf16.mxu0 %v2955
    %6290 = vmatpush1.bf16.msra.mxu0 %v2954
    %6291 = vmatprep.subr.bf16.mxu0 %v2963
    %6292 = vmatpush1.bf16.msra.mxu0 %v2962
    %6293 = vmatprep.subr.bf16.mxu0 %v2971
    %6294 = vmatpush1.bf16.msra.mxu0 %v2970
    %6295 = vmatprep.subr.bf16.mxu0 %v2979
    %6296 = vmatpush1.bf16.msra.mxu0 %v2978
    %6297 = vmatprep.subr.bf16.mxu0 %v2987
    %6298 = vmatpush1.bf16.msra.mxu0 %v2986
    %6299 = vmatprep.subr.bf16.mxu0 %v2995
    %6300 = vmatpush1.bf16.msra.mxu0 %v2994
    %6301 = vmatprep.subr.bf16.mxu0 %v3003
    %6302 = vmatpush1.bf16.msra.mxu0 %v3002
    %6303 = vmatprep.subr.bf16.mxu0 %v3011
    %6304 = vmatpush1.bf16.msra.mxu0 %v3010
    %6305 = vmatprep.subr.bf16.mxu0 %v3019
    %6306 = vmatpush1.bf16.msra.mxu0 %v3018
    %6307 = vmatprep.subr.bf16.mxu0 %v3027
    %6308 = vmatpush1.bf16.msra.mxu0 %v3026
    %6309 = vmatprep.subr.bf16.mxu0 %v3035
    %6310 = vmatpush1.bf16.msra.mxu0 %v3034
    %6311 = vmatprep.subr.bf16.mxu0 %v3043
    %6312 = vmatpush1.bf16.msra.mxu0 %v3042
    %6313 = vmatprep.subr.bf16.mxu0 %v3051
    %6314 = vmatpush1.bf16.msra.mxu0 %v3050
    %6315 = vmatprep.subr.bf16.mxu0 %v3059
    %6316 = vmatpush1.bf16.msra.mxu0 %v3058
    %6317 = vmatprep.subr.bf16.mxu0 %v3067
    %6318 = vmatpush1.bf16.msra.mxu0 %v3066
    %6319 = vmatprep.subr.bf16.mxu0 %v3075
    %6320 = vmatpush1.bf16.msra.mxu0 %v3074
    %6321 = vmatprep.mubr.bf16.mxu0 %v5861
    %6322 = vmatmul.mubr.bf16.gmra.mrb[0].mxu0 %v5860
    %v6323 = vpop.f32.mrb[0].mxu0
    %v6324 = vadd.f32 0.0, %v6323
    %v6325 = vpop.f32.mrb[0].mxu0
    %v6326 = vadd.f32 0.0, %v6325
    %v6327 = vpop.f32.mrb[0].mxu0
    %v6328 = vpop.f32.mrb[0].mxu0
    %6329 = vdwg.mxu0
    %6330 = vmatprep.subr.bf16.mxu0 %v2957
    %6331 = vmatpush1.bf16.msra.mxu0 %v2956
    %6332 = vmatprep.subr.bf16.mxu0 %v2965
    %6333 = vmatpush1.bf16.msra.mxu0 %v2964
    %6334 = vmatprep.subr.bf16.mxu0 %v2973
    %6335 = vmatpush1.bf16.msra.mxu0 %v2972
    %6336 = vmatprep.subr.bf16.mxu0 %v2981
    %6337 = vmatpush1.bf16.msra.mxu0 %v2980
    %6338 = vmatprep.subr.bf16.mxu0 %v2989
    %6339 = vmatpush1.bf16.msra.mxu0 %v2988
    %6340 = vmatprep.subr.bf16.mxu0 %v2997
    %6341 = vmatpush1.bf16.msra.mxu0 %v2996
    %6342 = vmatprep.subr.bf16.mxu0 %v3005
    %6343 = vmatpush1.bf16.msra.mxu0 %v3004
    %6344 = vmatprep.subr.bf16.mxu0 %v3013
    %6345 = vmatpush1.bf16.msra.mxu0 %v3012
    %6346 = vmatprep.subr.bf16.mxu0 %v3021
    %6347 = vmatpush1.bf16.msra.mxu0 %v3020
    %6348 = vmatprep.subr.bf16.mxu0 %v3029
    %6349 = vmatpush1.bf16.msra.mxu0 %v3028
    %6350 = vmatprep.subr.bf16.mxu0 %v3037
    %6351 = vmatpush1.bf16.msra.mxu0 %v3036
    %6352 = vmatprep.subr.bf16.mxu0 %v3045
    %6353 = vmatpush1.bf16.msra.mxu0 %v3044
    %6354 = vmatprep.subr.bf16.mxu0 %v3053
    %6355 = vmatpush1.bf16.msra.mxu0 %v3052
    %6356 = vmatprep.subr.bf16.mxu0 %v3061
    %6357 = vmatpush1.bf16.msra.mxu0 %v3060
    %6358 = vmatprep.subr.bf16.mxu0 %v3069
    %6359 = vmatpush1.bf16.msra.mxu0 %v3068
    %6360 = vmatprep.subr.bf16.mxu0 %v3077
    %6361 = vmatpush1.bf16.msra.mxu0 %v3076
    %6362 = vmatprep.mubr.bf16.mxu0 %v5861
    %6363 = vmatmul.mubr.bf16.gmra.mrb[0].mxu0 %v5860
    %v6364 = vpop.f32.mrb[0].mxu0
    %v6365 = vadd.f32 0.0, %v6364
    %v6366 = vpop.f32.mrb[0].mxu0
    %v6367 = vadd.f32 0.0, %v6366
    %v6368 = vpop.f32.mrb[0].mxu0
    %v6369 = vpop.f32.mrb[0].mxu0
    %6370 = vdwg.mxu0
    %6371 = vmatprep.subr.bf16.mxu0 %v2959
    %6372 = vmatpush1.bf16.msra.mxu0 %v2958
    %6373 = vmatprep.subr.bf16.mxu0 %v2967
    %6374 = vmatpush1.bf16.msra.mxu0 %v2966
    %6375 = vmatprep.subr.bf16.mxu0 %v2975
    %6376 = vmatpush1.bf16.msra.mxu0 %v2974
    %6377 = vmatprep.subr.bf16.mxu0 %v2983
    %6378 = vmatpush1.bf16.msra.mxu0 %v2982
    %6379 = vmatprep.subr.bf16.mxu0 %v2991
    %6380 = vmatpush1.bf16.msra.mxu0 %v2990
    %6381 = vmatprep.subr.bf16.mxu0 %v2999
    %6382 = vmatpush1.bf16.msra.mxu0 %v2998
    %6383 = vmatprep.subr.bf16.mxu0 %v3007
    %6384 = vmatpush1.bf16.msra.mxu0 %v3006
    %6385 = vmatprep.subr.bf16.mxu0 %v3015
    %6386 = vmatpush1.bf16.msra.mxu0 %v3014
    %6387 = vmatprep.subr.bf16.mxu0 %v3023
    %6388 = vmatpush1.bf16.msra.mxu0 %v3022
    %6389 = vmatprep.subr.bf16.mxu0 %v3031
    %6390 = vmatpush1.bf16.msra.mxu0 %v3030
    %6391 = vmatprep.subr.bf16.mxu0 %v3039
    %6392 = vmatpush1.bf16.msra.mxu0 %v3038
    %6393 = vmatprep.subr.bf16.mxu0 %v3047
    %6394 = vmatpush1.bf16.msra.mxu0 %v3046
    %6395 = vmatprep.subr.bf16.mxu0 %v3055
    %6396 = vmatpush1.bf16.msra.mxu0 %v3054
    %6397 = vmatprep.subr.bf16.mxu0 %v3063
    %6398 = vmatpush1.bf16.msra.mxu0 %v3062
    %6399 = vmatprep.subr.bf16.mxu0 %v3071
    %6400 = vmatpush1.bf16.msra.mxu0 %v3070
    %6401 = vmatprep.subr.bf16.mxu0 %v3079
    %6402 = vmatpush1.bf16.msra.mxu0 %v3078
    %6403 = vmatprep.mubr.bf16.mxu0 %v5861
    %6404 = vmatmul.mubr.bf16.gmra.mrb[0].mxu0 %v5860
    %v6405 = vpop.f32.mrb[0].mxu0
    %v6406 = vadd.f32 0.0, %v6405
    %v6407 = vpop.f32.mrb[0].mxu0
    %v6408 = vadd.f32 0.0, %v6407
    %v6409 = vpop.f32.mrb[0].mxu0
    %v6410 = vpop.f32.mrb[0].mxu0
    %6411 = vdwg.mxu0
    %v6412 = vadd.f32 %v6240, %v6283
    %v6413 = vadd.f32 %v6241, %v6285
    %v6414 = vadd.f32 %v6242, %v6324
    %v6415 = vadd.f32 %v6243, %v6326
    %v6416 = vadd.f32 %v6244, %v6365
    %v6417 = vadd.f32 %v6245, %v6367
    %v6418 = vadd.f32 %v6246, %v6406
    %v6419 = vadd.f32 %v6247, %v6408
    %v6420 = vxor.u32 %v6412, 2147483648
    %v6421 = vxor.u32 %v6413, 2147483648
    %v6422 = vmul.f32 %v6420, 1.442695
    %v6423 = vpow.pop %v6422
    %v6424 = vmul.f32 %v6421, 1.442695
    %v6425 = vpow.pop %v6424
    %v6426 = vadd.f32 %v6423, 1.0
    %v6427 = vadd.f32 %v6425, 1.0
    %v6428 = vrcp.pop %v6426
    %v6429 = vmul.f32 1.0, %v6428
    %v6430 = vrcp.pop %v6427
    %v6431 = vmul.f32 1.0, %v6430
    %v6432 = vxor.u32 %v6414, 2147483648
    %v6433 = vxor.u32 %v6415, 2147483648
    %v6434 = vmul.f32 %v6432, 1.442695
    %v6435 = vpow.pop %v6434
    %v6436 = vmul.f32 %v6433, 1.442695
    %v6437 = vpow.pop %v6436
    %v6438 = vadd.f32 %v6435, 1.0
    %v6439 = vadd.f32 %v6437, 1.0
    %v6440 = vrcp.pop %v6438
    %v6441 = vmul.f32 1.0, %v6440
    %v6442 = vrcp.pop %v6439
    %v6443 = vmul.f32 1.0, %v6442
    %v6444 = vtanh.pop %v6416
    %v6445 = vtanh.pop %v6417
    %v6446 = vxor.u32 %v6418, 2147483648
    %v6447 = vxor.u32 %v6419, 2147483648
    %v6448 = vmul.f32 %v6446, 1.442695
    %v6449 = vpow.pop %v6448
    %v6450 = vmul.f32 %v6447, 1.442695
    %v6451 = vpow.pop %v6450
    %v6452 = vadd.f32 %v6449, 1.0
    %v6453 = vadd.f32 %v6451, 1.0
    %v6454 = vrcp.pop %v6452
    %v6455 = vmul.f32 1.0, %v6454
    %v6456 = vrcp.pop %v6453
    %v6457 = vmul.f32 1.0, %v6456
    %v6458 = vmul.f32 %v6441, %v5854
    %v6459 = vmul.f32 %v6443, %v5855
    %v6460 = vmul.f32 %v6429, %v6444
    %v6461 = vmul.f32 %v6431, %v6445
    %v6462 = vadd.f32 %v6458, %v6460
    %v6463 = vadd.f32 %v6459, %v6461
    %v6464 = vtanh.pop %v6462
    %v6465 = vtanh.pop %v6463
    %v6466 = vmul.f32 %v6455, %v6464
    %v6467 = vmul.f32 %v6457, %v6465
    %v6468 = vpack.c.bf16 %v6466, %v6466
    %v6469 = vpack.c.bf16 %v6467, %v6467
    %v6470 = vpack.c.bf16 %v6238, %v6238
    %v6471 = vpack.c.bf16 %v6239, %v6239
    %6472 = vmatprep.subr.bf16.mxu0 %v1759
    %6473 = vmatpush1.bf16.msra.mxu0 %v1758
    %6474 = vmatprep.subr.bf16.mxu0 %v1767
    %6475 = vmatpush1.bf16.msra.mxu0 %v1766
    %6476 = vmatprep.subr.bf16.mxu0 %v1775
    %6477 = vmatpush1.bf16.msra.mxu0 %v1774
    %6478 = vmatprep.subr.bf16.mxu0 %v1783
    %6479 = vmatpush1.bf16.msra.mxu0 %v1782
    %6480 = vmatprep.subr.bf16.mxu0 %v1791
    %6481 = vmatpush1.bf16.msra.mxu0 %v1790
    %6482 = vmatprep.subr.bf16.mxu0 %v1799
    %6483 = vmatpush1.bf16.msra.mxu0 %v1798
    %6484 = vmatprep.subr.bf16.mxu0 %v1807
    %6485 = vmatpush1.bf16.msra.mxu0 %v1806
    %6486 = vmatprep.subr.bf16.mxu0 %v1815
    %6487 = vmatpush1.bf16.msra.mxu0 %v1814
    %6488 = vmatprep.subr.bf16.mxu0 %v1823
    %6489 = vmatpush1.bf16.msra.mxu0 %v1822
    %6490 = vmatprep.subr.bf16.mxu0 %v1831
    %6491 = vmatpush1.bf16.msra.mxu0 %v1830
    %6492 = vmatprep.subr.bf16.mxu0 %v1839
    %6493 = vmatpush1.bf16.msra.mxu0 %v1838
    %6494 = vmatprep.subr.bf16.mxu0 %v1847
    %6495 = vmatpush1.bf16.msra.mxu0 %v1846
    %6496 = vmatprep.subr.bf16.mxu0 %v1855
    %6497 = vmatpush1.bf16.msra.mxu0 %v1854
    %6498 = vmatprep.subr.bf16.mxu0 %v1863
    %6499 = vmatpush1.bf16.msra.mxu0 %v1862
    %6500 = vmatprep.subr.bf16.mxu0 %v1871
    %6501 = vmatpush1.bf16.msra.mxu0 %v1870
    %6502 = vmatprep.subr.bf16.mxu0 %v1879
    %6503 = vmatpush1.bf16.msra.mxu0 %v1878
    %6504 = vmatprep.mubr.bf16.mxu0 %v6469
    %6505 = vmatmul.mubr.bf16.gmra.mrb[0].mxu0 %v6468
    %v6506 = vpop.f32.mrb[0].mxu0
    %v6507 = vadd.f32 %v2019, %v6506
    %v6508 = vpop.f32.mrb[0].mxu0
    %v6509 = vadd.f32 %v2023, %v6508
    %v6510 = vpop.f32.mrb[0].mxu0
    %v6511 = vpop.f32.mrb[0].mxu0
    %6512 = vdwg.mxu0
    %6513 = vmatprep.subr.bf16.mxu0 %v1887
    %6514 = vmatpush1.bf16.msra.mxu0 %v1886
    %6515 = vmatprep.subr.bf16.mxu0 %v1895
    %6516 = vmatpush1.bf16.msra.mxu0 %v1894
    %6517 = vmatprep.subr.bf16.mxu0 %v1903
    %6518 = vmatpush1.bf16.msra.mxu0 %v1902
    %6519 = vmatprep.subr.bf16.mxu0 %v1911
    %6520 = vmatpush1.bf16.msra.mxu0 %v1910
    %6521 = vmatprep.subr.bf16.mxu0 %v1919
    %6522 = vmatpush1.bf16.msra.mxu0 %v1918
    %6523 = vmatprep.subr.bf16.mxu0 %v1927
    %6524 = vmatpush1.bf16.msra.mxu0 %v1926
    %6525 = vmatprep.subr.bf16.mxu0 %v1935
    %6526 = vmatpush1.bf16.msra.mxu0 %v1934
    %6527 = vmatprep.subr.bf16.mxu0 %v1943
    %6528 = vmatpush1.bf16.msra.mxu0 %v1942
    %6529 = vmatprep.subr.bf16.mxu0 %v1951
    %6530 = vmatpush1.bf16.msra.mxu0 %v1950
    %6531 = vmatprep.subr.bf16.mxu0 %v1959
    %6532 = vmatpush1.bf16.msra.mxu0 %v1958
    %6533 = vmatprep.subr.bf16.mxu0 %v1967
    %6534 = vmatpush1.bf16.msra.mxu0 %v1966
    %6535 = vmatprep.subr.bf16.mxu0 %v1975
    %6536 = vmatpush1.bf16.msra.mxu0 %v1974
    %6537 = vmatprep.subr.bf16.mxu0 %v1983
    %6538 = vmatpush1.bf16.msra.mxu0 %v1982
    %6539 = vmatprep.subr.bf16.mxu0 %v1991
    %6540 = vmatpush1.bf16.msra.mxu0 %v1990
    %6541 = vmatprep.subr.bf16.mxu0 %v1999
    %6542 = vmatpush1.bf16.msra.mxu0 %v1998
    %6543 = vmatprep.subr.bf16.mxu0 %v2007
    %6544 = vmatpush1.bf16.msra.mxu0 %v2006
    %6545 = vmatprep.mubr.bf16.mxu0 %v6471
    %6546 = vmatmul.mubr.bf16.gmra.mrb[0].mxu0 %v6470
    %v6547 = vpop.f32.mrb[0].mxu0
    %v6548 = vadd.f32 %v6507, %v6547
    %v6549 = vpop.f32.mrb[0].mxu0
    %v6550 = vadd.f32 %v6509, %v6549
    %v6551 = vpop.f32.mrb[0].mxu0
    %v6552 = vpop.f32.mrb[0].mxu0
    %6553 = vdwg.mxu0
    %6554 = vmatprep.subr.bf16.mxu0 %v1761
    %6555 = vmatpush1.bf16.msra.mxu0 %v1760
    %6556 = vmatprep.subr.bf16.mxu0 %v1769
    %6557 = vmatpush1.bf16.msra.mxu0 %v1768
    %6558 = vmatprep.subr.bf16.mxu0 %v1777
    %6559 = vmatpush1.bf16.msra.mxu0 %v1776
    %6560 = vmatprep.subr.bf16.mxu0 %v1785
    %6561 = vmatpush1.bf16.msra.mxu0 %v1784
    %6562 = vmatprep.subr.bf16.mxu0 %v1793
    %6563 = vmatpush1.bf16.msra.mxu0 %v1792
    %6564 = vmatprep.subr.bf16.mxu0 %v1801
    %6565 = vmatpush1.bf16.msra.mxu0 %v1800
    %6566 = vmatprep.subr.bf16.mxu0 %v1809
    %6567 = vmatpush1.bf16.msra.mxu0 %v1808
    %6568 = vmatprep.subr.bf16.mxu0 %v1817
    %6569 = vmatpush1.bf16.msra.mxu0 %v1816
    %6570 = vmatprep.subr.bf16.mxu0 %v1825
    %6571 = vmatpush1.bf16.msra.mxu0 %v1824
    %6572 = vmatprep.subr.bf16.mxu0 %v1833
    %6573 = vmatpush1.bf16.msra.mxu0 %v1832
    %6574 = vmatprep.subr.bf16.mxu0 %v1841
    %6575 = vmatpush1.bf16.msra.mxu0 %v1840
    %6576 = vmatprep.subr.bf16.mxu0 %v1849
    %6577 = vmatpush1.bf16.msra.mxu0 %v1848
    %6578 = vmatprep.subr.bf16.mxu0 %v1857
    %6579 = vmatpush1.bf16.msra.mxu0 %v1856
    %6580 = vmatprep.subr.bf16.mxu0 %v1865
    %6581 = vmatpush1.bf16.msra.mxu0 %v1864
    %6582 = vmatprep.subr.bf16.mxu0 %v1873
    %6583 = vmatpush1.bf16.msra.mxu0 %v1872
    %6584 = vmatprep.subr.bf16.mxu0 %v1881
    %6585 = vmatpush1.bf16.msra.mxu0 %v1880
    %6586 = vmatprep.mubr.bf16.mxu0 %v6469
    %6587 = vmatmul.mubr.bf16.gmra.mrb[0].mxu0 %v6468
    %v6588 = vpop.f32.mrb[0].mxu0
    %v6589 = vadd.f32 %v2027, %v6588
    %v6590 = vpop.f32.mrb[0].mxu0
    %v6591 = vadd.f32 %v2031, %v6590
    %v6592 = vpop.f32.mrb[0].mxu0
    %v6593 = vpop.f32.mrb[0].mxu0
    %6594 = vdwg.mxu0
    %6595 = vmatprep.subr.bf16.mxu0 %v1889
    %6596 = vmatpush1.bf16.msra.mxu0 %v1888
    %6597 = vmatprep.subr.bf16.mxu0 %v1897
    %6598 = vmatpush1.bf16.msra.mxu0 %v1896
    %6599 = vmatprep.subr.bf16.mxu0 %v1905
    %6600 = vmatpush1.bf16.msra.mxu0 %v1904
    %6601 = vmatprep.subr.bf16.mxu0 %v1913
    %6602 = vmatpush1.bf16.msra.mxu0 %v1912
    %6603 = vmatprep.subr.bf16.mxu0 %v1921
    %6604 = vmatpush1.bf16.msra.mxu0 %v1920
    %6605 = vmatprep.subr.bf16.mxu0 %v1929
    %6606 = vmatpush1.bf16.msra.mxu0 %v1928
    %6607 = vmatprep.subr.bf16.mxu0 %v1937
    %6608 = vmatpush1.bf16.msra.mxu0 %v1936
    %6609 = vmatprep.subr.bf16.mxu0 %v1945
    %6610 = vmatpush1.bf16.msra.mxu0 %v1944
    %6611 = vmatprep.subr.bf16.mxu0 %v1953
    %6612 = vmatpush1.bf16.msra.mxu0 %v1952
    %6613 = vmatprep.subr.bf16.mxu0 %v1961
    %6614 = vmatpush1.bf16.msra.mxu0 %v1960
    %6615 = vmatprep.subr.bf16.mxu0 %v1969
    %6616 = vmatpush1.bf16.msra.mxu0 %v1968
    %6617 = vmatprep.subr.bf16.mxu0 %v1977
    %6618 = vmatpush1.bf16.msra.mxu0 %v1976
    %6619 = vmatprep.subr.bf16.mxu0 %v1985
    %6620 = vmatpush1.bf16.msra.mxu0 %v1984
    %6621 = vmatprep.subr.bf16.mxu0 %v1993
    %6622 = vmatpush1.bf16.msra.mxu0 %v1992
    %6623 = vmatprep.subr.bf16.mxu0 %v2001
    %6624 = vmatpush1.bf16.msra.mxu0 %v2000
    %6625 = vmatprep.subr.bf16.mxu0 %v2009
    %6626 = vmatpush1.bf16.msra.mxu0 %v2008
    %6627 = vmatprep.mubr.bf16.mxu0 %v6471
    %6628 = vmatmul.mubr.bf16.gmra.mrb[0].mxu0 %v6470
    %v6629 = vpop.f32.mrb[0].mxu0
    %v6630 = vadd.f32 %v6589, %v6629
    %v6631 = vpop.f32.mrb[0].mxu0
    %v6632 = vadd.f32 %v6591, %v6631
    %v6633 = vpop.f32.mrb[0].mxu0
    %v6634 = vpop.f32.mrb[0].mxu0
    %6635 = vdwg.mxu0
    %6636 = vmatprep.subr.bf16.mxu0 %v1763
    %6637 = vmatpush1.bf16.msra.mxu0 %v1762
    %6638 = vmatprep.subr.bf16.mxu0 %v1771
    %6639 = vmatpush1.bf16.msra.mxu0 %v1770
    %6640 = vmatprep.subr.bf16.mxu0 %v1779
    %6641 = vmatpush1.bf16.msra.mxu0 %v1778
    %6642 = vmatprep.subr.bf16.mxu0 %v1787
    %6643 = vmatpush1.bf16.msra.mxu0 %v1786
    %6644 = vmatprep.subr.bf16.mxu0 %v1795
    %6645 = vmatpush1.bf16.msra.mxu0 %v1794
    %6646 = vmatprep.subr.bf16.mxu0 %v1803
    %6647 = vmatpush1.bf16.msra.mxu0 %v1802
    %6648 = vmatprep.subr.bf16.mxu0 %v1811
    %6649 = vmatpush1.bf16.msra.mxu0 %v1810
    %6650 = vmatprep.subr.bf16.mxu0 %v1819
    %6651 = vmatpush1.bf16.msra.mxu0 %v1818
    %6652 = vmatprep.subr.bf16.mxu0 %v1827
    %6653 = vmatpush1.bf16.msra.mxu0 %v1826
    %6654 = vmatprep.subr.bf16.mxu0 %v1835
    %6655 = vmatpush1.bf16.msra.mxu0 %v1834
    %6656 = vmatprep.subr.bf16.mxu0 %v1843
    %6657 = vmatpush1.bf16.msra.mxu0 %v1842
    %6658 = vmatprep.subr.bf16.mxu0 %v1851
    %6659 = vmatpush1.bf16.msra.mxu0 %v1850
    %6660 = vmatprep.subr.bf16.mxu0 %v1859
    %6661 = vmatpush1.bf16.msra.mxu0 %v1858
    %6662 = vmatprep.subr.bf16.mxu0 %v1867
    %6663 = vmatpush1.bf16.msra.mxu0 %v1866
    %6664 = vmatprep.subr.bf16.mxu0 %v1875
    %6665 = vmatpush1.bf16.msra.mxu0 %v1874
    %6666 = vmatprep.subr.bf16.mxu0 %v1883
    %6667 = vmatpush1.bf16.msra.mxu0 %v1882
    %6668 = vmatprep.mubr.bf16.mxu0 %v6469
    %6669 = vmatmul.mubr.bf16.gmra.mrb[0].mxu0 %v6468
    %v6670 = vpop.f32.mrb[0].mxu0
    %v6671 = vadd.f32 %v2035, %v6670
    %v6672 = vpop.f32.mrb[0].mxu0
    %v6673 = vadd.f32 %v2039, %v6672
    %v6674 = vpop.f32.mrb[0].mxu0
    %v6675 = vpop.f32.mrb[0].mxu0
    %6676 = vdwg.mxu0
    %6677 = vmatprep.subr.bf16.mxu0 %v1891
    %6678 = vmatpush1.bf16.msra.mxu0 %v1890
    %6679 = vmatprep.subr.bf16.mxu0 %v1899
    %6680 = vmatpush1.bf16.msra.mxu0 %v1898
    %6681 = vmatprep.subr.bf16.mxu0 %v1907
    %6682 = vmatpush1.bf16.msra.mxu0 %v1906
    %6683 = vmatprep.subr.bf16.mxu0 %v1915
    %6684 = vmatpush1.bf16.msra.mxu0 %v1914
    %6685 = vmatprep.subr.bf16.mxu0 %v1923
    %6686 = vmatpush1.bf16.msra.mxu0 %v1922
    %6687 = vmatprep.subr.bf16.mxu0 %v1931
    %6688 = vmatpush1.bf16.msra.mxu0 %v1930
    %6689 = vmatprep.subr.bf16.mxu0 %v1939
    %6690 = vmatpush1.bf16.msra.mxu0 %v1938
    %6691 = vmatprep.subr.bf16.mxu0 %v1947
    %6692 = vmatpush1.bf16.msra.mxu0 %v1946
    %6693 = vmatprep.subr.bf16.mxu0 %v1955
    %6694 = vmatpush1.bf16.msra.mxu0 %v1954
    %6695 = vmatprep.subr.bf16.mxu0 %v1963
    %6696 = vmatpush1.bf16.msra.mxu0 %v1962
    %6697 = vmatprep.subr.bf16.mxu0 %v1971
    %6698 = vmatpush1.bf16.msra.mxu0 %v1970
    %6699 = vmatprep.subr.bf16.mxu0 %v1979
    %6700 = vmatpush1.bf16.msra.mxu0 %v1978
    %6701 = vmatprep.subr.bf16.mxu0 %v1987
    %6702 = vmatpush1.bf16.msra.mxu0 %v1986
    %6703 = vmatprep.subr.bf16.mxu0 %v1995
    %6704 = vmatpush1.bf16.msra.mxu0 %v1994
    %6705 = vmatprep.subr.bf16.mxu0 %v2003
    %6706 = vmatpush1.bf16.msra.mxu0 %v2002
    %6707 = vmatprep.subr.bf16.mxu0 %v2011
    %6708 = vmatpush1.bf16.msra.mxu0 %v2010
    %6709 = vmatprep.mubr.bf16.mxu0 %v6471
    %6710 = vmatmul.mubr.bf16.gmra.mrb[0].mxu0 %v6470
    %v6711 = vpop.f32.mrb[0].mxu0
    %v6712 = vadd.f32 %v6671, %v6711
    %v6713 = vpop.f32.mrb[0].mxu0
    %v6714 = vadd.f32 %v6673, %v6713
    %v6715 = vpop.f32.mrb[0].mxu0
    %v6716 = vpop.f32.mrb[0].mxu0
    %6717 = vdwg.mxu0
    %6718 = vmatprep.subr.bf16.mxu0 %v1765
    %6719 = vmatpush1.bf16.msra.mxu0 %v1764
    %6720 = vmatprep.subr.bf16.mxu0 %v1773
    %6721 = vmatpush1.bf16.msra.mxu0 %v1772
    %6722 = vmatprep.subr.bf16.mxu0 %v1781
    %6723 = vmatpush1.bf16.msra.mxu0 %v1780
    %6724 = vmatprep.subr.bf16.mxu0 %v1789
    %6725 = vmatpush1.bf16.msra.mxu0 %v1788
    %6726 = vmatprep.subr.bf16.mxu0 %v1797
    %6727 = vmatpush1.bf16.msra.mxu0 %v1796
    %6728 = vmatprep.subr.bf16.mxu0 %v1805
    %6729 = vmatpush1.bf16.msra.mxu0 %v1804
    %6730 = vmatprep.subr.bf16.mxu0 %v1813
    %6731 = vmatpush1.bf16.msra.mxu0 %v1812
    %6732 = vmatprep.subr.bf16.mxu0 %v1821
    %6733 = vmatpush1.bf16.msra.mxu0 %v1820
    %6734 = vmatprep.subr.bf16.mxu0 %v1829
    %6735 = vmatpush1.bf16.msra.mxu0 %v1828
    %6736 = vmatprep.subr.bf16.mxu0 %v1837
    %6737 = vmatpush1.bf16.msra.mxu0 %v1836
    %6738 = vmatprep.subr.bf16.mxu0 %v1845
    %6739 = vmatpush1.bf16.msra.mxu0 %v1844
    %6740 = vmatprep.subr.bf16.mxu0 %v1853
    %6741 = vmatpush1.bf16.msra.mxu0 %v1852
    %6742 = vmatprep.subr.bf16.mxu0 %v1861
    %6743 = vmatpush1.bf16.msra.mxu0 %v1860
    %6744 = vmatprep.subr.bf16.mxu0 %v1869
    %6745 = vmatpush1.bf16.msra.mxu0 %v1868
    %6746 = vmatprep.subr.bf16.mxu0 %v1877
    %6747 = vmatpush1.bf16.msra.mxu0 %v1876
    %6748 = vmatprep.subr.bf16.mxu0 %v1885
    %6749 = vmatpush1.bf16.msra.mxu0 %v1884
    %6750 = vmatprep.mubr.bf16.mxu0 %v6469
    %6751 = vmatmul.mubr.bf16.gmra.mrb[0].mxu0 %v6468
    %v6752 = vpop.f32.mrb[0].mxu0
    %v6753 = vadd.f32 %v2043, %v6752
    %v6754 = vpop.f32.mrb[0].mxu0
    %v6755 = vadd.f32 %v2047, %v6754
    %v6756 = vpop.f32.mrb[0].mxu0
    %v6757 = vpop.f32.mrb[0].mxu0
    %6758 = vdwg.mxu0
    %6759 = vmatprep.subr.bf16.mxu0 %v1893
    %6760 = vmatpush1.bf16.msra.mxu0 %v1892
    %6761 = vmatprep.subr.bf16.mxu0 %v1901
    %6762 = vmatpush1.bf16.msra.mxu0 %v1900
    %6763 = vmatprep.subr.bf16.mxu0 %v1909
    %6764 = vmatpush1.bf16.msra.mxu0 %v1908
    %6765 = vmatprep.subr.bf16.mxu0 %v1917
    %6766 = vmatpush1.bf16.msra.mxu0 %v1916
    %6767 = vmatprep.subr.bf16.mxu0 %v1925
    %6768 = vmatpush1.bf16.msra.mxu0 %v1924
    %6769 = vmatprep.subr.bf16.mxu0 %v1933
    %6770 = vmatpush1.bf16.msra.mxu0 %v1932
    %6771 = vmatprep.subr.bf16.mxu0 %v1941
    %6772 = vmatpush1.bf16.msra.mxu0 %v1940
    %6773 = vmatprep.subr.bf16.mxu0 %v1949
    %6774 = vmatpush1.bf16.msra.mxu0 %v1948
    %6775 = vmatprep.subr.bf16.mxu0 %v1957
    %6776 = vmatpush1.bf16.msra.mxu0 %v1956
    %6777 = vmatprep.subr.bf16.mxu0 %v1965
    %6778 = vmatpush1.bf16.msra.mxu0 %v1964
    %6779 = vmatprep.subr.bf16.mxu0 %v1973
    %6780 = vmatpush1.bf16.msra.mxu0 %v1972
    %6781 = vmatprep.subr.bf16.mxu0 %v1981
    %6782 = vmatpush1.bf16.msra.mxu0 %v1980
    %6783 = vmatprep.subr.bf16.mxu0 %v1989
    %6784 = vmatpush1.bf16.msra.mxu0 %v1988
    %6785 = vmatprep.subr.bf16.mxu0 %v1997
    %6786 = vmatpush1.bf16.msra.mxu0 %v1996
    %6787 = vmatprep.subr.bf16.mxu0 %v2005
    %6788 = vmatpush1.bf16.msra.mxu0 %v2004
    %6789 = vmatprep.subr.bf16.mxu0 %v2013
    %6790 = vmatpush1.bf16.msra.mxu0 %v2012
    %6791 = vmatprep.mubr.bf16.mxu0 %v6471
    %6792 = vmatmul.mubr.bf16.gmra.mrb[0].mxu0 %v6470
    %v6793 = vpop.f32.mrb[0].mxu0
    %v6794 = vadd.f32 %v6753, %v6793
    %v6795 = vpop.f32.mrb[0].mxu0
    %v6796 = vadd.f32 %v6755, %v6795
    %v6797 = vpop.f32.mrb[0].mxu0
    %v6798 = vpop.f32.mrb[0].mxu0
    %6799 = vdwg.mxu0
    %v6800 = vxor.u32 %v6548, 2147483648
    %v6801 = vxor.u32 %v6550, 2147483648
    %v6802 = vmul.f32 %v6800, 1.442695
    %v6803 = vpow.pop %v6802
    %v6804 = vmul.f32 %v6801, 1.442695
    %v6805 = vpow.pop %v6804
    %v6806 = vadd.f32 %v6803, 1.0
    %v6807 = vadd.f32 %v6805, 1.0
    %v6808 = vrcp.pop %v6806
    %v6809 = vmul.f32 1.0, %v6808
    %v6810 = vrcp.pop %v6807
    %v6811 = vmul.f32 1.0, %v6810
    %v6812 = vxor.u32 %v6630, 2147483648
    %v6813 = vxor.u32 %v6632, 2147483648
    %v6814 = vmul.f32 %v6812, 1.442695
    %v6815 = vpow.pop %v6814
    %v6816 = vmul.f32 %v6813, 1.442695
    %v6817 = vpow.pop %v6816
    %v6818 = vadd.f32 %v6815, 1.0
    %v6819 = vadd.f32 %v6817, 1.0
    %v6820 = vrcp.pop %v6818
    %v6821 = vmul.f32 1.0, %v6820
    %v6822 = vrcp.pop %v6819
    %v6823 = vmul.f32 1.0, %v6822
    %v6824 = vtanh.pop %v6712
    %v6825 = vtanh.pop %v6714
    %v6826 = vxor.u32 %v6794, 2147483648
    %v6827 = vxor.u32 %v6796, 2147483648
    %v6828 = vmul.f32 %v6826, 1.442695
    %v6829 = vpow.pop %v6828
    %v6830 = vmul.f32 %v6827, 1.442695
    %v6831 = vpow.pop %v6830
    %v6832 = vadd.f32 %v6829, 1.0
    %v6833 = vadd.f32 %v6831, 1.0
    %v6834 = vrcp.pop %v6832
    %v6835 = vmul.f32 1.0, %v6834
    %v6836 = vrcp.pop %v6833
    %v6837 = vmul.f32 1.0, %v6836
    %v6838 = vmul.f32 %v6821, %v6234
    %v6839 = vmul.f32 %v6823, %v6235
    %v6840 = vmul.f32 %v6809, %v6824
    %v6841 = vmul.f32 %v6811, %v6825
    %v6842 = vadd.f32 %v6838, %v6840
    %v6843 = vadd.f32 %v6839, %v6841
    %v6844 = vtanh.pop %v6842
    %v6845 = vtanh.pop %v6843
    %v6846 = vmul.f32 %v6835, %v6844
    %v6847 = vmul.f32 %v6837, %v6845
    %v6848 = vld [vmem:[#allocation2 + $0x1c0] sm:$0xff]
    %v6849 = vld [vmem:[#allocation2 + $0x1c8] sm:$0xff]
    %v6850 = vld [vmem:[#allocation2 + $0x1d0] sm:$0xff]
    %v6851 = vld [vmem:[#allocation2 + $0x1d8] sm:$0xff]
    %v6852 = vld [vmem:[#allocation2 + $0x1e0] sm:$0xff]
    %v6853 = vld [vmem:[#allocation2 + $0x1e8] sm:$0xff]
    %v6854 = vld [vmem:[#allocation2 + $0x1f0] sm:$0xff]
    %v6855 = vld [vmem:[#allocation2 + $0x1f8] sm:$0xff]
    %6856 = vmatprep.subr.bf16.mxu0 %v2953
    %6857 = vmatpush1.bf16.msra.mxu0 %v2952
    %6858 = vmatprep.subr.bf16.mxu0 %v2961
    %6859 = vmatpush1.bf16.msra.mxu0 %v2960
    %6860 = vmatprep.subr.bf16.mxu0 %v2969
    %6861 = vmatpush1.bf16.msra.mxu0 %v2968
    %6862 = vmatprep.subr.bf16.mxu0 %v2977
    %6863 = vmatpush1.bf16.msra.mxu0 %v2976
    %6864 = vmatprep.subr.bf16.mxu0 %v2985
    %6865 = vmatpush1.bf16.msra.mxu0 %v2984
    %6866 = vmatprep.subr.bf16.mxu0 %v2993
    %6867 = vmatpush1.bf16.msra.mxu0 %v2992
    %6868 = vmatprep.subr.bf16.mxu0 %v3001
    %6869 = vmatpush1.bf16.msra.mxu0 %v3000
    %6870 = vmatprep.subr.bf16.mxu0 %v3009
    %6871 = vmatpush1.bf16.msra.mxu0 %v3008
    %6872 = vmatprep.subr.bf16.mxu0 %v3017
    %6873 = vmatpush1.bf16.msra.mxu0 %v3016
    %6874 = vmatprep.subr.bf16.mxu0 %v3025
    %6875 = vmatpush1.bf16.msra.mxu0 %v3024
    %6876 = vmatprep.subr.bf16.mxu0 %v3033
    %6877 = vmatpush1.bf16.msra.mxu0 %v3032
    %6878 = vmatprep.subr.bf16.mxu0 %v3041
    %6879 = vmatpush1.bf16.msra.mxu0 %v3040
    %6880 = vmatprep.subr.bf16.mxu0 %v3049
    %6881 = vmatpush1.bf16.msra.mxu0 %v3048
    %6882 = vmatprep.subr.bf16.mxu0 %v3057
    %6883 = vmatpush1.bf16.msra.mxu0 %v3056
    %6884 = vmatprep.subr.bf16.mxu0 %v3065
    %6885 = vmatpush1.bf16.msra.mxu0 %v3064
    %6886 = vmatprep.subr.bf16.mxu0 %v3073
    %6887 = vmatpush1.bf16.msra.mxu0 %v3072
    %6888 = vmatprep.mubr.bf16.mxu0 %v6469
    %6889 = vmatmul.mubr.bf16.gmra.mrb[0].mxu0 %v6468
    %v6890 = vpop.f32.mrb[0].mxu0
    %v6891 = vadd.f32 0.0, %v6890
    %v6892 = vpop.f32.mrb[0].mxu0
    %v6893 = vadd.f32 0.0, %v6892
    %v6894 = vpop.f32.mrb[0].mxu0
    %v6895 = vpop.f32.mrb[0].mxu0
    %6896 = vdwg.mxu0
    %6897 = vmatprep.subr.bf16.mxu0 %v2955
    %6898 = vmatpush1.bf16.msra.mxu0 %v2954
    %6899 = vmatprep.subr.bf16.mxu0 %v2963
    %6900 = vmatpush1.bf16.msra.mxu0 %v2962
    %6901 = vmatprep.subr.bf16.mxu0 %v2971
    %6902 = vmatpush1.bf16.msra.mxu0 %v2970
    %6903 = vmatprep.subr.bf16.mxu0 %v2979
    %6904 = vmatpush1.bf16.msra.mxu0 %v2978
    %6905 = vmatprep.subr.bf16.mxu0 %v2987
    %6906 = vmatpush1.bf16.msra.mxu0 %v2986
    %6907 = vmatprep.subr.bf16.mxu0 %v2995
    %6908 = vmatpush1.bf16.msra.mxu0 %v2994
    %6909 = vmatprep.subr.bf16.mxu0 %v3003
    %6910 = vmatpush1.bf16.msra.mxu0 %v3002
    %6911 = vmatprep.subr.bf16.mxu0 %v3011
    %6912 = vmatpush1.bf16.msra.mxu0 %v3010
    %6913 = vmatprep.subr.bf16.mxu0 %v3019
    %6914 = vmatpush1.bf16.msra.mxu0 %v3018
    %6915 = vmatprep.subr.bf16.mxu0 %v3027
    %6916 = vmatpush1.bf16.msra.mxu0 %v3026
    %6917 = vmatprep.subr.bf16.mxu0 %v3035
    %6918 = vmatpush1.bf16.msra.mxu0 %v3034
    %6919 = vmatprep.subr.bf16.mxu0 %v3043
    %6920 = vmatpush1.bf16.msra.mxu0 %v3042
    %6921 = vmatprep.subr.bf16.mxu0 %v3051
    %6922 = vmatpush1.bf16.msra.mxu0 %v3050
    %6923 = vmatprep.subr.bf16.mxu0 %v3059
    %6924 = vmatpush1.bf16.msra.mxu0 %v3058
    %6925 = vmatprep.subr.bf16.mxu0 %v3067
    %6926 = vmatpush1.bf16.msra.mxu0 %v3066
    %6927 = vmatprep.subr.bf16.mxu0 %v3075
    %6928 = vmatpush1.bf16.msra.mxu0 %v3074
    %6929 = vmatprep.mubr.bf16.mxu0 %v6469
    %6930 = vmatmul.mubr.bf16.gmra.mrb[0].mxu0 %v6468
    %v6931 = vpop.f32.mrb[0].mxu0
    %v6932 = vadd.f32 0.0, %v6931
    %v6933 = vpop.f32.mrb[0].mxu0
    %v6934 = vadd.f32 0.0, %v6933
    %v6935 = vpop.f32.mrb[0].mxu0
    %v6936 = vpop.f32.mrb[0].mxu0
    %6937 = vdwg.mxu0
    %6938 = vmatprep.subr.bf16.mxu0 %v2957
    %6939 = vmatpush1.bf16.msra.mxu0 %v2956
    %6940 = vmatprep.subr.bf16.mxu0 %v2965
    %6941 = vmatpush1.bf16.msra.mxu0 %v2964
    %6942 = vmatprep.subr.bf16.mxu0 %v2973
    %6943 = vmatpush1.bf16.msra.mxu0 %v2972
    %6944 = vmatprep.subr.bf16.mxu0 %v2981
    %6945 = vmatpush1.bf16.msra.mxu0 %v2980
    %6946 = vmatprep.subr.bf16.mxu0 %v2989
    %6947 = vmatpush1.bf16.msra.mxu0 %v2988
    %6948 = vmatprep.subr.bf16.mxu0 %v2997
    %6949 = vmatpush1.bf16.msra.mxu0 %v2996
    %6950 = vmatprep.subr.bf16.mxu0 %v3005
    %6951 = vmatpush1.bf16.msra.mxu0 %v3004
    %6952 = vmatprep.subr.bf16.mxu0 %v3013
    %6953 = vmatpush1.bf16.msra.mxu0 %v3012
    %6954 = vmatprep.subr.bf16.mxu0 %v3021
    %6955 = vmatpush1.bf16.msra.mxu0 %v3020
    %6956 = vmatprep.subr.bf16.mxu0 %v3029
    %6957 = vmatpush1.bf16.msra.mxu0 %v3028
    %6958 = vmatprep.subr.bf16.mxu0 %v3037
    %6959 = vmatpush1.bf16.msra.mxu0 %v3036
    %6960 = vmatprep.subr.bf16.mxu0 %v3045
    %6961 = vmatpush1.bf16.msra.mxu0 %v3044
    %6962 = vmatprep.subr.bf16.mxu0 %v3053
    %6963 = vmatpush1.bf16.msra.mxu0 %v3052
    %6964 = vmatprep.subr.bf16.mxu0 %v3061
    %6965 = vmatpush1.bf16.msra.mxu0 %v3060
    %6966 = vmatprep.subr.bf16.mxu0 %v3069
    %6967 = vmatpush1.bf16.msra.mxu0 %v3068
    %6968 = vmatprep.subr.bf16.mxu0 %v3077
    %6969 = vmatpush1.bf16.msra.mxu0 %v3076
    %6970 = vmatprep.mubr.bf16.mxu0 %v6469
    %6971 = vmatmul.mubr.bf16.gmra.mrb[0].mxu0 %v6468
    %v6972 = vpop.f32.mrb[0].mxu0
    %v6973 = vadd.f32 0.0, %v6972
    %v6974 = vpop.f32.mrb[0].mxu0
    %v6975 = vadd.f32 0.0, %v6974
    %v6976 = vpop.f32.mrb[0].mxu0
    %v6977 = vpop.f32.mrb[0].mxu0
    %6978 = vdwg.mxu0
    %6979 = vmatprep.subr.bf16.mxu0 %v2959
    %6980 = vmatpush1.bf16.msra.mxu0 %v2958
    %6981 = vmatprep.subr.bf16.mxu0 %v2967
    %6982 = vmatpush1.bf16.msra.mxu0 %v2966
    %6983 = vmatprep.subr.bf16.mxu0 %v2975
    %6984 = vmatpush1.bf16.msra.mxu0 %v2974
    %6985 = vmatprep.subr.bf16.mxu0 %v2983
    %6986 = vmatpush1.bf16.msra.mxu0 %v2982
    %6987 = vmatprep.subr.bf16.mxu0 %v2991
    %6988 = vmatpush1.bf16.msra.mxu0 %v2990
    %6989 = vmatprep.subr.bf16.mxu0 %v2999
    %6990 = vmatpush1.bf16.msra.mxu0 %v2998
    %6991 = vmatprep.subr.bf16.mxu0 %v3007
    %6992 = vmatpush1.bf16.msra.mxu0 %v3006
    %6993 = vmatprep.subr.bf16.mxu0 %v3015
    %6994 = vmatpush1.bf16.msra.mxu0 %v3014
    %6995 = vmatprep.subr.bf16.mxu0 %v3023
    %6996 = vmatpush1.bf16.msra.mxu0 %v3022
    %6997 = vmatprep.subr.bf16.mxu0 %v3031
    %6998 = vmatpush1.bf16.msra.mxu0 %v3030
    %6999 = vmatprep.subr.bf16.mxu0 %v3039
    %7000 = vmatpush1.bf16.msra.mxu0 %v3038
    %7001 = vmatprep.subr.bf16.mxu0 %v3047
    %7002 = vmatpush1.bf16.msra.mxu0 %v3046
    %7003 = vmatprep.subr.bf16.mxu0 %v3055
    %7004 = vmatpush1.bf16.msra.mxu0 %v3054
    %7005 = vmatprep.subr.bf16.mxu0 %v3063
    %7006 = vmatpush1.bf16.msra.mxu0 %v3062
    %7007 = vmatprep.subr.bf16.mxu0 %v3071
    %7008 = vmatpush1.bf16.msra.mxu0 %v3070
    %7009 = vmatprep.subr.bf16.mxu0 %v3079
    %7010 = vmatpush1.bf16.msra.mxu0 %v3078
    %7011 = vmatprep.mubr.bf16.mxu0 %v6469
    %7012 = vmatmul.mubr.bf16.gmra.mrb[0].mxu0 %v6468
    %v7013 = vpop.f32.mrb[0].mxu0
    %v7014 = vadd.f32 0.0, %v7013
    %v7015 = vpop.f32.mrb[0].mxu0
    %v7016 = vadd.f32 0.0, %v7015
    %v7017 = vpop.f32.mrb[0].mxu0
    %v7018 = vpop.f32.mrb[0].mxu0
    %7019 = vdwg.mxu0
    %v7020 = vadd.f32 %v6848, %v6891
    %v7021 = vadd.f32 %v6849, %v6893
    %v7022 = vadd.f32 %v6850, %v6932
    %v7023 = vadd.f32 %v6851, %v6934
    %v7024 = vadd.f32 %v6852, %v6973
    %v7025 = vadd.f32 %v6853, %v6975
    %v7026 = vadd.f32 %v6854, %v7014
    %v7027 = vadd.f32 %v6855, %v7016
    %v7028 = vxor.u32 %v7020, 2147483648
    %v7029 = vxor.u32 %v7021, 2147483648
    %v7030 = vmul.f32 %v7028, 1.442695
    %v7031 = vpow.pop %v7030
    %v7032 = vmul.f32 %v7029, 1.442695
    %v7033 = vpow.pop %v7032
    %v7034 = vadd.f32 %v7031, 1.0
    %v7035 = vadd.f32 %v7033, 1.0
    %v7036 = vrcp.pop %v7034
    %v7037 = vmul.f32 1.0, %v7036
    %v7038 = vrcp.pop %v7035
    %v7039 = vmul.f32 1.0, %v7038
    %v7040 = vxor.u32 %v7022, 2147483648
    %v7041 = vxor.u32 %v7023, 2147483648
    %v7042 = vmul.f32 %v7040, 1.442695
    %v7043 = vpow.pop %v7042
    %v7044 = vmul.f32 %v7041, 1.442695
    %v7045 = vpow.pop %v7044
    %v7046 = vadd.f32 %v7043, 1.0
    %v7047 = vadd.f32 %v7045, 1.0
    %v7048 = vrcp.pop %v7046
    %v7049 = vmul.f32 1.0, %v7048
    %v7050 = vrcp.pop %v7047
    %v7051 = vmul.f32 1.0, %v7050
    %v7052 = vtanh.pop %v7024
    %v7053 = vtanh.pop %v7025
    %v7054 = vxor.u32 %v7026, 2147483648
    %v7055 = vxor.u32 %v7027, 2147483648
    %v7056 = vmul.f32 %v7054, 1.442695
    %v7057 = vpow.pop %v7056
    %v7058 = vmul.f32 %v7055, 1.442695
    %v7059 = vpow.pop %v7058
    %v7060 = vadd.f32 %v7057, 1.0
    %v7061 = vadd.f32 %v7059, 1.0
    %v7062 = vrcp.pop %v7060
    %v7063 = vmul.f32 1.0, %v7062
    %v7064 = vrcp.pop %v7061
    %v7065 = vmul.f32 1.0, %v7064
    %v7066 = vmul.f32 %v7049, %v6462
    %v7067 = vmul.f32 %v7051, %v6463
    %v7068 = vmul.f32 %v7037, %v7052
    %v7069 = vmul.f32 %v7039, %v7053
    %v7070 = vadd.f32 %v7066, %v7068
    %v7071 = vadd.f32 %v7067, %v7069
    %v7072 = vtanh.pop %v7070
    %v7073 = vtanh.pop %v7071
    %v7074 = vmul.f32 %v7063, %v7072
    %v7075 = vmul.f32 %v7065, %v7073
    %v7076 = vpack.c.bf16 %v7074, %v7074
    %v7077 = vpack.c.bf16 %v7075, %v7075
    %v7078 = vpack.c.bf16 %v6846, %v6846
    %v7079 = vpack.c.bf16 %v6847, %v6847
    %7080 = vmatprep.subr.bf16.mxu0 %v1759
    %7081 = vmatpush1.bf16.msra.mxu0 %v1758
    %7082 = vmatprep.subr.bf16.mxu0 %v1767
    %7083 = vmatpush1.bf16.msra.mxu0 %v1766
    %7084 = vmatprep.subr.bf16.mxu0 %v1775
    %7085 = vmatpush1.bf16.msra.mxu0 %v1774
    %7086 = vmatprep.subr.bf16.mxu0 %v1783
    %7087 = vmatpush1.bf16.msra.mxu0 %v1782
    %7088 = vmatprep.subr.bf16.mxu0 %v1791
    %7089 = vmatpush1.bf16.msra.mxu0 %v1790
    %7090 = vmatprep.subr.bf16.mxu0 %v1799
    %7091 = vmatpush1.bf16.msra.mxu0 %v1798
    %7092 = vmatprep.subr.bf16.mxu0 %v1807
    %7093 = vmatpush1.bf16.msra.mxu0 %v1806
    %7094 = vmatprep.subr.bf16.mxu0 %v1815
    %7095 = vmatpush1.bf16.msra.mxu0 %v1814
    %7096 = vmatprep.subr.bf16.mxu0 %v1823
    %7097 = vmatpush1.bf16.msra.mxu0 %v1822
    %7098 = vmatprep.subr.bf16.mxu0 %v1831
    %7099 = vmatpush1.bf16.msra.mxu0 %v1830
    %7100 = vmatprep.subr.bf16.mxu0 %v1839
    %7101 = vmatpush1.bf16.msra.mxu0 %v1838
    %7102 = vmatprep.subr.bf16.mxu0 %v1847
    %7103 = vmatpush1.bf16.msra.mxu0 %v1846
    %7104 = vmatprep.subr.bf16.mxu0 %v1855
    %7105 = vmatpush1.bf16.msra.mxu0 %v1854
    %7106 = vmatprep.subr.bf16.mxu0 %v1863
    %7107 = vmatpush1.bf16.msra.mxu0 %v1862
    %7108 = vmatprep.subr.bf16.mxu0 %v1871
    %7109 = vmatpush1.bf16.msra.mxu0 %v1870
    %7110 = vmatprep.subr.bf16.mxu0 %v1879
    %7111 = vmatpush1.bf16.msra.mxu0 %v1878
    %7112 = vmatprep.mubr.bf16.mxu0 %v7077
    %7113 = vmatmul.mubr.bf16.gmra.mrb[0].mxu0 %v7076
    %v7114 = vpop.f32.mrb[0].mxu0
    %v7115 = vadd.f32 %v2019, %v7114
    %v7116 = vpop.f32.mrb[0].mxu0
    %v7117 = vadd.f32 %v2023, %v7116
    %v7118 = vpop.f32.mrb[0].mxu0
    %v7119 = vpop.f32.mrb[0].mxu0
    %7120 = vdwg.mxu0
    %7121 = vmatprep.subr.bf16.mxu0 %v1887
    %7122 = vmatpush1.bf16.msra.mxu0 %v1886
    %7123 = vmatprep.subr.bf16.mxu0 %v1895
    %7124 = vmatpush1.bf16.msra.mxu0 %v1894
    %7125 = vmatprep.subr.bf16.mxu0 %v1903
    %7126 = vmatpush1.bf16.msra.mxu0 %v1902
    %7127 = vmatprep.subr.bf16.mxu0 %v1911
    %7128 = vmatpush1.bf16.msra.mxu0 %v1910
    %7129 = vmatprep.subr.bf16.mxu0 %v1919
    %7130 = vmatpush1.bf16.msra.mxu0 %v1918
    %7131 = vmatprep.subr.bf16.mxu0 %v1927
    %7132 = vmatpush1.bf16.msra.mxu0 %v1926
    %7133 = vmatprep.subr.bf16.mxu0 %v1935
    %7134 = vmatpush1.bf16.msra.mxu0 %v1934
    %7135 = vmatprep.subr.bf16.mxu0 %v1943
    %7136 = vmatpush1.bf16.msra.mxu0 %v1942
    %7137 = vmatprep.subr.bf16.mxu0 %v1951
    %7138 = vmatpush1.bf16.msra.mxu0 %v1950
    %7139 = vmatprep.subr.bf16.mxu0 %v1959
    %7140 = vmatpush1.bf16.msra.mxu0 %v1958
    %7141 = vmatprep.subr.bf16.mxu0 %v1967
    %7142 = vmatpush1.bf16.msra.mxu0 %v1966
    %7143 = vmatprep.subr.bf16.mxu0 %v1975
    %7144 = vmatpush1.bf16.msra.mxu0 %v1974
    %7145 = vmatprep.subr.bf16.mxu0 %v1983
    %7146 = vmatpush1.bf16.msra.mxu0 %v1982
    %7147 = vmatprep.subr.bf16.mxu0 %v1991
    %7148 = vmatpush1.bf16.msra.mxu0 %v1990
    %7149 = vmatprep.subr.bf16.mxu0 %v1999
    %7150 = vmatpush1.bf16.msra.mxu0 %v1998
    %7151 = vmatprep.subr.bf16.mxu0 %v2007
    %7152 = vmatpush1.bf16.msra.mxu0 %v2006
    %7153 = vmatprep.mubr.bf16.mxu0 %v7079
    %7154 = vmatmul.mubr.bf16.gmra.mrb[0].mxu0 %v7078
    %v7155 = vpop.f32.mrb[0].mxu0
    %v7156 = vadd.f32 %v7115, %v7155
    %v7157 = vpop.f32.mrb[0].mxu0
    %v7158 = vadd.f32 %v7117, %v7157
    %v7159 = vpop.f32.mrb[0].mxu0
    %v7160 = vpop.f32.mrb[0].mxu0
    %7161 = vdwg.mxu0
    %7162 = vmatprep.subr.bf16.mxu0 %v1761
    %7163 = vmatpush1.bf16.msra.mxu0 %v1760
    %7164 = vmatprep.subr.bf16.mxu0 %v1769
    %7165 = vmatpush1.bf16.msra.mxu0 %v1768
    %7166 = vmatprep.subr.bf16.mxu0 %v1777
    %7167 = vmatpush1.bf16.msra.mxu0 %v1776
    %7168 = vmatprep.subr.bf16.mxu0 %v1785
    %7169 = vmatpush1.bf16.msra.mxu0 %v1784
    %7170 = vmatprep.subr.bf16.mxu0 %v1793
    %7171 = vmatpush1.bf16.msra.mxu0 %v1792
    %7172 = vmatprep.subr.bf16.mxu0 %v1801
    %7173 = vmatpush1.bf16.msra.mxu0 %v1800
    %7174 = vmatprep.subr.bf16.mxu0 %v1809
    %7175 = vmatpush1.bf16.msra.mxu0 %v1808
    %7176 = vmatprep.subr.bf16.mxu0 %v1817
    %7177 = vmatpush1.bf16.msra.mxu0 %v1816
    %7178 = vmatprep.subr.bf16.mxu0 %v1825
    %7179 = vmatpush1.bf16.msra.mxu0 %v1824
    %7180 = vmatprep.subr.bf16.mxu0 %v1833
    %7181 = vmatpush1.bf16.msra.mxu0 %v1832
    %7182 = vmatprep.subr.bf16.mxu0 %v1841
    %7183 = vmatpush1.bf16.msra.mxu0 %v1840
    %7184 = vmatprep.subr.bf16.mxu0 %v1849
    %7185 = vmatpush1.bf16.msra.mxu0 %v1848
    %7186 = vmatprep.subr.bf16.mxu0 %v1857
    %7187 = vmatpush1.bf16.msra.mxu0 %v1856
    %7188 = vmatprep.subr.bf16.mxu0 %v1865
    %7189 = vmatpush1.bf16.msra.mxu0 %v1864
    %7190 = vmatprep.subr.bf16.mxu0 %v1873
    %7191 = vmatpush1.bf16.msra.mxu0 %v1872
    %7192 = vmatprep.subr.bf16.mxu0 %v1881
    %7193 = vmatpush1.bf16.msra.mxu0 %v1880
    %7194 = vmatprep.mubr.bf16.mxu0 %v7077
    %7195 = vmatmul.mubr.bf16.gmra.mrb[0].mxu0 %v7076
    %v7196 = vpop.f32.mrb[0].mxu0
    %v7197 = vadd.f32 %v2027, %v7196
    %v7198 = vpop.f32.mrb[0].mxu0
    %v7199 = vadd.f32 %v2031, %v7198
    %v7200 = vpop.f32.mrb[0].mxu0
    %v7201 = vpop.f32.mrb[0].mxu0
    %7202 = vdwg.mxu0
    %7203 = vmatprep.subr.bf16.mxu0 %v1889
    %7204 = vmatpush1.bf16.msra.mxu0 %v1888
    %7205 = vmatprep.subr.bf16.mxu0 %v1897
    %7206 = vmatpush1.bf16.msra.mxu0 %v1896
    %7207 = vmatprep.subr.bf16.mxu0 %v1905
    %7208 = vmatpush1.bf16.msra.mxu0 %v1904
    %7209 = vmatprep.subr.bf16.mxu0 %v1913
    %7210 = vmatpush1.bf16.msra.mxu0 %v1912
    %7211 = vmatprep.subr.bf16.mxu0 %v1921
    %7212 = vmatpush1.bf16.msra.mxu0 %v1920
    %7213 = vmatprep.subr.bf16.mxu0 %v1929
    %7214 = vmatpush1.bf16.msra.mxu0 %v1928
    %7215 = vmatprep.subr.bf16.mxu0 %v1937
    %7216 = vmatpush1.bf16.msra.mxu0 %v1936
    %7217 = vmatprep.subr.bf16.mxu0 %v1945
    %7218 = vmatpush1.bf16.msra.mxu0 %v1944
    %7219 = vmatprep.subr.bf16.mxu0 %v1953
    %7220 = vmatpush1.bf16.msra.mxu0 %v1952
    %7221 = vmatprep.subr.bf16.mxu0 %v1961
    %7222 = vmatpush1.bf16.msra.mxu0 %v1960
    %7223 = vmatprep.subr.bf16.mxu0 %v1969
    %7224 = vmatpush1.bf16.msra.mxu0 %v1968
    %7225 = vmatprep.subr.bf16.mxu0 %v1977
    %7226 = vmatpush1.bf16.msra.mxu0 %v1976
    %7227 = vmatprep.subr.bf16.mxu0 %v1985
    %7228 = vmatpush1.bf16.msra.mxu0 %v1984
    %7229 = vmatprep.subr.bf16.mxu0 %v1993
    %7230 = vmatpush1.bf16.msra.mxu0 %v1992
    %7231 = vmatprep.subr.bf16.mxu0 %v2001
    %7232 = vmatpush1.bf16.msra.mxu0 %v2000
    %7233 = vmatprep.subr.bf16.mxu0 %v2009
    %7234 = vmatpush1.bf16.msra.mxu0 %v2008
    %7235 = vmatprep.mubr.bf16.mxu0 %v7079
    %7236 = vmatmul.mubr.bf16.gmra.mrb[0].mxu0 %v7078
    %v7237 = vpop.f32.mrb[0].mxu0
    %v7238 = vadd.f32 %v7197, %v7237
    %v7239 = vpop.f32.mrb[0].mxu0
    %v7240 = vadd.f32 %v7199, %v7239
    %v7241 = vpop.f32.mrb[0].mxu0
    %v7242 = vpop.f32.mrb[0].mxu0
    %7243 = vdwg.mxu0
    %7244 = vmatprep.subr.bf16.mxu0 %v1763
    %7245 = vmatpush1.bf16.msra.mxu0 %v1762
    %7246 = vmatprep.subr.bf16.mxu0 %v1771
    %7247 = vmatpush1.bf16.msra.mxu0 %v1770
    %7248 = vmatprep.subr.bf16.mxu0 %v1779
    %7249 = vmatpush1.bf16.msra.mxu0 %v1778
    %7250 = vmatprep.subr.bf16.mxu0 %v1787
    %7251 = vmatpush1.bf16.msra.mxu0 %v1786
    %7252 = vmatprep.subr.bf16.mxu0 %v1795
    %7253 = vmatpush1.bf16.msra.mxu0 %v1794
    %7254 = vmatprep.subr.bf16.mxu0 %v1803
    %7255 = vmatpush1.bf16.msra.mxu0 %v1802
    %7256 = vmatprep.subr.bf16.mxu0 %v1811
    %7257 = vmatpush1.bf16.msra.mxu0 %v1810
    %7258 = vmatprep.subr.bf16.mxu0 %v1819
    %7259 = vmatpush1.bf16.msra.mxu0 %v1818
    %7260 = vmatprep.subr.bf16.mxu0 %v1827
    %7261 = vmatpush1.bf16.msra.mxu0 %v1826
    %7262 = vmatprep.subr.bf16.mxu0 %v1835
    %7263 = vmatpush1.bf16.msra.mxu0 %v1834
    %7264 = vmatprep.subr.bf16.mxu0 %v1843
    %7265 = vmatpush1.bf16.msra.mxu0 %v1842
    %7266 = vmatprep.subr.bf16.mxu0 %v1851
    %7267 = vmatpush1.bf16.msra.mxu0 %v1850
    %7268 = vmatprep.subr.bf16.mxu0 %v1859
    %7269 = vmatpush1.bf16.msra.mxu0 %v1858
    %7270 = vmatprep.subr.bf16.mxu0 %v1867
    %7271 = vmatpush1.bf16.msra.mxu0 %v1866
    %7272 = vmatprep.subr.bf16.mxu0 %v1875
    %7273 = vmatpush1.bf16.msra.mxu0 %v1874
    %7274 = vmatprep.subr.bf16.mxu0 %v1883
    %7275 = vmatpush1.bf16.msra.mxu0 %v1882
    %7276 = vmatprep.mubr.bf16.mxu0 %v7077
    %7277 = vmatmul.mubr.bf16.gmra.mrb[0].mxu0 %v7076
    %v7278 = vpop.f32.mrb[0].mxu0
    %v7279 = vadd.f32 %v2035, %v7278
    %v7280 = vpop.f32.mrb[0].mxu0
    %v7281 = vadd.f32 %v2039, %v7280
    %v7282 = vpop.f32.mrb[0].mxu0
    %v7283 = vpop.f32.mrb[0].mxu0
    %7284 = vdwg.mxu0
    %7285 = vmatprep.subr.bf16.mxu0 %v1891
    %7286 = vmatpush1.bf16.msra.mxu0 %v1890
    %7287 = vmatprep.subr.bf16.mxu0 %v1899
    %7288 = vmatpush1.bf16.msra.mxu0 %v1898
    %7289 = vmatprep.subr.bf16.mxu0 %v1907
    %7290 = vmatpush1.bf16.msra.mxu0 %v1906
    %7291 = vmatprep.subr.bf16.mxu0 %v1915
    %7292 = vmatpush1.bf16.msra.mxu0 %v1914
    %7293 = vmatprep.subr.bf16.mxu0 %v1923
    %7294 = vmatpush1.bf16.msra.mxu0 %v1922
    %7295 = vmatprep.subr.bf16.mxu0 %v1931
    %7296 = vmatpush1.bf16.msra.mxu0 %v1930
    %7297 = vmatprep.subr.bf16.mxu0 %v1939
    %7298 = vmatpush1.bf16.msra.mxu0 %v1938
    %7299 = vmatprep.subr.bf16.mxu0 %v1947
    %7300 = vmatpush1.bf16.msra.mxu0 %v1946
    %7301 = vmatprep.subr.bf16.mxu0 %v1955
    %7302 = vmatpush1.bf16.msra.mxu0 %v1954
    %7303 = vmatprep.subr.bf16.mxu0 %v1963
    %7304 = vmatpush1.bf16.msra.mxu0 %v1962
    %7305 = vmatprep.subr.bf16.mxu0 %v1971
    %7306 = vmatpush1.bf16.msra.mxu0 %v1970
    %7307 = vmatprep.subr.bf16.mxu0 %v1979
    %7308 = vmatpush1.bf16.msra.mxu0 %v1978
    %7309 = vmatprep.subr.bf16.mxu0 %v1987
    %7310 = vmatpush1.bf16.msra.mxu0 %v1986
    %7311 = vmatprep.subr.bf16.mxu0 %v1995
    %7312 = vmatpush1.bf16.msra.mxu0 %v1994
    %7313 = vmatprep.subr.bf16.mxu0 %v2003
    %7314 = vmatpush1.bf16.msra.mxu0 %v2002
    %7315 = vmatprep.subr.bf16.mxu0 %v2011
    %7316 = vmatpush1.bf16.msra.mxu0 %v2010
    %7317 = vmatprep.mubr.bf16.mxu0 %v7079
    %7318 = vmatmul.mubr.bf16.gmra.mrb[0].mxu0 %v7078
    %v7319 = vpop.f32.mrb[0].mxu0
    %v7320 = vadd.f32 %v7279, %v7319
    %v7321 = vpop.f32.mrb[0].mxu0
    %v7322 = vadd.f32 %v7281, %v7321
    %v7323 = vpop.f32.mrb[0].mxu0
    %v7324 = vpop.f32.mrb[0].mxu0
    %7325 = vdwg.mxu0
    %7326 = vmatprep.subr.bf16.mxu0 %v1765
    %7327 = vmatpush1.bf16.msra.mxu0 %v1764
    %7328 = vmatprep.subr.bf16.mxu0 %v1773
    %7329 = vmatpush1.bf16.msra.mxu0 %v1772
    %7330 = vmatprep.subr.bf16.mxu0 %v1781
    %7331 = vmatpush1.bf16.msra.mxu0 %v1780
    %7332 = vmatprep.subr.bf16.mxu0 %v1789
    %7333 = vmatpush1.bf16.msra.mxu0 %v1788
    %7334 = vmatprep.subr.bf16.mxu0 %v1797
    %7335 = vmatpush1.bf16.msra.mxu0 %v1796
    %7336 = vmatprep.subr.bf16.mxu0 %v1805
    %7337 = vmatpush1.bf16.msra.mxu0 %v1804
    %7338 = vmatprep.subr.bf16.mxu0 %v1813
    %7339 = vmatpush1.bf16.msra.mxu0 %v1812
    %7340 = vmatprep.subr.bf16.mxu0 %v1821
    %7341 = vmatpush1.bf16.msra.mxu0 %v1820
    %7342 = vmatprep.subr.bf16.mxu0 %v1829
    %7343 = vmatpush1.bf16.msra.mxu0 %v1828
    %7344 = vmatprep.subr.bf16.mxu0 %v1837
    %7345 = vmatpush1.bf16.msra.mxu0 %v1836
    %7346 = vmatprep.subr.bf16.mxu0 %v1845
    %7347 = vmatpush1.bf16.msra.mxu0 %v1844
    %7348 = vmatprep.subr.bf16.mxu0 %v1853
    %7349 = vmatpush1.bf16.msra.mxu0 %v1852
    %7350 = vmatprep.subr.bf16.mxu0 %v1861
    %7351 = vmatpush1.bf16.msra.mxu0 %v1860
    %7352 = vmatprep.subr.bf16.mxu0 %v1869
    %7353 = vmatpush1.bf16.msra.mxu0 %v1868
    %7354 = vmatprep.subr.bf16.mxu0 %v1877
    %7355 = vmatpush1.bf16.msra.mxu0 %v1876
    %7356 = vmatprep.subr.bf16.mxu0 %v1885
    %7357 = vmatpush1.bf16.msra.mxu0 %v1884
    %7358 = vmatprep.mubr.bf16.mxu0 %v7077
    %7359 = vmatmul.mubr.bf16.gmra.mrb[0].mxu0 %v7076
    %v7360 = vpop.f32.mrb[0].mxu0
    %v7361 = vadd.f32 %v2043, %v7360
    %v7362 = vpop.f32.mrb[0].mxu0
    %v7363 = vadd.f32 %v2047, %v7362
    %v7364 = vpop.f32.mrb[0].mxu0
    %v7365 = vpop.f32.mrb[0].mxu0
    %7366 = vdwg.mxu0
    %7367 = vmatprep.subr.bf16.mxu0 %v1893
    %7368 = vmatpush1.bf16.msra.mxu0 %v1892
    %7369 = vmatprep.subr.bf16.mxu0 %v1901
    %7370 = vmatpush1.bf16.msra.mxu0 %v1900
    %7371 = vmatprep.subr.bf16.mxu0 %v1909
    %7372 = vmatpush1.bf16.msra.mxu0 %v1908
    %7373 = vmatprep.subr.bf16.mxu0 %v1917
    %7374 = vmatpush1.bf16.msra.mxu0 %v1916
    %7375 = vmatprep.subr.bf16.mxu0 %v1925
    %7376 = vmatpush1.bf16.msra.mxu0 %v1924
    %7377 = vmatprep.subr.bf16.mxu0 %v1933
    %7378 = vmatpush1.bf16.msra.mxu0 %v1932
    %7379 = vmatprep.subr.bf16.mxu0 %v1941
    %7380 = vmatpush1.bf16.msra.mxu0 %v1940
    %7381 = vmatprep.subr.bf16.mxu0 %v1949
    %7382 = vmatpush1.bf16.msra.mxu0 %v1948
    %7383 = vmatprep.subr.bf16.mxu0 %v1957
    %7384 = vmatpush1.bf16.msra.mxu0 %v1956
    %7385 = vmatprep.subr.bf16.mxu0 %v1965
    %7386 = vmatpush1.bf16.msra.mxu0 %v1964
    %7387 = vmatprep.subr.bf16.mxu0 %v1973
    %7388 = vmatpush1.bf16.msra.mxu0 %v1972
    %7389 = vmatprep.subr.bf16.mxu0 %v1981
    %7390 = vmatpush1.bf16.msra.mxu0 %v1980
    %7391 = vmatprep.subr.bf16.mxu0 %v1989
    %7392 = vmatpush1.bf16.msra.mxu0 %v1988
    %7393 = vmatprep.subr.bf16.mxu0 %v1997
    %7394 = vmatpush1.bf16.msra.mxu0 %v1996
    %7395 = vmatprep.subr.bf16.mxu0 %v2005
    %7396 = vmatpush1.bf16.msra.mxu0 %v2004
    %7397 = vmatprep.subr.bf16.mxu0 %v2013
    %7398 = vmatpush1.bf16.msra.mxu0 %v2012
    %7399 = vmatprep.mubr.bf16.mxu0 %v7079
    %7400 = vmatmul.mubr.bf16.gmra.mrb[0].mxu0 %v7078
    %v7401 = vpop.f32.mrb[0].mxu0
    %v7402 = vadd.f32 %v7361, %v7401
    %v7403 = vpop.f32.mrb[0].mxu0
    %v7404 = vadd.f32 %v7363, %v7403
    %v7405 = vpop.f32.mrb[0].mxu0
    %v7406 = vpop.f32.mrb[0].mxu0
    %7407 = vdwg.mxu0
    %v7408 = vxor.u32 %v7156, 2147483648
    %v7409 = vxor.u32 %v7158, 2147483648
    %v7410 = vmul.f32 %v7408, 1.442695
    %v7411 = vpow.pop %v7410
    %v7412 = vmul.f32 %v7409, 1.442695
    %v7413 = vpow.pop %v7412
    %v7414 = vadd.f32 %v7411, 1.0
    %v7415 = vadd.f32 %v7413, 1.0
    %v7416 = vrcp.pop %v7414
    %v7417 = vmul.f32 1.0, %v7416
    %v7418 = vrcp.pop %v7415
    %v7419 = vmul.f32 1.0, %v7418
    %v7420 = vxor.u32 %v7238, 2147483648
    %v7421 = vxor.u32 %v7240, 2147483648
    %v7422 = vmul.f32 %v7420, 1.442695
    %v7423 = vpow.pop %v7422
    %v7424 = vmul.f32 %v7421, 1.442695
    %v7425 = vpow.pop %v7424
    %v7426 = vadd.f32 %v7423, 1.0
    %v7427 = vadd.f32 %v7425, 1.0
    %v7428 = vrcp.pop %v7426
    %v7429 = vmul.f32 1.0, %v7428
    %v7430 = vrcp.pop %v7427
    %v7431 = vmul.f32 1.0, %v7430
    %v7432 = vtanh.pop %v7320
    %v7433 = vtanh.pop %v7322
    %v7434 = vxor.u32 %v7402, 2147483648
    %v7435 = vxor.u32 %v7404, 2147483648
    %v7436 = vmul.f32 %v7434, 1.442695
    %v7437 = vpow.pop %v7436
    %v7438 = vmul.f32 %v7435, 1.442695
    %v7439 = vpow.pop %v7438
    %v7440 = vadd.f32 %v7437, 1.0
    %v7441 = vadd.f32 %v7439, 1.0
    %v7442 = vrcp.pop %v7440
    %v7443 = vmul.f32 1.0, %v7442
    %v7444 = vrcp.pop %v7441
    %v7445 = vmul.f32 1.0, %v7444
    %v7446 = vmul.f32 %v7429, %v6842
    %v7447 = vmul.f32 %v7431, %v6843
    %v7448 = vmul.f32 %v7417, %v7432
    %v7449 = vmul.f32 %v7419, %v7433
    %v7450 = vadd.f32 %v7446, %v7448
    %v7451 = vadd.f32 %v7447, %v7449
    %v7452 = vtanh.pop %v7450
    %v7453 = vtanh.pop %v7451
    %v7454 = vmul.f32 %v7443, %v7452
    %v7455 = vmul.f32 %v7445, %v7453
    %s7456 = smul.u32 4, 32
    %s7457 = smul.u32 %s7456, 4
    %s7458 = sshll.u32 %s7457, 4
    %7459 = dma.done %s86, %s7458
    %s7460 = smul.u32 %s1751, 2
    %s7461 = sshll.u32 %s7460, 4
    %7462 = dma.done %s121, %s7461
    %v7463 = vpack.c.bf16 %v7454, %v7454
    %v7464 = vpack.c.bf16 %v7455, %v7455
    %v7465 = vld [vmem:[#allocation4] sm:$0xff]
    %v7466 = vld [vmem:[#allocation4 + $0x8] sm:$0xff]
    %v7467 = vld [vmem:[#allocation4 + $0x10] sm:$0xff]
    %v7468 = vld [vmem:[#allocation4 + $0x18] sm:$0xff]
    %v7469 = vld [vmem:[#allocation4 + $0x20] sm:$0xff]
    %v7470 = vld [vmem:[#allocation4 + $0x28] sm:$0xff]
    %v7471 = vld [vmem:[#allocation4 + $0x30] sm:$0xff]
    %v7472 = vld [vmem:[#allocation4 + $0x38] sm:$0xff]
    %v7473 = vld [vmem:[#allocation4 + $0x40] sm:$0xff]
    %v7474 = vld [vmem:[#allocation4 + $0x48] sm:$0xff]
    %v7475 = vld [vmem:[#allocation4 + $0x50] sm:$0xff]
    %v7476 = vld [vmem:[#allocation4 + $0x58] sm:$0xff]
    %v7477 = vld [vmem:[#allocation4 + $0x60] sm:$0xff]
    %v7478 = vld [vmem:[#allocation4 + $0x68] sm:$0xff]
    %v7479 = vld [vmem:[#allocation4 + $0x70] sm:$0xff]
    %v7480 = vld [vmem:[#allocation4 + $0x78] sm:$0xff]
    %v7481 = vld [vmem:[#allocation4 + $0x80] sm:$0xff]
    %v7482 = vld [vmem:[#allocation4 + $0x88] sm:$0xff]
    %v7483 = vld [vmem:[#allocation4 + $0x90] sm:$0xff]
    %v7484 = vld [vmem:[#allocation4 + $0x98] sm:$0xff]
    %v7485 = vld [vmem:[#allocation4 + $0xa0] sm:$0xff]
    %v7486 = vld [vmem:[#allocation4 + $0xa8] sm:$0xff]
    %v7487 = vld [vmem:[#allocation4 + $0xb0] sm:$0xff]
    %v7488 = vld [vmem:[#allocation4 + $0xb8] sm:$0xff]
    %v7489 = vld [vmem:[#allocation4 + $0xc0] sm:$0xff]
    %v7490 = vld [vmem:[#allocation4 + $0xc8] sm:$0xff]
    %v7491 = vld [vmem:[#allocation4 + $0xd0] sm:$0xff]
    %v7492 = vld [vmem:[#allocation4 + $0xd8] sm:$0xff]
    %v7493 = vld [vmem:[#allocation4 + $0xe0] sm:$0xff]
    %v7494 = vld [vmem:[#allocation4 + $0xe8] sm:$0xff]
    %v7495 = vld [vmem:[#allocation4 + $0xf0] sm:$0xff]
    %v7496 = vld [vmem:[#allocation4 + $0xf8] sm:$0xff]
    %v7497 = vld [vmem:[#allocation4 + $0x100] sm:$0xff]
    %v7498 = vld [vmem:[#allocation4 + $0x108] sm:$0xff]
    %v7499 = vld [vmem:[#allocation4 + $0x110] sm:$0xff]
    %v7500 = vld [vmem:[#allocation4 + $0x118] sm:$0xff]
    %v7501 = vld [vmem:[#allocation4 + $0x120] sm:$0xff]
    %v7502 = vld [vmem:[#allocation4 + $0x128] sm:$0xff]
    %v7503 = vld [vmem:[#allocation4 + $0x130] sm:$0xff]
    %v7504 = vld [vmem:[#allocation4 + $0x138] sm:$0xff]
    %v7505 = vld [vmem:[#allocation4 + $0x140] sm:$0xff]
    %v7506 = vld [vmem:[#allocation4 + $0x148] sm:$0xff]
    %v7507 = vld [vmem:[#allocation4 + $0x150] sm:$0xff]
    %v7508 = vld [vmem:[#allocation4 + $0x158] sm:$0xff]
    %v7509 = vld [vmem:[#allocation4 + $0x160] sm:$0xff]
    %v7510 = vld [vmem:[#allocation4 + $0x168] sm:$0xff]
    %v7511 = vld [vmem:[#allocation4 + $0x170] sm:$0xff]
    %v7512 = vld [vmem:[#allocation4 + $0x178] sm:$0xff]
    %v7513 = vld [vmem:[#allocation4 + $0x180] sm:$0xff]
    %v7514 = vld [vmem:[#allocation4 + $0x188] sm:$0xff]
    %v7515 = vld [vmem:[#allocation4 + $0x190] sm:$0xff]
    %v7516 = vld [vmem:[#allocation4 + $0x198] sm:$0xff]
    %v7517 = vld [vmem:[#allocation4 + $0x1a0] sm:$0xff]
    %v7518 = vld [vmem:[#allocation4 + $0x1a8] sm:$0xff]
    %v7519 = vld [vmem:[#allocation4 + $0x1b0] sm:$0xff]
    %v7520 = vld [vmem:[#allocation4 + $0x1b8] sm:$0xff]
    %v7521 = vld [vmem:[#allocation4 + $0x1c0] sm:$0xff]
    %v7522 = vld [vmem:[#allocation4 + $0x1c8] sm:$0xff]
    %v7523 = vld [vmem:[#allocation4 + $0x1d0] sm:$0xff]
    %v7524 = vld [vmem:[#allocation4 + $0x1d8] sm:$0xff]
    %v7525 = vld [vmem:[#allocation4 + $0x1e0] sm:$0xff]
    %v7526 = vld [vmem:[#allocation4 + $0x1e8] sm:$0xff]
    %v7527 = vld [vmem:[#allocation4 + $0x1f0] sm:$0xff]
    %v7528 = vld [vmem:[#allocation4 + $0x1f8] sm:$0xff]
    %v7529 = vld [vmem:[%s7] sm:$0xf]
    %v7531 = vlaneseq
    %v7532 = vshrl.u32 %v7531, 7
    %v7533 = vsub.s32 0, %v7532
    %v7534 = vrot.slane %v7529, %v7533
    %v7535 = vlaneseq
    %v7536 = vshrl.u32 %v7535, 7
    %v7537 = vsub.s32 1, %v7536
    %v7538 = vrot.slane %v7529, %v7537
    %v7539 = vlaneseq
    %v7540 = vshrl.u32 %v7539, 7
    %v7541 = vsub.s32 2, %v7540
    %v7542 = vrot.slane %v7529, %v7541
    %v7543 = vlaneseq
    %v7544 = vshrl.u32 %v7543, 7
    %v7545 = vsub.s32 3, %v7544
    %v7546 = vrot.slane %v7529, %v7545
    %7551 = vmatprep.subr.bf16.mxu0 %v7466
    %7552 = vmatpush1.bf16.msra.mxu0 %v7465
    %7553 = vmatprep.subr.bf16.mxu0 %v7470
    %7554 = vmatpush1.bf16.msra.mxu0 %v7469
    %7555 = vmatprep.subr.bf16.mxu0 %v7474
    %7556 = vmatpush1.bf16.msra.mxu0 %v7473
    %7557 = vmatprep.subr.bf16.mxu0 %v7478
    %7558 = vmatpush1.bf16.msra.mxu0 %v7477
    %7559 = vmatprep.subr.bf16.mxu0 %v7482
    %7560 = vmatpush1.bf16.msra.mxu0 %v7481
    %7561 = vmatprep.subr.bf16.mxu0 %v7486
    %7562 = vmatpush1.bf16.msra.mxu0 %v7485
    %7563 = vmatprep.subr.bf16.mxu0 %v7490
    %7564 = vmatpush1.bf16.msra.mxu0 %v7489
    %7565 = vmatprep.subr.bf16.mxu0 %v7494
    %7566 = vmatpush1.bf16.msra.mxu0 %v7493
    %7567 = vmatprep.subr.bf16.mxu0 %v7498
    %7568 = vmatpush1.bf16.msra.mxu0 %v7497
    %7569 = vmatprep.subr.bf16.mxu0 %v7502
    %7570 = vmatpush1.bf16.msra.mxu0 %v7501
    %7571 = vmatprep.subr.bf16.mxu0 %v7506
    %7572 = vmatpush1.bf16.msra.mxu0 %v7505
    %7573 = vmatprep.subr.bf16.mxu0 %v7510
    %7574 = vmatpush1.bf16.msra.mxu0 %v7509
    %7575 = vmatprep.subr.bf16.mxu0 %v7514
    %7576 = vmatpush1.bf16.msra.mxu0 %v7513
    %7577 = vmatprep.subr.bf16.mxu0 %v7518
    %7578 = vmatpush1.bf16.msra.mxu0 %v7517
    %7579 = vmatprep.subr.bf16.mxu0 %v7522
    %7580 = vmatpush1.bf16.msra.mxu0 %v7521
    %7581 = vmatprep.subr.bf16.mxu0 %v7526
    %7582 = vmatpush1.bf16.msra.mxu0 %v7525
    %7583 = vmatprep.mubr.bf16.mxu0 %v7464
    %7584 = vmatmul.mubr.bf16.gmra.mrb[0].mxu0 %v7463
    %v7585 = vpop.f32.mrb[0].mxu0
    %v7586 = vadd.f32 %v7534, %v7585
    %v7587 = vpop.f32.mrb[0].mxu0
    %v7588 = vadd.f32 %v7538, %v7587
    %v7589 = vpop.f32.mrb[0].mxu0
    %v7590 = vpop.f32.mrb[0].mxu0
    %7591 = vdwg.mxu0
    %7592 = vmatprep.subr.bf16.mxu0 %v7468
    %7593 = vmatpush1.bf16.msra.mxu0 %v7467
    %7594 = vmatprep.subr.bf16.mxu0 %v7472
    %7595 = vmatpush1.bf16.msra.mxu0 %v7471
    %7596 = vmatprep.subr.bf16.mxu0 %v7476
    %7597 = vmatpush1.bf16.msra.mxu0 %v7475
    %7598 = vmatprep.subr.bf16.mxu0 %v7480
    %7599 = vmatpush1.bf16.msra.mxu0 %v7479
    %7600 = vmatprep.subr.bf16.mxu0 %v7484
    %7601 = vmatpush1.bf16.msra.mxu0 %v7483
    %7602 = vmatprep.subr.bf16.mxu0 %v7488
    %7603 = vmatpush1.bf16.msra.mxu0 %v7487
    %7604 = vmatprep.subr.bf16.mxu0 %v7492
    %7605 = vmatpush1.bf16.msra.mxu0 %v7491
    %7606 = vmatprep.subr.bf16.mxu0 %v7496
    %7607 = vmatpush1.bf16.msra.mxu0 %v7495
    %7608 = vmatprep.subr.bf16.mxu0 %v7500
    %7609 = vmatpush1.bf16.msra.mxu0 %v7499
    %7610 = vmatprep.subr.bf16.mxu0 %v7504
    %7611 = vmatpush1.bf16.msra.mxu0 %v7503
    %7612 = vmatprep.subr.bf16.mxu0 %v7508
    %7613 = vmatpush1.bf16.msra.mxu0 %v7507
    %7614 = vmatprep.subr.bf16.mxu0 %v7512
    %7615 = vmatpush1.bf16.msra.mxu0 %v7511
    %7616 = vmatprep.subr.bf16.mxu0 %v7516
    %7617 = vmatpush1.bf16.msra.mxu0 %v7515
    %7618 = vmatprep.subr.bf16.mxu0 %v7520
    %7619 = vmatpush1.bf16.msra.mxu0 %v7519
    %7620 = vmatprep.subr.bf16.mxu0 %v7524
    %7621 = vmatpush1.bf16.msra.mxu0 %v7523
    %7622 = vmatprep.subr.bf16.mxu0 %v7528
    %7623 = vmatpush1.bf16.msra.mxu0 %v7527
    %7624 = vmatprep.mubr.bf16.mxu0 %v7464
    %7625 = vmatmul.mubr.bf16.gmra.mrb[0].mxu0 %v7463
    %v7626 = vpop.f32.mrb[0].mxu0
    %v7627 = vadd.f32 %v7542, %v7626
    %v7628 = vpop.f32.mrb[0].mxu0
    %v7629 = vadd.f32 %v7546, %v7628
    %v7630 = vpop.f32.mrb[0].mxu0
    %v7631 = vpop.f32.mrb[0].mxu0
    %7632 = vdwg.mxu0
    %v7633 = vmax.f32 %v7586, 0.0
    %v7634 = vmax.f32 %v7588, 0.0
    %v7635 = vmax.f32 %v7627, 0.0
    %v7636 = vmax.f32 %v7629, 0.0
    %v7637 = vpack.c.bf16 %v7633, %v7633
    %v7638 = vpack.c.bf16 %v7634, %v7634
    %v7639 = vpack.c.bf16 %v7635, %v7635
    %v7640 = vpack.c.bf16 %v7636, %v7636
    %v7641 = vld [vmem:[#allocation5] sm:$0xff]
    %v7642 = vld [vmem:[#allocation5 + $0x8] sm:$0xff]
    %v7643 = vld [vmem:[#allocation5 + $0x10] sm:$0xff]
    %v7644 = vld [vmem:[#allocation5 + $0x18] sm:$0xff]
    %v7645 = vld [vmem:[#allocation5 + $0x20] sm:$0xff]
    %v7646 = vld [vmem:[#allocation5 + $0x28] sm:$0xff]
    %v7647 = vld [vmem:[#allocation5 + $0x30] sm:$0xff]
    %v7648 = vld [vmem:[#allocation5 + $0x38] sm:$0xff]
    %v7649 = vld [vmem:[#allocation5 + $0x40] sm:$0xff]
    %v7650 = vld [vmem:[#allocation5 + $0x48] sm:$0xff]
    %v7651 = vld [vmem:[#allocation5 + $0x50] sm:$0xff]
    %v7652 = vld [vmem:[#allocation5 + $0x58] sm:$0xff]
    %v7653 = vld [vmem:[#allocation5 + $0x60] sm:$0xff]
    %v7654 = vld [vmem:[#allocation5 + $0x68] sm:$0xff]
    %v7655 = vld [vmem:[#allocation5 + $0x70] sm:$0xff]
    %v7656 = vld [vmem:[#allocation5 + $0x78] sm:$0xff]
    %v7657 = vld [vmem:[#allocation5 + $0x80] sm:$0xff]
    %v7658 = vld [vmem:[#allocation5 + $0x88] sm:$0xff]
    %v7659 = vld [vmem:[#allocation5 + $0x90] sm:$0xff]
    %v7660 = vld [vmem:[#allocation5 + $0x98] sm:$0xff]
    %v7661 = vld [vmem:[#allocation5 + $0xa0] sm:$0xff]
    %v7662 = vld [vmem:[#allocation5 + $0xa8] sm:$0xff]
    %v7663 = vld [vmem:[#allocation5 + $0xb0] sm:$0xff]
    %v7664 = vld [vmem:[#allocation5 + $0xb8] sm:$0xff]
    %v7665 = vld [vmem:[#allocation5 + $0xc0] sm:$0xff]
    %v7666 = vld [vmem:[#allocation5 + $0xc8] sm:$0xff]
    %v7667 = vld [vmem:[#allocation5 + $0xd0] sm:$0xff]
    %v7668 = vld [vmem:[#allocation5 + $0xd8] sm:$0xff]
    %v7669 = vld [vmem:[#allocation5 + $0xe0] sm:$0xff]
    %v7670 = vld [vmem:[#allocation5 + $0xe8] sm:$0xff]
    %v7671 = vld [vmem:[#allocation5 + $0xf0] sm:$0xff]
    %v7672 = vld [vmem:[#allocation5 + $0xf8] sm:$0xff]
    %v7673 = vld [vmem:[#allocation5 + $0x100] sm:$0xff]
    %v7674 = vld [vmem:[#allocation5 + $0x108] sm:$0xff]
    %v7675 = vld [vmem:[#allocation5 + $0x110] sm:$0xff]
    %v7676 = vld [vmem:[#allocation5 + $0x118] sm:$0xff]
    %v7677 = vld [vmem:[#allocation5 + $0x120] sm:$0xff]
    %v7678 = vld [vmem:[#allocation5 + $0x128] sm:$0xff]
    %v7679 = vld [vmem:[#allocation5 + $0x130] sm:$0xff]
    %v7680 = vld [vmem:[#allocation5 + $0x138] sm:$0xff]
    %v7681 = vld [vmem:[#allocation5 + $0x140] sm:$0xff]
    %v7682 = vld [vmem:[#allocation5 + $0x148] sm:$0xff]
    %v7683 = vld [vmem:[#allocation5 + $0x150] sm:$0xff]
    %v7684 = vld [vmem:[#allocation5 + $0x158] sm:$0xff]
    %v7685 = vld [vmem:[#allocation5 + $0x160] sm:$0xff]
    %v7686 = vld [vmem:[#allocation5 + $0x168] sm:$0xff]
    %v7687 = vld [vmem:[#allocation5 + $0x170] sm:$0xff]
    %v7688 = vld [vmem:[#allocation5 + $0x178] sm:$0xff]
    %v7689 = vld [vmem:[#allocation5 + $0x180] sm:$0xff]
    %v7690 = vld [vmem:[#allocation5 + $0x188] sm:$0xff]
    %v7691 = vld [vmem:[#allocation5 + $0x190] sm:$0xff]
    %v7692 = vld [vmem:[#allocation5 + $0x198] sm:$0xff]
    %v7693 = vld [vmem:[#allocation5 + $0x1a0] sm:$0xff]
    %v7694 = vld [vmem:[#allocation5 + $0x1a8] sm:$0xff]
    %v7695 = vld [vmem:[#allocation5 + $0x1b0] sm:$0xff]
    %v7696 = vld [vmem:[#allocation5 + $0x1b8] sm:$0xff]
    %v7697 = vld [vmem:[#allocation5 + $0x1c0] sm:$0xff]
    %v7698 = vld [vmem:[#allocation5 + $0x1c8] sm:$0xff]
    %v7699 = vld [vmem:[#allocation5 + $0x1d0] sm:$0xff]
    %v7700 = vld [vmem:[#allocation5 + $0x1d8] sm:$0xff]
    %v7701 = vld [vmem:[#allocation5 + $0x1e0] sm:$0xff]
    %v7702 = vld [vmem:[#allocation5 + $0x1e8] sm:$0xff]
    %v7703 = vld [vmem:[#allocation5 + $0x1f0] sm:$0xff]
    %v7704 = vld [vmem:[#allocation5 + $0x1f8] sm:$0xff]
    %v7705 = vld [vmem:[%s9] sm:$0x3]
    %v7707 = vlaneseq
    %v7708 = vshrl.u32 %v7707, 7
    %v7709 = vsub.s32 0, %v7708
    %v7710 = vrot.slane %v7705, %v7709
    %v7711 = vlaneseq
    %v7712 = vshrl.u32 %v7711, 7
    %v7713 = vsub.s32 1, %v7712
    %v7714 = vrot.slane %v7705, %v7713
    %7717 = vmatprep.subr.bf16.mxu0 %v7642
    %7718 = vmatpush1.bf16.msra.mxu0 %v7641
    %7719 = vmatprep.subr.bf16.mxu0 %v7644
    %7720 = vmatpush1.bf16.msra.mxu0 %v7643
    %7721 = vmatprep.subr.bf16.mxu0 %v7646
    %7722 = vmatpush1.bf16.msra.mxu0 %v7645
    %7723 = vmatprep.subr.bf16.mxu0 %v7648
    %7724 = vmatpush1.bf16.msra.mxu0 %v7647
    %7725 = vmatprep.subr.bf16.mxu0 %v7650
    %7726 = vmatpush1.bf16.msra.mxu0 %v7649
    %7727 = vmatprep.subr.bf16.mxu0 %v7652
    %7728 = vmatpush1.bf16.msra.mxu0 %v7651
    %7729 = vmatprep.subr.bf16.mxu0 %v7654
    %7730 = vmatpush1.bf16.msra.mxu0 %v7653
    %7731 = vmatprep.subr.bf16.mxu0 %v7656
    %7732 = vmatpush1.bf16.msra.mxu0 %v7655
    %7733 = vmatprep.subr.bf16.mxu0 %v7658
    %7734 = vmatpush1.bf16.msra.mxu0 %v7657
    %7735 = vmatprep.subr.bf16.mxu0 %v7660
    %7736 = vmatpush1.bf16.msra.mxu0 %v7659
    %7737 = vmatprep.subr.bf16.mxu0 %v7662
    %7738 = vmatpush1.bf16.msra.mxu0 %v7661
    %7739 = vmatprep.subr.bf16.mxu0 %v7664
    %7740 = vmatpush1.bf16.msra.mxu0 %v7663
    %7741 = vmatprep.subr.bf16.mxu0 %v7666
    %7742 = vmatpush1.bf16.msra.mxu0 %v7665
    %7743 = vmatprep.subr.bf16.mxu0 %v7668
    %7744 = vmatpush1.bf16.msra.mxu0 %v7667
    %7745 = vmatprep.subr.bf16.mxu0 %v7670
    %7746 = vmatpush1.bf16.msra.mxu0 %v7669
    %7747 = vmatprep.subr.bf16.mxu0 %v7672
    %7748 = vmatpush1.bf16.msra.mxu0 %v7671
    %7749 = vmatprep.mubr.bf16.mxu0 %v7638
    %7750 = vmatmul.mubr.bf16.gmra.mrb[0].mxu0 %v7637
    %v7751 = vpop.f32.mrb[0].mxu0
    %v7752 = vadd.f32 %v7710, %v7751
    %v7753 = vpop.f32.mrb[0].mxu0
    %v7754 = vadd.f32 %v7714, %v7753
    %v7755 = vpop.f32.mrb[0].mxu0
    %v7756 = vpop.f32.mrb[0].mxu0
    %7757 = vdwg.mxu0
    %7758 = vmatprep.subr.bf16.mxu0 %v7674
    %7759 = vmatpush1.bf16.msra.mxu0 %v7673
    %7760 = vmatprep.subr.bf16.mxu0 %v7676
    %7761 = vmatpush1.bf16.msra.mxu0 %v7675
    %7762 = vmatprep.subr.bf16.mxu0 %v7678
    %7763 = vmatpush1.bf16.msra.mxu0 %v7677
    %7764 = vmatprep.subr.bf16.mxu0 %v7680
    %7765 = vmatpush1.bf16.msra.mxu0 %v7679
    %7766 = vmatprep.subr.bf16.mxu0 %v7682
    %7767 = vmatpush1.bf16.msra.mxu0 %v7681
    %7768 = vmatprep.subr.bf16.mxu0 %v7684
    %7769 = vmatpush1.bf16.msra.mxu0 %v7683
    %7770 = vmatprep.subr.bf16.mxu0 %v7686
    %7771 = vmatpush1.bf16.msra.mxu0 %v7685
    %7772 = vmatprep.subr.bf16.mxu0 %v7688
    %7773 = vmatpush1.bf16.msra.mxu0 %v7687
    %7774 = vmatprep.subr.bf16.mxu0 %v7690
    %7775 = vmatpush1.bf16.msra.mxu0 %v7689
    %7776 = vmatprep.subr.bf16.mxu0 %v7692
    %7777 = vmatpush1.bf16.msra.mxu0 %v7691
    %7778 = vmatprep.subr.bf16.mxu0 %v7694
    %7779 = vmatpush1.bf16.msra.mxu0 %v7693
    %7780 = vmatprep.subr.bf16.mxu0 %v7696
    %7781 = vmatpush1.bf16.msra.mxu0 %v7695
    %7782 = vmatprep.subr.bf16.mxu0 %v7698
    %7783 = vmatpush1.bf16.msra.mxu0 %v7697
    %7784 = vmatprep.subr.bf16.mxu0 %v7700
    %7785 = vmatpush1.bf16.msra.mxu0 %v7699
    %7786 = vmatprep.subr.bf16.mxu0 %v7702
    %7787 = vmatpush1.bf16.msra.mxu0 %v7701
    %7788 = vmatprep.subr.bf16.mxu0 %v7704
    %7789 = vmatpush1.bf16.msra.mxu0 %v7703
    %7790 = vmatprep.mubr.bf16.mxu0 %v7640
    %7791 = vmatmul.mubr.bf16.gmra.mrb[0].mxu0 %v7639
    %v7792 = vpop.f32.mrb[0].mxu0
    %v7793 = vadd.f32 %v7752, %v7792
    %v7794 = vpop.f32.mrb[0].mxu0
    %v7795 = vadd.f32 %v7754, %v7794
    %v7796 = vpop.f32.mrb[0].mxu0
    %v7797 = vpop.f32.mrb[0].mxu0
    %7798 = vdwg.mxu0
    %v7799 = vmax.f32 %v7793, 0.0
    %v7800 = vmax.f32 %v7795, 0.0
    %v7801 = vld [vmem:[%s10] sm:$0x3]
    %v7803 = vlaneseq
    %v7804 = vshrl.u32 %v7803, 7
    %v7805 = vsub.s32 0, %v7804
    %v7806 = vrot.slane %v7801, %v7805
    %v7807 = vlaneseq
    %v7808 = vshrl.u32 %v7807, 7
    %v7809 = vsub.s32 1, %v7808
    %v7810 = vrot.slane %v7801, %v7809
    %v7813 = vmul.f32 %v7799, %v7806
    %v7814 = vmul.f32 %v7800, %v7810
    %v7815 = vadd.f32 %v7813, %v7814
    %7816 = vadd.xlane.f32.xlu0 %v7815
    %v7817 = vpop.xlane.xlu0 %7816
    %s7818 = sld [smem:[#allocation7]]
    %v7819 = vstv %s7818
    %v7820 = vadd.f32 %v7817, %v7819
    %7821 = vst [vmem:[%s12] sm:$0xff] %v7820
    // Predicated region
    $region42: #{forecast_lstm_forward.1} parent=1 // pred_check
      _
    $region43: #{forecast_lstm_forward.1} parent=1 // pred_check_branch
      %7823 = sbr.rel (0) target = $region45
    $region44: #{forecast_lstm_forward.1} parent=1 // pred_region
      _
    $region45: #{forecast_lstm_forward.1} parent=1 // pred_fallthru
      _
    // Predicated region
    $region46: #{forecast_lstm_forward.1} parent=1 // pred_check
      _
    $region47: #{forecast_lstm_forward.1} parent=1 // pred_check_branch
      %7825 = sbr.rel (0) target = $region49
    $region48: #{forecast_lstm_forward.1} parent=1 // pred_region
      _
    $region49: #{forecast_lstm_forward.1} parent=1 // pred_fallthru
      _
    %7826 = vsyncpa [#allocation9], 1
  %7827 = vsyncmov [#allocation6]
  %s7828 = vpop.sfrf %7827
  %p7829 = scmp.eq.s32.totalorder %s7828, 0
  %p7830 = pneg %p7829
  %7832 = shalt.err (%p7830)
  %s7833 = scalar_lea.sflag [#allocation6], 1
  %7834 = vsyncmov %s7833
  %s7835 = vpop.sfrf %7834
  %p7836 = scmp.eq.s32.totalorder %s7835, 0
  %p7837 = pneg %p7836
  %7839 = shalt.err (%p7837)
  %s7840 = scalar_lea.sflag [#allocation6], 2
  %7841 = vsyncmov %s7840
  %s7842 = vpop.sfrf %7841
  %p7843 = scmp.eq.s32.totalorder %s7842, 0
  %p7844 = pneg %p7843
  %7846 = shalt.err (%p7844)

</llo_original>
